<compile_context>
chip_gen: v6e
topology: v6e:2x2x1
jax: 0.10.0
libtpu: 0.0.40
codegen_flags: <defaults>
</compile_context>

<pallas_src>
import functools

import jax
import jax.numpy as jnp
from jax.experimental import pallas as pl
from jax.experimental.pallas import tpu as pltpu

IN_DIM = 1
H1 = 10
H2 = 1000          # l2 output / l3 contraction width
K_PAD = 1024       # H2 zero-padded (multiple of 32 -> int8 sublane tile, and of 256 -> MXU)
OUT = 10000        # l3 output width -> unflattened to (100, 100)
TILE_N = 2560      # lane-dim tile of the l3 output: 4 tiles, ragged last tile clipped


def _default_w3_mode():
    """Pick the storage dtype for the dominant w3 HBM stream."""
    try:
        kind = jax.devices()[0].device_kind.lower()
    except Exception:
        return "bf16"
    if any(v in kind for v in ("v5", "v6", "v7", "tpu7")):
        return "int8"      # 4x smaller stream; dequantized on the VPU, f32 accumulation
    return "bf16"          # conservative fallback (e.g. interpret mode / unknown device)


def prepare_params(w1, b1, w2, w3, *, w3_mode=None):
    """One-time weight preprocessing (call at init time, NOT per forward).

    PyTorch Linear stores (out, in); transpose to (in, out) so the kernel computes h @ W.
    w2/w3 contraction dim is zero-padded 1000 -> 1024.  w3 may be stored as
    "int8" (per-output-column symmetric scales), "bf16", or "f32".
    Returns (w1t, b1r, w2t, scales, w3q)."""
    if w3_mode is None:
        w3_mode = _default_w3_mode()

    w1t = jnp.asarray(w1, jnp.float32).T.reshape(1, H1)              # (1, 10)
    b1r = jnp.asarray(b1, jnp.float32).reshape(1, H1)                # (1, 10)
    w2t = jnp.zeros((H1, K_PAD), jnp.float32).at[:, :H2].set(
        jnp.asarray(w2, jnp.float32).T)                              # (10, 1024), pad cols = 0
    w3t = jnp.zeros((K_PAD, OUT), jnp.float32).at[:H2, :].set(
        jnp.asarray(w3, jnp.float32).T)                              # (1024, 10000), pad rows = 0

    if w3_mode == "int8":
        amax = jnp.max(jnp.abs(w3t), axis=0, keepdims=True)          # (1, 10000)
        scale = jnp.where(amax > 0.0, amax / 127.0, 1.0).astype(jnp.float32)
        w3q = jnp.clip(jnp.round(w3t / scale), -127.0, 127.0).astype(jnp.int8)
        scales = scale
    elif w3_mode == "bf16":
        w3q = w3t.astype(jnp.bfloat16)
        scales = jnp.ones((1, OUT), jnp.float32)
    elif w3_mode == "f32":
        w3q = w3t
        scales = jnp.ones((1, OUT), jnp.float32)
    else:
        raise ValueError(f"unknown w3_mode: {w3_mode}")
    return w1t, b1r, w2t, scales, w3q


def _decoder_kernel(x_ref, w1t_ref, b1_ref, w2t_ref, scale_ref, w3_ref, o_ref):
    # --- fused l1/l2 head, recomputed per output tile (negligible vs the w3 tile DMA) ---
    # l1 (in_features == 1): broadcasted multiply + bias, ReLU.  (B,1)*(1,10)+(1,10)
    h1 = jnp.maximum(x_ref[...] * w1t_ref[...] + b1_ref[...], 0.0)                # (B, 10)
    # l2: (B,10) @ (10, K_PAD), ReLU.  Padded columns of w2t are zero -> h2 pad = 0.
    h2 = jnp.maximum(
        jnp.dot(h1, w2t_ref[...], preferred_element_type=jnp.float32), 0.0)       # (B, K_PAD)

    # --- l3 output tile: the HBM-bound part ---
    # Dequantize the streamed w3 tile to f32 (VPU work, hidden under the next tile's DMA),
    # f32 matmul, per-output-column dequant scale on the f32 accumulator, sigmoid.
    w3 = w3_ref[...].astype(jnp.float32)                                          # (K_PAD, TILE_N)
    z = jnp.dot(h2, w3, preferred_element_type=jnp.float32) * scale_ref[...]      # (B, TILE_N)
    o_ref[...] = jax.nn.sigmoid(z)


@functools.partial(jax.jit, static_argnames=("tile_n",))
def decoder_forward(x, w1t, b1r, w2t, scales, w3q, *, tile_n=TILE_N):
    """x: (B, 1) float32; weights already prepared by prepare_params()."""
    B = x.shape[0]
    grid = (pl.cdiv(OUT, tile_n),)   # 4 tiles at tile_n=2560; last tile is ragged (clipped)

    out = pl.pallas_call(
        _decoder_kernel,
        out_shape=jax.ShapeDtypeStruct((B, OUT), jnp.float32),
        grid_spec=pltpu.PrefetchScalarGridSpec(
            num_scalar_prefetch=0,
            grid=grid,
            in_specs=[
                pl.BlockSpec((B, IN_DIM), lambda j: (0, 0)),       # x          (resident)
                pl.BlockSpec((1, H1), lambda j: (0, 0)),           # w1^T       (resident)
                pl.BlockSpec((1, H1), lambda j: (0, 0)),           # b1         (resident)
                pl.BlockSpec((H1, K_PAD), lambda j: (0, 0)),       # w2^T, padded (resident)
                pl.BlockSpec((1, tile_n), lambda j: (0, j)),       # dequant scales tile
                pl.BlockSpec((K_PAD, tile_n), lambda j: (0, j)),   # w3^T tile  (the HBM stream)
            ],
            out_specs=pl.BlockSpec((B, tile_n), lambda j: (0, j)),
        ),
        compiler_params=pltpu.CompilerParams(
            # Independent output tiles: 4 tiles -> clean 2+2 split across v7x's two TCs.
            dimension_semantics=("parallel",),
            # Above v5e's 16 MiB scoped default (f32 anchor path needs ~21 MB of buffers),
            # within every generation's physical VMEM (v7x: 64 MiB).
            vmem_limit_bytes=32 * 1024 * 1024,
        ),
    )(x, w1t, b1r, w2t, scales, w3q)

    return out.reshape(B, 100, 100)   # nn.Unflatten(1, (100, 100))


def reference_forward(x, w1, b1, w2, w3):
    h1 = jnp.maximum(x @ w1.T + b1[None, :], 0.0)
    h2 = jnp.maximum(h1 @ w2.T, 0.0)
    o = jax.nn.sigmoid(h2 @ w3.T)
    return o.reshape(x.shape[0], 100, 100)


if __name__ == "__main__":
    key = jax.random.PRNGKey(0)
    kx, k1, kb1, k2, k3 = jax.random.split(key, 5)

    B = 2
    x = jax.random.normal(kx, (B, IN_DIM), jnp.float32)

    # Deterministic synthetic parameters (PyTorch shapes: Linear stores (out, in)).
    w1 = jax.random.normal(k1, (H1, IN_DIM), jnp.float32) * 0.5
    b1 = jax.random.normal(kb1, (H1,), jnp.float32) * 0.1
    w2 = jax.random.normal(k2, (H2, H1), jnp.float32) * (1.0 / jnp.sqrt(H1))
    w3 = jax.random.normal(k3, (OUT, H2), jnp.float32) * (1.0 / jnp.sqrt(H2))

    ref = reference_forward(x, w1, b1, w2, w3)

    # Exactness anchor: full-precision w3 stream must match the reference to f32 accuracy.
    params_f32 = prepare_params(w1, b1, w2, w3, w3_mode="f32")       # one-time prep
    out_f32 = jax.block_until_ready(decoder_forward(x, *params_f32))
    assert out_f32.shape == (B, 100, 100), out_f32.shape
    assert jnp.allclose(out_f32, ref, atol=1e-5, rtol=1e-5), float(
        jnp.max(jnp.abs(out_f32 - ref)))

    # Default (chip-tuned, reduced-precision) path: int8 w3 stream on TPU, bf16 fallback.
    params = prepare_params(w1, b1, w2, w3)                          # one-time prep
    out = jax.block_until_ready(decoder_forward(x, *params))
    assert out.shape == (B, 100, 100), out.shape
    assert jnp.allclose(out, ref, atol=3e-2), float(jnp.max(jnp.abs(out - ref)))

    print("KERNEL_OK")
</pallas_src>

<mosaic_0001>
module attributes {stable_mosaic.version = 11 : i64} {
  func.func @_decoder_kernel(%arg0: i32, %arg1: memref<2x1xf32, #tpu.memory_space<vmem>>, %arg2: memref<1x10xf32, #tpu.memory_space<vmem>>, %arg3: memref<1x10xf32, #tpu.memory_space<vmem>>, %arg4: memref<10x1024xf32, #tpu.memory_space<vmem>>, %arg5: memref<1x2560xf32, #tpu.memory_space<vmem>>, %arg6: memref<1024x2560xf32, #tpu.memory_space<vmem>>, %arg7: memref<2x2560xf32, #tpu.memory_space<vmem>>) attributes {dimension_semantics = [#tpu.dimension_semantics<parallel>], iteration_bounds = array<i64: 4>, scalar_prefetch = 0 : i64, scratch_operands = 0 : i64, tpu.core_type = #tpu.core_type<tc>, window_params = [{pipeline_mode = #tpu.pipeline_mode<synchronous>, transform_indices = @transform_0, window_bounds = array<i64: 2, 1>}, {pipeline_mode = #tpu.pipeline_mode<synchronous>, transform_indices = @transform_1, window_bounds = array<i64: 1, 10>}, {pipeline_mode = #tpu.pipeline_mode<synchronous>, transform_indices = @transform_2, window_bounds = array<i64: 1, 10>}, {pipeline_mode = #tpu.pipeline_mode<synchronous>, transform_indices = @transform_3, window_bounds = array<i64: 10, 1024>}, {transform_indices = @transform_4, window_bounds = array<i64: 1, 2560>}, {transform_indices = @transform_5, window_bounds = array<i64: 1024, 2560>}, {transform_indices = @transform_6, window_bounds = array<i64: 2, 2560>}]} {
    %c0 = arith.constant 0 : index
    %c0_0 = arith.constant 0 : index
    %0 = vector.load %arg1[%c0, %c0_0] : memref<2x1xf32, #tpu.memory_space<vmem>>, vector<2x1xf32>
    %c0_1 = arith.constant 0 : index
    %c0_2 = arith.constant 0 : index
    %1 = vector.load %arg2[%c0_1, %c0_2] : memref<1x10xf32, #tpu.memory_space<vmem>>, vector<1x10xf32>
    %2 = vector.broadcast %0 : vector<2x1xf32> to vector<2x10xf32>
    %3 = vector.broadcast %1 : vector<1x10xf32> to vector<2x10xf32>
    %4 = arith.mulf %2, %3 : vector<2x10xf32>
    %c0_3 = arith.constant 0 : index
    %c0_4 = arith.constant 0 : index
    %5 = vector.load %arg3[%c0_3, %c0_4] : memref<1x10xf32, #tpu.memory_space<vmem>>, vector<1x10xf32>
    %6 = vector.broadcast %5 : vector<1x10xf32> to vector<2x10xf32>
    %7 = arith.addf %4, %6 : vector<2x10xf32>
    %cst = arith.constant 0.000000e+00 : f32
    %8 = vector.broadcast %cst : f32 to vector<2x10xf32>
    %9 = arith.maximumf %7, %8 : vector<2x10xf32>
    %c0_5 = arith.constant 0 : index
    %c0_6 = arith.constant 0 : index
    %10 = vector.load %arg4[%c0_5, %c0_6] : memref<10x1024xf32, #tpu.memory_space<vmem>>, vector<10x1024xf32>
    %cst_7 = arith.constant dense<0.000000e+00> : vector<2x1024xf32>
    %11 = tpu.matmul %9, %10, %cst_7 {dimension_numbers = #tpu.dot_dimension_numbers<[1], [0], [0], [1], [0, 0, 1, 1], [], []>} : vector<2x10xf32>, vector<10x1024xf32>, vector<2x1024xf32> -> vector<2x1024xf32>
    %cst_8 = arith.constant 0.000000e+00 : f32
    %12 = vector.broadcast %cst_8 : f32 to vector<2x1024xf32>
    %13 = arith.maximumf %11, %12 : vector<2x1024xf32>
    %c0_9 = arith.constant 0 : index
    %c0_10 = arith.constant 0 : index
    %14 = vector.load %arg6[%c0_9, %c0_10] : memref<1024x2560xf32, #tpu.memory_space<vmem>>, vector<1024x2560xf32>
    %cst_11 = arith.constant dense<0.000000e+00> : vector<2x2560xf32>
    %15 = tpu.matmul %13, %14, %cst_11 {dimension_numbers = #tpu.dot_dimension_numbers<[1], [0], [0], [1], [0, 0, 1, 1], [], []>} : vector<2x1024xf32>, vector<1024x2560xf32>, vector<2x2560xf32> -> vector<2x2560xf32>
    %c0_12 = arith.constant 0 : index
    %c0_13 = arith.constant 0 : index
    %16 = vector.load %arg5[%c0_12, %c0_13] : memref<1x2560xf32, #tpu.memory_space<vmem>>, vector<1x2560xf32>
    %17 = vector.broadcast %16 : vector<1x2560xf32> to vector<2x2560xf32>
    %18 = arith.mulf %15, %17 : vector<2x2560xf32>
    %19 = arith.negf %18 : vector<2x2560xf32>
    %20 = math.exp %19 : vector<2x2560xf32>
    %cst_14 = arith.constant 1.000000e+00 : f32
    %21 = vector.broadcast %cst_14 : f32 to vector<2x2560xf32>
    %22 = arith.addf %21, %20 : vector<2x2560xf32>
    %23 = arith.divf %21, %22 : vector<2x2560xf32>
    %c0_15 = arith.constant 0 : index
    %c0_16 = arith.constant 0 : index
    %24 = vector.load %arg7[%c0_15, %c0_16] : memref<2x2560xf32, #tpu.memory_space<vmem>>, vector<2x2560xf32>
    tpu.vector_store %arg7[%c0_15, %c0_16], %23 {strides = array<i32>} : memref<2x2560xf32, #tpu.memory_space<vmem>>, vector<2x2560xf32>,
    return
  }
  func.func @transform_0(%arg0: i32) -> (i32, i32) {
    %c0_i32 = arith.constant 0 : i32
    %c0_i32_0 = arith.constant 0 : i32
    %c0_i32_1 = arith.constant 0 : i32
    return %c0_i32, %c0_i32_0 : i32, i32
  }
  func.func @transform_1(%arg0: i32) -> (i32, i32) {
    %c0_i32 = arith.constant 0 : i32
    %c0_i32_0 = arith.constant 0 : i32
    %c0_i32_1 = arith.constant 0 : i32
    return %c0_i32, %c0_i32_0 : i32, i32
  }
  func.func @transform_2(%arg0: i32) -> (i32, i32) {
    %c0_i32 = arith.constant 0 : i32
    %c0_i32_0 = arith.constant 0 : i32
    %c0_i32_1 = arith.constant 0 : i32
    return %c0_i32, %c0_i32_0 : i32, i32
  }
  func.func @transform_3(%arg0: i32) -> (i32, i32) {
    %c0_i32 = arith.constant 0 : i32
    %c0_i32_0 = arith.constant 0 : i32
    %c0_i32_1 = arith.constant 0 : i32
    return %c0_i32, %c0_i32_0 : i32, i32
  }
  func.func @transform_4(%arg0: i32) -> (i32, i32) {
    %c0_i32 = arith.constant 0 : i32
    %c0_i32_0 = arith.constant 0 : i32
    return %c0_i32, %arg0 : i32, i32
  }
  func.func @transform_5(%arg0: i32) -> (i32, i32) {
    %c0_i32 = arith.constant 0 : i32
    %c0_i32_0 = arith.constant 0 : i32
    return %c0_i32, %arg0 : i32, i32
  }
  func.func @transform_6(%arg0: i32) -> (i32, i32) {
    %c0_i32 = arith.constant 0 : i32
    %c0_i32_0 = arith.constant 0 : i32
    return %c0_i32, %arg0 : i32, i32
  }
}

</mosaic_0001>

<llo_original>
// kernel: decoder_forward.1
$region0: #{decoder_forward.1}
  #allocation0 [shape = 'u32[]', space=smem, size = 0x4, offset = 0x4, fixed_abs, tag = 'smem constant byte address 0x4 - core index']
  #allocation1 [shape = 'u32[144,128]{1,0:T(1,128)}', space=vmem, size = 0x12000, scoped, tag = 'internal scratch']
  %s0 = inlined_call_operand.vmem [shape: f32[2,1], index: 0, kind: input, shape index: {}]
  %s1 = inlined_call_operand.vmem [shape: f32[1,10], index: 1, kind: input, shape index: {}]
  %s2 = inlined_call_operand.vmem [shape: f32[1,10], index: 2, kind: input, shape index: {}]
  %s3 = inlined_call_operand.vmem [shape: f32[10,1024], index: 3, kind: input, shape index: {}]
  %s4 = inlined_call_operand.vmem [shape: f32[1,10000], index: 4, kind: input, shape index: {}]
  %s5 = inlined_call_operand.vmem [shape: f32[1024,10000], index: 5, kind: input, shape index: {}]
  %s6 = inlined_call_operand.vmem [shape: f32[2,10000], index: 6, kind: output, shape index: {}]
  %s7 = sld [smem:[#allocation0]]
  $region171: #{decoder_forward.1} parent=0
    _
  %s9 = ssub.s32 1, %s7
  %s10 = scalar_select 0, %s9, %s7
  $region1: #{decoder_forward.1} parent=0
    #allocation2 [shape = 'u8[20971520]{0}', space=vmem, size = 0x1400000, scoped, tag = 'input window, operand 5']
    #allocation3 [shape = 'u8[40960]{0}', space=vmem, size = 0xa000, scoped, tag = 'output window, operand 0']
    loop: start=0, step=1, limit=6
    $region2: #{decoder_forward.1} parent=1 // loop_pre_header
      _
    $region3: #{decoder_forward.1} parent=1 // loop_header
      %s12 = sphi 0, %s16
      %p13 = scmp.ge.s32.totalorder %s12, 6
      %s20 = sphi 0, %s20
      %s22 = sphi 0, %s20
      %s23 = sphi 0, %s22
      %s37 = sphi 0, %s23
      %s41 = sphi 0, %s41
      %s43 = sphi 0, %s41
      %s44 = sphi 0, %s43
      %s58 = sphi 0, %s44
      %s62 = sphi 0, %s62
      %s64 = sphi 0, %s62
      %s65 = sphi 0, %s64
      %s79 = sphi 0, %s65
      %s83 = sphi 0, %s83
      %s85 = sphi 0, %s83
      %s86 = sphi 0, %s85
      %s100 = sphi 0, %s86
      %s106 = sphi 0, %s108
      %s109 = sphi 0, %s106
      %s110 = sphi 0, %s109
      %s126 = sphi 0, %s110
      %s132 = sphi 0, %s134
      %s135 = sphi 0, %s132
      %s136 = sphi 0, %s135
      %s152 = sphi 0, %s136
      %s158 = sphi 0, %s160
      %s161 = sphi 0, %s158
      %s162 = sphi 0, %s161
      %s178 = sphi 0, %s162
    $region4: #{decoder_forward.1} parent=1 // loop_header_branch
      %15 = sbr.rel (%p13) target = $region8
    $region5: #{decoder_forward.1} parent=1 // loop_body
      %s17 = ssub.s32 %s12, 1
      %s18 = ssub.s32 %s12, 2
      %s19 = sadd.s32 %s12, 1
      %s21 = sadd.s32 %s20, 1
      %p24 = scmp.eq.s32.totalorder %s12, 3
      %p25 = scmp.ne.s32.totalorder %s20, %s22
      %p26 = scmp.eq.s32.totalorder %s12, 0
      %p27 = por %p25, %p26
      %p28 = scmp.ne.s32.totalorder %s20, %s22
      %p29 = scmp.eq.s32.totalorder %s17, 3
      %p30 = por %p28, %p29
      %p31 = scmp.ne.s32.totalorder %s22, %s23
      %p32 = scmp.eq.s32.totalorder %s17, 0
      %p33 = por %p31, %p32
      %p34 = scmp.ne.s32.totalorder %s22, %s23
      %p35 = scmp.eq.s32.totalorder %s18, 3
      %p36 = por %p34, %p35
      %p38 = scmp.ne.s32.totalorder %s23, %s37
      %p39 = scmp.eq.s32.totalorder %s18, 0
      %p40 = por %p38, %p39
      %s42 = sadd.s32 %s41, 1
      %p45 = scmp.eq.s32.totalorder %s12, 3
      %p46 = scmp.ne.s32.totalorder %s41, %s43
      %p47 = scmp.eq.s32.totalorder %s12, 0
      %p48 = por %p46, %p47
      %p49 = scmp.ne.s32.totalorder %s41, %s43
      %p50 = scmp.eq.s32.totalorder %s17, 3
      %p51 = por %p49, %p50
      %p52 = scmp.ne.s32.totalorder %s43, %s44
      %p53 = scmp.eq.s32.totalorder %s17, 0
      %p54 = por %p52, %p53
      %p55 = scmp.ne.s32.totalorder %s43, %s44
      %p56 = scmp.eq.s32.totalorder %s18, 3
      %p57 = por %p55, %p56
      %p59 = scmp.ne.s32.totalorder %s44, %s58
      %p60 = scmp.eq.s32.totalorder %s18, 0
      %p61 = por %p59, %p60
      %s63 = sadd.s32 %s62, 1
      %p66 = scmp.eq.s32.totalorder %s12, 3
      %p67 = scmp.ne.s32.totalorder %s62, %s64
      %p68 = scmp.eq.s32.totalorder %s12, 0
      %p69 = por %p67, %p68
      %p70 = scmp.ne.s32.totalorder %s62, %s64
      %p71 = scmp.eq.s32.totalorder %s17, 3
      %p72 = por %p70, %p71
      %p73 = scmp.ne.s32.totalorder %s64, %s65
      %p74 = scmp.eq.s32.totalorder %s17, 0
      %p75 = por %p73, %p74
      %p76 = scmp.ne.s32.totalorder %s64, %s65
      %p77 = scmp.eq.s32.totalorder %s18, 3
      %p78 = por %p76, %p77
      %p80 = scmp.ne.s32.totalorder %s65, %s79
      %p81 = scmp.eq.s32.totalorder %s18, 0
      %p82 = por %p80, %p81
      %s84 = sadd.s32 %s83, 1
      %p87 = scmp.eq.s32.totalorder %s12, 3
      %p88 = scmp.ne.s32.totalorder %s83, %s85
      %p89 = scmp.eq.s32.totalorder %s12, 0
      %p90 = por %p88, %p89
      %p91 = scmp.ne.s32.totalorder %s83, %s85
      %p92 = scmp.eq.s32.totalorder %s17, 3
      %p93 = por %p91, %p92
      %p94 = scmp.ne.s32.totalorder %s85, %s86
      %p95 = scmp.eq.s32.totalorder %s17, 0
      %p96 = por %p94, %p95
      %p97 = scmp.ne.s32.totalorder %s85, %s86
      %p98 = scmp.eq.s32.totalorder %s18, 3
      %p99 = por %p97, %p98
      %p101 = scmp.ne.s32.totalorder %s86, %s100
      %p102 = scmp.eq.s32.totalorder %s18, 0
      %p103 = por %p101, %p102
      %s104 = ssub.s32 %s12, %s19
      %p105 = scmp.eq.s32.totalorder %s104, 0
      %s107 = sadd.s32 %s106, 1
      %s108 = scalar_select %p105, %s106, %s107
      %p111 = pneg %p105
      %p112 = scmp.eq.s32.totalorder %s12, 3
      %p113 = por %p111, %p112
      %p114 = scmp.ne.s32.totalorder %s106, %s109
      %p115 = scmp.eq.s32.totalorder %s12, 0
      %p116 = por %p114, %p115
      %p117 = scmp.ne.s32.totalorder %s106, %s109
      %p118 = scmp.eq.s32.totalorder %s17, 3
      %p119 = por %p117, %p118
      %p120 = scmp.ne.s32.totalorder %s109, %s110
      %p121 = scmp.eq.s32.totalorder %s17, 0
      %p122 = por %p120, %p121
      %p123 = scmp.ne.s32.totalorder %s109, %s110
      %p124 = scmp.eq.s32.totalorder %s18, 3
      %p125 = por %p123, %p124
      %p127 = scmp.ne.s32.totalorder %s110, %s126
      %p128 = scmp.eq.s32.totalorder %s18, 0
      %p129 = por %p127, %p128
      %s130 = ssub.s32 %s12, %s19
      %p131 = scmp.eq.s32.totalorder %s130, 0
      %s133 = sadd.s32 %s132, 1
      %s134 = scalar_select %p131, %s132, %s133
      %p137 = pneg %p131
      %p138 = scmp.eq.s32.totalorder %s12, 3
      %p139 = por %p137, %p138
      %p140 = scmp.ne.s32.totalorder %s132, %s135
      %p141 = scmp.eq.s32.totalorder %s12, 0
      %p142 = por %p140, %p141
      %p143 = scmp.ne.s32.totalorder %s132, %s135
      %p144 = scmp.eq.s32.totalorder %s17, 3
      %p145 = por %p143, %p144
      %p146 = scmp.ne.s32.totalorder %s135, %s136
      %p147 = scmp.eq.s32.totalorder %s17, 0
      %p148 = por %p146, %p147
      %p149 = scmp.ne.s32.totalorder %s135, %s136
      %p150 = scmp.eq.s32.totalorder %s18, 3
      %p151 = por %p149, %p150
      %p153 = scmp.ne.s32.totalorder %s136, %s152
      %p154 = scmp.eq.s32.totalorder %s18, 0
      %p155 = por %p153, %p154
      %s156 = ssub.s32 %s12, %s19
      %p157 = scmp.eq.s32.totalorder %s156, 0
      %s159 = sadd.s32 %s158, 1
      %s160 = scalar_select %p157, %s158, %s159
      %p163 = pneg %p157
      %p164 = scmp.eq.s32.totalorder %s12, 3
      %p165 = por %p163, %p164
      %p166 = scmp.ne.s32.totalorder %s158, %s161
      %p167 = scmp.eq.s32.totalorder %s12, 0
      %p168 = por %p166, %p167
      %p169 = scmp.ne.s32.totalorder %s158, %s161
      %p170 = scmp.eq.s32.totalorder %s17, 3
      %p171 = por %p169, %p170
      %p172 = scmp.ne.s32.totalorder %s161, %s162
      %p173 = scmp.eq.s32.totalorder %s17, 0
      %p174 = por %p172, %p173
      %p175 = scmp.ne.s32.totalorder %s161, %s162
      %p176 = scmp.eq.s32.totalorder %s18, 3
      %p177 = por %p175, %p176
      %p179 = scmp.ne.s32.totalorder %s162, %s178
      %p180 = scmp.eq.s32.totalorder %s18, 0
      %p181 = por %p179, %p180
      %p182 = scmp.le.s32.totalorder 1, %s12
      %p183 = scmp.lt.s32.totalorder %s12, 5
      %p184 = pnand %p182, %p183
      %p185 = pneg %p184
      // Predicated region
      $region9: #{decoder_forward.1} parent=5 // pred_check
        _
      $region10: #{decoder_forward.1} parent=5 // pred_check_branch
        %187 = sbr.rel (%p184) target = $region12
      $region11: #{decoder_forward.1} parent=5 // pred_region
        %s188 = ssub.s32 %s12, 1
        // Predicated region
        $region13: #{decoder_forward.1} parent=11 // pred_check
          %p189 = pneg %p33
        $region14: #{decoder_forward.1} parent=11 // pred_check_branch
          %191 = sbr.rel (%p189) target = $region16
        $region15: #{decoder_forward.1} parent=11 // pred_region
          _
        $region16: #{decoder_forward.1} parent=11 // pred_fallthru
          _
        // Predicated region
        $region17: #{decoder_forward.1} parent=11 // pred_check
          %p192 = pneg %p54
        $region18: #{decoder_forward.1} parent=11 // pred_check_branch
          %194 = sbr.rel (%p192) target = $region20
        $region19: #{decoder_forward.1} parent=11 // pred_region
          _
        $region20: #{decoder_forward.1} parent=11 // pred_fallthru
          _
        // Predicated region
        $region21: #{decoder_forward.1} parent=11 // pred_check
          %p195 = pneg %p75
        $region22: #{decoder_forward.1} parent=11 // pred_check_branch
          %197 = sbr.rel (%p195) target = $region24
        $region23: #{decoder_forward.1} parent=11 // pred_region
          _
        $region24: #{decoder_forward.1} parent=11 // pred_fallthru
          _
        // Predicated region
        $region25: #{decoder_forward.1} parent=11 // pred_check
          %p198 = pneg %p96
        $region26: #{decoder_forward.1} parent=11 // pred_check_branch
          %200 = sbr.rel (%p198) target = $region28
        $region27: #{decoder_forward.1} parent=11 // pred_region
          _
        $region28: #{decoder_forward.1} parent=11 // pred_fallthru
          _
      $region12: #{decoder_forward.1} parent=5 // pred_fallthru
        _
      %p201 = scmp.lt.s32.totalorder %s12, 4
      // Predicated region
      $region29: #{decoder_forward.1} parent=5 // pred_check
        %p202 = pneg %p201
      $region30: #{decoder_forward.1} parent=5 // pred_check_branch
        %204 = sbr.rel (%p202) target = $region32
      $region31: #{decoder_forward.1} parent=5 // pred_region
        // Predicated region
        $region33: #{decoder_forward.1} parent=31 // pred_check
          %p205 = pneg %p116
        $region34: #{decoder_forward.1} parent=31 // pred_check_branch
          %207 = sbr.rel (%p205) target = $region36
        $region35: #{decoder_forward.1} parent=31 // pred_region
          %s208 = smul.u32 20, %s12
          %s209 = ssub.s32 79, %s208
          %p210 = scmp.lt.s32.totalorder %s209, 20
          %s211 = scalar_select %p210, %s209, 20
          %s212 = smul.u32 16, %s211
          %p213 = scmp.lt.s32.totalorder %s208, 78
          %s214 = scalar_select %p213, %s208, 78
          %s215 = scalar_lea.vmem %s4, %s214
          %s216 = smul.u32 20, %s12
          %s217 = ssub.s32 79, %s216
          %p218 = scmp.lt.s32.totalorder %s217, 20
          %s219 = scalar_select %p218, %s217, 20
          %s220 = smul.u32 16, %s219
        $region36: #{decoder_forward.1} parent=31 // pred_fallthru
          _
        // Predicated region
        $region37: #{decoder_forward.1} parent=31 // pred_check
          %p221 = pneg %p142
        $region38: #{decoder_forward.1} parent=31 // pred_check_branch
          %223 = sbr.rel (%p221) target = $region40
        $region39: #{decoder_forward.1} parent=31 // pred_region
          %s224 = sand.u32 %s132, 1
          %s225 = sand.u32 %s132, 1
          %s226 = smul.addr %s225, 20480
          %s227 = scalar_lea.vmem [#allocation2], %s226
          %s228 = smul.u32 20, %s12
          %s229 = ssub.s32 79, %s228
          %p230 = scmp.lt.s32.totalorder %s229, 20
          %s231 = scalar_select %p230, %s229, 20
          %s232 = smul.u32 16384, %s231
          %p233 = scmp.ne.s32.totalorder 0, %s232
          %s234 = smul.addr %s228, 8
          %s235 = scalar_lea.vmem %s5, %s234
          %s236 = smul.u32 %s231, 8
          // Predicated region
          $region41: #{decoder_forward.1} parent=39 // pred_check
            %p237 = pneg %p233
          $region42: #{decoder_forward.1} parent=39 // pred_check_branch
            %239 = sbr.rel (%p237) target = $region44
          $region43: #{decoder_forward.1} parent=39 // pred_region
            %p240 = scmp.lt.u32.totalorder %s236, 8
            %p241 = pneg %p240
            // Predicated region
            $region45: #{decoder_forward.1} parent=43 // pred_check
              _
            $region46: #{decoder_forward.1} parent=43 // pred_check_branch
              %243 = sbr.rel (%p240) target = $region48
            $region47: #{decoder_forward.1} parent=43 // pred_region
              %s513 = sand.u32 %s236, 7
              %p514 = scmp.eq.s32.totalorder %s513, 0
              // Predicated region
              $region60: #{decoder_forward.1} parent=47 // pred_check
                %p515 = pneg %p514
              $region61: #{decoder_forward.1} parent=47 // pred_check_branch
                %517 = sbr.rel (%p515) target = $region63
              $region62: #{decoder_forward.1} parent=47 // pred_region
                %s518 = sshrl.u32 %s236, 3
                // While loop
                $region64: #{decoder_forward.1} parent=62 // loop_pre_header
                  _
                $region65: #{decoder_forward.1} parent=62 // loop_header
                  %s522 = sphi 0, %s524
                  %p523 = scmp.ge.s32.totalorder %s522, %s518
                  %s527 = sphi 0, %s788
                  %s528 = sphi %s235, %s791
                  %s529 = sphi %s227, %s792
                $region66: #{decoder_forward.1} parent=62 // loop_header_branch
                  %526 = sbr.rel (%p523) target = $region70
                $region67: #{decoder_forward.1} parent=62 // loop_body
                  %v530 = vld [vmem:[%s528] sm:$0xff]
                  %531 = vst [vmem:[%s529] sm:$0xff] %v530
                  %v532 = vld [vmem:[%s528 + $0x278] sm:$0xff]
                  %533 = vst [vmem:[%s529 + $0xa0] sm:$0xff] %v532
                  %v534 = vld [vmem:[%s528 + $0x4f0] sm:$0xff]
                  %535 = vst [vmem:[%s529 + $0x140] sm:$0xff] %v534
                  %v536 = vld [vmem:[%s528 + $0x768] sm:$0xff]
                  %537 = vst [vmem:[%s529 + $0x1e0] sm:$0xff] %v536
                  %v538 = vld [vmem:[%s528 + $0x9e0] sm:$0xff]
                  %539 = vst [vmem:[%s529 + $0x280] sm:$0xff] %v538
                  %v540 = vld [vmem:[%s528 + $0xc58] sm:$0xff]
                  %541 = vst [vmem:[%s529 + $0x320] sm:$0xff] %v540
                  %v542 = vld [vmem:[%s528 + $0xed0] sm:$0xff]
                  %543 = vst [vmem:[%s529 + $0x3c0] sm:$0xff] %v542
                  %v544 = vld [vmem:[%s528 + $0x1148] sm:$0xff]
                  %545 = vst [vmem:[%s529 + $0x460] sm:$0xff] %v544
                  %v546 = vld [vmem:[%s528 + $0x13c0] sm:$0xff]
                  %547 = vst [vmem:[%s529 + $0x500] sm:$0xff] %v546
                  %v548 = vld [vmem:[%s528 + $0x1638] sm:$0xff]
                  %549 = vst [vmem:[%s529 + $0x5a0] sm:$0xff] %v548
                  %v550 = vld [vmem:[%s528 + $0x18b0] sm:$0xff]
                  %551 = vst [vmem:[%s529 + $0x640] sm:$0xff] %v550
                  %v552 = vld [vmem:[%s528 + $0x1b28] sm:$0xff]
                  %553 = vst [vmem:[%s529 + $0x6e0] sm:$0xff] %v552
                  %v554 = vld [vmem:[%s528 + $0x1da0] sm:$0xff]
                  %555 = vst [vmem:[%s529 + $0x780] sm:$0xff] %v554
                  %v556 = vld [vmem:[%s528 + $0x2018] sm:$0xff]
                  %557 = vst [vmem:[%s529 + $0x820] sm:$0xff] %v556
                  %v558 = vld [vmem:[%s528 + $0x2290] sm:$0xff]
                  %559 = vst [vmem:[%s529 + $0x8c0] sm:$0xff] %v558
                  %v560 = vld [vmem:[%s528 + $0x2508] sm:$0xff]
                  %561 = vst [vmem:[%s529 + $0x960] sm:$0xff] %v560
                  %v562 = vld [vmem:[%s528 + $0x2780] sm:$0xff]
                  %563 = vst [vmem:[%s529 + $0xa00] sm:$0xff] %v562
                  %v564 = vld [vmem:[%s528 + $0x29f8] sm:$0xff]
                  %565 = vst [vmem:[%s529 + $0xaa0] sm:$0xff] %v564
                  %v566 = vld [vmem:[%s528 + $0x2c70] sm:$0xff]
                  %567 = vst [vmem:[%s529 + $0xb40] sm:$0xff] %v566
                  %v568 = vld [vmem:[%s528 + $0x2ee8] sm:$0xff]
                  %569 = vst [vmem:[%s529 + $0xbe0] sm:$0xff] %v568
                  %v570 = vld [vmem:[%s528 + $0x3160] sm:$0xff]
                  %571 = vst [vmem:[%s529 + $0xc80] sm:$0xff] %v570
                  %v572 = vld [vmem:[%s528 + $0x33d8] sm:$0xff]
                  %573 = vst [vmem:[%s529 + $0xd20] sm:$0xff] %v572
                  %v574 = vld [vmem:[%s528 + $0x3650] sm:$0xff]
                  %575 = vst [vmem:[%s529 + $0xdc0] sm:$0xff] %v574
                  %v576 = vld [vmem:[%s528 + $0x38c8] sm:$0xff]
                  %577 = vst [vmem:[%s529 + $0xe60] sm:$0xff] %v576
                  %v578 = vld [vmem:[%s528 + $0x3b40] sm:$0xff]
                  %579 = vst [vmem:[%s529 + $0xf00] sm:$0xff] %v578
                  %v580 = vld [vmem:[%s528 + $0x3db8] sm:$0xff]
                  %581 = vst [vmem:[%s529 + $0xfa0] sm:$0xff] %v580
                  %v582 = vld [vmem:[%s528 + $0x4030] sm:$0xff]
                  %583 = vst [vmem:[%s529 + $0x1040] sm:$0xff] %v582
                  %v584 = vld [vmem:[%s528 + $0x42a8] sm:$0xff]
                  %585 = vst [vmem:[%s529 + $0x10e0] sm:$0xff] %v584
                  %v586 = vld [vmem:[%s528 + $0x4520] sm:$0xff]
                  %587 = vst [vmem:[%s529 + $0x1180] sm:$0xff] %v586
                  %v588 = vld [vmem:[%s528 + $0x4798] sm:$0xff]
                  %589 = vst [vmem:[%s529 + $0x1220] sm:$0xff] %v588
                  %v590 = vld [vmem:[%s528 + $0x4a10] sm:$0xff]
                  %591 = vst [vmem:[%s529 + $0x12c0] sm:$0xff] %v590
                  %v592 = vld [vmem:[%s528 + $0x4c88] sm:$0xff]
                  %593 = vst [vmem:[%s529 + $0x1360] sm:$0xff] %v592
                  %v594 = vld [vmem:[%s528 + $0x4f00] sm:$0xff]
                  %595 = vst [vmem:[%s529 + $0x1400] sm:$0xff] %v594
                  %v596 = vld [vmem:[%s528 + $0x5178] sm:$0xff]
                  %597 = vst [vmem:[%s529 + $0x14a0] sm:$0xff] %v596
                  %v598 = vld [vmem:[%s528 + $0x53f0] sm:$0xff]
                  %599 = vst [vmem:[%s529 + $0x1540] sm:$0xff] %v598
                  %v600 = vld [vmem:[%s528 + $0x5668] sm:$0xff]
                  %601 = vst [vmem:[%s529 + $0x15e0] sm:$0xff] %v600
                  %v602 = vld [vmem:[%s528 + $0x58e0] sm:$0xff]
                  %603 = vst [vmem:[%s529 + $0x1680] sm:$0xff] %v602
                  %v604 = vld [vmem:[%s528 + $0x5b58] sm:$0xff]
                  %605 = vst [vmem:[%s529 + $0x1720] sm:$0xff] %v604
                  %v606 = vld [vmem:[%s528 + $0x5dd0] sm:$0xff]
                  %607 = vst [vmem:[%s529 + $0x17c0] sm:$0xff] %v606
                  %v608 = vld [vmem:[%s528 + $0x6048] sm:$0xff]
                  %609 = vst [vmem:[%s529 + $0x1860] sm:$0xff] %v608
                  %v610 = vld [vmem:[%s528 + $0x62c0] sm:$0xff]
                  %611 = vst [vmem:[%s529 + $0x1900] sm:$0xff] %v610
                  %v612 = vld [vmem:[%s528 + $0x6538] sm:$0xff]
                  %613 = vst [vmem:[%s529 + $0x19a0] sm:$0xff] %v612
                  %v614 = vld [vmem:[%s528 + $0x67b0] sm:$0xff]
                  %615 = vst [vmem:[%s529 + $0x1a40] sm:$0xff] %v614
                  %v616 = vld [vmem:[%s528 + $0x6a28] sm:$0xff]
                  %617 = vst [vmem:[%s529 + $0x1ae0] sm:$0xff] %v616
                  %v618 = vld [vmem:[%s528 + $0x6ca0] sm:$0xff]
                  %619 = vst [vmem:[%s529 + $0x1b80] sm:$0xff] %v618
                  %v620 = vld [vmem:[%s528 + $0x6f18] sm:$0xff]
                  %621 = vst [vmem:[%s529 + $0x1c20] sm:$0xff] %v620
                  %v622 = vld [vmem:[%s528 + $0x7190] sm:$0xff]
                  %623 = vst [vmem:[%s529 + $0x1cc0] sm:$0xff] %v622
                  %v624 = vld [vmem:[%s528 + $0x7408] sm:$0xff]
                  %625 = vst [vmem:[%s529 + $0x1d60] sm:$0xff] %v624
                  %v626 = vld [vmem:[%s528 + $0x7680] sm:$0xff]
                  %627 = vst [vmem:[%s529 + $0x1e00] sm:$0xff] %v626
                  %v628 = vld [vmem:[%s528 + $0x78f8] sm:$0xff]
                  %629 = vst [vmem:[%s529 + $0x1ea0] sm:$0xff] %v628
                  %v630 = vld [vmem:[%s528 + $0x7b70] sm:$0xff]
                  %631 = vst [vmem:[%s529 + $0x1f40] sm:$0xff] %v630
                  %v632 = vld [vmem:[%s528 + $0x7de8] sm:$0xff]
                  %633 = vst [vmem:[%s529 + $0x1fe0] sm:$0xff] %v632
                  %v634 = vld [vmem:[%s528 + $0x8060] sm:$0xff]
                  %635 = vst [vmem:[%s529 + $0x2080] sm:$0xff] %v634
                  %v636 = vld [vmem:[%s528 + $0x82d8] sm:$0xff]
                  %637 = vst [vmem:[%s529 + $0x2120] sm:$0xff] %v636
                  %v638 = vld [vmem:[%s528 + $0x8550] sm:$0xff]
                  %639 = vst [vmem:[%s529 + $0x21c0] sm:$0xff] %v638
                  %v640 = vld [vmem:[%s528 + $0x87c8] sm:$0xff]
                  %641 = vst [vmem:[%s529 + $0x2260] sm:$0xff] %v640
                  %v642 = vld [vmem:[%s528 + $0x8a40] sm:$0xff]
                  %643 = vst [vmem:[%s529 + $0x2300] sm:$0xff] %v642
                  %v644 = vld [vmem:[%s528 + $0x8cb8] sm:$0xff]
                  %645 = vst [vmem:[%s529 + $0x23a0] sm:$0xff] %v644
                  %v646 = vld [vmem:[%s528 + $0x8f30] sm:$0xff]
                  %647 = vst [vmem:[%s529 + $0x2440] sm:$0xff] %v646
                  %v648 = vld [vmem:[%s528 + $0x91a8] sm:$0xff]
                  %649 = vst [vmem:[%s529 + $0x24e0] sm:$0xff] %v648
                  %v650 = vld [vmem:[%s528 + $0x9420] sm:$0xff]
                  %651 = vst [vmem:[%s529 + $0x2580] sm:$0xff] %v650
                  %v652 = vld [vmem:[%s528 + $0x9698] sm:$0xff]
                  %653 = vst [vmem:[%s529 + $0x2620] sm:$0xff] %v652
                  %v654 = vld [vmem:[%s528 + $0x9910] sm:$0xff]
                  %655 = vst [vmem:[%s529 + $0x26c0] sm:$0xff] %v654
                  %v656 = vld [vmem:[%s528 + $0x9b88] sm:$0xff]
                  %657 = vst [vmem:[%s529 + $0x2760] sm:$0xff] %v656
                  %v658 = vld [vmem:[%s528 + $0x9e00] sm:$0xff]
                  %659 = vst [vmem:[%s529 + $0x2800] sm:$0xff] %v658
                  %v660 = vld [vmem:[%s528 + $0xa078] sm:$0xff]
                  %661 = vst [vmem:[%s529 + $0x28a0] sm:$0xff] %v660
                  %v662 = vld [vmem:[%s528 + $0xa2f0] sm:$0xff]
                  %663 = vst [vmem:[%s529 + $0x2940] sm:$0xff] %v662
                  %v664 = vld [vmem:[%s528 + $0xa568] sm:$0xff]
                  %665 = vst [vmem:[%s529 + $0x29e0] sm:$0xff] %v664
                  %v666 = vld [vmem:[%s528 + $0xa7e0] sm:$0xff]
                  %667 = vst [vmem:[%s529 + $0x2a80] sm:$0xff] %v666
                  %v668 = vld [vmem:[%s528 + $0xaa58] sm:$0xff]
                  %669 = vst [vmem:[%s529 + $0x2b20] sm:$0xff] %v668
                  %v670 = vld [vmem:[%s528 + $0xacd0] sm:$0xff]
                  %671 = vst [vmem:[%s529 + $0x2bc0] sm:$0xff] %v670
                  %v672 = vld [vmem:[%s528 + $0xaf48] sm:$0xff]
                  %673 = vst [vmem:[%s529 + $0x2c60] sm:$0xff] %v672
                  %v674 = vld [vmem:[%s528 + $0xb1c0] sm:$0xff]
                  %675 = vst [vmem:[%s529 + $0x2d00] sm:$0xff] %v674
                  %v676 = vld [vmem:[%s528 + $0xb438] sm:$0xff]
                  %677 = vst [vmem:[%s529 + $0x2da0] sm:$0xff] %v676
                  %v678 = vld [vmem:[%s528 + $0xb6b0] sm:$0xff]
                  %679 = vst [vmem:[%s529 + $0x2e40] sm:$0xff] %v678
                  %v680 = vld [vmem:[%s528 + $0xb928] sm:$0xff]
                  %681 = vst [vmem:[%s529 + $0x2ee0] sm:$0xff] %v680
                  %v682 = vld [vmem:[%s528 + $0xbba0] sm:$0xff]
                  %683 = vst [vmem:[%s529 + $0x2f80] sm:$0xff] %v682
                  %v684 = vld [vmem:[%s528 + $0xbe18] sm:$0xff]
                  %685 = vst [vmem:[%s529 + $0x3020] sm:$0xff] %v684
                  %v686 = vld [vmem:[%s528 + $0xc090] sm:$0xff]
                  %687 = vst [vmem:[%s529 + $0x30c0] sm:$0xff] %v686
                  %v688 = vld [vmem:[%s528 + $0xc308] sm:$0xff]
                  %689 = vst [vmem:[%s529 + $0x3160] sm:$0xff] %v688
                  %v690 = vld [vmem:[%s528 + $0xc580] sm:$0xff]
                  %691 = vst [vmem:[%s529 + $0x3200] sm:$0xff] %v690
                  %v692 = vld [vmem:[%s528 + $0xc7f8] sm:$0xff]
                  %693 = vst [vmem:[%s529 + $0x32a0] sm:$0xff] %v692
                  %v694 = vld [vmem:[%s528 + $0xca70] sm:$0xff]
                  %695 = vst [vmem:[%s529 + $0x3340] sm:$0xff] %v694
                  %v696 = vld [vmem:[%s528 + $0xcce8] sm:$0xff]
                  %697 = vst [vmem:[%s529 + $0x33e0] sm:$0xff] %v696
                  %v698 = vld [vmem:[%s528 + $0xcf60] sm:$0xff]
                  %699 = vst [vmem:[%s529 + $0x3480] sm:$0xff] %v698
                  %v700 = vld [vmem:[%s528 + $0xd1d8] sm:$0xff]
                  %701 = vst [vmem:[%s529 + $0x3520] sm:$0xff] %v700
                  %v702 = vld [vmem:[%s528 + $0xd450] sm:$0xff]
                  %703 = vst [vmem:[%s529 + $0x35c0] sm:$0xff] %v702
                  %v704 = vld [vmem:[%s528 + $0xd6c8] sm:$0xff]
                  %705 = vst [vmem:[%s529 + $0x3660] sm:$0xff] %v704
                  %v706 = vld [vmem:[%s528 + $0xd940] sm:$0xff]
                  %707 = vst [vmem:[%s529 + $0x3700] sm:$0xff] %v706
                  %v708 = vld [vmem:[%s528 + $0xdbb8] sm:$0xff]
                  %709 = vst [vmem:[%s529 + $0x37a0] sm:$0xff] %v708
                  %v710 = vld [vmem:[%s528 + $0xde30] sm:$0xff]
                  %711 = vst [vmem:[%s529 + $0x3840] sm:$0xff] %v710
                  %v712 = vld [vmem:[%s528 + $0xe0a8] sm:$0xff]
                  %713 = vst [vmem:[%s529 + $0x38e0] sm:$0xff] %v712
                  %v714 = vld [vmem:[%s528 + $0xe320] sm:$0xff]
                  %715 = vst [vmem:[%s529 + $0x3980] sm:$0xff] %v714
                  %v716 = vld [vmem:[%s528 + $0xe598] sm:$0xff]
                  %717 = vst [vmem:[%s529 + $0x3a20] sm:$0xff] %v716
                  %v718 = vld [vmem:[%s528 + $0xe810] sm:$0xff]
                  %719 = vst [vmem:[%s529 + $0x3ac0] sm:$0xff] %v718
                  %v720 = vld [vmem:[%s528 + $0xea88] sm:$0xff]
                  %721 = vst [vmem:[%s529 + $0x3b60] sm:$0xff] %v720
                  %v722 = vld [vmem:[%s528 + $0xed00] sm:$0xff]
                  %723 = vst [vmem:[%s529 + $0x3c00] sm:$0xff] %v722
                  %v724 = vld [vmem:[%s528 + $0xef78] sm:$0xff]
                  %725 = vst [vmem:[%s529 + $0x3ca0] sm:$0xff] %v724
                  %v726 = vld [vmem:[%s528 + $0xf1f0] sm:$0xff]
                  %727 = vst [vmem:[%s529 + $0x3d40] sm:$0xff] %v726
                  %v728 = vld [vmem:[%s528 + $0xf468] sm:$0xff]
                  %729 = vst [vmem:[%s529 + $0x3de0] sm:$0xff] %v728
                  %v730 = vld [vmem:[%s528 + $0xf6e0] sm:$0xff]
                  %731 = vst [vmem:[%s529 + $0x3e80] sm:$0xff] %v730
                  %v732 = vld [vmem:[%s528 + $0xf958] sm:$0xff]
                  %733 = vst [vmem:[%s529 + $0x3f20] sm:$0xff] %v732
                  %v734 = vld [vmem:[%s528 + $0xfbd0] sm:$0xff]
                  %735 = vst [vmem:[%s529 + $0x3fc0] sm:$0xff] %v734
                  %v736 = vld [vmem:[%s528 + $0xfe48] sm:$0xff]
                  %737 = vst [vmem:[%s529 + $0x4060] sm:$0xff] %v736
                  %v738 = vld [vmem:[%s528 + $0x100c0] sm:$0xff]
                  %739 = vst [vmem:[%s529 + $0x4100] sm:$0xff] %v738
                  %v740 = vld [vmem:[%s528 + $0x10338] sm:$0xff]
                  %741 = vst [vmem:[%s529 + $0x41a0] sm:$0xff] %v740
                  %v742 = vld [vmem:[%s528 + $0x105b0] sm:$0xff]
                  %743 = vst [vmem:[%s529 + $0x4240] sm:$0xff] %v742
                  %v744 = vld [vmem:[%s528 + $0x10828] sm:$0xff]
                  %745 = vst [vmem:[%s529 + $0x42e0] sm:$0xff] %v744
                  %v746 = vld [vmem:[%s528 + $0x10aa0] sm:$0xff]
                  %747 = vst [vmem:[%s529 + $0x4380] sm:$0xff] %v746
                  %v748 = vld [vmem:[%s528 + $0x10d18] sm:$0xff]
                  %749 = vst [vmem:[%s529 + $0x4420] sm:$0xff] %v748
                  %v750 = vld [vmem:[%s528 + $0x10f90] sm:$0xff]
                  %751 = vst [vmem:[%s529 + $0x44c0] sm:$0xff] %v750
                  %v752 = vld [vmem:[%s528 + $0x11208] sm:$0xff]
                  %753 = vst [vmem:[%s529 + $0x4560] sm:$0xff] %v752
                  %v754 = vld [vmem:[%s528 + $0x11480] sm:$0xff]
                  %755 = vst [vmem:[%s529 + $0x4600] sm:$0xff] %v754
                  %v756 = vld [vmem:[%s528 + $0x116f8] sm:$0xff]
                  %757 = vst [vmem:[%s529 + $0x46a0] sm:$0xff] %v756
                  %v758 = vld [vmem:[%s528 + $0x11970] sm:$0xff]
                  %759 = vst [vmem:[%s529 + $0x4740] sm:$0xff] %v758
                  %v760 = vld [vmem:[%s528 + $0x11be8] sm:$0xff]
                  %761 = vst [vmem:[%s529 + $0x47e0] sm:$0xff] %v760
                  %v762 = vld [vmem:[%s528 + $0x11e60] sm:$0xff]
                  %763 = vst [vmem:[%s529 + $0x4880] sm:$0xff] %v762
                  %v764 = vld [vmem:[%s528 + $0x120d8] sm:$0xff]
                  %765 = vst [vmem:[%s529 + $0x4920] sm:$0xff] %v764
                  %v766 = vld [vmem:[%s528 + $0x12350] sm:$0xff]
                  %767 = vst [vmem:[%s529 + $0x49c0] sm:$0xff] %v766
                  %v768 = vld [vmem:[%s528 + $0x125c8] sm:$0xff]
                  %769 = vst [vmem:[%s529 + $0x4a60] sm:$0xff] %v768
                  %v770 = vld [vmem:[%s528 + $0x12840] sm:$0xff]
                  %771 = vst [vmem:[%s529 + $0x4b00] sm:$0xff] %v770
                  %v772 = vld [vmem:[%s528 + $0x12ab8] sm:$0xff]
                  %773 = vst [vmem:[%s529 + $0x4ba0] sm:$0xff] %v772
                  %v774 = vld [vmem:[%s528 + $0x12d30] sm:$0xff]
                  %775 = vst [vmem:[%s529 + $0x4c40] sm:$0xff] %v774
                  %v776 = vld [vmem:[%s528 + $0x12fa8] sm:$0xff]
                  %777 = vst [vmem:[%s529 + $0x4ce0] sm:$0xff] %v776
                  %v778 = vld [vmem:[%s528 + $0x13220] sm:$0xff]
                  %779 = vst [vmem:[%s529 + $0x4d80] sm:$0xff] %v778
                  %v780 = vld [vmem:[%s528 + $0x13498] sm:$0xff]
                  %781 = vst [vmem:[%s529 + $0x4e20] sm:$0xff] %v780
                  %v782 = vld [vmem:[%s528 + $0x13710] sm:$0xff]
                  %783 = vst [vmem:[%s529 + $0x4ec0] sm:$0xff] %v782
                  %v784 = vld [vmem:[%s528 + $0x13988] sm:$0xff]
                  %785 = vst [vmem:[%s529 + $0x4f60] sm:$0xff] %v784
                  %s786 = sadd.s32 1, %s527
                  %p787 = scmp.ge.s32.totalorder %s786, %s518
                  %s788 = scalar_select %p787, 0, %s786
                  %s789 = smul.u32 %s788, 8
                  %s790 = smul.u32 %s788, 8
                  %s791 = scalar_lea.vmem %s235, %s789
                  %s792 = scalar_lea.vmem %s227, %s790 [#allocation2]
                $region68: #{decoder_forward.1} parent=62 // loop_footer
                  %s524 = sadd.s32 %s522, 1
                $region69: #{decoder_forward.1} parent=62 // loop_footer_branch
                  %521 = sbr.rel target = $region65
                $region70: #{decoder_forward.1} parent=62 // loop_exit
                  _
              $region63: #{decoder_forward.1} parent=47 // pred_fallthru
                _
              %p793 = pneg %p514
              // Predicated region
              $region71: #{decoder_forward.1} parent=47 // pred_check
                _
              $region72: #{decoder_forward.1} parent=47 // pred_check_branch
                %795 = sbr.rel (%p514) target = $region74
              $region73: #{decoder_forward.1} parent=47 // pred_region
                %s796 = sand.u32 %s236, 7
                %s797 = ssub.s32 %s236, %s796
                %s798 = scalar_lea.vmem %s235, %s797
                %s799 = ssub.s32 %s236, %s796
                %s800 = scalar_lea.vmem %s227, %s799 [#allocation2]
                %s801 = sshrl.u32 %s236, 3
                // While loop
                $region75: #{decoder_forward.1} parent=73 // loop_pre_header
                  _
                $region76: #{decoder_forward.1} parent=73 // loop_header
                  %s805 = sphi 0, %s807
                  %p806 = scmp.ge.s32.totalorder %s805, %s801
                  %s810 = sphi 0, %s1071
                  %s811 = sphi %s235, %s1074
                  %s812 = sphi %s227, %s1075
                $region77: #{decoder_forward.1} parent=73 // loop_header_branch
                  %809 = sbr.rel (%p806) target = $region81
                $region78: #{decoder_forward.1} parent=73 // loop_body
                  %v813 = vld [vmem:[%s811] sm:$0xff]
                  %814 = vst [vmem:[%s812] sm:$0xff] %v813
                  %v815 = vld [vmem:[%s811 + $0x278] sm:$0xff]
                  %816 = vst [vmem:[%s812 + $0xa0] sm:$0xff] %v815
                  %v817 = vld [vmem:[%s811 + $0x4f0] sm:$0xff]
                  %818 = vst [vmem:[%s812 + $0x140] sm:$0xff] %v817
                  %v819 = vld [vmem:[%s811 + $0x768] sm:$0xff]
                  %820 = vst [vmem:[%s812 + $0x1e0] sm:$0xff] %v819
                  %v821 = vld [vmem:[%s811 + $0x9e0] sm:$0xff]
                  %822 = vst [vmem:[%s812 + $0x280] sm:$0xff] %v821
                  %v823 = vld [vmem:[%s811 + $0xc58] sm:$0xff]
                  %824 = vst [vmem:[%s812 + $0x320] sm:$0xff] %v823
                  %v825 = vld [vmem:[%s811 + $0xed0] sm:$0xff]
                  %826 = vst [vmem:[%s812 + $0x3c0] sm:$0xff] %v825
                  %v827 = vld [vmem:[%s811 + $0x1148] sm:$0xff]
                  %828 = vst [vmem:[%s812 + $0x460] sm:$0xff] %v827
                  %v829 = vld [vmem:[%s811 + $0x13c0] sm:$0xff]
                  %830 = vst [vmem:[%s812 + $0x500] sm:$0xff] %v829
                  %v831 = vld [vmem:[%s811 + $0x1638] sm:$0xff]
                  %832 = vst [vmem:[%s812 + $0x5a0] sm:$0xff] %v831
                  %v833 = vld [vmem:[%s811 + $0x18b0] sm:$0xff]
                  %834 = vst [vmem:[%s812 + $0x640] sm:$0xff] %v833
                  %v835 = vld [vmem:[%s811 + $0x1b28] sm:$0xff]
                  %836 = vst [vmem:[%s812 + $0x6e0] sm:$0xff] %v835
                  %v837 = vld [vmem:[%s811 + $0x1da0] sm:$0xff]
                  %838 = vst [vmem:[%s812 + $0x780] sm:$0xff] %v837
                  %v839 = vld [vmem:[%s811 + $0x2018] sm:$0xff]
                  %840 = vst [vmem:[%s812 + $0x820] sm:$0xff] %v839
                  %v841 = vld [vmem:[%s811 + $0x2290] sm:$0xff]
                  %842 = vst [vmem:[%s812 + $0x8c0] sm:$0xff] %v841
                  %v843 = vld [vmem:[%s811 + $0x2508] sm:$0xff]
                  %844 = vst [vmem:[%s812 + $0x960] sm:$0xff] %v843
                  %v845 = vld [vmem:[%s811 + $0x2780] sm:$0xff]
                  %846 = vst [vmem:[%s812 + $0xa00] sm:$0xff] %v845
                  %v847 = vld [vmem:[%s811 + $0x29f8] sm:$0xff]
                  %848 = vst [vmem:[%s812 + $0xaa0] sm:$0xff] %v847
                  %v849 = vld [vmem:[%s811 + $0x2c70] sm:$0xff]
                  %850 = vst [vmem:[%s812 + $0xb40] sm:$0xff] %v849
                  %v851 = vld [vmem:[%s811 + $0x2ee8] sm:$0xff]
                  %852 = vst [vmem:[%s812 + $0xbe0] sm:$0xff] %v851
                  %v853 = vld [vmem:[%s811 + $0x3160] sm:$0xff]
                  %854 = vst [vmem:[%s812 + $0xc80] sm:$0xff] %v853
                  %v855 = vld [vmem:[%s811 + $0x33d8] sm:$0xff]
                  %856 = vst [vmem:[%s812 + $0xd20] sm:$0xff] %v855
                  %v857 = vld [vmem:[%s811 + $0x3650] sm:$0xff]
                  %858 = vst [vmem:[%s812 + $0xdc0] sm:$0xff] %v857
                  %v859 = vld [vmem:[%s811 + $0x38c8] sm:$0xff]
                  %860 = vst [vmem:[%s812 + $0xe60] sm:$0xff] %v859
                  %v861 = vld [vmem:[%s811 + $0x3b40] sm:$0xff]
                  %862 = vst [vmem:[%s812 + $0xf00] sm:$0xff] %v861
                  %v863 = vld [vmem:[%s811 + $0x3db8] sm:$0xff]
                  %864 = vst [vmem:[%s812 + $0xfa0] sm:$0xff] %v863
                  %v865 = vld [vmem:[%s811 + $0x4030] sm:$0xff]
                  %866 = vst [vmem:[%s812 + $0x1040] sm:$0xff] %v865
                  %v867 = vld [vmem:[%s811 + $0x42a8] sm:$0xff]
                  %868 = vst [vmem:[%s812 + $0x10e0] sm:$0xff] %v867
                  %v869 = vld [vmem:[%s811 + $0x4520] sm:$0xff]
                  %870 = vst [vmem:[%s812 + $0x1180] sm:$0xff] %v869
                  %v871 = vld [vmem:[%s811 + $0x4798] sm:$0xff]
                  %872 = vst [vmem:[%s812 + $0x1220] sm:$0xff] %v871
                  %v873 = vld [vmem:[%s811 + $0x4a10] sm:$0xff]
                  %874 = vst [vmem:[%s812 + $0x12c0] sm:$0xff] %v873
                  %v875 = vld [vmem:[%s811 + $0x4c88] sm:$0xff]
                  %876 = vst [vmem:[%s812 + $0x1360] sm:$0xff] %v875
                  %v877 = vld [vmem:[%s811 + $0x4f00] sm:$0xff]
                  %878 = vst [vmem:[%s812 + $0x1400] sm:$0xff] %v877
                  %v879 = vld [vmem:[%s811 + $0x5178] sm:$0xff]
                  %880 = vst [vmem:[%s812 + $0x14a0] sm:$0xff] %v879
                  %v881 = vld [vmem:[%s811 + $0x53f0] sm:$0xff]
                  %882 = vst [vmem:[%s812 + $0x1540] sm:$0xff] %v881
                  %v883 = vld [vmem:[%s811 + $0x5668] sm:$0xff]
                  %884 = vst [vmem:[%s812 + $0x15e0] sm:$0xff] %v883
                  %v885 = vld [vmem:[%s811 + $0x58e0] sm:$0xff]
                  %886 = vst [vmem:[%s812 + $0x1680] sm:$0xff] %v885
                  %v887 = vld [vmem:[%s811 + $0x5b58] sm:$0xff]
                  %888 = vst [vmem:[%s812 + $0x1720] sm:$0xff] %v887
                  %v889 = vld [vmem:[%s811 + $0x5dd0] sm:$0xff]
                  %890 = vst [vmem:[%s812 + $0x17c0] sm:$0xff] %v889
                  %v891 = vld [vmem:[%s811 + $0x6048] sm:$0xff]
                  %892 = vst [vmem:[%s812 + $0x1860] sm:$0xff] %v891
                  %v893 = vld [vmem:[%s811 + $0x62c0] sm:$0xff]
                  %894 = vst [vmem:[%s812 + $0x1900] sm:$0xff] %v893
                  %v895 = vld [vmem:[%s811 + $0x6538] sm:$0xff]
                  %896 = vst [vmem:[%s812 + $0x19a0] sm:$0xff] %v895
                  %v897 = vld [vmem:[%s811 + $0x67b0] sm:$0xff]
                  %898 = vst [vmem:[%s812 + $0x1a40] sm:$0xff] %v897
                  %v899 = vld [vmem:[%s811 + $0x6a28] sm:$0xff]
                  %900 = vst [vmem:[%s812 + $0x1ae0] sm:$0xff] %v899
                  %v901 = vld [vmem:[%s811 + $0x6ca0] sm:$0xff]
                  %902 = vst [vmem:[%s812 + $0x1b80] sm:$0xff] %v901
                  %v903 = vld [vmem:[%s811 + $0x6f18] sm:$0xff]
                  %904 = vst [vmem:[%s812 + $0x1c20] sm:$0xff] %v903
                  %v905 = vld [vmem:[%s811 + $0x7190] sm:$0xff]
                  %906 = vst [vmem:[%s812 + $0x1cc0] sm:$0xff] %v905
                  %v907 = vld [vmem:[%s811 + $0x7408] sm:$0xff]
                  %908 = vst [vmem:[%s812 + $0x1d60] sm:$0xff] %v907
                  %v909 = vld [vmem:[%s811 + $0x7680] sm:$0xff]
                  %910 = vst [vmem:[%s812 + $0x1e00] sm:$0xff] %v909
                  %v911 = vld [vmem:[%s811 + $0x78f8] sm:$0xff]
                  %912 = vst [vmem:[%s812 + $0x1ea0] sm:$0xff] %v911
                  %v913 = vld [vmem:[%s811 + $0x7b70] sm:$0xff]
                  %914 = vst [vmem:[%s812 + $0x1f40] sm:$0xff] %v913
                  %v915 = vld [vmem:[%s811 + $0x7de8] sm:$0xff]
                  %916 = vst [vmem:[%s812 + $0x1fe0] sm:$0xff] %v915
                  %v917 = vld [vmem:[%s811 + $0x8060] sm:$0xff]
                  %918 = vst [vmem:[%s812 + $0x2080] sm:$0xff] %v917
                  %v919 = vld [vmem:[%s811 + $0x82d8] sm:$0xff]
                  %920 = vst [vmem:[%s812 + $0x2120] sm:$0xff] %v919
                  %v921 = vld [vmem:[%s811 + $0x8550] sm:$0xff]
                  %922 = vst [vmem:[%s812 + $0x21c0] sm:$0xff] %v921
                  %v923 = vld [vmem:[%s811 + $0x87c8] sm:$0xff]
                  %924 = vst [vmem:[%s812 + $0x2260] sm:$0xff] %v923
                  %v925 = vld [vmem:[%s811 + $0x8a40] sm:$0xff]
                  %926 = vst [vmem:[%s812 + $0x2300] sm:$0xff] %v925
                  %v927 = vld [vmem:[%s811 + $0x8cb8] sm:$0xff]
                  %928 = vst [vmem:[%s812 + $0x23a0] sm:$0xff] %v927
                  %v929 = vld [vmem:[%s811 + $0x8f30] sm:$0xff]
                  %930 = vst [vmem:[%s812 + $0x2440] sm:$0xff] %v929
                  %v931 = vld [vmem:[%s811 + $0x91a8] sm:$0xff]
                  %932 = vst [vmem:[%s812 + $0x24e0] sm:$0xff] %v931
                  %v933 = vld [vmem:[%s811 + $0x9420] sm:$0xff]
                  %934 = vst [vmem:[%s812 + $0x2580] sm:$0xff] %v933
                  %v935 = vld [vmem:[%s811 + $0x9698] sm:$0xff]
                  %936 = vst [vmem:[%s812 + $0x2620] sm:$0xff] %v935
                  %v937 = vld [vmem:[%s811 + $0x9910] sm:$0xff]
                  %938 = vst [vmem:[%s812 + $0x26c0] sm:$0xff] %v937
                  %v939 = vld [vmem:[%s811 + $0x9b88] sm:$0xff]
                  %940 = vst [vmem:[%s812 + $0x2760] sm:$0xff] %v939
                  %v941 = vld [vmem:[%s811 + $0x9e00] sm:$0xff]
                  %942 = vst [vmem:[%s812 + $0x2800] sm:$0xff] %v941
                  %v943 = vld [vmem:[%s811 + $0xa078] sm:$0xff]
                  %944 = vst [vmem:[%s812 + $0x28a0] sm:$0xff] %v943
                  %v945 = vld [vmem:[%s811 + $0xa2f0] sm:$0xff]
                  %946 = vst [vmem:[%s812 + $0x2940] sm:$0xff] %v945
                  %v947 = vld [vmem:[%s811 + $0xa568] sm:$0xff]
                  %948 = vst [vmem:[%s812 + $0x29e0] sm:$0xff] %v947
                  %v949 = vld [vmem:[%s811 + $0xa7e0] sm:$0xff]
                  %950 = vst [vmem:[%s812 + $0x2a80] sm:$0xff] %v949
                  %v951 = vld [vmem:[%s811 + $0xaa58] sm:$0xff]
                  %952 = vst [vmem:[%s812 + $0x2b20] sm:$0xff] %v951
                  %v953 = vld [vmem:[%s811 + $0xacd0] sm:$0xff]
                  %954 = vst [vmem:[%s812 + $0x2bc0] sm:$0xff] %v953
                  %v955 = vld [vmem:[%s811 + $0xaf48] sm:$0xff]
                  %956 = vst [vmem:[%s812 + $0x2c60] sm:$0xff] %v955
                  %v957 = vld [vmem:[%s811 + $0xb1c0] sm:$0xff]
                  %958 = vst [vmem:[%s812 + $0x2d00] sm:$0xff] %v957
                  %v959 = vld [vmem:[%s811 + $0xb438] sm:$0xff]
                  %960 = vst [vmem:[%s812 + $0x2da0] sm:$0xff] %v959
                  %v961 = vld [vmem:[%s811 + $0xb6b0] sm:$0xff]
                  %962 = vst [vmem:[%s812 + $0x2e40] sm:$0xff] %v961
                  %v963 = vld [vmem:[%s811 + $0xb928] sm:$0xff]
                  %964 = vst [vmem:[%s812 + $0x2ee0] sm:$0xff] %v963
                  %v965 = vld [vmem:[%s811 + $0xbba0] sm:$0xff]
                  %966 = vst [vmem:[%s812 + $0x2f80] sm:$0xff] %v965
                  %v967 = vld [vmem:[%s811 + $0xbe18] sm:$0xff]
                  %968 = vst [vmem:[%s812 + $0x3020] sm:$0xff] %v967
                  %v969 = vld [vmem:[%s811 + $0xc090] sm:$0xff]
                  %970 = vst [vmem:[%s812 + $0x30c0] sm:$0xff] %v969
                  %v971 = vld [vmem:[%s811 + $0xc308] sm:$0xff]
                  %972 = vst [vmem:[%s812 + $0x3160] sm:$0xff] %v971
                  %v973 = vld [vmem:[%s811 + $0xc580] sm:$0xff]
                  %974 = vst [vmem:[%s812 + $0x3200] sm:$0xff] %v973
                  %v975 = vld [vmem:[%s811 + $0xc7f8] sm:$0xff]
                  %976 = vst [vmem:[%s812 + $0x32a0] sm:$0xff] %v975
                  %v977 = vld [vmem:[%s811 + $0xca70] sm:$0xff]
                  %978 = vst [vmem:[%s812 + $0x3340] sm:$0xff] %v977
                  %v979 = vld [vmem:[%s811 + $0xcce8] sm:$0xff]
                  %980 = vst [vmem:[%s812 + $0x33e0] sm:$0xff] %v979
                  %v981 = vld [vmem:[%s811 + $0xcf60] sm:$0xff]
                  %982 = vst [vmem:[%s812 + $0x3480] sm:$0xff] %v981
                  %v983 = vld [vmem:[%s811 + $0xd1d8] sm:$0xff]
                  %984 = vst [vmem:[%s812 + $0x3520] sm:$0xff] %v983
                  %v985 = vld [vmem:[%s811 + $0xd450] sm:$0xff]
                  %986 = vst [vmem:[%s812 + $0x35c0] sm:$0xff] %v985
                  %v987 = vld [vmem:[%s811 + $0xd6c8] sm:$0xff]
                  %988 = vst [vmem:[%s812 + $0x3660] sm:$0xff] %v987
                  %v989 = vld [vmem:[%s811 + $0xd940] sm:$0xff]
                  %990 = vst [vmem:[%s812 + $0x3700] sm:$0xff] %v989
                  %v991 = vld [vmem:[%s811 + $0xdbb8] sm:$0xff]
                  %992 = vst [vmem:[%s812 + $0x37a0] sm:$0xff] %v991
                  %v993 = vld [vmem:[%s811 + $0xde30] sm:$0xff]
                  %994 = vst [vmem:[%s812 + $0x3840] sm:$0xff] %v993
                  %v995 = vld [vmem:[%s811 + $0xe0a8] sm:$0xff]
                  %996 = vst [vmem:[%s812 + $0x38e0] sm:$0xff] %v995
                  %v997 = vld [vmem:[%s811 + $0xe320] sm:$0xff]
                  %998 = vst [vmem:[%s812 + $0x3980] sm:$0xff] %v997
                  %v999 = vld [vmem:[%s811 + $0xe598] sm:$0xff]
                  %1000 = vst [vmem:[%s812 + $0x3a20] sm:$0xff] %v999
                  %v1001 = vld [vmem:[%s811 + $0xe810] sm:$0xff]
                  %1002 = vst [vmem:[%s812 + $0x3ac0] sm:$0xff] %v1001
                  %v1003 = vld [vmem:[%s811 + $0xea88] sm:$0xff]
                  %1004 = vst [vmem:[%s812 + $0x3b60] sm:$0xff] %v1003
                  %v1005 = vld [vmem:[%s811 + $0xed00] sm:$0xff]
                  %1006 = vst [vmem:[%s812 + $0x3c00] sm:$0xff] %v1005
                  %v1007 = vld [vmem:[%s811 + $0xef78] sm:$0xff]
                  %1008 = vst [vmem:[%s812 + $0x3ca0] sm:$0xff] %v1007
                  %v1009 = vld [vmem:[%s811 + $0xf1f0] sm:$0xff]
                  %1010 = vst [vmem:[%s812 + $0x3d40] sm:$0xff] %v1009
                  %v1011 = vld [vmem:[%s811 + $0xf468] sm:$0xff]
                  %1012 = vst [vmem:[%s812 + $0x3de0] sm:$0xff] %v1011
                  %v1013 = vld [vmem:[%s811 + $0xf6e0] sm:$0xff]
                  %1014 = vst [vmem:[%s812 + $0x3e80] sm:$0xff] %v1013
                  %v1015 = vld [vmem:[%s811 + $0xf958] sm:$0xff]
                  %1016 = vst [vmem:[%s812 + $0x3f20] sm:$0xff] %v1015
                  %v1017 = vld [vmem:[%s811 + $0xfbd0] sm:$0xff]
                  %1018 = vst [vmem:[%s812 + $0x3fc0] sm:$0xff] %v1017
                  %v1019 = vld [vmem:[%s811 + $0xfe48] sm:$0xff]
                  %1020 = vst [vmem:[%s812 + $0x4060] sm:$0xff] %v1019
                  %v1021 = vld [vmem:[%s811 + $0x100c0] sm:$0xff]
                  %1022 = vst [vmem:[%s812 + $0x4100] sm:$0xff] %v1021
                  %v1023 = vld [vmem:[%s811 + $0x10338] sm:$0xff]
                  %1024 = vst [vmem:[%s812 + $0x41a0] sm:$0xff] %v1023
                  %v1025 = vld [vmem:[%s811 + $0x105b0] sm:$0xff]
                  %1026 = vst [vmem:[%s812 + $0x4240] sm:$0xff] %v1025
                  %v1027 = vld [vmem:[%s811 + $0x10828] sm:$0xff]
                  %1028 = vst [vmem:[%s812 + $0x42e0] sm:$0xff] %v1027
                  %v1029 = vld [vmem:[%s811 + $0x10aa0] sm:$0xff]
                  %1030 = vst [vmem:[%s812 + $0x4380] sm:$0xff] %v1029
                  %v1031 = vld [vmem:[%s811 + $0x10d18] sm:$0xff]
                  %1032 = vst [vmem:[%s812 + $0x4420] sm:$0xff] %v1031
                  %v1033 = vld [vmem:[%s811 + $0x10f90] sm:$0xff]
                  %1034 = vst [vmem:[%s812 + $0x44c0] sm:$0xff] %v1033
                  %v1035 = vld [vmem:[%s811 + $0x11208] sm:$0xff]
                  %1036 = vst [vmem:[%s812 + $0x4560] sm:$0xff] %v1035
                  %v1037 = vld [vmem:[%s811 + $0x11480] sm:$0xff]
                  %1038 = vst [vmem:[%s812 + $0x4600] sm:$0xff] %v1037
                  %v1039 = vld [vmem:[%s811 + $0x116f8] sm:$0xff]
                  %1040 = vst [vmem:[%s812 + $0x46a0] sm:$0xff] %v1039
                  %v1041 = vld [vmem:[%s811 + $0x11970] sm:$0xff]
                  %1042 = vst [vmem:[%s812 + $0x4740] sm:$0xff] %v1041
                  %v1043 = vld [vmem:[%s811 + $0x11be8] sm:$0xff]
                  %1044 = vst [vmem:[%s812 + $0x47e0] sm:$0xff] %v1043
                  %v1045 = vld [vmem:[%s811 + $0x11e60] sm:$0xff]
                  %1046 = vst [vmem:[%s812 + $0x4880] sm:$0xff] %v1045
                  %v1047 = vld [vmem:[%s811 + $0x120d8] sm:$0xff]
                  %1048 = vst [vmem:[%s812 + $0x4920] sm:$0xff] %v1047
                  %v1049 = vld [vmem:[%s811 + $0x12350] sm:$0xff]
                  %1050 = vst [vmem:[%s812 + $0x49c0] sm:$0xff] %v1049
                  %v1051 = vld [vmem:[%s811 + $0x125c8] sm:$0xff]
                  %1052 = vst [vmem:[%s812 + $0x4a60] sm:$0xff] %v1051
                  %v1053 = vld [vmem:[%s811 + $0x12840] sm:$0xff]
                  %1054 = vst [vmem:[%s812 + $0x4b00] sm:$0xff] %v1053
                  %v1055 = vld [vmem:[%s811 + $0x12ab8] sm:$0xff]
                  %1056 = vst [vmem:[%s812 + $0x4ba0] sm:$0xff] %v1055
                  %v1057 = vld [vmem:[%s811 + $0x12d30] sm:$0xff]
                  %1058 = vst [vmem:[%s812 + $0x4c40] sm:$0xff] %v1057
                  %v1059 = vld [vmem:[%s811 + $0x12fa8] sm:$0xff]
                  %1060 = vst [vmem:[%s812 + $0x4ce0] sm:$0xff] %v1059
                  %v1061 = vld [vmem:[%s811 + $0x13220] sm:$0xff]
                  %1062 = vst [vmem:[%s812 + $0x4d80] sm:$0xff] %v1061
                  %v1063 = vld [vmem:[%s811 + $0x13498] sm:$0xff]
                  %1064 = vst [vmem:[%s812 + $0x4e20] sm:$0xff] %v1063
                  %v1065 = vld [vmem:[%s811 + $0x13710] sm:$0xff]
                  %1066 = vst [vmem:[%s812 + $0x4ec0] sm:$0xff] %v1065
                  %v1067 = vld [vmem:[%s811 + $0x13988] sm:$0xff]
                  %1068 = vst [vmem:[%s812 + $0x4f60] sm:$0xff] %v1067
                  %s1069 = sadd.s32 1, %s810
                  %p1070 = scmp.ge.s32.totalorder %s1069, %s801
                  %s1071 = scalar_select %p1070, 0, %s1069
                  %s1072 = smul.u32 %s1071, 8
                  %s1073 = smul.u32 %s1071, 8
                  %s1074 = scalar_lea.vmem %s235, %s1072
                  %s1075 = scalar_lea.vmem %s227, %s1073 [#allocation2]
                $region79: #{decoder_forward.1} parent=73 // loop_footer
                  %s807 = sadd.s32 %s805, 1
                $region80: #{decoder_forward.1} parent=73 // loop_footer_branch
                  %804 = sbr.rel target = $region76
                $region81: #{decoder_forward.1} parent=73 // loop_exit
                  _
                %s1076 = sshll.u32 1, %s796
                %s1077 = ssub.s32 %s1076, 1
                loop: start=0, step=1, limit=1
                $region82: #{decoder_forward.1} parent=73 // loop_pre_header
                  _
                $region83: #{decoder_forward.1} parent=73 // loop_header
                  %s1079 = sphi 0, %s1083
                  %p1080 = scmp.ge.s32.totalorder %s1079, 1
                  %s1084 = sphi %s798, %s798
                  %s1085 = sphi %s800, %s800
                $region84: #{decoder_forward.1} parent=73 // loop_header_branch
                  %1082 = sbr.rel (%p1080) target = $region88
                $region85: #{decoder_forward.1} parent=73 // loop_body
                  %v1086 = vld [vmem:[%s1084] sm:%s1077]
                  %1087 = vst [vmem:[%s1085] sm:%s1077] %v1086
                  %v1088 = vld [vmem:[%s1084 + $0x278] sm:%s1077]
                  %1089 = vst [vmem:[%s1085 + $0xa0] sm:%s1077] %v1088
                  %v1090 = vld [vmem:[%s1084 + $0x4f0] sm:%s1077]
                  %1091 = vst [vmem:[%s1085 + $0x140] sm:%s1077] %v1090
                  %v1092 = vld [vmem:[%s1084 + $0x768] sm:%s1077]
                  %1093 = vst [vmem:[%s1085 + $0x1e0] sm:%s1077] %v1092
                  %v1094 = vld [vmem:[%s1084 + $0x9e0] sm:%s1077]
                  %1095 = vst [vmem:[%s1085 + $0x280] sm:%s1077] %v1094
                  %v1096 = vld [vmem:[%s1084 + $0xc58] sm:%s1077]
                  %1097 = vst [vmem:[%s1085 + $0x320] sm:%s1077] %v1096
                  %v1098 = vld [vmem:[%s1084 + $0xed0] sm:%s1077]
                  %1099 = vst [vmem:[%s1085 + $0x3c0] sm:%s1077] %v1098
                  %v1100 = vld [vmem:[%s1084 + $0x1148] sm:%s1077]
                  %1101 = vst [vmem:[%s1085 + $0x460] sm:%s1077] %v1100
                  %v1102 = vld [vmem:[%s1084 + $0x13c0] sm:%s1077]
                  %1103 = vst [vmem:[%s1085 + $0x500] sm:%s1077] %v1102
                  %v1104 = vld [vmem:[%s1084 + $0x1638] sm:%s1077]
                  %1105 = vst [vmem:[%s1085 + $0x5a0] sm:%s1077] %v1104
                  %v1106 = vld [vmem:[%s1084 + $0x18b0] sm:%s1077]
                  %1107 = vst [vmem:[%s1085 + $0x640] sm:%s1077] %v1106
                  %v1108 = vld [vmem:[%s1084 + $0x1b28] sm:%s1077]
                  %1109 = vst [vmem:[%s1085 + $0x6e0] sm:%s1077] %v1108
                  %v1110 = vld [vmem:[%s1084 + $0x1da0] sm:%s1077]
                  %1111 = vst [vmem:[%s1085 + $0x780] sm:%s1077] %v1110
                  %v1112 = vld [vmem:[%s1084 + $0x2018] sm:%s1077]
                  %1113 = vst [vmem:[%s1085 + $0x820] sm:%s1077] %v1112
                  %v1114 = vld [vmem:[%s1084 + $0x2290] sm:%s1077]
                  %1115 = vst [vmem:[%s1085 + $0x8c0] sm:%s1077] %v1114
                  %v1116 = vld [vmem:[%s1084 + $0x2508] sm:%s1077]
                  %1117 = vst [vmem:[%s1085 + $0x960] sm:%s1077] %v1116
                  %v1118 = vld [vmem:[%s1084 + $0x2780] sm:%s1077]
                  %1119 = vst [vmem:[%s1085 + $0xa00] sm:%s1077] %v1118
                  %v1120 = vld [vmem:[%s1084 + $0x29f8] sm:%s1077]
                  %1121 = vst [vmem:[%s1085 + $0xaa0] sm:%s1077] %v1120
                  %v1122 = vld [vmem:[%s1084 + $0x2c70] sm:%s1077]
                  %1123 = vst [vmem:[%s1085 + $0xb40] sm:%s1077] %v1122
                  %v1124 = vld [vmem:[%s1084 + $0x2ee8] sm:%s1077]
                  %1125 = vst [vmem:[%s1085 + $0xbe0] sm:%s1077] %v1124
                  %v1126 = vld [vmem:[%s1084 + $0x3160] sm:%s1077]
                  %1127 = vst [vmem:[%s1085 + $0xc80] sm:%s1077] %v1126
                  %v1128 = vld [vmem:[%s1084 + $0x33d8] sm:%s1077]
                  %1129 = vst [vmem:[%s1085 + $0xd20] sm:%s1077] %v1128
                  %v1130 = vld [vmem:[%s1084 + $0x3650] sm:%s1077]
                  %1131 = vst [vmem:[%s1085 + $0xdc0] sm:%s1077] %v1130
                  %v1132 = vld [vmem:[%s1084 + $0x38c8] sm:%s1077]
                  %1133 = vst [vmem:[%s1085 + $0xe60] sm:%s1077] %v1132
                  %v1134 = vld [vmem:[%s1084 + $0x3b40] sm:%s1077]
                  %1135 = vst [vmem:[%s1085 + $0xf00] sm:%s1077] %v1134
                  %v1136 = vld [vmem:[%s1084 + $0x3db8] sm:%s1077]
                  %1137 = vst [vmem:[%s1085 + $0xfa0] sm:%s1077] %v1136
                  %v1138 = vld [vmem:[%s1084 + $0x4030] sm:%s1077]
                  %1139 = vst [vmem:[%s1085 + $0x1040] sm:%s1077] %v1138
                  %v1140 = vld [vmem:[%s1084 + $0x42a8] sm:%s1077]
                  %1141 = vst [vmem:[%s1085 + $0x10e0] sm:%s1077] %v1140
                  %v1142 = vld [vmem:[%s1084 + $0x4520] sm:%s1077]
                  %1143 = vst [vmem:[%s1085 + $0x1180] sm:%s1077] %v1142
                  %v1144 = vld [vmem:[%s1084 + $0x4798] sm:%s1077]
                  %1145 = vst [vmem:[%s1085 + $0x1220] sm:%s1077] %v1144
                  %v1146 = vld [vmem:[%s1084 + $0x4a10] sm:%s1077]
                  %1147 = vst [vmem:[%s1085 + $0x12c0] sm:%s1077] %v1146
                  %v1148 = vld [vmem:[%s1084 + $0x4c88] sm:%s1077]
                  %1149 = vst [vmem:[%s1085 + $0x1360] sm:%s1077] %v1148
                  %v1150 = vld [vmem:[%s1084 + $0x4f00] sm:%s1077]
                  %1151 = vst [vmem:[%s1085 + $0x1400] sm:%s1077] %v1150
                  %v1152 = vld [vmem:[%s1084 + $0x5178] sm:%s1077]
                  %1153 = vst [vmem:[%s1085 + $0x14a0] sm:%s1077] %v1152
                  %v1154 = vld [vmem:[%s1084 + $0x53f0] sm:%s1077]
                  %1155 = vst [vmem:[%s1085 + $0x1540] sm:%s1077] %v1154
                  %v1156 = vld [vmem:[%s1084 + $0x5668] sm:%s1077]
                  %1157 = vst [vmem:[%s1085 + $0x15e0] sm:%s1077] %v1156
                  %v1158 = vld [vmem:[%s1084 + $0x58e0] sm:%s1077]
                  %1159 = vst [vmem:[%s1085 + $0x1680] sm:%s1077] %v1158
                  %v1160 = vld [vmem:[%s1084 + $0x5b58] sm:%s1077]
                  %1161 = vst [vmem:[%s1085 + $0x1720] sm:%s1077] %v1160
                  %v1162 = vld [vmem:[%s1084 + $0x5dd0] sm:%s1077]
                  %1163 = vst [vmem:[%s1085 + $0x17c0] sm:%s1077] %v1162
                  %v1164 = vld [vmem:[%s1084 + $0x6048] sm:%s1077]
                  %1165 = vst [vmem:[%s1085 + $0x1860] sm:%s1077] %v1164
                  %v1166 = vld [vmem:[%s1084 + $0x62c0] sm:%s1077]
                  %1167 = vst [vmem:[%s1085 + $0x1900] sm:%s1077] %v1166
                  %v1168 = vld [vmem:[%s1084 + $0x6538] sm:%s1077]
                  %1169 = vst [vmem:[%s1085 + $0x19a0] sm:%s1077] %v1168
                  %v1170 = vld [vmem:[%s1084 + $0x67b0] sm:%s1077]
                  %1171 = vst [vmem:[%s1085 + $0x1a40] sm:%s1077] %v1170
                  %v1172 = vld [vmem:[%s1084 + $0x6a28] sm:%s1077]
                  %1173 = vst [vmem:[%s1085 + $0x1ae0] sm:%s1077] %v1172
                  %v1174 = vld [vmem:[%s1084 + $0x6ca0] sm:%s1077]
                  %1175 = vst [vmem:[%s1085 + $0x1b80] sm:%s1077] %v1174
                  %v1176 = vld [vmem:[%s1084 + $0x6f18] sm:%s1077]
                  %1177 = vst [vmem:[%s1085 + $0x1c20] sm:%s1077] %v1176
                  %v1178 = vld [vmem:[%s1084 + $0x7190] sm:%s1077]
                  %1179 = vst [vmem:[%s1085 + $0x1cc0] sm:%s1077] %v1178
                  %v1180 = vld [vmem:[%s1084 + $0x7408] sm:%s1077]
                  %1181 = vst [vmem:[%s1085 + $0x1d60] sm:%s1077] %v1180
                  %v1182 = vld [vmem:[%s1084 + $0x7680] sm:%s1077]
                  %1183 = vst [vmem:[%s1085 + $0x1e00] sm:%s1077] %v1182
                  %v1184 = vld [vmem:[%s1084 + $0x78f8] sm:%s1077]
                  %1185 = vst [vmem:[%s1085 + $0x1ea0] sm:%s1077] %v1184
                  %v1186 = vld [vmem:[%s1084 + $0x7b70] sm:%s1077]
                  %1187 = vst [vmem:[%s1085 + $0x1f40] sm:%s1077] %v1186
                  %v1188 = vld [vmem:[%s1084 + $0x7de8] sm:%s1077]
                  %1189 = vst [vmem:[%s1085 + $0x1fe0] sm:%s1077] %v1188
                  %v1190 = vld [vmem:[%s1084 + $0x8060] sm:%s1077]
                  %1191 = vst [vmem:[%s1085 + $0x2080] sm:%s1077] %v1190
                  %v1192 = vld [vmem:[%s1084 + $0x82d8] sm:%s1077]
                  %1193 = vst [vmem:[%s1085 + $0x2120] sm:%s1077] %v1192
                  %v1194 = vld [vmem:[%s1084 + $0x8550] sm:%s1077]
                  %1195 = vst [vmem:[%s1085 + $0x21c0] sm:%s1077] %v1194
                  %v1196 = vld [vmem:[%s1084 + $0x87c8] sm:%s1077]
                  %1197 = vst [vmem:[%s1085 + $0x2260] sm:%s1077] %v1196
                  %v1198 = vld [vmem:[%s1084 + $0x8a40] sm:%s1077]
                  %1199 = vst [vmem:[%s1085 + $0x2300] sm:%s1077] %v1198
                  %v1200 = vld [vmem:[%s1084 + $0x8cb8] sm:%s1077]
                  %1201 = vst [vmem:[%s1085 + $0x23a0] sm:%s1077] %v1200
                  %v1202 = vld [vmem:[%s1084 + $0x8f30] sm:%s1077]
                  %1203 = vst [vmem:[%s1085 + $0x2440] sm:%s1077] %v1202
                  %v1204 = vld [vmem:[%s1084 + $0x91a8] sm:%s1077]
                  %1205 = vst [vmem:[%s1085 + $0x24e0] sm:%s1077] %v1204
                  %v1206 = vld [vmem:[%s1084 + $0x9420] sm:%s1077]
                  %1207 = vst [vmem:[%s1085 + $0x2580] sm:%s1077] %v1206
                  %v1208 = vld [vmem:[%s1084 + $0x9698] sm:%s1077]
                  %1209 = vst [vmem:[%s1085 + $0x2620] sm:%s1077] %v1208
                  %v1210 = vld [vmem:[%s1084 + $0x9910] sm:%s1077]
                  %1211 = vst [vmem:[%s1085 + $0x26c0] sm:%s1077] %v1210
                  %v1212 = vld [vmem:[%s1084 + $0x9b88] sm:%s1077]
                  %1213 = vst [vmem:[%s1085 + $0x2760] sm:%s1077] %v1212
                  %v1214 = vld [vmem:[%s1084 + $0x9e00] sm:%s1077]
                  %1215 = vst [vmem:[%s1085 + $0x2800] sm:%s1077] %v1214
                  %v1216 = vld [vmem:[%s1084 + $0xa078] sm:%s1077]
                  %1217 = vst [vmem:[%s1085 + $0x28a0] sm:%s1077] %v1216
                  %v1218 = vld [vmem:[%s1084 + $0xa2f0] sm:%s1077]
                  %1219 = vst [vmem:[%s1085 + $0x2940] sm:%s1077] %v1218
                  %v1220 = vld [vmem:[%s1084 + $0xa568] sm:%s1077]
                  %1221 = vst [vmem:[%s1085 + $0x29e0] sm:%s1077] %v1220
                  %v1222 = vld [vmem:[%s1084 + $0xa7e0] sm:%s1077]
                  %1223 = vst [vmem:[%s1085 + $0x2a80] sm:%s1077] %v1222
                  %v1224 = vld [vmem:[%s1084 + $0xaa58] sm:%s1077]
                  %1225 = vst [vmem:[%s1085 + $0x2b20] sm:%s1077] %v1224
                  %v1226 = vld [vmem:[%s1084 + $0xacd0] sm:%s1077]
                  %1227 = vst [vmem:[%s1085 + $0x2bc0] sm:%s1077] %v1226
                  %v1228 = vld [vmem:[%s1084 + $0xaf48] sm:%s1077]
                  %1229 = vst [vmem:[%s1085 + $0x2c60] sm:%s1077] %v1228
                  %v1230 = vld [vmem:[%s1084 + $0xb1c0] sm:%s1077]
                  %1231 = vst [vmem:[%s1085 + $0x2d00] sm:%s1077] %v1230
                  %v1232 = vld [vmem:[%s1084 + $0xb438] sm:%s1077]
                  %1233 = vst [vmem:[%s1085 + $0x2da0] sm:%s1077] %v1232
                  %v1234 = vld [vmem:[%s1084 + $0xb6b0] sm:%s1077]
                  %1235 = vst [vmem:[%s1085 + $0x2e40] sm:%s1077] %v1234
                  %v1236 = vld [vmem:[%s1084 + $0xb928] sm:%s1077]
                  %1237 = vst [vmem:[%s1085 + $0x2ee0] sm:%s1077] %v1236
                  %v1238 = vld [vmem:[%s1084 + $0xbba0] sm:%s1077]
                  %1239 = vst [vmem:[%s1085 + $0x2f80] sm:%s1077] %v1238
                  %v1240 = vld [vmem:[%s1084 + $0xbe18] sm:%s1077]
                  %1241 = vst [vmem:[%s1085 + $0x3020] sm:%s1077] %v1240
                  %v1242 = vld [vmem:[%s1084 + $0xc090] sm:%s1077]
                  %1243 = vst [vmem:[%s1085 + $0x30c0] sm:%s1077] %v1242
                  %v1244 = vld [vmem:[%s1084 + $0xc308] sm:%s1077]
                  %1245 = vst [vmem:[%s1085 + $0x3160] sm:%s1077] %v1244
                  %v1246 = vld [vmem:[%s1084 + $0xc580] sm:%s1077]
                  %1247 = vst [vmem:[%s1085 + $0x3200] sm:%s1077] %v1246
                  %v1248 = vld [vmem:[%s1084 + $0xc7f8] sm:%s1077]
                  %1249 = vst [vmem:[%s1085 + $0x32a0] sm:%s1077] %v1248
                  %v1250 = vld [vmem:[%s1084 + $0xca70] sm:%s1077]
                  %1251 = vst [vmem:[%s1085 + $0x3340] sm:%s1077] %v1250
                  %v1252 = vld [vmem:[%s1084 + $0xcce8] sm:%s1077]
                  %1253 = vst [vmem:[%s1085 + $0x33e0] sm:%s1077] %v1252
                  %v1254 = vld [vmem:[%s1084 + $0xcf60] sm:%s1077]
                  %1255 = vst [vmem:[%s1085 + $0x3480] sm:%s1077] %v1254
                  %v1256 = vld [vmem:[%s1084 + $0xd1d8] sm:%s1077]
                  %1257 = vst [vmem:[%s1085 + $0x3520] sm:%s1077] %v1256
                  %v1258 = vld [vmem:[%s1084 + $0xd450] sm:%s1077]
                  %1259 = vst [vmem:[%s1085 + $0x35c0] sm:%s1077] %v1258
                  %v1260 = vld [vmem:[%s1084 + $0xd6c8] sm:%s1077]
                  %1261 = vst [vmem:[%s1085 + $0x3660] sm:%s1077] %v1260
                  %v1262 = vld [vmem:[%s1084 + $0xd940] sm:%s1077]
                  %1263 = vst [vmem:[%s1085 + $0x3700] sm:%s1077] %v1262
                  %v1264 = vld [vmem:[%s1084 + $0xdbb8] sm:%s1077]
                  %1265 = vst [vmem:[%s1085 + $0x37a0] sm:%s1077] %v1264
                  %v1266 = vld [vmem:[%s1084 + $0xde30] sm:%s1077]
                  %1267 = vst [vmem:[%s1085 + $0x3840] sm:%s1077] %v1266
                  %v1268 = vld [vmem:[%s1084 + $0xe0a8] sm:%s1077]
                  %1269 = vst [vmem:[%s1085 + $0x38e0] sm:%s1077] %v1268
                  %v1270 = vld [vmem:[%s1084 + $0xe320] sm:%s1077]
                  %1271 = vst [vmem:[%s1085 + $0x3980] sm:%s1077] %v1270
                  %v1272 = vld [vmem:[%s1084 + $0xe598] sm:%s1077]
                  %1273 = vst [vmem:[%s1085 + $0x3a20] sm:%s1077] %v1272
                  %v1274 = vld [vmem:[%s1084 + $0xe810] sm:%s1077]
                  %1275 = vst [vmem:[%s1085 + $0x3ac0] sm:%s1077] %v1274
                  %v1276 = vld [vmem:[%s1084 + $0xea88] sm:%s1077]
                  %1277 = vst [vmem:[%s1085 + $0x3b60] sm:%s1077] %v1276
                  %v1278 = vld [vmem:[%s1084 + $0xed00] sm:%s1077]
                  %1279 = vst [vmem:[%s1085 + $0x3c00] sm:%s1077] %v1278
                  %v1280 = vld [vmem:[%s1084 + $0xef78] sm:%s1077]
                  %1281 = vst [vmem:[%s1085 + $0x3ca0] sm:%s1077] %v1280
                  %v1282 = vld [vmem:[%s1084 + $0xf1f0] sm:%s1077]
                  %1283 = vst [vmem:[%s1085 + $0x3d40] sm:%s1077] %v1282
                  %v1284 = vld [vmem:[%s1084 + $0xf468] sm:%s1077]
                  %1285 = vst [vmem:[%s1085 + $0x3de0] sm:%s1077] %v1284
                  %v1286 = vld [vmem:[%s1084 + $0xf6e0] sm:%s1077]
                  %1287 = vst [vmem:[%s1085 + $0x3e80] sm:%s1077] %v1286
                  %v1288 = vld [vmem:[%s1084 + $0xf958] sm:%s1077]
                  %1289 = vst [vmem:[%s1085 + $0x3f20] sm:%s1077] %v1288
                  %v1290 = vld [vmem:[%s1084 + $0xfbd0] sm:%s1077]
                  %1291 = vst [vmem:[%s1085 + $0x3fc0] sm:%s1077] %v1290
                  %v1292 = vld [vmem:[%s1084 + $0xfe48] sm:%s1077]
                  %1293 = vst [vmem:[%s1085 + $0x4060] sm:%s1077] %v1292
                  %v1294 = vld [vmem:[%s1084 + $0x100c0] sm:%s1077]
                  %1295 = vst [vmem:[%s1085 + $0x4100] sm:%s1077] %v1294
                  %v1296 = vld [vmem:[%s1084 + $0x10338] sm:%s1077]
                  %1297 = vst [vmem:[%s1085 + $0x41a0] sm:%s1077] %v1296
                  %v1298 = vld [vmem:[%s1084 + $0x105b0] sm:%s1077]
                  %1299 = vst [vmem:[%s1085 + $0x4240] sm:%s1077] %v1298
                  %v1300 = vld [vmem:[%s1084 + $0x10828] sm:%s1077]
                  %1301 = vst [vmem:[%s1085 + $0x42e0] sm:%s1077] %v1300
                  %v1302 = vld [vmem:[%s1084 + $0x10aa0] sm:%s1077]
                  %1303 = vst [vmem:[%s1085 + $0x4380] sm:%s1077] %v1302
                  %v1304 = vld [vmem:[%s1084 + $0x10d18] sm:%s1077]
                  %1305 = vst [vmem:[%s1085 + $0x4420] sm:%s1077] %v1304
                  %v1306 = vld [vmem:[%s1084 + $0x10f90] sm:%s1077]
                  %1307 = vst [vmem:[%s1085 + $0x44c0] sm:%s1077] %v1306
                  %v1308 = vld [vmem:[%s1084 + $0x11208] sm:%s1077]
                  %1309 = vst [vmem:[%s1085 + $0x4560] sm:%s1077] %v1308
                  %v1310 = vld [vmem:[%s1084 + $0x11480] sm:%s1077]
                  %1311 = vst [vmem:[%s1085 + $0x4600] sm:%s1077] %v1310
                  %v1312 = vld [vmem:[%s1084 + $0x116f8] sm:%s1077]
                  %1313 = vst [vmem:[%s1085 + $0x46a0] sm:%s1077] %v1312
                  %v1314 = vld [vmem:[%s1084 + $0x11970] sm:%s1077]
                  %1315 = vst [vmem:[%s1085 + $0x4740] sm:%s1077] %v1314
                  %v1316 = vld [vmem:[%s1084 + $0x11be8] sm:%s1077]
                  %1317 = vst [vmem:[%s1085 + $0x47e0] sm:%s1077] %v1316
                  %v1318 = vld [vmem:[%s1084 + $0x11e60] sm:%s1077]
                  %1319 = vst [vmem:[%s1085 + $0x4880] sm:%s1077] %v1318
                  %v1320 = vld [vmem:[%s1084 + $0x120d8] sm:%s1077]
                  %1321 = vst [vmem:[%s1085 + $0x4920] sm:%s1077] %v1320
                  %v1322 = vld [vmem:[%s1084 + $0x12350] sm:%s1077]
                  %1323 = vst [vmem:[%s1085 + $0x49c0] sm:%s1077] %v1322
                  %v1324 = vld [vmem:[%s1084 + $0x125c8] sm:%s1077]
                  %1325 = vst [vmem:[%s1085 + $0x4a60] sm:%s1077] %v1324
                  %v1326 = vld [vmem:[%s1084 + $0x12840] sm:%s1077]
                  %1327 = vst [vmem:[%s1085 + $0x4b00] sm:%s1077] %v1326
                  %v1328 = vld [vmem:[%s1084 + $0x12ab8] sm:%s1077]
                  %1329 = vst [vmem:[%s1085 + $0x4ba0] sm:%s1077] %v1328
                  %v1330 = vld [vmem:[%s1084 + $0x12d30] sm:%s1077]
                  %1331 = vst [vmem:[%s1085 + $0x4c40] sm:%s1077] %v1330
                  %v1332 = vld [vmem:[%s1084 + $0x12fa8] sm:%s1077]
                  %1333 = vst [vmem:[%s1085 + $0x4ce0] sm:%s1077] %v1332
                  %v1334 = vld [vmem:[%s1084 + $0x13220] sm:%s1077]
                  %1335 = vst [vmem:[%s1085 + $0x4d80] sm:%s1077] %v1334
                  %v1336 = vld [vmem:[%s1084 + $0x13498] sm:%s1077]
                  %1337 = vst [vmem:[%s1085 + $0x4e20] sm:%s1077] %v1336
                  %v1338 = vld [vmem:[%s1084 + $0x13710] sm:%s1077]
                  %1339 = vst [vmem:[%s1085 + $0x4ec0] sm:%s1077] %v1338
                  %v1340 = vld [vmem:[%s1084 + $0x13988] sm:%s1077]
                  %1341 = vst [vmem:[%s1085 + $0x4f60] sm:%s1077] %v1340
                $region86: #{decoder_forward.1} parent=73 // loop_footer
                  %s1083 = sadd.s32 1, %s1079
                $region87: #{decoder_forward.1} parent=73 // loop_footer_branch
                  %1078 = sbr.rel target = $region83
                $region88: #{decoder_forward.1} parent=73 // loop_exit
                  _
              $region74: #{decoder_forward.1} parent=47 // pred_fallthru
                _
            $region48: #{decoder_forward.1} parent=43 // pred_fallthru
              _
            // Predicated region
            $region49: #{decoder_forward.1} parent=43 // pred_check
              %p244 = pneg %p240
            $region50: #{decoder_forward.1} parent=43 // pred_check_branch
              %246 = sbr.rel (%p244) target = $region52
            $region51: #{decoder_forward.1} parent=43 // pred_region
              %s247 = sshll.u32 1, %s236
              %s248 = ssub.s32 %s247, 1
              loop: start=0, step=1, limit=1
              $region53: #{decoder_forward.1} parent=51 // loop_pre_header
                _
              $region54: #{decoder_forward.1} parent=51 // loop_header
                %s250 = sphi 0, %s254
                %p251 = scmp.ge.s32.totalorder %s250, 1
                %s255 = sphi %s235, %s235
                %s256 = sphi %s227, %s227
              $region55: #{decoder_forward.1} parent=51 // loop_header_branch
                %253 = sbr.rel (%p251) target = $region59
              $region56: #{decoder_forward.1} parent=51 // loop_body
                %v257 = vld [vmem:[%s255] sm:%s248]
                %258 = vst [vmem:[%s256] sm:%s248] %v257
                %v259 = vld [vmem:[%s255 + $0x278] sm:%s248]
                %260 = vst [vmem:[%s256 + $0xa0] sm:%s248] %v259
                %v261 = vld [vmem:[%s255 + $0x4f0] sm:%s248]
                %262 = vst [vmem:[%s256 + $0x140] sm:%s248] %v261
                %v263 = vld [vmem:[%s255 + $0x768] sm:%s248]
                %264 = vst [vmem:[%s256 + $0x1e0] sm:%s248] %v263
                %v265 = vld [vmem:[%s255 + $0x9e0] sm:%s248]
                %266 = vst [vmem:[%s256 + $0x280] sm:%s248] %v265
                %v267 = vld [vmem:[%s255 + $0xc58] sm:%s248]
                %268 = vst [vmem:[%s256 + $0x320] sm:%s248] %v267
                %v269 = vld [vmem:[%s255 + $0xed0] sm:%s248]
                %270 = vst [vmem:[%s256 + $0x3c0] sm:%s248] %v269
                %v271 = vld [vmem:[%s255 + $0x1148] sm:%s248]
                %272 = vst [vmem:[%s256 + $0x460] sm:%s248] %v271
                %v273 = vld [vmem:[%s255 + $0x13c0] sm:%s248]
                %274 = vst [vmem:[%s256 + $0x500] sm:%s248] %v273
                %v275 = vld [vmem:[%s255 + $0x1638] sm:%s248]
                %276 = vst [vmem:[%s256 + $0x5a0] sm:%s248] %v275
                %v277 = vld [vmem:[%s255 + $0x18b0] sm:%s248]
                %278 = vst [vmem:[%s256 + $0x640] sm:%s248] %v277
                %v279 = vld [vmem:[%s255 + $0x1b28] sm:%s248]
                %280 = vst [vmem:[%s256 + $0x6e0] sm:%s248] %v279
                %v281 = vld [vmem:[%s255 + $0x1da0] sm:%s248]
                %282 = vst [vmem:[%s256 + $0x780] sm:%s248] %v281
                %v283 = vld [vmem:[%s255 + $0x2018] sm:%s248]
                %284 = vst [vmem:[%s256 + $0x820] sm:%s248] %v283
                %v285 = vld [vmem:[%s255 + $0x2290] sm:%s248]
                %286 = vst [vmem:[%s256 + $0x8c0] sm:%s248] %v285
                %v287 = vld [vmem:[%s255 + $0x2508] sm:%s248]
                %288 = vst [vmem:[%s256 + $0x960] sm:%s248] %v287
                %v289 = vld [vmem:[%s255 + $0x2780] sm:%s248]
                %290 = vst [vmem:[%s256 + $0xa00] sm:%s248] %v289
                %v291 = vld [vmem:[%s255 + $0x29f8] sm:%s248]
                %292 = vst [vmem:[%s256 + $0xaa0] sm:%s248] %v291
                %v293 = vld [vmem:[%s255 + $0x2c70] sm:%s248]
                %294 = vst [vmem:[%s256 + $0xb40] sm:%s248] %v293
                %v295 = vld [vmem:[%s255 + $0x2ee8] sm:%s248]
                %296 = vst [vmem:[%s256 + $0xbe0] sm:%s248] %v295
                %v297 = vld [vmem:[%s255 + $0x3160] sm:%s248]
                %298 = vst [vmem:[%s256 + $0xc80] sm:%s248] %v297
                %v299 = vld [vmem:[%s255 + $0x33d8] sm:%s248]
                %300 = vst [vmem:[%s256 + $0xd20] sm:%s248] %v299
                %v301 = vld [vmem:[%s255 + $0x3650] sm:%s248]
                %302 = vst [vmem:[%s256 + $0xdc0] sm:%s248] %v301
                %v303 = vld [vmem:[%s255 + $0x38c8] sm:%s248]
                %304 = vst [vmem:[%s256 + $0xe60] sm:%s248] %v303
                %v305 = vld [vmem:[%s255 + $0x3b40] sm:%s248]
                %306 = vst [vmem:[%s256 + $0xf00] sm:%s248] %v305
                %v307 = vld [vmem:[%s255 + $0x3db8] sm:%s248]
                %308 = vst [vmem:[%s256 + $0xfa0] sm:%s248] %v307
                %v309 = vld [vmem:[%s255 + $0x4030] sm:%s248]
                %310 = vst [vmem:[%s256 + $0x1040] sm:%s248] %v309
                %v311 = vld [vmem:[%s255 + $0x42a8] sm:%s248]
                %312 = vst [vmem:[%s256 + $0x10e0] sm:%s248] %v311
                %v313 = vld [vmem:[%s255 + $0x4520] sm:%s248]
                %314 = vst [vmem:[%s256 + $0x1180] sm:%s248] %v313
                %v315 = vld [vmem:[%s255 + $0x4798] sm:%s248]
                %316 = vst [vmem:[%s256 + $0x1220] sm:%s248] %v315
                %v317 = vld [vmem:[%s255 + $0x4a10] sm:%s248]
                %318 = vst [vmem:[%s256 + $0x12c0] sm:%s248] %v317
                %v319 = vld [vmem:[%s255 + $0x4c88] sm:%s248]
                %320 = vst [vmem:[%s256 + $0x1360] sm:%s248] %v319
                %v321 = vld [vmem:[%s255 + $0x4f00] sm:%s248]
                %322 = vst [vmem:[%s256 + $0x1400] sm:%s248] %v321
                %v323 = vld [vmem:[%s255 + $0x5178] sm:%s248]
                %324 = vst [vmem:[%s256 + $0x14a0] sm:%s248] %v323
                %v325 = vld [vmem:[%s255 + $0x53f0] sm:%s248]
                %326 = vst [vmem:[%s256 + $0x1540] sm:%s248] %v325
                %v327 = vld [vmem:[%s255 + $0x5668] sm:%s248]
                %328 = vst [vmem:[%s256 + $0x15e0] sm:%s248] %v327
                %v329 = vld [vmem:[%s255 + $0x58e0] sm:%s248]
                %330 = vst [vmem:[%s256 + $0x1680] sm:%s248] %v329
                %v331 = vld [vmem:[%s255 + $0x5b58] sm:%s248]
                %332 = vst [vmem:[%s256 + $0x1720] sm:%s248] %v331
                %v333 = vld [vmem:[%s255 + $0x5dd0] sm:%s248]
                %334 = vst [vmem:[%s256 + $0x17c0] sm:%s248] %v333
                %v335 = vld [vmem:[%s255 + $0x6048] sm:%s248]
                %336 = vst [vmem:[%s256 + $0x1860] sm:%s248] %v335
                %v337 = vld [vmem:[%s255 + $0x62c0] sm:%s248]
                %338 = vst [vmem:[%s256 + $0x1900] sm:%s248] %v337
                %v339 = vld [vmem:[%s255 + $0x6538] sm:%s248]
                %340 = vst [vmem:[%s256 + $0x19a0] sm:%s248] %v339
                %v341 = vld [vmem:[%s255 + $0x67b0] sm:%s248]
                %342 = vst [vmem:[%s256 + $0x1a40] sm:%s248] %v341
                %v343 = vld [vmem:[%s255 + $0x6a28] sm:%s248]
                %344 = vst [vmem:[%s256 + $0x1ae0] sm:%s248] %v343
                %v345 = vld [vmem:[%s255 + $0x6ca0] sm:%s248]
                %346 = vst [vmem:[%s256 + $0x1b80] sm:%s248] %v345
                %v347 = vld [vmem:[%s255 + $0x6f18] sm:%s248]
                %348 = vst [vmem:[%s256 + $0x1c20] sm:%s248] %v347
                %v349 = vld [vmem:[%s255 + $0x7190] sm:%s248]
                %350 = vst [vmem:[%s256 + $0x1cc0] sm:%s248] %v349
                %v351 = vld [vmem:[%s255 + $0x7408] sm:%s248]
                %352 = vst [vmem:[%s256 + $0x1d60] sm:%s248] %v351
                %v353 = vld [vmem:[%s255 + $0x7680] sm:%s248]
                %354 = vst [vmem:[%s256 + $0x1e00] sm:%s248] %v353
                %v355 = vld [vmem:[%s255 + $0x78f8] sm:%s248]
                %356 = vst [vmem:[%s256 + $0x1ea0] sm:%s248] %v355
                %v357 = vld [vmem:[%s255 + $0x7b70] sm:%s248]
                %358 = vst [vmem:[%s256 + $0x1f40] sm:%s248] %v357
                %v359 = vld [vmem:[%s255 + $0x7de8] sm:%s248]
                %360 = vst [vmem:[%s256 + $0x1fe0] sm:%s248] %v359
                %v361 = vld [vmem:[%s255 + $0x8060] sm:%s248]
                %362 = vst [vmem:[%s256 + $0x2080] sm:%s248] %v361
                %v363 = vld [vmem:[%s255 + $0x82d8] sm:%s248]
                %364 = vst [vmem:[%s256 + $0x2120] sm:%s248] %v363
                %v365 = vld [vmem:[%s255 + $0x8550] sm:%s248]
                %366 = vst [vmem:[%s256 + $0x21c0] sm:%s248] %v365
                %v367 = vld [vmem:[%s255 + $0x87c8] sm:%s248]
                %368 = vst [vmem:[%s256 + $0x2260] sm:%s248] %v367
                %v369 = vld [vmem:[%s255 + $0x8a40] sm:%s248]
                %370 = vst [vmem:[%s256 + $0x2300] sm:%s248] %v369
                %v371 = vld [vmem:[%s255 + $0x8cb8] sm:%s248]
                %372 = vst [vmem:[%s256 + $0x23a0] sm:%s248] %v371
                %v373 = vld [vmem:[%s255 + $0x8f30] sm:%s248]
                %374 = vst [vmem:[%s256 + $0x2440] sm:%s248] %v373
                %v375 = vld [vmem:[%s255 + $0x91a8] sm:%s248]
                %376 = vst [vmem:[%s256 + $0x24e0] sm:%s248] %v375
                %v377 = vld [vmem:[%s255 + $0x9420] sm:%s248]
                %378 = vst [vmem:[%s256 + $0x2580] sm:%s248] %v377
                %v379 = vld [vmem:[%s255 + $0x9698] sm:%s248]
                %380 = vst [vmem:[%s256 + $0x2620] sm:%s248] %v379
                %v381 = vld [vmem:[%s255 + $0x9910] sm:%s248]
                %382 = vst [vmem:[%s256 + $0x26c0] sm:%s248] %v381
                %v383 = vld [vmem:[%s255 + $0x9b88] sm:%s248]
                %384 = vst [vmem:[%s256 + $0x2760] sm:%s248] %v383
                %v385 = vld [vmem:[%s255 + $0x9e00] sm:%s248]
                %386 = vst [vmem:[%s256 + $0x2800] sm:%s248] %v385
                %v387 = vld [vmem:[%s255 + $0xa078] sm:%s248]
                %388 = vst [vmem:[%s256 + $0x28a0] sm:%s248] %v387
                %v389 = vld [vmem:[%s255 + $0xa2f0] sm:%s248]
                %390 = vst [vmem:[%s256 + $0x2940] sm:%s248] %v389
                %v391 = vld [vmem:[%s255 + $0xa568] sm:%s248]
                %392 = vst [vmem:[%s256 + $0x29e0] sm:%s248] %v391
                %v393 = vld [vmem:[%s255 + $0xa7e0] sm:%s248]
                %394 = vst [vmem:[%s256 + $0x2a80] sm:%s248] %v393
                %v395 = vld [vmem:[%s255 + $0xaa58] sm:%s248]
                %396 = vst [vmem:[%s256 + $0x2b20] sm:%s248] %v395
                %v397 = vld [vmem:[%s255 + $0xacd0] sm:%s248]
                %398 = vst [vmem:[%s256 + $0x2bc0] sm:%s248] %v397
                %v399 = vld [vmem:[%s255 + $0xaf48] sm:%s248]
                %400 = vst [vmem:[%s256 + $0x2c60] sm:%s248] %v399
                %v401 = vld [vmem:[%s255 + $0xb1c0] sm:%s248]
                %402 = vst [vmem:[%s256 + $0x2d00] sm:%s248] %v401
                %v403 = vld [vmem:[%s255 + $0xb438] sm:%s248]
                %404 = vst [vmem:[%s256 + $0x2da0] sm:%s248] %v403
                %v405 = vld [vmem:[%s255 + $0xb6b0] sm:%s248]
                %406 = vst [vmem:[%s256 + $0x2e40] sm:%s248] %v405
                %v407 = vld [vmem:[%s255 + $0xb928] sm:%s248]
                %408 = vst [vmem:[%s256 + $0x2ee0] sm:%s248] %v407
                %v409 = vld [vmem:[%s255 + $0xbba0] sm:%s248]
                %410 = vst [vmem:[%s256 + $0x2f80] sm:%s248] %v409
                %v411 = vld [vmem:[%s255 + $0xbe18] sm:%s248]
                %412 = vst [vmem:[%s256 + $0x3020] sm:%s248] %v411
                %v413 = vld [vmem:[%s255 + $0xc090] sm:%s248]
                %414 = vst [vmem:[%s256 + $0x30c0] sm:%s248] %v413
                %v415 = vld [vmem:[%s255 + $0xc308] sm:%s248]
                %416 = vst [vmem:[%s256 + $0x3160] sm:%s248] %v415
                %v417 = vld [vmem:[%s255 + $0xc580] sm:%s248]
                %418 = vst [vmem:[%s256 + $0x3200] sm:%s248] %v417
                %v419 = vld [vmem:[%s255 + $0xc7f8] sm:%s248]
                %420 = vst [vmem:[%s256 + $0x32a0] sm:%s248] %v419
                %v421 = vld [vmem:[%s255 + $0xca70] sm:%s248]
                %422 = vst [vmem:[%s256 + $0x3340] sm:%s248] %v421
                %v423 = vld [vmem:[%s255 + $0xcce8] sm:%s248]
                %424 = vst [vmem:[%s256 + $0x33e0] sm:%s248] %v423
                %v425 = vld [vmem:[%s255 + $0xcf60] sm:%s248]
                %426 = vst [vmem:[%s256 + $0x3480] sm:%s248] %v425
                %v427 = vld [vmem:[%s255 + $0xd1d8] sm:%s248]
                %428 = vst [vmem:[%s256 + $0x3520] sm:%s248] %v427
                %v429 = vld [vmem:[%s255 + $0xd450] sm:%s248]
                %430 = vst [vmem:[%s256 + $0x35c0] sm:%s248] %v429
                %v431 = vld [vmem:[%s255 + $0xd6c8] sm:%s248]
                %432 = vst [vmem:[%s256 + $0x3660] sm:%s248] %v431
                %v433 = vld [vmem:[%s255 + $0xd940] sm:%s248]
                %434 = vst [vmem:[%s256 + $0x3700] sm:%s248] %v433
                %v435 = vld [vmem:[%s255 + $0xdbb8] sm:%s248]
                %436 = vst [vmem:[%s256 + $0x37a0] sm:%s248] %v435
                %v437 = vld [vmem:[%s255 + $0xde30] sm:%s248]
                %438 = vst [vmem:[%s256 + $0x3840] sm:%s248] %v437
                %v439 = vld [vmem:[%s255 + $0xe0a8] sm:%s248]
                %440 = vst [vmem:[%s256 + $0x38e0] sm:%s248] %v439
                %v441 = vld [vmem:[%s255 + $0xe320] sm:%s248]
                %442 = vst [vmem:[%s256 + $0x3980] sm:%s248] %v441
                %v443 = vld [vmem:[%s255 + $0xe598] sm:%s248]
                %444 = vst [vmem:[%s256 + $0x3a20] sm:%s248] %v443
                %v445 = vld [vmem:[%s255 + $0xe810] sm:%s248]
                %446 = vst [vmem:[%s256 + $0x3ac0] sm:%s248] %v445
                %v447 = vld [vmem:[%s255 + $0xea88] sm:%s248]
                %448 = vst [vmem:[%s256 + $0x3b60] sm:%s248] %v447
                %v449 = vld [vmem:[%s255 + $0xed00] sm:%s248]
                %450 = vst [vmem:[%s256 + $0x3c00] sm:%s248] %v449
                %v451 = vld [vmem:[%s255 + $0xef78] sm:%s248]
                %452 = vst [vmem:[%s256 + $0x3ca0] sm:%s248] %v451
                %v453 = vld [vmem:[%s255 + $0xf1f0] sm:%s248]
                %454 = vst [vmem:[%s256 + $0x3d40] sm:%s248] %v453
                %v455 = vld [vmem:[%s255 + $0xf468] sm:%s248]
                %456 = vst [vmem:[%s256 + $0x3de0] sm:%s248] %v455
                %v457 = vld [vmem:[%s255 + $0xf6e0] sm:%s248]
                %458 = vst [vmem:[%s256 + $0x3e80] sm:%s248] %v457
                %v459 = vld [vmem:[%s255 + $0xf958] sm:%s248]
                %460 = vst [vmem:[%s256 + $0x3f20] sm:%s248] %v459
                %v461 = vld [vmem:[%s255 + $0xfbd0] sm:%s248]
                %462 = vst [vmem:[%s256 + $0x3fc0] sm:%s248] %v461
                %v463 = vld [vmem:[%s255 + $0xfe48] sm:%s248]
                %464 = vst [vmem:[%s256 + $0x4060] sm:%s248] %v463
                %v465 = vld [vmem:[%s255 + $0x100c0] sm:%s248]
                %466 = vst [vmem:[%s256 + $0x4100] sm:%s248] %v465
                %v467 = vld [vmem:[%s255 + $0x10338] sm:%s248]
                %468 = vst [vmem:[%s256 + $0x41a0] sm:%s248] %v467
                %v469 = vld [vmem:[%s255 + $0x105b0] sm:%s248]
                %470 = vst [vmem:[%s256 + $0x4240] sm:%s248] %v469
                %v471 = vld [vmem:[%s255 + $0x10828] sm:%s248]
                %472 = vst [vmem:[%s256 + $0x42e0] sm:%s248] %v471
                %v473 = vld [vmem:[%s255 + $0x10aa0] sm:%s248]
                %474 = vst [vmem:[%s256 + $0x4380] sm:%s248] %v473
                %v475 = vld [vmem:[%s255 + $0x10d18] sm:%s248]
                %476 = vst [vmem:[%s256 + $0x4420] sm:%s248] %v475
                %v477 = vld [vmem:[%s255 + $0x10f90] sm:%s248]
                %478 = vst [vmem:[%s256 + $0x44c0] sm:%s248] %v477
                %v479 = vld [vmem:[%s255 + $0x11208] sm:%s248]
                %480 = vst [vmem:[%s256 + $0x4560] sm:%s248] %v479
                %v481 = vld [vmem:[%s255 + $0x11480] sm:%s248]
                %482 = vst [vmem:[%s256 + $0x4600] sm:%s248] %v481
                %v483 = vld [vmem:[%s255 + $0x116f8] sm:%s248]
                %484 = vst [vmem:[%s256 + $0x46a0] sm:%s248] %v483
                %v485 = vld [vmem:[%s255 + $0x11970] sm:%s248]
                %486 = vst [vmem:[%s256 + $0x4740] sm:%s248] %v485
                %v487 = vld [vmem:[%s255 + $0x11be8] sm:%s248]
                %488 = vst [vmem:[%s256 + $0x47e0] sm:%s248] %v487
                %v489 = vld [vmem:[%s255 + $0x11e60] sm:%s248]
                %490 = vst [vmem:[%s256 + $0x4880] sm:%s248] %v489
                %v491 = vld [vmem:[%s255 + $0x120d8] sm:%s248]
                %492 = vst [vmem:[%s256 + $0x4920] sm:%s248] %v491
                %v493 = vld [vmem:[%s255 + $0x12350] sm:%s248]
                %494 = vst [vmem:[%s256 + $0x49c0] sm:%s248] %v493
                %v495 = vld [vmem:[%s255 + $0x125c8] sm:%s248]
                %496 = vst [vmem:[%s256 + $0x4a60] sm:%s248] %v495
                %v497 = vld [vmem:[%s255 + $0x12840] sm:%s248]
                %498 = vst [vmem:[%s256 + $0x4b00] sm:%s248] %v497
                %v499 = vld [vmem:[%s255 + $0x12ab8] sm:%s248]
                %500 = vst [vmem:[%s256 + $0x4ba0] sm:%s248] %v499
                %v501 = vld [vmem:[%s255 + $0x12d30] sm:%s248]
                %502 = vst [vmem:[%s256 + $0x4c40] sm:%s248] %v501
                %v503 = vld [vmem:[%s255 + $0x12fa8] sm:%s248]
                %504 = vst [vmem:[%s256 + $0x4ce0] sm:%s248] %v503
                %v505 = vld [vmem:[%s255 + $0x13220] sm:%s248]
                %506 = vst [vmem:[%s256 + $0x4d80] sm:%s248] %v505
                %v507 = vld [vmem:[%s255 + $0x13498] sm:%s248]
                %508 = vst [vmem:[%s256 + $0x4e20] sm:%s248] %v507
                %v509 = vld [vmem:[%s255 + $0x13710] sm:%s248]
                %510 = vst [vmem:[%s256 + $0x4ec0] sm:%s248] %v509
                %v511 = vld [vmem:[%s255 + $0x13988] sm:%s248]
                %512 = vst [vmem:[%s256 + $0x4f60] sm:%s248] %v511
              $region57: #{decoder_forward.1} parent=51 // loop_footer
                %s254 = sadd.s32 1, %s250
              $region58: #{decoder_forward.1} parent=51 // loop_footer_branch
                %249 = sbr.rel target = $region54
              $region59: #{decoder_forward.1} parent=51 // loop_exit
                _
            $region52: #{decoder_forward.1} parent=43 // pred_fallthru
              _
          $region44: #{decoder_forward.1} parent=39 // pred_fallthru
            _
          %1342 = vnop
        $region40: #{decoder_forward.1} parent=31 // pred_fallthru
          _
      $region32: #{decoder_forward.1} parent=5 // pred_fallthru
        _
      %p1343 = scmp.le.s32.totalorder 1, %s12
      %p1344 = scmp.lt.s32.totalorder %s12, 5
      %p1345 = pnand %p1343, %p1344
      %p1346 = pneg %p1345
      // Predicated region
      $region89: #{decoder_forward.1} parent=5 // pred_check
        _
      $region90: #{decoder_forward.1} parent=5 // pred_check_branch
        %1348 = sbr.rel (%p1345) target = $region92
      $region91: #{decoder_forward.1} parent=5 // pred_region
        %s1349 = ssub.s32 %s12, 1
        %s1350 = sand.u32 %s135, 1
        %s1351 = sand.u32 %s135, 1
        %s1352 = smul.addr %s1351, 20480
        %s1353 = scalar_lea.vmem [#allocation2], %s1352
        // Predicated region
        $region93: #{decoder_forward.1} parent=91 // pred_check
          %p1354 = pneg %p148
        $region94: #{decoder_forward.1} parent=91 // pred_check_branch
          %1356 = sbr.rel (%p1354) target = $region96
        $region95: #{decoder_forward.1} parent=91 // pred_region
          _
        $region96: #{decoder_forward.1} parent=91 // pred_fallthru
          _
        %p1357 = pneg %p33
        %p1358 = pneg %p30
        %p1359 = pneg %p54
        %p1360 = pneg %p51
        %p1361 = pneg %p75
        %p1362 = pneg %p72
        %p1363 = pneg %p96
        %p1364 = pneg %p93
        %s1365 = smul.u32 20, %s17
        %s1366 = ssub.s32 79, %s1365
        %p1367 = scmp.lt.s32.totalorder %s1366, 20
        %s1368 = scalar_select %p1367, %s1366, 20
        %s1369 = smul.u32 16, %s1368
        %p1370 = scmp.lt.s32.totalorder %s1365, 78
        %s1371 = scalar_select %p1370, %s1365, 78
        %s1372 = scalar_lea.vmem %s4, %s1371
        %p1373 = pneg %p122
        %p1374 = pneg %p119
        %s1375 = sand.u32 %s135, 1
        %s1376 = sand.u32 %s135, 1
        %s1377 = smul.addr %s1376, 20480
        %s1378 = scalar_lea.vmem [#allocation2], %s1377
        %p1379 = pneg %p148
        %p1380 = pneg %p145
        %p1381 = pneg %p174
        %p1382 = pneg %p171
        %s1383 = sand.u32 %s161, 1
        %s1384 = sand.u32 %s161, 1
        %s1385 = smul.addr %s1384, 40
        %s1386 = scalar_lea.vmem [#allocation3], %s1385
        %s1387 = smul.u32 20, %s17
        %s1388 = ssub.s32 79, %s1387
        %p1389 = scmp.lt.s32.totalorder %s1388, 20
        %s1390 = scalar_select %p1389, %s1388, 20
        %s1391 = smul.u32 16, %s1390
        %p1392 = scmp.lt.s32.totalorder %s1387, 78
        %s1393 = scalar_select %p1392, %s1387, 78
        %s1394 = scalar_lea.vmem %s4, %s1393
        %s1395 = smul.u32 20, %s17
        %s1396 = ssub.s32 79, %s1395
        %p1397 = scmp.lt.s32.totalorder %s1396, 20
        %s1398 = scalar_select %p1397, %s1396, 20
        %s1399 = smul.u32 16, %s1398
        %s1400 = smul.u32 20, %s17
        %s1401 = ssub.s32 79, %s1400
        %p1402 = scmp.lt.s32.totalorder %s1401, 20
        %s1403 = scalar_select %p1402, %s1401, 20
        %s1404 = smul.u32 16384, %s1403
        %s1405 = smul.u32 20, %s17
        %s1406 = ssub.s32 79, %s1405
        %p1407 = scmp.lt.s32.totalorder %s1406, 20
        %s1408 = scalar_select %p1407, %s1406, 20
        %s1409 = smul.u32 32, %s1408
        %v1410 = vld [vmem:[%s0] sm:$0x3]
        %v1411 = vld [vmem:[%s1] sm:$0x1]
        %1413 = vset.pattern.permute.xlu0 0
        %1414 = vperm.xlu0 %1413, %v1410
        %v1415 = vpop.permute.xlu0 %1414
        %v1418 = vlaneseq
        %v1419 = vshrl.u32 %v1418, 7
        %v1420 = vsub.s32 0, %v1419
        %v1421 = vrot.slane %v1411, %v1420
        %v1423 = vmul.f32 %v1415, %v1421
        %v1424 = vld [vmem:[%s2] sm:$0x1]
        %v1426 = vlaneseq
        %v1427 = vshrl.u32 %v1426, 7
        %v1428 = vsub.s32 0, %v1427
        %v1429 = vrot.slane %v1424, %v1428
        %v1431 = vadd.f32 %v1423, %v1429
        %v1432 = vmax.f32 %v1431, 0.0
        %v1433 = vld [vmem:[%s3] sm:$0xff]
        %v1434 = vld [vmem:[%s3 + $0x8] sm:$0xff]
        %v1435 = vld [vmem:[%s3 + $0x10] sm:$0xff]
        %v1436 = vld [vmem:[%s3 + $0x18] sm:$0xff]
        %v1437 = vld [vmem:[%s3 + $0x20] sm:$0xff]
        %v1438 = vld [vmem:[%s3 + $0x28] sm:$0xff]
        %v1439 = vld [vmem:[%s3 + $0x30] sm:$0xff]
        %v1440 = vld [vmem:[%s3 + $0x38] sm:$0xff]
        %v1441 = vld [vmem:[%s3 + $0x40] sm:$0x3]
        %v1442 = vld [vmem:[%s3 + $0x48] sm:$0x3]
        %v1443 = vld [vmem:[%s3 + $0x50] sm:$0x3]
        %v1444 = vld [vmem:[%s3 + $0x58] sm:$0x3]
        %v1445 = vld [vmem:[%s3 + $0x60] sm:$0x3]
        %v1446 = vld [vmem:[%s3 + $0x68] sm:$0x3]
        %v1447 = vld [vmem:[%s3 + $0x70] sm:$0x3]
        %v1448 = vld [vmem:[%s3 + $0x78] sm:$0x3]
        %vm1449 = vcmask 80896
        %v1451 = vsel %vm1449, %v1432, 0
        %vm1453 = vcmask 1041408
        %v1455 = vsel %vm1453, %v1441, 0
        %v1458 = vsel %vm1453, %v1442, 0
        %v1461 = vsel %vm1453, %v1443, 0
        %v1464 = vsel %vm1453, %v1444, 0
        %v1467 = vsel %vm1453, %v1445, 0
        %v1470 = vsel %vm1453, %v1446, 0
        %v1473 = vsel %vm1453, %v1447, 0
        %v1476 = vsel %vm1453, %v1448, 0
        %1478 = vmatprep.subr.mxu0 0.0
        %1479 = vmatpush1.msra.mxu0 0.0
        %1480 = vmatprep.subr.mxu0 0.0
        %1481 = vmatpush1.msra.mxu0 0.0
        %1482 = vmatprep.subr.mxu0 0.0
        %1483 = vmatpush1.msra.mxu0 0.0
        %1484 = vmatprep.subr.mxu0 0.0
        %1485 = vmatpush1.msra.mxu0 0.0
        %1486 = vmatprep.subr.mxu0 0.0
        %1487 = vmatpush1.msra.mxu0 0.0
        %1488 = vmatprep.subr.mxu0 0.0
        %1489 = vmatpush1.msra.mxu0 0.0
        %1490 = vmatprep.subr.mxu0 0.0
        %1491 = vmatpush1.msra.mxu0 0.0
        %1492 = vmatprep.subr.mxu0 0.0
        %1493 = vmatpush1.msra.mxu0 0.0
        %1494 = vmatprep.subr.mxu0 0.0
        %1495 = vmatpush1.msra.mxu0 0.0
        %1496 = vmatprep.subr.mxu0 0.0
        %1497 = vmatpush1.msra.mxu0 0.0
        %1498 = vmatprep.subr.mxu0 0.0
        %1499 = vmatpush1.msra.mxu0 0.0
        %1500 = vmatprep.subr.mxu0 0.0
        %1501 = vmatpush1.msra.mxu0 0.0
        %1502 = vmatprep.subr.mxu0 0.0
        %1503 = vmatpush1.msra.mxu0 0.0
        %1504 = vmatprep.subr.mxu0 0.0
        %1505 = vmatpush1.msra.mxu0 0.0
        %1506 = vmatprep.subr.mxu0 %v1458
        %1507 = vmatpush1.msra.mxu0 %v1455
        %1508 = vmatprep.subr.mxu0 %v1434
        %1509 = vmatpush1.msra.mxu0 %v1433
        %1510 = vmatprep.subr.mxu0 0.0
        %1511 = vmatpush2.msra.mxu0 0.0
        %1512 = vmatprep.subr.mxu0 0.0
        %1513 = vmatpush2.msra.mxu0 0.0
        %1514 = vmatprep.subr.mxu0 0.0
        %1515 = vmatpush2.msra.mxu0 0.0
        %1516 = vmatprep.subr.mxu0 0.0
        %1517 = vmatpush2.msra.mxu0 0.0
        %1518 = vmatprep.subr.mxu0 0.0
        %1519 = vmatpush2.msra.mxu0 0.0
        %1520 = vmatprep.subr.mxu0 0.0
        %1521 = vmatpush2.msra.mxu0 0.0
        %1522 = vmatprep.subr.mxu0 0.0
        %1523 = vmatpush2.msra.mxu0 0.0
        %1524 = vmatprep.subr.mxu0 0.0
        %1525 = vmatpush2.msra.mxu0 0.0
        %1526 = vmatprep.subr.mxu0 0.0
        %1527 = vmatpush2.msra.mxu0 0.0
        %1528 = vmatprep.subr.mxu0 0.0
        %1529 = vmatpush2.msra.mxu0 0.0
        %1530 = vmatprep.subr.mxu0 0.0
        %1531 = vmatpush2.msra.mxu0 0.0
        %1532 = vmatprep.subr.mxu0 0.0
        %1533 = vmatpush2.msra.mxu0 0.0
        %1534 = vmatprep.subr.mxu0 0.0
        %1535 = vmatpush2.msra.mxu0 0.0
        %1536 = vmatprep.subr.mxu0 0.0
        %1537 = vmatpush2.msra.mxu0 0.0
        %1538 = vmatprep.subr.mxu0 0.0
        %1539 = vmatpush2.msra.mxu0 0.0
        %1540 = vmatprep.subr.mxu0 0.0
        %1541 = vmatpush2.msra.mxu0 0.0
        %1542 = vmatprep.mubr.f32.mxu0 0.0
        %1543 = vmatmul.mubr.f32.gmra.mxu0 %v1451
        %v1544 = vpop.f32.mrf.mxu0
        %v1545 = vadd.f32 0.0, %v1544
        %v1546 = vpop.f32.mrf.mxu0
        %v1547 = vadd.f32 0.0, %v1546
        %1548 = vdwg.mxu0
        %1549 = vmatprep.subr.mxu0 0.0
        %1550 = vmatpush1.msra.mxu0 0.0
        %1551 = vmatprep.subr.mxu0 0.0
        %1552 = vmatpush1.msra.mxu0 0.0
        %1553 = vmatprep.subr.mxu0 0.0
        %1554 = vmatpush1.msra.mxu0 0.0
        %1555 = vmatprep.subr.mxu0 0.0
        %1556 = vmatpush1.msra.mxu0 0.0
        %1557 = vmatprep.subr.mxu0 0.0
        %1558 = vmatpush1.msra.mxu0 0.0
        %1559 = vmatprep.subr.mxu0 0.0
        %1560 = vmatpush1.msra.mxu0 0.0
        %1561 = vmatprep.subr.mxu0 0.0
        %1562 = vmatpush1.msra.mxu0 0.0
        %1563 = vmatprep.subr.mxu0 0.0
        %1564 = vmatpush1.msra.mxu0 0.0
        %1565 = vmatprep.subr.mxu0 0.0
        %1566 = vmatpush1.msra.mxu0 0.0
        %1567 = vmatprep.subr.mxu0 0.0
        %1568 = vmatpush1.msra.mxu0 0.0
        %1569 = vmatprep.subr.mxu0 0.0
        %1570 = vmatpush1.msra.mxu0 0.0
        %1571 = vmatprep.subr.mxu0 0.0
        %1572 = vmatpush1.msra.mxu0 0.0
        %1573 = vmatprep.subr.mxu0 0.0
        %1574 = vmatpush1.msra.mxu0 0.0
        %1575 = vmatprep.subr.mxu0 0.0
        %1576 = vmatpush1.msra.mxu0 0.0
        %1577 = vmatprep.subr.mxu0 %v1464
        %1578 = vmatpush1.msra.mxu0 %v1461
        %1579 = vmatprep.subr.mxu0 %v1436
        %1580 = vmatpush1.msra.mxu0 %v1435
        %1581 = vmatprep.subr.mxu0 0.0
        %1582 = vmatpush2.msra.mxu0 0.0
        %1583 = vmatprep.subr.mxu0 0.0
        %1584 = vmatpush2.msra.mxu0 0.0
        %1585 = vmatprep.subr.mxu0 0.0
        %1586 = vmatpush2.msra.mxu0 0.0
        %1587 = vmatprep.subr.mxu0 0.0
        %1588 = vmatpush2.msra.mxu0 0.0
        %1589 = vmatprep.subr.mxu0 0.0
        %1590 = vmatpush2.msra.mxu0 0.0
        %1591 = vmatprep.subr.mxu0 0.0
        %1592 = vmatpush2.msra.mxu0 0.0
        %1593 = vmatprep.subr.mxu0 0.0
        %1594 = vmatpush2.msra.mxu0 0.0
        %1595 = vmatprep.subr.mxu0 0.0
        %1596 = vmatpush2.msra.mxu0 0.0
        %1597 = vmatprep.subr.mxu0 0.0
        %1598 = vmatpush2.msra.mxu0 0.0
        %1599 = vmatprep.subr.mxu0 0.0
        %1600 = vmatpush2.msra.mxu0 0.0
        %1601 = vmatprep.subr.mxu0 0.0
        %1602 = vmatpush2.msra.mxu0 0.0
        %1603 = vmatprep.subr.mxu0 0.0
        %1604 = vmatpush2.msra.mxu0 0.0
        %1605 = vmatprep.subr.mxu0 0.0
        %1606 = vmatpush2.msra.mxu0 0.0
        %1607 = vmatprep.subr.mxu0 0.0
        %1608 = vmatpush2.msra.mxu0 0.0
        %1609 = vmatprep.subr.mxu0 0.0
        %1610 = vmatpush2.msra.mxu0 0.0
        %1611 = vmatprep.subr.mxu0 0.0
        %1612 = vmatpush2.msra.mxu0 0.0
        %1613 = vmatprep.mubr.f32.mxu0 0.0
        %1614 = vmatmul.mubr.f32.gmra.mxu0 %v1451
        %v1615 = vpop.f32.mrf.mxu0
        %v1616 = vadd.f32 0.0, %v1615
        %v1617 = vpop.f32.mrf.mxu0
        %v1618 = vadd.f32 0.0, %v1617
        %1619 = vdwg.mxu0
        %1620 = vmatprep.subr.mxu0 0.0
        %1621 = vmatpush1.msra.mxu0 0.0
        %1622 = vmatprep.subr.mxu0 0.0
        %1623 = vmatpush1.msra.mxu0 0.0
        %1624 = vmatprep.subr.mxu0 0.0
        %1625 = vmatpush1.msra.mxu0 0.0
        %1626 = vmatprep.subr.mxu0 0.0
        %1627 = vmatpush1.msra.mxu0 0.0
        %1628 = vmatprep.subr.mxu0 0.0
        %1629 = vmatpush1.msra.mxu0 0.0
        %1630 = vmatprep.subr.mxu0 0.0
        %1631 = vmatpush1.msra.mxu0 0.0
        %1632 = vmatprep.subr.mxu0 0.0
        %1633 = vmatpush1.msra.mxu0 0.0
        %1634 = vmatprep.subr.mxu0 0.0
        %1635 = vmatpush1.msra.mxu0 0.0
        %1636 = vmatprep.subr.mxu0 0.0
        %1637 = vmatpush1.msra.mxu0 0.0
        %1638 = vmatprep.subr.mxu0 0.0
        %1639 = vmatpush1.msra.mxu0 0.0
        %1640 = vmatprep.subr.mxu0 0.0
        %1641 = vmatpush1.msra.mxu0 0.0
        %1642 = vmatprep.subr.mxu0 0.0
        %1643 = vmatpush1.msra.mxu0 0.0
        %1644 = vmatprep.subr.mxu0 0.0
        %1645 = vmatpush1.msra.mxu0 0.0
        %1646 = vmatprep.subr.mxu0 0.0
        %1647 = vmatpush1.msra.mxu0 0.0
        %1648 = vmatprep.subr.mxu0 %v1470
        %1649 = vmatpush1.msra.mxu0 %v1467
        %1650 = vmatprep.subr.mxu0 %v1438
        %1651 = vmatpush1.msra.mxu0 %v1437
        %1652 = vmatprep.subr.mxu0 0.0
        %1653 = vmatpush2.msra.mxu0 0.0
        %1654 = vmatprep.subr.mxu0 0.0
        %1655 = vmatpush2.msra.mxu0 0.0
        %1656 = vmatprep.subr.mxu0 0.0
        %1657 = vmatpush2.msra.mxu0 0.0
        %1658 = vmatprep.subr.mxu0 0.0
        %1659 = vmatpush2.msra.mxu0 0.0
        %1660 = vmatprep.subr.mxu0 0.0
        %1661 = vmatpush2.msra.mxu0 0.0
        %1662 = vmatprep.subr.mxu0 0.0
        %1663 = vmatpush2.msra.mxu0 0.0
        %1664 = vmatprep.subr.mxu0 0.0
        %1665 = vmatpush2.msra.mxu0 0.0
        %1666 = vmatprep.subr.mxu0 0.0
        %1667 = vmatpush2.msra.mxu0 0.0
        %1668 = vmatprep.subr.mxu0 0.0
        %1669 = vmatpush2.msra.mxu0 0.0
        %1670 = vmatprep.subr.mxu0 0.0
        %1671 = vmatpush2.msra.mxu0 0.0
        %1672 = vmatprep.subr.mxu0 0.0
        %1673 = vmatpush2.msra.mxu0 0.0
        %1674 = vmatprep.subr.mxu0 0.0
        %1675 = vmatpush2.msra.mxu0 0.0
        %1676 = vmatprep.subr.mxu0 0.0
        %1677 = vmatpush2.msra.mxu0 0.0
        %1678 = vmatprep.subr.mxu0 0.0
        %1679 = vmatpush2.msra.mxu0 0.0
        %1680 = vmatprep.subr.mxu0 0.0
        %1681 = vmatpush2.msra.mxu0 0.0
        %1682 = vmatprep.subr.mxu0 0.0
        %1683 = vmatpush2.msra.mxu0 0.0
        %1684 = vmatprep.mubr.f32.mxu0 0.0
        %1685 = vmatmul.mubr.f32.gmra.mxu0 %v1451
        %v1686 = vpop.f32.mrf.mxu0
        %v1687 = vadd.f32 0.0, %v1686
        %v1688 = vpop.f32.mrf.mxu0
        %v1689 = vadd.f32 0.0, %v1688
        %1690 = vdwg.mxu0
        %1691 = vmatprep.subr.mxu0 0.0
        %1692 = vmatpush1.msra.mxu0 0.0
        %1693 = vmatprep.subr.mxu0 0.0
        %1694 = vmatpush1.msra.mxu0 0.0
        %1695 = vmatprep.subr.mxu0 0.0
        %1696 = vmatpush1.msra.mxu0 0.0
        %1697 = vmatprep.subr.mxu0 0.0
        %1698 = vmatpush1.msra.mxu0 0.0
        %1699 = vmatprep.subr.mxu0 0.0
        %1700 = vmatpush1.msra.mxu0 0.0
        %1701 = vmatprep.subr.mxu0 0.0
        %1702 = vmatpush1.msra.mxu0 0.0
        %1703 = vmatprep.subr.mxu0 0.0
        %1704 = vmatpush1.msra.mxu0 0.0
        %1705 = vmatprep.subr.mxu0 0.0
        %1706 = vmatpush1.msra.mxu0 0.0
        %1707 = vmatprep.subr.mxu0 0.0
        %1708 = vmatpush1.msra.mxu0 0.0
        %1709 = vmatprep.subr.mxu0 0.0
        %1710 = vmatpush1.msra.mxu0 0.0
        %1711 = vmatprep.subr.mxu0 0.0
        %1712 = vmatpush1.msra.mxu0 0.0
        %1713 = vmatprep.subr.mxu0 0.0
        %1714 = vmatpush1.msra.mxu0 0.0
        %1715 = vmatprep.subr.mxu0 0.0
        %1716 = vmatpush1.msra.mxu0 0.0
        %1717 = vmatprep.subr.mxu0 0.0
        %1718 = vmatpush1.msra.mxu0 0.0
        %1719 = vmatprep.subr.mxu0 %v1476
        %1720 = vmatpush1.msra.mxu0 %v1473
        %1721 = vmatprep.subr.mxu0 %v1440
        %1722 = vmatpush1.msra.mxu0 %v1439
        %1723 = vmatprep.subr.mxu0 0.0
        %1724 = vmatpush2.msra.mxu0 0.0
        %1725 = vmatprep.subr.mxu0 0.0
        %1726 = vmatpush2.msra.mxu0 0.0
        %1727 = vmatprep.subr.mxu0 0.0
        %1728 = vmatpush2.msra.mxu0 0.0
        %1729 = vmatprep.subr.mxu0 0.0
        %1730 = vmatpush2.msra.mxu0 0.0
        %1731 = vmatprep.subr.mxu0 0.0
        %1732 = vmatpush2.msra.mxu0 0.0
        %1733 = vmatprep.subr.mxu0 0.0
        %1734 = vmatpush2.msra.mxu0 0.0
        %1735 = vmatprep.subr.mxu0 0.0
        %1736 = vmatpush2.msra.mxu0 0.0
        %1737 = vmatprep.subr.mxu0 0.0
        %1738 = vmatpush2.msra.mxu0 0.0
        %1739 = vmatprep.subr.mxu0 0.0
        %1740 = vmatpush2.msra.mxu0 0.0
        %1741 = vmatprep.subr.mxu0 0.0
        %1742 = vmatpush2.msra.mxu0 0.0
        %1743 = vmatprep.subr.mxu0 0.0
        %1744 = vmatpush2.msra.mxu0 0.0
        %1745 = vmatprep.subr.mxu0 0.0
        %1746 = vmatpush2.msra.mxu0 0.0
        %1747 = vmatprep.subr.mxu0 0.0
        %1748 = vmatpush2.msra.mxu0 0.0
        %1749 = vmatprep.subr.mxu0 0.0
        %1750 = vmatpush2.msra.mxu0 0.0
        %1751 = vmatprep.subr.mxu0 0.0
        %1752 = vmatpush2.msra.mxu0 0.0
        %1753 = vmatprep.subr.mxu0 0.0
        %1754 = vmatpush2.msra.mxu0 0.0
        %1755 = vmatprep.mubr.f32.mxu0 0.0
        %1756 = vmatmul.mubr.f32.gmra.mxu0 %v1451
        %v1757 = vpop.f32.mrf.mxu0
        %v1758 = vadd.f32 0.0, %v1757
        %v1759 = vpop.f32.mrf.mxu0
        %v1760 = vadd.f32 0.0, %v1759
        %1761 = vdwg.mxu0
        %v1762 = vmax.f32 %v1545, 0.0
        %v1763 = vmax.f32 %v1547, 0.0
        %v1764 = vmax.f32 %v1616, 0.0
        %v1765 = vmax.f32 %v1618, 0.0
        %v1766 = vmax.f32 %v1687, 0.0
        %v1767 = vmax.f32 %v1689, 0.0
        %v1768 = vmax.f32 %v1758, 0.0
        %v1769 = vmax.f32 %v1760, 0.0
        %v1770 = vld [vmem:[%s1353] sm:$0xff]
        %v1771 = vld [vmem:[%s1353 + $0x8] sm:$0xff]
        %v1772 = vld [vmem:[%s1353 + $0x10] sm:$0xff]
        %v1773 = vld [vmem:[%s1353 + $0x18] sm:$0xff]
        %v1774 = vld [vmem:[%s1353 + $0x20] sm:$0xff]
        %v1775 = vld [vmem:[%s1353 + $0x28] sm:$0xff]
        %v1776 = vld [vmem:[%s1353 + $0x30] sm:$0xff]
        %v1777 = vld [vmem:[%s1353 + $0x38] sm:$0xff]
        %v1778 = vld [vmem:[%s1353 + $0x40] sm:$0xff]
        %v1779 = vld [vmem:[%s1353 + $0x48] sm:$0xff]
        %v1780 = vld [vmem:[%s1353 + $0x50] sm:$0xff]
        %v1781 = vld [vmem:[%s1353 + $0x58] sm:$0xff]
        %v1782 = vld [vmem:[%s1353 + $0x60] sm:$0xff]
        %v1783 = vld [vmem:[%s1353 + $0x68] sm:$0xff]
        %v1784 = vld [vmem:[%s1353 + $0x70] sm:$0xff]
        %v1785 = vld [vmem:[%s1353 + $0x78] sm:$0xff]
        %v1786 = vld [vmem:[%s1353 + $0x80] sm:$0xff]
        %v1787 = vld [vmem:[%s1353 + $0x88] sm:$0xff]
        %v1788 = vld [vmem:[%s1353 + $0x90] sm:$0xff]
        %v1789 = vld [vmem:[%s1353 + $0x98] sm:$0xff]
        %v1790 = vld [vmem:[%s1353 + $0xa0] sm:$0xff]
        %v1791 = vld [vmem:[%s1353 + $0xa8] sm:$0xff]
        %v1792 = vld [vmem:[%s1353 + $0xb0] sm:$0xff]
        %v1793 = vld [vmem:[%s1353 + $0xb8] sm:$0xff]
        %v1794 = vld [vmem:[%s1353 + $0xc0] sm:$0xff]
        %v1795 = vld [vmem:[%s1353 + $0xc8] sm:$0xff]
        %v1796 = vld [vmem:[%s1353 + $0xd0] sm:$0xff]
        %v1797 = vld [vmem:[%s1353 + $0xd8] sm:$0xff]
        %v1798 = vld [vmem:[%s1353 + $0xe0] sm:$0xff]
        %v1799 = vld [vmem:[%s1353 + $0xe8] sm:$0xff]
        %v1800 = vld [vmem:[%s1353 + $0xf0] sm:$0xff]
        %v1801 = vld [vmem:[%s1353 + $0xf8] sm:$0xff]
        %v1802 = vld [vmem:[%s1353 + $0x100] sm:$0xff]
        %v1803 = vld [vmem:[%s1353 + $0x108] sm:$0xff]
        %v1804 = vld [vmem:[%s1353 + $0x110] sm:$0xff]
        %v1805 = vld [vmem:[%s1353 + $0x118] sm:$0xff]
        %v1806 = vld [vmem:[%s1353 + $0x120] sm:$0xff]
        %v1807 = vld [vmem:[%s1353 + $0x128] sm:$0xff]
        %v1808 = vld [vmem:[%s1353 + $0x130] sm:$0xff]
        %v1809 = vld [vmem:[%s1353 + $0x138] sm:$0xff]
        %v1810 = vld [vmem:[%s1353 + $0x140] sm:$0xff]
        %v1811 = vld [vmem:[%s1353 + $0x148] sm:$0xff]
        %v1812 = vld [vmem:[%s1353 + $0x150] sm:$0xff]
        %v1813 = vld [vmem:[%s1353 + $0x158] sm:$0xff]
        %v1814 = vld [vmem:[%s1353 + $0x160] sm:$0xff]
        %v1815 = vld [vmem:[%s1353 + $0x168] sm:$0xff]
        %v1816 = vld [vmem:[%s1353 + $0x170] sm:$0xff]
        %v1817 = vld [vmem:[%s1353 + $0x178] sm:$0xff]
        %v1818 = vld [vmem:[%s1353 + $0x180] sm:$0xff]
        %v1819 = vld [vmem:[%s1353 + $0x188] sm:$0xff]
        %v1820 = vld [vmem:[%s1353 + $0x190] sm:$0xff]
        %v1821 = vld [vmem:[%s1353 + $0x198] sm:$0xff]
        %v1822 = vld [vmem:[%s1353 + $0x1a0] sm:$0xff]
        %v1823 = vld [vmem:[%s1353 + $0x1a8] sm:$0xff]
        %v1824 = vld [vmem:[%s1353 + $0x1b0] sm:$0xff]
        %v1825 = vld [vmem:[%s1353 + $0x1b8] sm:$0xff]
        %v1826 = vld [vmem:[%s1353 + $0x1c0] sm:$0xff]
        %v1827 = vld [vmem:[%s1353 + $0x1c8] sm:$0xff]
        %v1828 = vld [vmem:[%s1353 + $0x1d0] sm:$0xff]
        %v1829 = vld [vmem:[%s1353 + $0x1d8] sm:$0xff]
        %v1830 = vld [vmem:[%s1353 + $0x1e0] sm:$0xff]
        %v1831 = vld [vmem:[%s1353 + $0x1e8] sm:$0xff]
        %v1832 = vld [vmem:[%s1353 + $0x1f0] sm:$0xff]
        %v1833 = vld [vmem:[%s1353 + $0x1f8] sm:$0xff]
        %v1834 = vld [vmem:[%s1353 + $0x200] sm:$0xff]
        %v1835 = vld [vmem:[%s1353 + $0x208] sm:$0xff]
        %v1836 = vld [vmem:[%s1353 + $0x210] sm:$0xff]
        %v1837 = vld [vmem:[%s1353 + $0x218] sm:$0xff]
        %v1838 = vld [vmem:[%s1353 + $0x220] sm:$0xff]
        %v1839 = vld [vmem:[%s1353 + $0x228] sm:$0xff]
        %v1840 = vld [vmem:[%s1353 + $0x230] sm:$0xff]
        %v1841 = vld [vmem:[%s1353 + $0x238] sm:$0xff]
        %v1842 = vld [vmem:[%s1353 + $0x240] sm:$0xff]
        %v1843 = vld [vmem:[%s1353 + $0x248] sm:$0xff]
        %v1844 = vld [vmem:[%s1353 + $0x250] sm:$0xff]
        %v1845 = vld [vmem:[%s1353 + $0x258] sm:$0xff]
        %v1846 = vld [vmem:[%s1353 + $0x260] sm:$0xff]
        %v1847 = vld [vmem:[%s1353 + $0x268] sm:$0xff]
        %v1848 = vld [vmem:[%s1353 + $0x270] sm:$0xff]
        %v1849 = vld [vmem:[%s1353 + $0x278] sm:$0xff]
        %v1850 = vld [vmem:[%s1353 + $0x280] sm:$0xff]
        %v1851 = vld [vmem:[%s1353 + $0x288] sm:$0xff]
        %v1852 = vld [vmem:[%s1353 + $0x290] sm:$0xff]
        %v1853 = vld [vmem:[%s1353 + $0x298] sm:$0xff]
        %v1854 = vld [vmem:[%s1353 + $0x2a0] sm:$0xff]
        %v1855 = vld [vmem:[%s1353 + $0x2a8] sm:$0xff]
        %v1856 = vld [vmem:[%s1353 + $0x2b0] sm:$0xff]
        %v1857 = vld [vmem:[%s1353 + $0x2b8] sm:$0xff]
        %v1858 = vld [vmem:[%s1353 + $0x2c0] sm:$0xff]
        %v1859 = vld [vmem:[%s1353 + $0x2c8] sm:$0xff]
        %v1860 = vld [vmem:[%s1353 + $0x2d0] sm:$0xff]
        %v1861 = vld [vmem:[%s1353 + $0x2d8] sm:$0xff]
        %v1862 = vld [vmem:[%s1353 + $0x2e0] sm:$0xff]
        %v1863 = vld [vmem:[%s1353 + $0x2e8] sm:$0xff]
        %v1864 = vld [vmem:[%s1353 + $0x2f0] sm:$0xff]
        %v1865 = vld [vmem:[%s1353 + $0x2f8] sm:$0xff]
        %v1866 = vld [vmem:[%s1353 + $0x300] sm:$0xff]
        %v1867 = vld [vmem:[%s1353 + $0x308] sm:$0xff]
        %v1868 = vld [vmem:[%s1353 + $0x310] sm:$0xff]
        %v1869 = vld [vmem:[%s1353 + $0x318] sm:$0xff]
        %v1870 = vld [vmem:[%s1353 + $0x320] sm:$0xff]
        %v1871 = vld [vmem:[%s1353 + $0x328] sm:$0xff]
        %v1872 = vld [vmem:[%s1353 + $0x330] sm:$0xff]
        %v1873 = vld [vmem:[%s1353 + $0x338] sm:$0xff]
        %v1874 = vld [vmem:[%s1353 + $0x340] sm:$0xff]
        %v1875 = vld [vmem:[%s1353 + $0x348] sm:$0xff]
        %v1876 = vld [vmem:[%s1353 + $0x350] sm:$0xff]
        %v1877 = vld [vmem:[%s1353 + $0x358] sm:$0xff]
        %v1878 = vld [vmem:[%s1353 + $0x360] sm:$0xff]
        %v1879 = vld [vmem:[%s1353 + $0x368] sm:$0xff]
        %v1880 = vld [vmem:[%s1353 + $0x370] sm:$0xff]
        %v1881 = vld [vmem:[%s1353 + $0x378] sm:$0xff]
        %v1882 = vld [vmem:[%s1353 + $0x380] sm:$0xff]
        %v1883 = vld [vmem:[%s1353 + $0x388] sm:$0xff]
        %v1884 = vld [vmem:[%s1353 + $0x390] sm:$0xff]
        %v1885 = vld [vmem:[%s1353 + $0x398] sm:$0xff]
        %v1886 = vld [vmem:[%s1353 + $0x3a0] sm:$0xff]
        %v1887 = vld [vmem:[%s1353 + $0x3a8] sm:$0xff]
        %v1888 = vld [vmem:[%s1353 + $0x3b0] sm:$0xff]
        %v1889 = vld [vmem:[%s1353 + $0x3b8] sm:$0xff]
        %v1890 = vld [vmem:[%s1353 + $0x3c0] sm:$0xff]
        %v1891 = vld [vmem:[%s1353 + $0x3c8] sm:$0xff]
        %v1892 = vld [vmem:[%s1353 + $0x3d0] sm:$0xff]
        %v1893 = vld [vmem:[%s1353 + $0x3d8] sm:$0xff]
        %v1894 = vld [vmem:[%s1353 + $0x3e0] sm:$0xff]
        %v1895 = vld [vmem:[%s1353 + $0x3e8] sm:$0xff]
        %v1896 = vld [vmem:[%s1353 + $0x3f0] sm:$0xff]
        %v1897 = vld [vmem:[%s1353 + $0x3f8] sm:$0xff]
        %v1898 = vld [vmem:[%s1353 + $0x400] sm:$0xff]
        %v1899 = vld [vmem:[%s1353 + $0x408] sm:$0xff]
        %v1900 = vld [vmem:[%s1353 + $0x410] sm:$0xff]
        %v1901 = vld [vmem:[%s1353 + $0x418] sm:$0xff]
        %v1902 = vld [vmem:[%s1353 + $0x420] sm:$0xff]
        %v1903 = vld [vmem:[%s1353 + $0x428] sm:$0xff]
        %v1904 = vld [vmem:[%s1353 + $0x430] sm:$0xff]
        %v1905 = vld [vmem:[%s1353 + $0x438] sm:$0xff]
        %v1906 = vld [vmem:[%s1353 + $0x440] sm:$0xff]
        %v1907 = vld [vmem:[%s1353 + $0x448] sm:$0xff]
        %v1908 = vld [vmem:[%s1353 + $0x450] sm:$0xff]
        %v1909 = vld [vmem:[%s1353 + $0x458] sm:$0xff]
        %v1910 = vld [vmem:[%s1353 + $0x460] sm:$0xff]
        %v1911 = vld [vmem:[%s1353 + $0x468] sm:$0xff]
        %v1912 = vld [vmem:[%s1353 + $0x470] sm:$0xff]
        %v1913 = vld [vmem:[%s1353 + $0x478] sm:$0xff]
        %v1914 = vld [vmem:[%s1353 + $0x480] sm:$0xff]
        %v1915 = vld [vmem:[%s1353 + $0x488] sm:$0xff]
        %v1916 = vld [vmem:[%s1353 + $0x490] sm:$0xff]
        %v1917 = vld [vmem:[%s1353 + $0x498] sm:$0xff]
        %v1918 = vld [vmem:[%s1353 + $0x4a0] sm:$0xff]
        %v1919 = vld [vmem:[%s1353 + $0x4a8] sm:$0xff]
        %v1920 = vld [vmem:[%s1353 + $0x4b0] sm:$0xff]
        %v1921 = vld [vmem:[%s1353 + $0x4b8] sm:$0xff]
        %v1922 = vld [vmem:[%s1353 + $0x4c0] sm:$0xff]
        %v1923 = vld [vmem:[%s1353 + $0x4c8] sm:$0xff]
        %v1924 = vld [vmem:[%s1353 + $0x4d0] sm:$0xff]
        %v1925 = vld [vmem:[%s1353 + $0x4d8] sm:$0xff]
        %v1926 = vld [vmem:[%s1353 + $0x4e0] sm:$0xff]
        %v1927 = vld [vmem:[%s1353 + $0x4e8] sm:$0xff]
        %v1928 = vld [vmem:[%s1353 + $0x4f0] sm:$0xff]
        %v1929 = vld [vmem:[%s1353 + $0x4f8] sm:$0xff]
        %v1930 = vld [vmem:[%s1353 + $0x500] sm:$0xff]
        %v1931 = vld [vmem:[%s1353 + $0x508] sm:$0xff]
        %v1932 = vld [vmem:[%s1353 + $0x510] sm:$0xff]
        %v1933 = vld [vmem:[%s1353 + $0x518] sm:$0xff]
        %v1934 = vld [vmem:[%s1353 + $0x520] sm:$0xff]
        %v1935 = vld [vmem:[%s1353 + $0x528] sm:$0xff]
        %v1936 = vld [vmem:[%s1353 + $0x530] sm:$0xff]
        %v1937 = vld [vmem:[%s1353 + $0x538] sm:$0xff]
        %v1938 = vld [vmem:[%s1353 + $0x540] sm:$0xff]
        %v1939 = vld [vmem:[%s1353 + $0x548] sm:$0xff]
        %v1940 = vld [vmem:[%s1353 + $0x550] sm:$0xff]
        %v1941 = vld [vmem:[%s1353 + $0x558] sm:$0xff]
        %v1942 = vld [vmem:[%s1353 + $0x560] sm:$0xff]
        %v1943 = vld [vmem:[%s1353 + $0x568] sm:$0xff]
        %v1944 = vld [vmem:[%s1353 + $0x570] sm:$0xff]
        %v1945 = vld [vmem:[%s1353 + $0x578] sm:$0xff]
        %v1946 = vld [vmem:[%s1353 + $0x580] sm:$0xff]
        %v1947 = vld [vmem:[%s1353 + $0x588] sm:$0xff]
        %v1948 = vld [vmem:[%s1353 + $0x590] sm:$0xff]
        %v1949 = vld [vmem:[%s1353 + $0x598] sm:$0xff]
        %v1950 = vld [vmem:[%s1353 + $0x5a0] sm:$0xff]
        %v1951 = vld [vmem:[%s1353 + $0x5a8] sm:$0xff]
        %v1952 = vld [vmem:[%s1353 + $0x5b0] sm:$0xff]
        %v1953 = vld [vmem:[%s1353 + $0x5b8] sm:$0xff]
        %v1954 = vld [vmem:[%s1353 + $0x5c0] sm:$0xff]
        %v1955 = vld [vmem:[%s1353 + $0x5c8] sm:$0xff]
        %v1956 = vld [vmem:[%s1353 + $0x5d0] sm:$0xff]
        %v1957 = vld [vmem:[%s1353 + $0x5d8] sm:$0xff]
        %v1958 = vld [vmem:[%s1353 + $0x5e0] sm:$0xff]
        %v1959 = vld [vmem:[%s1353 + $0x5e8] sm:$0xff]
        %v1960 = vld [vmem:[%s1353 + $0x5f0] sm:$0xff]
        %v1961 = vld [vmem:[%s1353 + $0x5f8] sm:$0xff]
        %v1962 = vld [vmem:[%s1353 + $0x600] sm:$0xff]
        %v1963 = vld [vmem:[%s1353 + $0x608] sm:$0xff]
        %v1964 = vld [vmem:[%s1353 + $0x610] sm:$0xff]
        %v1965 = vld [vmem:[%s1353 + $0x618] sm:$0xff]
        %v1966 = vld [vmem:[%s1353 + $0x620] sm:$0xff]
        %v1967 = vld [vmem:[%s1353 + $0x628] sm:$0xff]
        %v1968 = vld [vmem:[%s1353 + $0x630] sm:$0xff]
        %v1969 = vld [vmem:[%s1353 + $0x638] sm:$0xff]
        %v1970 = vld [vmem:[%s1353 + $0x640] sm:$0xff]
        %v1971 = vld [vmem:[%s1353 + $0x648] sm:$0xff]
        %v1972 = vld [vmem:[%s1353 + $0x650] sm:$0xff]
        %v1973 = vld [vmem:[%s1353 + $0x658] sm:$0xff]
        %v1974 = vld [vmem:[%s1353 + $0x660] sm:$0xff]
        %v1975 = vld [vmem:[%s1353 + $0x668] sm:$0xff]
        %v1976 = vld [vmem:[%s1353 + $0x670] sm:$0xff]
        %v1977 = vld [vmem:[%s1353 + $0x678] sm:$0xff]
        %v1978 = vld [vmem:[%s1353 + $0x680] sm:$0xff]
        %v1979 = vld [vmem:[%s1353 + $0x688] sm:$0xff]
        %v1980 = vld [vmem:[%s1353 + $0x690] sm:$0xff]
        %v1981 = vld [vmem:[%s1353 + $0x698] sm:$0xff]
        %v1982 = vld [vmem:[%s1353 + $0x6a0] sm:$0xff]
        %v1983 = vld [vmem:[%s1353 + $0x6a8] sm:$0xff]
        %v1984 = vld [vmem:[%s1353 + $0x6b0] sm:$0xff]
        %v1985 = vld [vmem:[%s1353 + $0x6b8] sm:$0xff]
        %v1986 = vld [vmem:[%s1353 + $0x6c0] sm:$0xff]
        %v1987 = vld [vmem:[%s1353 + $0x6c8] sm:$0xff]
        %v1988 = vld [vmem:[%s1353 + $0x6d0] sm:$0xff]
        %v1989 = vld [vmem:[%s1353 + $0x6d8] sm:$0xff]
        %v1990 = vld [vmem:[%s1353 + $0x6e0] sm:$0xff]
        %v1991 = vld [vmem:[%s1353 + $0x6e8] sm:$0xff]
        %v1992 = vld [vmem:[%s1353 + $0x6f0] sm:$0xff]
        %v1993 = vld [vmem:[%s1353 + $0x6f8] sm:$0xff]
        %v1994 = vld [vmem:[%s1353 + $0x700] sm:$0xff]
        %v1995 = vld [vmem:[%s1353 + $0x708] sm:$0xff]
        %v1996 = vld [vmem:[%s1353 + $0x710] sm:$0xff]
        %v1997 = vld [vmem:[%s1353 + $0x718] sm:$0xff]
        %v1998 = vld [vmem:[%s1353 + $0x720] sm:$0xff]
        %v1999 = vld [vmem:[%s1353 + $0x728] sm:$0xff]
        %v2000 = vld [vmem:[%s1353 + $0x730] sm:$0xff]
        %v2001 = vld [vmem:[%s1353 + $0x738] sm:$0xff]
        %v2002 = vld [vmem:[%s1353 + $0x740] sm:$0xff]
        %v2003 = vld [vmem:[%s1353 + $0x748] sm:$0xff]
        %v2004 = vld [vmem:[%s1353 + $0x750] sm:$0xff]
        %v2005 = vld [vmem:[%s1353 + $0x758] sm:$0xff]
        %v2006 = vld [vmem:[%s1353 + $0x760] sm:$0xff]
        %v2007 = vld [vmem:[%s1353 + $0x768] sm:$0xff]
        %v2008 = vld [vmem:[%s1353 + $0x770] sm:$0xff]
        %v2009 = vld [vmem:[%s1353 + $0x778] sm:$0xff]
        %v2010 = vld [vmem:[%s1353 + $0x780] sm:$0xff]
        %v2011 = vld [vmem:[%s1353 + $0x788] sm:$0xff]
        %v2012 = vld [vmem:[%s1353 + $0x790] sm:$0xff]
        %v2013 = vld [vmem:[%s1353 + $0x798] sm:$0xff]
        %v2014 = vld [vmem:[%s1353 + $0x7a0] sm:$0xff]
        %v2015 = vld [vmem:[%s1353 + $0x7a8] sm:$0xff]
        %v2016 = vld [vmem:[%s1353 + $0x7b0] sm:$0xff]
        %v2017 = vld [vmem:[%s1353 + $0x7b8] sm:$0xff]
        %v2018 = vld [vmem:[%s1353 + $0x7c0] sm:$0xff]
        %v2019 = vld [vmem:[%s1353 + $0x7c8] sm:$0xff]
        %v2020 = vld [vmem:[%s1353 + $0x7d0] sm:$0xff]
        %v2021 = vld [vmem:[%s1353 + $0x7d8] sm:$0xff]
        %v2022 = vld [vmem:[%s1353 + $0x7e0] sm:$0xff]
        %v2023 = vld [vmem:[%s1353 + $0x7e8] sm:$0xff]
        %v2024 = vld [vmem:[%s1353 + $0x7f0] sm:$0xff]
        %v2025 = vld [vmem:[%s1353 + $0x7f8] sm:$0xff]
        %v2026 = vld [vmem:[%s1353 + $0x800] sm:$0xff]
        %v2027 = vld [vmem:[%s1353 + $0x808] sm:$0xff]
        %v2028 = vld [vmem:[%s1353 + $0x810] sm:$0xff]
        %v2029 = vld [vmem:[%s1353 + $0x818] sm:$0xff]
        %v2030 = vld [vmem:[%s1353 + $0x820] sm:$0xff]
        %v2031 = vld [vmem:[%s1353 + $0x828] sm:$0xff]
        %v2032 = vld [vmem:[%s1353 + $0x830] sm:$0xff]
        %v2033 = vld [vmem:[%s1353 + $0x838] sm:$0xff]
        %v2034 = vld [vmem:[%s1353 + $0x840] sm:$0xff]
        %v2035 = vld [vmem:[%s1353 + $0x848] sm:$0xff]
        %v2036 = vld [vmem:[%s1353 + $0x850] sm:$0xff]
        %v2037 = vld [vmem:[%s1353 + $0x858] sm:$0xff]
        %v2038 = vld [vmem:[%s1353 + $0x860] sm:$0xff]
        %v2039 = vld [vmem:[%s1353 + $0x868] sm:$0xff]
        %v2040 = vld [vmem:[%s1353 + $0x870] sm:$0xff]
        %v2041 = vld [vmem:[%s1353 + $0x878] sm:$0xff]
        %v2042 = vld [vmem:[%s1353 + $0x880] sm:$0xff]
        %v2043 = vld [vmem:[%s1353 + $0x888] sm:$0xff]
        %v2044 = vld [vmem:[%s1353 + $0x890] sm:$0xff]
        %v2045 = vld [vmem:[%s1353 + $0x898] sm:$0xff]
        %v2046 = vld [vmem:[%s1353 + $0x8a0] sm:$0xff]
        %v2047 = vld [vmem:[%s1353 + $0x8a8] sm:$0xff]
        %v2048 = vld [vmem:[%s1353 + $0x8b0] sm:$0xff]
        %v2049 = vld [vmem:[%s1353 + $0x8b8] sm:$0xff]
        %v2050 = vld [vmem:[%s1353 + $0x8c0] sm:$0xff]
        %v2051 = vld [vmem:[%s1353 + $0x8c8] sm:$0xff]
        %v2052 = vld [vmem:[%s1353 + $0x8d0] sm:$0xff]
        %v2053 = vld [vmem:[%s1353 + $0x8d8] sm:$0xff]
        %v2054 = vld [vmem:[%s1353 + $0x8e0] sm:$0xff]
        %v2055 = vld [vmem:[%s1353 + $0x8e8] sm:$0xff]
        %v2056 = vld [vmem:[%s1353 + $0x8f0] sm:$0xff]
        %v2057 = vld [vmem:[%s1353 + $0x8f8] sm:$0xff]
        %v2058 = vld [vmem:[%s1353 + $0x900] sm:$0xff]
        %v2059 = vld [vmem:[%s1353 + $0x908] sm:$0xff]
        %v2060 = vld [vmem:[%s1353 + $0x910] sm:$0xff]
        %v2061 = vld [vmem:[%s1353 + $0x918] sm:$0xff]
        %v2062 = vld [vmem:[%s1353 + $0x920] sm:$0xff]
        %v2063 = vld [vmem:[%s1353 + $0x928] sm:$0xff]
        %v2064 = vld [vmem:[%s1353 + $0x930] sm:$0xff]
        %v2065 = vld [vmem:[%s1353 + $0x938] sm:$0xff]
        %v2066 = vld [vmem:[%s1353 + $0x940] sm:$0xff]
        %v2067 = vld [vmem:[%s1353 + $0x948] sm:$0xff]
        %v2068 = vld [vmem:[%s1353 + $0x950] sm:$0xff]
        %v2069 = vld [vmem:[%s1353 + $0x958] sm:$0xff]
        %v2070 = vld [vmem:[%s1353 + $0x960] sm:$0xff]
        %v2071 = vld [vmem:[%s1353 + $0x968] sm:$0xff]
        %v2072 = vld [vmem:[%s1353 + $0x970] sm:$0xff]
        %v2073 = vld [vmem:[%s1353 + $0x978] sm:$0xff]
        %v2074 = vld [vmem:[%s1353 + $0x980] sm:$0xff]
        %v2075 = vld [vmem:[%s1353 + $0x988] sm:$0xff]
        %v2076 = vld [vmem:[%s1353 + $0x990] sm:$0xff]
        %v2077 = vld [vmem:[%s1353 + $0x998] sm:$0xff]
        %v2078 = vld [vmem:[%s1353 + $0x9a0] sm:$0xff]
        %v2079 = vld [vmem:[%s1353 + $0x9a8] sm:$0xff]
        %v2080 = vld [vmem:[%s1353 + $0x9b0] sm:$0xff]
        %v2081 = vld [vmem:[%s1353 + $0x9b8] sm:$0xff]
        %v2082 = vld [vmem:[%s1353 + $0x9c0] sm:$0xff]
        %v2083 = vld [vmem:[%s1353 + $0x9c8] sm:$0xff]
        %v2084 = vld [vmem:[%s1353 + $0x9d0] sm:$0xff]
        %v2085 = vld [vmem:[%s1353 + $0x9d8] sm:$0xff]
        %v2086 = vld [vmem:[%s1353 + $0x9e0] sm:$0xff]
        %v2087 = vld [vmem:[%s1353 + $0x9e8] sm:$0xff]
        %v2088 = vld [vmem:[%s1353 + $0x9f0] sm:$0xff]
        %v2089 = vld [vmem:[%s1353 + $0x9f8] sm:$0xff]
        %v2090 = vld [vmem:[%s1353 + $0xa00] sm:$0xff]
        %v2091 = vld [vmem:[%s1353 + $0xa08] sm:$0xff]
        %v2092 = vld [vmem:[%s1353 + $0xa10] sm:$0xff]
        %v2093 = vld [vmem:[%s1353 + $0xa18] sm:$0xff]
        %v2094 = vld [vmem:[%s1353 + $0xa20] sm:$0xff]
        %v2095 = vld [vmem:[%s1353 + $0xa28] sm:$0xff]
        %v2096 = vld [vmem:[%s1353 + $0xa30] sm:$0xff]
        %v2097 = vld [vmem:[%s1353 + $0xa38] sm:$0xff]
        %v2098 = vld [vmem:[%s1353 + $0xa40] sm:$0xff]
        %v2099 = vld [vmem:[%s1353 + $0xa48] sm:$0xff]
        %v2100 = vld [vmem:[%s1353 + $0xa50] sm:$0xff]
        %v2101 = vld [vmem:[%s1353 + $0xa58] sm:$0xff]
        %v2102 = vld [vmem:[%s1353 + $0xa60] sm:$0xff]
        %v2103 = vld [vmem:[%s1353 + $0xa68] sm:$0xff]
        %v2104 = vld [vmem:[%s1353 + $0xa70] sm:$0xff]
        %v2105 = vld [vmem:[%s1353 + $0xa78] sm:$0xff]
        %v2106 = vld [vmem:[%s1353 + $0xa80] sm:$0xff]
        %v2107 = vld [vmem:[%s1353 + $0xa88] sm:$0xff]
        %v2108 = vld [vmem:[%s1353 + $0xa90] sm:$0xff]
        %v2109 = vld [vmem:[%s1353 + $0xa98] sm:$0xff]
        %v2110 = vld [vmem:[%s1353 + $0xaa0] sm:$0xff]
        %v2111 = vld [vmem:[%s1353 + $0xaa8] sm:$0xff]
        %v2112 = vld [vmem:[%s1353 + $0xab0] sm:$0xff]
        %v2113 = vld [vmem:[%s1353 + $0xab8] sm:$0xff]
        %v2114 = vld [vmem:[%s1353 + $0xac0] sm:$0xff]
        %v2115 = vld [vmem:[%s1353 + $0xac8] sm:$0xff]
        %v2116 = vld [vmem:[%s1353 + $0xad0] sm:$0xff]
        %v2117 = vld [vmem:[%s1353 + $0xad8] sm:$0xff]
        %v2118 = vld [vmem:[%s1353 + $0xae0] sm:$0xff]
        %v2119 = vld [vmem:[%s1353 + $0xae8] sm:$0xff]
        %v2120 = vld [vmem:[%s1353 + $0xaf0] sm:$0xff]
        %v2121 = vld [vmem:[%s1353 + $0xaf8] sm:$0xff]
        %v2122 = vld [vmem:[%s1353 + $0xb00] sm:$0xff]
        %v2123 = vld [vmem:[%s1353 + $0xb08] sm:$0xff]
        %v2124 = vld [vmem:[%s1353 + $0xb10] sm:$0xff]
        %v2125 = vld [vmem:[%s1353 + $0xb18] sm:$0xff]
        %v2126 = vld [vmem:[%s1353 + $0xb20] sm:$0xff]
        %v2127 = vld [vmem:[%s1353 + $0xb28] sm:$0xff]
        %v2128 = vld [vmem:[%s1353 + $0xb30] sm:$0xff]
        %v2129 = vld [vmem:[%s1353 + $0xb38] sm:$0xff]
        %v2130 = vld [vmem:[%s1353 + $0xb40] sm:$0xff]
        %v2131 = vld [vmem:[%s1353 + $0xb48] sm:$0xff]
        %v2132 = vld [vmem:[%s1353 + $0xb50] sm:$0xff]
        %v2133 = vld [vmem:[%s1353 + $0xb58] sm:$0xff]
        %v2134 = vld [vmem:[%s1353 + $0xb60] sm:$0xff]
        %v2135 = vld [vmem:[%s1353 + $0xb68] sm:$0xff]
        %v2136 = vld [vmem:[%s1353 + $0xb70] sm:$0xff]
        %v2137 = vld [vmem:[%s1353 + $0xb78] sm:$0xff]
        %v2138 = vld [vmem:[%s1353 + $0xb80] sm:$0xff]
        %v2139 = vld [vmem:[%s1353 + $0xb88] sm:$0xff]
        %v2140 = vld [vmem:[%s1353 + $0xb90] sm:$0xff]
        %v2141 = vld [vmem:[%s1353 + $0xb98] sm:$0xff]
        %v2142 = vld [vmem:[%s1353 + $0xba0] sm:$0xff]
        %v2143 = vld [vmem:[%s1353 + $0xba8] sm:$0xff]
        %v2144 = vld [vmem:[%s1353 + $0xbb0] sm:$0xff]
        %v2145 = vld [vmem:[%s1353 + $0xbb8] sm:$0xff]
        %v2146 = vld [vmem:[%s1353 + $0xbc0] sm:$0xff]
        %v2147 = vld [vmem:[%s1353 + $0xbc8] sm:$0xff]
        %v2148 = vld [vmem:[%s1353 + $0xbd0] sm:$0xff]
        %v2149 = vld [vmem:[%s1353 + $0xbd8] sm:$0xff]
        %v2150 = vld [vmem:[%s1353 + $0xbe0] sm:$0xff]
        %v2151 = vld [vmem:[%s1353 + $0xbe8] sm:$0xff]
        %v2152 = vld [vmem:[%s1353 + $0xbf0] sm:$0xff]
        %v2153 = vld [vmem:[%s1353 + $0xbf8] sm:$0xff]
        %v2154 = vld [vmem:[%s1353 + $0xc00] sm:$0xff]
        %v2155 = vld [vmem:[%s1353 + $0xc08] sm:$0xff]
        %v2156 = vld [vmem:[%s1353 + $0xc10] sm:$0xff]
        %v2157 = vld [vmem:[%s1353 + $0xc18] sm:$0xff]
        %v2158 = vld [vmem:[%s1353 + $0xc20] sm:$0xff]
        %v2159 = vld [vmem:[%s1353 + $0xc28] sm:$0xff]
        %v2160 = vld [vmem:[%s1353 + $0xc30] sm:$0xff]
        %v2161 = vld [vmem:[%s1353 + $0xc38] sm:$0xff]
        %v2162 = vld [vmem:[%s1353 + $0xc40] sm:$0xff]
        %v2163 = vld [vmem:[%s1353 + $0xc48] sm:$0xff]
        %v2164 = vld [vmem:[%s1353 + $0xc50] sm:$0xff]
        %v2165 = vld [vmem:[%s1353 + $0xc58] sm:$0xff]
        %v2166 = vld [vmem:[%s1353 + $0xc60] sm:$0xff]
        %v2167 = vld [vmem:[%s1353 + $0xc68] sm:$0xff]
        %v2168 = vld [vmem:[%s1353 + $0xc70] sm:$0xff]
        %v2169 = vld [vmem:[%s1353 + $0xc78] sm:$0xff]
        %v2170 = vld [vmem:[%s1353 + $0xc80] sm:$0xff]
        %v2171 = vld [vmem:[%s1353 + $0xc88] sm:$0xff]
        %v2172 = vld [vmem:[%s1353 + $0xc90] sm:$0xff]
        %v2173 = vld [vmem:[%s1353 + $0xc98] sm:$0xff]
        %v2174 = vld [vmem:[%s1353 + $0xca0] sm:$0xff]
        %v2175 = vld [vmem:[%s1353 + $0xca8] sm:$0xff]
        %v2176 = vld [vmem:[%s1353 + $0xcb0] sm:$0xff]
        %v2177 = vld [vmem:[%s1353 + $0xcb8] sm:$0xff]
        %v2178 = vld [vmem:[%s1353 + $0xcc0] sm:$0xff]
        %v2179 = vld [vmem:[%s1353 + $0xcc8] sm:$0xff]
        %v2180 = vld [vmem:[%s1353 + $0xcd0] sm:$0xff]
        %v2181 = vld [vmem:[%s1353 + $0xcd8] sm:$0xff]
        %v2182 = vld [vmem:[%s1353 + $0xce0] sm:$0xff]
        %v2183 = vld [vmem:[%s1353 + $0xce8] sm:$0xff]
        %v2184 = vld [vmem:[%s1353 + $0xcf0] sm:$0xff]
        %v2185 = vld [vmem:[%s1353 + $0xcf8] sm:$0xff]
        %v2186 = vld [vmem:[%s1353 + $0xd00] sm:$0xff]
        %v2187 = vld [vmem:[%s1353 + $0xd08] sm:$0xff]
        %v2188 = vld [vmem:[%s1353 + $0xd10] sm:$0xff]
        %v2189 = vld [vmem:[%s1353 + $0xd18] sm:$0xff]
        %v2190 = vld [vmem:[%s1353 + $0xd20] sm:$0xff]
        %v2191 = vld [vmem:[%s1353 + $0xd28] sm:$0xff]
        %v2192 = vld [vmem:[%s1353 + $0xd30] sm:$0xff]
        %v2193 = vld [vmem:[%s1353 + $0xd38] sm:$0xff]
        %v2194 = vld [vmem:[%s1353 + $0xd40] sm:$0xff]
        %v2195 = vld [vmem:[%s1353 + $0xd48] sm:$0xff]
        %v2196 = vld [vmem:[%s1353 + $0xd50] sm:$0xff]
        %v2197 = vld [vmem:[%s1353 + $0xd58] sm:$0xff]
        %v2198 = vld [vmem:[%s1353 + $0xd60] sm:$0xff]
        %v2199 = vld [vmem:[%s1353 + $0xd68] sm:$0xff]
        %v2200 = vld [vmem:[%s1353 + $0xd70] sm:$0xff]
        %v2201 = vld [vmem:[%s1353 + $0xd78] sm:$0xff]
        %v2202 = vld [vmem:[%s1353 + $0xd80] sm:$0xff]
        %v2203 = vld [vmem:[%s1353 + $0xd88] sm:$0xff]
        %v2204 = vld [vmem:[%s1353 + $0xd90] sm:$0xff]
        %v2205 = vld [vmem:[%s1353 + $0xd98] sm:$0xff]
        %v2206 = vld [vmem:[%s1353 + $0xda0] sm:$0xff]
        %v2207 = vld [vmem:[%s1353 + $0xda8] sm:$0xff]
        %v2208 = vld [vmem:[%s1353 + $0xdb0] sm:$0xff]
        %v2209 = vld [vmem:[%s1353 + $0xdb8] sm:$0xff]
        %v2210 = vld [vmem:[%s1353 + $0xdc0] sm:$0xff]
        %v2211 = vld [vmem:[%s1353 + $0xdc8] sm:$0xff]
        %v2212 = vld [vmem:[%s1353 + $0xdd0] sm:$0xff]
        %v2213 = vld [vmem:[%s1353 + $0xdd8] sm:$0xff]
        %v2214 = vld [vmem:[%s1353 + $0xde0] sm:$0xff]
        %v2215 = vld [vmem:[%s1353 + $0xde8] sm:$0xff]
        %v2216 = vld [vmem:[%s1353 + $0xdf0] sm:$0xff]
        %v2217 = vld [vmem:[%s1353 + $0xdf8] sm:$0xff]
        %v2218 = vld [vmem:[%s1353 + $0xe00] sm:$0xff]
        %v2219 = vld [vmem:[%s1353 + $0xe08] sm:$0xff]
        %v2220 = vld [vmem:[%s1353 + $0xe10] sm:$0xff]
        %v2221 = vld [vmem:[%s1353 + $0xe18] sm:$0xff]
        %v2222 = vld [vmem:[%s1353 + $0xe20] sm:$0xff]
        %v2223 = vld [vmem:[%s1353 + $0xe28] sm:$0xff]
        %v2224 = vld [vmem:[%s1353 + $0xe30] sm:$0xff]
        %v2225 = vld [vmem:[%s1353 + $0xe38] sm:$0xff]
        %v2226 = vld [vmem:[%s1353 + $0xe40] sm:$0xff]
        %v2227 = vld [vmem:[%s1353 + $0xe48] sm:$0xff]
        %v2228 = vld [vmem:[%s1353 + $0xe50] sm:$0xff]
        %v2229 = vld [vmem:[%s1353 + $0xe58] sm:$0xff]
        %v2230 = vld [vmem:[%s1353 + $0xe60] sm:$0xff]
        %v2231 = vld [vmem:[%s1353 + $0xe68] sm:$0xff]
        %v2232 = vld [vmem:[%s1353 + $0xe70] sm:$0xff]
        %v2233 = vld [vmem:[%s1353 + $0xe78] sm:$0xff]
        %v2234 = vld [vmem:[%s1353 + $0xe80] sm:$0xff]
        %v2235 = vld [vmem:[%s1353 + $0xe88] sm:$0xff]
        %v2236 = vld [vmem:[%s1353 + $0xe90] sm:$0xff]
        %v2237 = vld [vmem:[%s1353 + $0xe98] sm:$0xff]
        %v2238 = vld [vmem:[%s1353 + $0xea0] sm:$0xff]
        %v2239 = vld [vmem:[%s1353 + $0xea8] sm:$0xff]
        %v2240 = vld [vmem:[%s1353 + $0xeb0] sm:$0xff]
        %v2241 = vld [vmem:[%s1353 + $0xeb8] sm:$0xff]
        %v2242 = vld [vmem:[%s1353 + $0xec0] sm:$0xff]
        %v2243 = vld [vmem:[%s1353 + $0xec8] sm:$0xff]
        %v2244 = vld [vmem:[%s1353 + $0xed0] sm:$0xff]
        %v2245 = vld [vmem:[%s1353 + $0xed8] sm:$0xff]
        %v2246 = vld [vmem:[%s1353 + $0xee0] sm:$0xff]
        %v2247 = vld [vmem:[%s1353 + $0xee8] sm:$0xff]
        %v2248 = vld [vmem:[%s1353 + $0xef0] sm:$0xff]
        %v2249 = vld [vmem:[%s1353 + $0xef8] sm:$0xff]
        %v2250 = vld [vmem:[%s1353 + $0xf00] sm:$0xff]
        %v2251 = vld [vmem:[%s1353 + $0xf08] sm:$0xff]
        %v2252 = vld [vmem:[%s1353 + $0xf10] sm:$0xff]
        %v2253 = vld [vmem:[%s1353 + $0xf18] sm:$0xff]
        %v2254 = vld [vmem:[%s1353 + $0xf20] sm:$0xff]
        %v2255 = vld [vmem:[%s1353 + $0xf28] sm:$0xff]
        %v2256 = vld [vmem:[%s1353 + $0xf30] sm:$0xff]
        %v2257 = vld [vmem:[%s1353 + $0xf38] sm:$0xff]
        %v2258 = vld [vmem:[%s1353 + $0xf40] sm:$0xff]
        %v2259 = vld [vmem:[%s1353 + $0xf48] sm:$0xff]
        %v2260 = vld [vmem:[%s1353 + $0xf50] sm:$0xff]
        %v2261 = vld [vmem:[%s1353 + $0xf58] sm:$0xff]
        %v2262 = vld [vmem:[%s1353 + $0xf60] sm:$0xff]
        %v2263 = vld [vmem:[%s1353 + $0xf68] sm:$0xff]
        %v2264 = vld [vmem:[%s1353 + $0xf70] sm:$0xff]
        %v2265 = vld [vmem:[%s1353 + $0xf78] sm:$0xff]
        %v2266 = vld [vmem:[%s1353 + $0xf80] sm:$0xff]
        %v2267 = vld [vmem:[%s1353 + $0xf88] sm:$0xff]
        %v2268 = vld [vmem:[%s1353 + $0xf90] sm:$0xff]
        %v2269 = vld [vmem:[%s1353 + $0xf98] sm:$0xff]
        %v2270 = vld [vmem:[%s1353 + $0xfa0] sm:$0xff]
        %v2271 = vld [vmem:[%s1353 + $0xfa8] sm:$0xff]
        %v2272 = vld [vmem:[%s1353 + $0xfb0] sm:$0xff]
        %v2273 = vld [vmem:[%s1353 + $0xfb8] sm:$0xff]
        %v2274 = vld [vmem:[%s1353 + $0xfc0] sm:$0xff]
        %v2275 = vld [vmem:[%s1353 + $0xfc8] sm:$0xff]
        %v2276 = vld [vmem:[%s1353 + $0xfd0] sm:$0xff]
        %v2277 = vld [vmem:[%s1353 + $0xfd8] sm:$0xff]
        %v2278 = vld [vmem:[%s1353 + $0xfe0] sm:$0xff]
        %v2279 = vld [vmem:[%s1353 + $0xfe8] sm:$0xff]
        %v2280 = vld [vmem:[%s1353 + $0xff0] sm:$0xff]
        %v2281 = vld [vmem:[%s1353 + $0xff8] sm:$0xff]
        %v2282 = vld [vmem:[%s1353 + $0x1000] sm:$0xff]
        %v2283 = vld [vmem:[%s1353 + $0x1008] sm:$0xff]
        %v2284 = vld [vmem:[%s1353 + $0x1010] sm:$0xff]
        %v2285 = vld [vmem:[%s1353 + $0x1018] sm:$0xff]
        %v2286 = vld [vmem:[%s1353 + $0x1020] sm:$0xff]
        %v2287 = vld [vmem:[%s1353 + $0x1028] sm:$0xff]
        %v2288 = vld [vmem:[%s1353 + $0x1030] sm:$0xff]
        %v2289 = vld [vmem:[%s1353 + $0x1038] sm:$0xff]
        %v2290 = vld [vmem:[%s1353 + $0x1040] sm:$0xff]
        %v2291 = vld [vmem:[%s1353 + $0x1048] sm:$0xff]
        %v2292 = vld [vmem:[%s1353 + $0x1050] sm:$0xff]
        %v2293 = vld [vmem:[%s1353 + $0x1058] sm:$0xff]
        %v2294 = vld [vmem:[%s1353 + $0x1060] sm:$0xff]
        %v2295 = vld [vmem:[%s1353 + $0x1068] sm:$0xff]
        %v2296 = vld [vmem:[%s1353 + $0x1070] sm:$0xff]
        %v2297 = vld [vmem:[%s1353 + $0x1078] sm:$0xff]
        %v2298 = vld [vmem:[%s1353 + $0x1080] sm:$0xff]
        %v2299 = vld [vmem:[%s1353 + $0x1088] sm:$0xff]
        %v2300 = vld [vmem:[%s1353 + $0x1090] sm:$0xff]
        %v2301 = vld [vmem:[%s1353 + $0x1098] sm:$0xff]
        %v2302 = vld [vmem:[%s1353 + $0x10a0] sm:$0xff]
        %v2303 = vld [vmem:[%s1353 + $0x10a8] sm:$0xff]
        %v2304 = vld [vmem:[%s1353 + $0x10b0] sm:$0xff]
        %v2305 = vld [vmem:[%s1353 + $0x10b8] sm:$0xff]
        %v2306 = vld [vmem:[%s1353 + $0x10c0] sm:$0xff]
        %v2307 = vld [vmem:[%s1353 + $0x10c8] sm:$0xff]
        %v2308 = vld [vmem:[%s1353 + $0x10d0] sm:$0xff]
        %v2309 = vld [vmem:[%s1353 + $0x10d8] sm:$0xff]
        %v2310 = vld [vmem:[%s1353 + $0x10e0] sm:$0xff]
        %v2311 = vld [vmem:[%s1353 + $0x10e8] sm:$0xff]
        %v2312 = vld [vmem:[%s1353 + $0x10f0] sm:$0xff]
        %v2313 = vld [vmem:[%s1353 + $0x10f8] sm:$0xff]
        %v2314 = vld [vmem:[%s1353 + $0x1100] sm:$0xff]
        %v2315 = vld [vmem:[%s1353 + $0x1108] sm:$0xff]
        %v2316 = vld [vmem:[%s1353 + $0x1110] sm:$0xff]
        %v2317 = vld [vmem:[%s1353 + $0x1118] sm:$0xff]
        %v2318 = vld [vmem:[%s1353 + $0x1120] sm:$0xff]
        %v2319 = vld [vmem:[%s1353 + $0x1128] sm:$0xff]
        %v2320 = vld [vmem:[%s1353 + $0x1130] sm:$0xff]
        %v2321 = vld [vmem:[%s1353 + $0x1138] sm:$0xff]
        %v2322 = vld [vmem:[%s1353 + $0x1140] sm:$0xff]
        %v2323 = vld [vmem:[%s1353 + $0x1148] sm:$0xff]
        %v2324 = vld [vmem:[%s1353 + $0x1150] sm:$0xff]
        %v2325 = vld [vmem:[%s1353 + $0x1158] sm:$0xff]
        %v2326 = vld [vmem:[%s1353 + $0x1160] sm:$0xff]
        %v2327 = vld [vmem:[%s1353 + $0x1168] sm:$0xff]
        %v2328 = vld [vmem:[%s1353 + $0x1170] sm:$0xff]
        %v2329 = vld [vmem:[%s1353 + $0x1178] sm:$0xff]
        %v2330 = vld [vmem:[%s1353 + $0x1180] sm:$0xff]
        %v2331 = vld [vmem:[%s1353 + $0x1188] sm:$0xff]
        %v2332 = vld [vmem:[%s1353 + $0x1190] sm:$0xff]
        %v2333 = vld [vmem:[%s1353 + $0x1198] sm:$0xff]
        %v2334 = vld [vmem:[%s1353 + $0x11a0] sm:$0xff]
        %v2335 = vld [vmem:[%s1353 + $0x11a8] sm:$0xff]
        %v2336 = vld [vmem:[%s1353 + $0x11b0] sm:$0xff]
        %v2337 = vld [vmem:[%s1353 + $0x11b8] sm:$0xff]
        %v2338 = vld [vmem:[%s1353 + $0x11c0] sm:$0xff]
        %v2339 = vld [vmem:[%s1353 + $0x11c8] sm:$0xff]
        %v2340 = vld [vmem:[%s1353 + $0x11d0] sm:$0xff]
        %v2341 = vld [vmem:[%s1353 + $0x11d8] sm:$0xff]
        %v2342 = vld [vmem:[%s1353 + $0x11e0] sm:$0xff]
        %v2343 = vld [vmem:[%s1353 + $0x11e8] sm:$0xff]
        %v2344 = vld [vmem:[%s1353 + $0x11f0] sm:$0xff]
        %v2345 = vld [vmem:[%s1353 + $0x11f8] sm:$0xff]
        %v2346 = vld [vmem:[%s1353 + $0x1200] sm:$0xff]
        %v2347 = vld [vmem:[%s1353 + $0x1208] sm:$0xff]
        %v2348 = vld [vmem:[%s1353 + $0x1210] sm:$0xff]
        %v2349 = vld [vmem:[%s1353 + $0x1218] sm:$0xff]
        %v2350 = vld [vmem:[%s1353 + $0x1220] sm:$0xff]
        %v2351 = vld [vmem:[%s1353 + $0x1228] sm:$0xff]
        %v2352 = vld [vmem:[%s1353 + $0x1230] sm:$0xff]
        %v2353 = vld [vmem:[%s1353 + $0x1238] sm:$0xff]
        %v2354 = vld [vmem:[%s1353 + $0x1240] sm:$0xff]
        %v2355 = vld [vmem:[%s1353 + $0x1248] sm:$0xff]
        %v2356 = vld [vmem:[%s1353 + $0x1250] sm:$0xff]
        %v2357 = vld [vmem:[%s1353 + $0x1258] sm:$0xff]
        %v2358 = vld [vmem:[%s1353 + $0x1260] sm:$0xff]
        %v2359 = vld [vmem:[%s1353 + $0x1268] sm:$0xff]
        %v2360 = vld [vmem:[%s1353 + $0x1270] sm:$0xff]
        %v2361 = vld [vmem:[%s1353 + $0x1278] sm:$0xff]
        %v2362 = vld [vmem:[%s1353 + $0x1280] sm:$0xff]
        %v2363 = vld [vmem:[%s1353 + $0x1288] sm:$0xff]
        %v2364 = vld [vmem:[%s1353 + $0x1290] sm:$0xff]
        %v2365 = vld [vmem:[%s1353 + $0x1298] sm:$0xff]
        %v2366 = vld [vmem:[%s1353 + $0x12a0] sm:$0xff]
        %v2367 = vld [vmem:[%s1353 + $0x12a8] sm:$0xff]
        %v2368 = vld [vmem:[%s1353 + $0x12b0] sm:$0xff]
        %v2369 = vld [vmem:[%s1353 + $0x12b8] sm:$0xff]
        %v2370 = vld [vmem:[%s1353 + $0x12c0] sm:$0xff]
        %v2371 = vld [vmem:[%s1353 + $0x12c8] sm:$0xff]
        %v2372 = vld [vmem:[%s1353 + $0x12d0] sm:$0xff]
        %v2373 = vld [vmem:[%s1353 + $0x12d8] sm:$0xff]
        %v2374 = vld [vmem:[%s1353 + $0x12e0] sm:$0xff]
        %v2375 = vld [vmem:[%s1353 + $0x12e8] sm:$0xff]
        %v2376 = vld [vmem:[%s1353 + $0x12f0] sm:$0xff]
        %v2377 = vld [vmem:[%s1353 + $0x12f8] sm:$0xff]
        %v2378 = vld [vmem:[%s1353 + $0x1300] sm:$0xff]
        %v2379 = vld [vmem:[%s1353 + $0x1308] sm:$0xff]
        %v2380 = vld [vmem:[%s1353 + $0x1310] sm:$0xff]
        %v2381 = vld [vmem:[%s1353 + $0x1318] sm:$0xff]
        %v2382 = vld [vmem:[%s1353 + $0x1320] sm:$0xff]
        %v2383 = vld [vmem:[%s1353 + $0x1328] sm:$0xff]
        %v2384 = vld [vmem:[%s1353 + $0x1330] sm:$0xff]
        %v2385 = vld [vmem:[%s1353 + $0x1338] sm:$0xff]
        %v2386 = vld [vmem:[%s1353 + $0x1340] sm:$0xff]
        %v2387 = vld [vmem:[%s1353 + $0x1348] sm:$0xff]
        %v2388 = vld [vmem:[%s1353 + $0x1350] sm:$0xff]
        %v2389 = vld [vmem:[%s1353 + $0x1358] sm:$0xff]
        %v2390 = vld [vmem:[%s1353 + $0x1360] sm:$0xff]
        %v2391 = vld [vmem:[%s1353 + $0x1368] sm:$0xff]
        %v2392 = vld [vmem:[%s1353 + $0x1370] sm:$0xff]
        %v2393 = vld [vmem:[%s1353 + $0x1378] sm:$0xff]
        %v2394 = vld [vmem:[%s1353 + $0x1380] sm:$0xff]
        %v2395 = vld [vmem:[%s1353 + $0x1388] sm:$0xff]
        %v2396 = vld [vmem:[%s1353 + $0x1390] sm:$0xff]
        %v2397 = vld [vmem:[%s1353 + $0x1398] sm:$0xff]
        %v2398 = vld [vmem:[%s1353 + $0x13a0] sm:$0xff]
        %v2399 = vld [vmem:[%s1353 + $0x13a8] sm:$0xff]
        %v2400 = vld [vmem:[%s1353 + $0x13b0] sm:$0xff]
        %v2401 = vld [vmem:[%s1353 + $0x13b8] sm:$0xff]
        %v2402 = vld [vmem:[%s1353 + $0x13c0] sm:$0xff]
        %v2403 = vld [vmem:[%s1353 + $0x13c8] sm:$0xff]
        %v2404 = vld [vmem:[%s1353 + $0x13d0] sm:$0xff]
        %v2405 = vld [vmem:[%s1353 + $0x13d8] sm:$0xff]
        %v2406 = vld [vmem:[%s1353 + $0x13e0] sm:$0xff]
        %v2407 = vld [vmem:[%s1353 + $0x13e8] sm:$0xff]
        %v2408 = vld [vmem:[%s1353 + $0x13f0] sm:$0xff]
        %v2409 = vld [vmem:[%s1353 + $0x13f8] sm:$0xff]
        %v2410 = vld [vmem:[%s1353 + $0x1400] sm:$0xff]
        %v2411 = vld [vmem:[%s1353 + $0x1408] sm:$0xff]
        %v2412 = vld [vmem:[%s1353 + $0x1410] sm:$0xff]
        %v2413 = vld [vmem:[%s1353 + $0x1418] sm:$0xff]
        %v2414 = vld [vmem:[%s1353 + $0x1420] sm:$0xff]
        %v2415 = vld [vmem:[%s1353 + $0x1428] sm:$0xff]
        %v2416 = vld [vmem:[%s1353 + $0x1430] sm:$0xff]
        %v2417 = vld [vmem:[%s1353 + $0x1438] sm:$0xff]
        %v2418 = vld [vmem:[%s1353 + $0x1440] sm:$0xff]
        %v2419 = vld [vmem:[%s1353 + $0x1448] sm:$0xff]
        %v2420 = vld [vmem:[%s1353 + $0x1450] sm:$0xff]
        %v2421 = vld [vmem:[%s1353 + $0x1458] sm:$0xff]
        %v2422 = vld [vmem:[%s1353 + $0x1460] sm:$0xff]
        %v2423 = vld [vmem:[%s1353 + $0x1468] sm:$0xff]
        %v2424 = vld [vmem:[%s1353 + $0x1470] sm:$0xff]
        %v2425 = vld [vmem:[%s1353 + $0x1478] sm:$0xff]
        %v2426 = vld [vmem:[%s1353 + $0x1480] sm:$0xff]
        %v2427 = vld [vmem:[%s1353 + $0x1488] sm:$0xff]
        %v2428 = vld [vmem:[%s1353 + $0x1490] sm:$0xff]
        %v2429 = vld [vmem:[%s1353 + $0x1498] sm:$0xff]
        %v2430 = vld [vmem:[%s1353 + $0x14a0] sm:$0xff]
        %v2431 = vld [vmem:[%s1353 + $0x14a8] sm:$0xff]
        %v2432 = vld [vmem:[%s1353 + $0x14b0] sm:$0xff]
        %v2433 = vld [vmem:[%s1353 + $0x14b8] sm:$0xff]
        %v2434 = vld [vmem:[%s1353 + $0x14c0] sm:$0xff]
        %v2435 = vld [vmem:[%s1353 + $0x14c8] sm:$0xff]
        %v2436 = vld [vmem:[%s1353 + $0x14d0] sm:$0xff]
        %v2437 = vld [vmem:[%s1353 + $0x14d8] sm:$0xff]
        %v2438 = vld [vmem:[%s1353 + $0x14e0] sm:$0xff]
        %v2439 = vld [vmem:[%s1353 + $0x14e8] sm:$0xff]
        %v2440 = vld [vmem:[%s1353 + $0x14f0] sm:$0xff]
        %v2441 = vld [vmem:[%s1353 + $0x14f8] sm:$0xff]
        %v2442 = vld [vmem:[%s1353 + $0x1500] sm:$0xff]
        %v2443 = vld [vmem:[%s1353 + $0x1508] sm:$0xff]
        %v2444 = vld [vmem:[%s1353 + $0x1510] sm:$0xff]
        %v2445 = vld [vmem:[%s1353 + $0x1518] sm:$0xff]
        %v2446 = vld [vmem:[%s1353 + $0x1520] sm:$0xff]
        %v2447 = vld [vmem:[%s1353 + $0x1528] sm:$0xff]
        %v2448 = vld [vmem:[%s1353 + $0x1530] sm:$0xff]
        %v2449 = vld [vmem:[%s1353 + $0x1538] sm:$0xff]
        %v2450 = vld [vmem:[%s1353 + $0x1540] sm:$0xff]
        %v2451 = vld [vmem:[%s1353 + $0x1548] sm:$0xff]
        %v2452 = vld [vmem:[%s1353 + $0x1550] sm:$0xff]
        %v2453 = vld [vmem:[%s1353 + $0x1558] sm:$0xff]
        %v2454 = vld [vmem:[%s1353 + $0x1560] sm:$0xff]
        %v2455 = vld [vmem:[%s1353 + $0x1568] sm:$0xff]
        %v2456 = vld [vmem:[%s1353 + $0x1570] sm:$0xff]
        %v2457 = vld [vmem:[%s1353 + $0x1578] sm:$0xff]
        %v2458 = vld [vmem:[%s1353 + $0x1580] sm:$0xff]
        %v2459 = vld [vmem:[%s1353 + $0x1588] sm:$0xff]
        %v2460 = vld [vmem:[%s1353 + $0x1590] sm:$0xff]
        %v2461 = vld [vmem:[%s1353 + $0x1598] sm:$0xff]
        %v2462 = vld [vmem:[%s1353 + $0x15a0] sm:$0xff]
        %v2463 = vld [vmem:[%s1353 + $0x15a8] sm:$0xff]
        %v2464 = vld [vmem:[%s1353 + $0x15b0] sm:$0xff]
        %v2465 = vld [vmem:[%s1353 + $0x15b8] sm:$0xff]
        %v2466 = vld [vmem:[%s1353 + $0x15c0] sm:$0xff]
        %v2467 = vld [vmem:[%s1353 + $0x15c8] sm:$0xff]
        %v2468 = vld [vmem:[%s1353 + $0x15d0] sm:$0xff]
        %v2469 = vld [vmem:[%s1353 + $0x15d8] sm:$0xff]
        %v2470 = vld [vmem:[%s1353 + $0x15e0] sm:$0xff]
        %v2471 = vld [vmem:[%s1353 + $0x15e8] sm:$0xff]
        %v2472 = vld [vmem:[%s1353 + $0x15f0] sm:$0xff]
        %v2473 = vld [vmem:[%s1353 + $0x15f8] sm:$0xff]
        %v2474 = vld [vmem:[%s1353 + $0x1600] sm:$0xff]
        %v2475 = vld [vmem:[%s1353 + $0x1608] sm:$0xff]
        %v2476 = vld [vmem:[%s1353 + $0x1610] sm:$0xff]
        %v2477 = vld [vmem:[%s1353 + $0x1618] sm:$0xff]
        %v2478 = vld [vmem:[%s1353 + $0x1620] sm:$0xff]
        %v2479 = vld [vmem:[%s1353 + $0x1628] sm:$0xff]
        %v2480 = vld [vmem:[%s1353 + $0x1630] sm:$0xff]
        %v2481 = vld [vmem:[%s1353 + $0x1638] sm:$0xff]
        %v2482 = vld [vmem:[%s1353 + $0x1640] sm:$0xff]
        %v2483 = vld [vmem:[%s1353 + $0x1648] sm:$0xff]
        %v2484 = vld [vmem:[%s1353 + $0x1650] sm:$0xff]
        %v2485 = vld [vmem:[%s1353 + $0x1658] sm:$0xff]
        %v2486 = vld [vmem:[%s1353 + $0x1660] sm:$0xff]
        %v2487 = vld [vmem:[%s1353 + $0x1668] sm:$0xff]
        %v2488 = vld [vmem:[%s1353 + $0x1670] sm:$0xff]
        %v2489 = vld [vmem:[%s1353 + $0x1678] sm:$0xff]
        %v2490 = vld [vmem:[%s1353 + $0x1680] sm:$0xff]
        %v2491 = vld [vmem:[%s1353 + $0x1688] sm:$0xff]
        %v2492 = vld [vmem:[%s1353 + $0x1690] sm:$0xff]
        %v2493 = vld [vmem:[%s1353 + $0x1698] sm:$0xff]
        %v2494 = vld [vmem:[%s1353 + $0x16a0] sm:$0xff]
        %v2495 = vld [vmem:[%s1353 + $0x16a8] sm:$0xff]
        %v2496 = vld [vmem:[%s1353 + $0x16b0] sm:$0xff]
        %v2497 = vld [vmem:[%s1353 + $0x16b8] sm:$0xff]
        %v2498 = vld [vmem:[%s1353 + $0x16c0] sm:$0xff]
        %v2499 = vld [vmem:[%s1353 + $0x16c8] sm:$0xff]
        %v2500 = vld [vmem:[%s1353 + $0x16d0] sm:$0xff]
        %v2501 = vld [vmem:[%s1353 + $0x16d8] sm:$0xff]
        %v2502 = vld [vmem:[%s1353 + $0x16e0] sm:$0xff]
        %v2503 = vld [vmem:[%s1353 + $0x16e8] sm:$0xff]
        %v2504 = vld [vmem:[%s1353 + $0x16f0] sm:$0xff]
        %v2505 = vld [vmem:[%s1353 + $0x16f8] sm:$0xff]
        %v2506 = vld [vmem:[%s1353 + $0x1700] sm:$0xff]
        %v2507 = vld [vmem:[%s1353 + $0x1708] sm:$0xff]
        %v2508 = vld [vmem:[%s1353 + $0x1710] sm:$0xff]
        %v2509 = vld [vmem:[%s1353 + $0x1718] sm:$0xff]
        %v2510 = vld [vmem:[%s1353 + $0x1720] sm:$0xff]
        %v2511 = vld [vmem:[%s1353 + $0x1728] sm:$0xff]
        %v2512 = vld [vmem:[%s1353 + $0x1730] sm:$0xff]
        %v2513 = vld [vmem:[%s1353 + $0x1738] sm:$0xff]
        %v2514 = vld [vmem:[%s1353 + $0x1740] sm:$0xff]
        %v2515 = vld [vmem:[%s1353 + $0x1748] sm:$0xff]
        %v2516 = vld [vmem:[%s1353 + $0x1750] sm:$0xff]
        %v2517 = vld [vmem:[%s1353 + $0x1758] sm:$0xff]
        %v2518 = vld [vmem:[%s1353 + $0x1760] sm:$0xff]
        %v2519 = vld [vmem:[%s1353 + $0x1768] sm:$0xff]
        %v2520 = vld [vmem:[%s1353 + $0x1770] sm:$0xff]
        %v2521 = vld [vmem:[%s1353 + $0x1778] sm:$0xff]
        %v2522 = vld [vmem:[%s1353 + $0x1780] sm:$0xff]
        %v2523 = vld [vmem:[%s1353 + $0x1788] sm:$0xff]
        %v2524 = vld [vmem:[%s1353 + $0x1790] sm:$0xff]
        %v2525 = vld [vmem:[%s1353 + $0x1798] sm:$0xff]
        %v2526 = vld [vmem:[%s1353 + $0x17a0] sm:$0xff]
        %v2527 = vld [vmem:[%s1353 + $0x17a8] sm:$0xff]
        %v2528 = vld [vmem:[%s1353 + $0x17b0] sm:$0xff]
        %v2529 = vld [vmem:[%s1353 + $0x17b8] sm:$0xff]
        %v2530 = vld [vmem:[%s1353 + $0x17c0] sm:$0xff]
        %v2531 = vld [vmem:[%s1353 + $0x17c8] sm:$0xff]
        %v2532 = vld [vmem:[%s1353 + $0x17d0] sm:$0xff]
        %v2533 = vld [vmem:[%s1353 + $0x17d8] sm:$0xff]
        %v2534 = vld [vmem:[%s1353 + $0x17e0] sm:$0xff]
        %v2535 = vld [vmem:[%s1353 + $0x17e8] sm:$0xff]
        %v2536 = vld [vmem:[%s1353 + $0x17f0] sm:$0xff]
        %v2537 = vld [vmem:[%s1353 + $0x17f8] sm:$0xff]
        %v2538 = vld [vmem:[%s1353 + $0x1800] sm:$0xff]
        %v2539 = vld [vmem:[%s1353 + $0x1808] sm:$0xff]
        %v2540 = vld [vmem:[%s1353 + $0x1810] sm:$0xff]
        %v2541 = vld [vmem:[%s1353 + $0x1818] sm:$0xff]
        %v2542 = vld [vmem:[%s1353 + $0x1820] sm:$0xff]
        %v2543 = vld [vmem:[%s1353 + $0x1828] sm:$0xff]
        %v2544 = vld [vmem:[%s1353 + $0x1830] sm:$0xff]
        %v2545 = vld [vmem:[%s1353 + $0x1838] sm:$0xff]
        %v2546 = vld [vmem:[%s1353 + $0x1840] sm:$0xff]
        %v2547 = vld [vmem:[%s1353 + $0x1848] sm:$0xff]
        %v2548 = vld [vmem:[%s1353 + $0x1850] sm:$0xff]
        %v2549 = vld [vmem:[%s1353 + $0x1858] sm:$0xff]
        %v2550 = vld [vmem:[%s1353 + $0x1860] sm:$0xff]
        %v2551 = vld [vmem:[%s1353 + $0x1868] sm:$0xff]
        %v2552 = vld [vmem:[%s1353 + $0x1870] sm:$0xff]
        %v2553 = vld [vmem:[%s1353 + $0x1878] sm:$0xff]
        %v2554 = vld [vmem:[%s1353 + $0x1880] sm:$0xff]
        %v2555 = vld [vmem:[%s1353 + $0x1888] sm:$0xff]
        %v2556 = vld [vmem:[%s1353 + $0x1890] sm:$0xff]
        %v2557 = vld [vmem:[%s1353 + $0x1898] sm:$0xff]
        %v2558 = vld [vmem:[%s1353 + $0x18a0] sm:$0xff]
        %v2559 = vld [vmem:[%s1353 + $0x18a8] sm:$0xff]
        %v2560 = vld [vmem:[%s1353 + $0x18b0] sm:$0xff]
        %v2561 = vld [vmem:[%s1353 + $0x18b8] sm:$0xff]
        %v2562 = vld [vmem:[%s1353 + $0x18c0] sm:$0xff]
        %v2563 = vld [vmem:[%s1353 + $0x18c8] sm:$0xff]
        %v2564 = vld [vmem:[%s1353 + $0x18d0] sm:$0xff]
        %v2565 = vld [vmem:[%s1353 + $0x18d8] sm:$0xff]
        %v2566 = vld [vmem:[%s1353 + $0x18e0] sm:$0xff]
        %v2567 = vld [vmem:[%s1353 + $0x18e8] sm:$0xff]
        %v2568 = vld [vmem:[%s1353 + $0x18f0] sm:$0xff]
        %v2569 = vld [vmem:[%s1353 + $0x18f8] sm:$0xff]
        %v2570 = vld [vmem:[%s1353 + $0x1900] sm:$0xff]
        %v2571 = vld [vmem:[%s1353 + $0x1908] sm:$0xff]
        %v2572 = vld [vmem:[%s1353 + $0x1910] sm:$0xff]
        %v2573 = vld [vmem:[%s1353 + $0x1918] sm:$0xff]
        %v2574 = vld [vmem:[%s1353 + $0x1920] sm:$0xff]
        %v2575 = vld [vmem:[%s1353 + $0x1928] sm:$0xff]
        %v2576 = vld [vmem:[%s1353 + $0x1930] sm:$0xff]
        %v2577 = vld [vmem:[%s1353 + $0x1938] sm:$0xff]
        %v2578 = vld [vmem:[%s1353 + $0x1940] sm:$0xff]
        %v2579 = vld [vmem:[%s1353 + $0x1948] sm:$0xff]
        %v2580 = vld [vmem:[%s1353 + $0x1950] sm:$0xff]
        %v2581 = vld [vmem:[%s1353 + $0x1958] sm:$0xff]
        %v2582 = vld [vmem:[%s1353 + $0x1960] sm:$0xff]
        %v2583 = vld [vmem:[%s1353 + $0x1968] sm:$0xff]
        %v2584 = vld [vmem:[%s1353 + $0x1970] sm:$0xff]
        %v2585 = vld [vmem:[%s1353 + $0x1978] sm:$0xff]
        %v2586 = vld [vmem:[%s1353 + $0x1980] sm:$0xff]
        %v2587 = vld [vmem:[%s1353 + $0x1988] sm:$0xff]
        %v2588 = vld [vmem:[%s1353 + $0x1990] sm:$0xff]
        %v2589 = vld [vmem:[%s1353 + $0x1998] sm:$0xff]
        %v2590 = vld [vmem:[%s1353 + $0x19a0] sm:$0xff]
        %v2591 = vld [vmem:[%s1353 + $0x19a8] sm:$0xff]
        %v2592 = vld [vmem:[%s1353 + $0x19b0] sm:$0xff]
        %v2593 = vld [vmem:[%s1353 + $0x19b8] sm:$0xff]
        %v2594 = vld [vmem:[%s1353 + $0x19c0] sm:$0xff]
        %v2595 = vld [vmem:[%s1353 + $0x19c8] sm:$0xff]
        %v2596 = vld [vmem:[%s1353 + $0x19d0] sm:$0xff]
        %v2597 = vld [vmem:[%s1353 + $0x19d8] sm:$0xff]
        %v2598 = vld [vmem:[%s1353 + $0x19e0] sm:$0xff]
        %v2599 = vld [vmem:[%s1353 + $0x19e8] sm:$0xff]
        %v2600 = vld [vmem:[%s1353 + $0x19f0] sm:$0xff]
        %v2601 = vld [vmem:[%s1353 + $0x19f8] sm:$0xff]
        %v2602 = vld [vmem:[%s1353 + $0x1a00] sm:$0xff]
        %v2603 = vld [vmem:[%s1353 + $0x1a08] sm:$0xff]
        %v2604 = vld [vmem:[%s1353 + $0x1a10] sm:$0xff]
        %v2605 = vld [vmem:[%s1353 + $0x1a18] sm:$0xff]
        %v2606 = vld [vmem:[%s1353 + $0x1a20] sm:$0xff]
        %v2607 = vld [vmem:[%s1353 + $0x1a28] sm:$0xff]
        %v2608 = vld [vmem:[%s1353 + $0x1a30] sm:$0xff]
        %v2609 = vld [vmem:[%s1353 + $0x1a38] sm:$0xff]
        %v2610 = vld [vmem:[%s1353 + $0x1a40] sm:$0xff]
        %v2611 = vld [vmem:[%s1353 + $0x1a48] sm:$0xff]
        %v2612 = vld [vmem:[%s1353 + $0x1a50] sm:$0xff]
        %v2613 = vld [vmem:[%s1353 + $0x1a58] sm:$0xff]
        %v2614 = vld [vmem:[%s1353 + $0x1a60] sm:$0xff]
        %v2615 = vld [vmem:[%s1353 + $0x1a68] sm:$0xff]
        %v2616 = vld [vmem:[%s1353 + $0x1a70] sm:$0xff]
        %v2617 = vld [vmem:[%s1353 + $0x1a78] sm:$0xff]
        %v2618 = vld [vmem:[%s1353 + $0x1a80] sm:$0xff]
        %v2619 = vld [vmem:[%s1353 + $0x1a88] sm:$0xff]
        %v2620 = vld [vmem:[%s1353 + $0x1a90] sm:$0xff]
        %v2621 = vld [vmem:[%s1353 + $0x1a98] sm:$0xff]
        %v2622 = vld [vmem:[%s1353 + $0x1aa0] sm:$0xff]
        %v2623 = vld [vmem:[%s1353 + $0x1aa8] sm:$0xff]
        %v2624 = vld [vmem:[%s1353 + $0x1ab0] sm:$0xff]
        %v2625 = vld [vmem:[%s1353 + $0x1ab8] sm:$0xff]
        %v2626 = vld [vmem:[%s1353 + $0x1ac0] sm:$0xff]
        %v2627 = vld [vmem:[%s1353 + $0x1ac8] sm:$0xff]
        %v2628 = vld [vmem:[%s1353 + $0x1ad0] sm:$0xff]
        %v2629 = vld [vmem:[%s1353 + $0x1ad8] sm:$0xff]
        %v2630 = vld [vmem:[%s1353 + $0x1ae0] sm:$0xff]
        %v2631 = vld [vmem:[%s1353 + $0x1ae8] sm:$0xff]
        %v2632 = vld [vmem:[%s1353 + $0x1af0] sm:$0xff]
        %v2633 = vld [vmem:[%s1353 + $0x1af8] sm:$0xff]
        %v2634 = vld [vmem:[%s1353 + $0x1b00] sm:$0xff]
        %v2635 = vld [vmem:[%s1353 + $0x1b08] sm:$0xff]
        %v2636 = vld [vmem:[%s1353 + $0x1b10] sm:$0xff]
        %v2637 = vld [vmem:[%s1353 + $0x1b18] sm:$0xff]
        %v2638 = vld [vmem:[%s1353 + $0x1b20] sm:$0xff]
        %v2639 = vld [vmem:[%s1353 + $0x1b28] sm:$0xff]
        %v2640 = vld [vmem:[%s1353 + $0x1b30] sm:$0xff]
        %v2641 = vld [vmem:[%s1353 + $0x1b38] sm:$0xff]
        %v2642 = vld [vmem:[%s1353 + $0x1b40] sm:$0xff]
        %v2643 = vld [vmem:[%s1353 + $0x1b48] sm:$0xff]
        %v2644 = vld [vmem:[%s1353 + $0x1b50] sm:$0xff]
        %v2645 = vld [vmem:[%s1353 + $0x1b58] sm:$0xff]
        %v2646 = vld [vmem:[%s1353 + $0x1b60] sm:$0xff]
        %v2647 = vld [vmem:[%s1353 + $0x1b68] sm:$0xff]
        %v2648 = vld [vmem:[%s1353 + $0x1b70] sm:$0xff]
        %v2649 = vld [vmem:[%s1353 + $0x1b78] sm:$0xff]
        %v2650 = vld [vmem:[%s1353 + $0x1b80] sm:$0xff]
        %v2651 = vld [vmem:[%s1353 + $0x1b88] sm:$0xff]
        %v2652 = vld [vmem:[%s1353 + $0x1b90] sm:$0xff]
        %v2653 = vld [vmem:[%s1353 + $0x1b98] sm:$0xff]
        %v2654 = vld [vmem:[%s1353 + $0x1ba0] sm:$0xff]
        %v2655 = vld [vmem:[%s1353 + $0x1ba8] sm:$0xff]
        %v2656 = vld [vmem:[%s1353 + $0x1bb0] sm:$0xff]
        %v2657 = vld [vmem:[%s1353 + $0x1bb8] sm:$0xff]
        %v2658 = vld [vmem:[%s1353 + $0x1bc0] sm:$0xff]
        %v2659 = vld [vmem:[%s1353 + $0x1bc8] sm:$0xff]
        %v2660 = vld [vmem:[%s1353 + $0x1bd0] sm:$0xff]
        %v2661 = vld [vmem:[%s1353 + $0x1bd8] sm:$0xff]
        %v2662 = vld [vmem:[%s1353 + $0x1be0] sm:$0xff]
        %v2663 = vld [vmem:[%s1353 + $0x1be8] sm:$0xff]
        %v2664 = vld [vmem:[%s1353 + $0x1bf0] sm:$0xff]
        %v2665 = vld [vmem:[%s1353 + $0x1bf8] sm:$0xff]
        %v2666 = vld [vmem:[%s1353 + $0x1c00] sm:$0xff]
        %v2667 = vld [vmem:[%s1353 + $0x1c08] sm:$0xff]
        %v2668 = vld [vmem:[%s1353 + $0x1c10] sm:$0xff]
        %v2669 = vld [vmem:[%s1353 + $0x1c18] sm:$0xff]
        %v2670 = vld [vmem:[%s1353 + $0x1c20] sm:$0xff]
        %v2671 = vld [vmem:[%s1353 + $0x1c28] sm:$0xff]
        %v2672 = vld [vmem:[%s1353 + $0x1c30] sm:$0xff]
        %v2673 = vld [vmem:[%s1353 + $0x1c38] sm:$0xff]
        %v2674 = vld [vmem:[%s1353 + $0x1c40] sm:$0xff]
        %v2675 = vld [vmem:[%s1353 + $0x1c48] sm:$0xff]
        %v2676 = vld [vmem:[%s1353 + $0x1c50] sm:$0xff]
        %v2677 = vld [vmem:[%s1353 + $0x1c58] sm:$0xff]
        %v2678 = vld [vmem:[%s1353 + $0x1c60] sm:$0xff]
        %v2679 = vld [vmem:[%s1353 + $0x1c68] sm:$0xff]
        %v2680 = vld [vmem:[%s1353 + $0x1c70] sm:$0xff]
        %v2681 = vld [vmem:[%s1353 + $0x1c78] sm:$0xff]
        %v2682 = vld [vmem:[%s1353 + $0x1c80] sm:$0xff]
        %v2683 = vld [vmem:[%s1353 + $0x1c88] sm:$0xff]
        %v2684 = vld [vmem:[%s1353 + $0x1c90] sm:$0xff]
        %v2685 = vld [vmem:[%s1353 + $0x1c98] sm:$0xff]
        %v2686 = vld [vmem:[%s1353 + $0x1ca0] sm:$0xff]
        %v2687 = vld [vmem:[%s1353 + $0x1ca8] sm:$0xff]
        %v2688 = vld [vmem:[%s1353 + $0x1cb0] sm:$0xff]
        %v2689 = vld [vmem:[%s1353 + $0x1cb8] sm:$0xff]
        %v2690 = vld [vmem:[%s1353 + $0x1cc0] sm:$0xff]
        %v2691 = vld [vmem:[%s1353 + $0x1cc8] sm:$0xff]
        %v2692 = vld [vmem:[%s1353 + $0x1cd0] sm:$0xff]
        %v2693 = vld [vmem:[%s1353 + $0x1cd8] sm:$0xff]
        %v2694 = vld [vmem:[%s1353 + $0x1ce0] sm:$0xff]
        %v2695 = vld [vmem:[%s1353 + $0x1ce8] sm:$0xff]
        %v2696 = vld [vmem:[%s1353 + $0x1cf0] sm:$0xff]
        %v2697 = vld [vmem:[%s1353 + $0x1cf8] sm:$0xff]
        %v2698 = vld [vmem:[%s1353 + $0x1d00] sm:$0xff]
        %v2699 = vld [vmem:[%s1353 + $0x1d08] sm:$0xff]
        %v2700 = vld [vmem:[%s1353 + $0x1d10] sm:$0xff]
        %v2701 = vld [vmem:[%s1353 + $0x1d18] sm:$0xff]
        %v2702 = vld [vmem:[%s1353 + $0x1d20] sm:$0xff]
        %v2703 = vld [vmem:[%s1353 + $0x1d28] sm:$0xff]
        %v2704 = vld [vmem:[%s1353 + $0x1d30] sm:$0xff]
        %v2705 = vld [vmem:[%s1353 + $0x1d38] sm:$0xff]
        %v2706 = vld [vmem:[%s1353 + $0x1d40] sm:$0xff]
        %v2707 = vld [vmem:[%s1353 + $0x1d48] sm:$0xff]
        %v2708 = vld [vmem:[%s1353 + $0x1d50] sm:$0xff]
        %v2709 = vld [vmem:[%s1353 + $0x1d58] sm:$0xff]
        %v2710 = vld [vmem:[%s1353 + $0x1d60] sm:$0xff]
        %v2711 = vld [vmem:[%s1353 + $0x1d68] sm:$0xff]
        %v2712 = vld [vmem:[%s1353 + $0x1d70] sm:$0xff]
        %v2713 = vld [vmem:[%s1353 + $0x1d78] sm:$0xff]
        %v2714 = vld [vmem:[%s1353 + $0x1d80] sm:$0xff]
        %v2715 = vld [vmem:[%s1353 + $0x1d88] sm:$0xff]
        %v2716 = vld [vmem:[%s1353 + $0x1d90] sm:$0xff]
        %v2717 = vld [vmem:[%s1353 + $0x1d98] sm:$0xff]
        %v2718 = vld [vmem:[%s1353 + $0x1da0] sm:$0xff]
        %v2719 = vld [vmem:[%s1353 + $0x1da8] sm:$0xff]
        %v2720 = vld [vmem:[%s1353 + $0x1db0] sm:$0xff]
        %v2721 = vld [vmem:[%s1353 + $0x1db8] sm:$0xff]
        %v2722 = vld [vmem:[%s1353 + $0x1dc0] sm:$0xff]
        %v2723 = vld [vmem:[%s1353 + $0x1dc8] sm:$0xff]
        %v2724 = vld [vmem:[%s1353 + $0x1dd0] sm:$0xff]
        %v2725 = vld [vmem:[%s1353 + $0x1dd8] sm:$0xff]
        %v2726 = vld [vmem:[%s1353 + $0x1de0] sm:$0xff]
        %v2727 = vld [vmem:[%s1353 + $0x1de8] sm:$0xff]
        %v2728 = vld [vmem:[%s1353 + $0x1df0] sm:$0xff]
        %v2729 = vld [vmem:[%s1353 + $0x1df8] sm:$0xff]
        %v2730 = vld [vmem:[%s1353 + $0x1e00] sm:$0xff]
        %v2731 = vld [vmem:[%s1353 + $0x1e08] sm:$0xff]
        %v2732 = vld [vmem:[%s1353 + $0x1e10] sm:$0xff]
        %v2733 = vld [vmem:[%s1353 + $0x1e18] sm:$0xff]
        %v2734 = vld [vmem:[%s1353 + $0x1e20] sm:$0xff]
        %v2735 = vld [vmem:[%s1353 + $0x1e28] sm:$0xff]
        %v2736 = vld [vmem:[%s1353 + $0x1e30] sm:$0xff]
        %v2737 = vld [vmem:[%s1353 + $0x1e38] sm:$0xff]
        %v2738 = vld [vmem:[%s1353 + $0x1e40] sm:$0xff]
        %v2739 = vld [vmem:[%s1353 + $0x1e48] sm:$0xff]
        %v2740 = vld [vmem:[%s1353 + $0x1e50] sm:$0xff]
        %v2741 = vld [vmem:[%s1353 + $0x1e58] sm:$0xff]
        %v2742 = vld [vmem:[%s1353 + $0x1e60] sm:$0xff]
        %v2743 = vld [vmem:[%s1353 + $0x1e68] sm:$0xff]
        %v2744 = vld [vmem:[%s1353 + $0x1e70] sm:$0xff]
        %v2745 = vld [vmem:[%s1353 + $0x1e78] sm:$0xff]
        %v2746 = vld [vmem:[%s1353 + $0x1e80] sm:$0xff]
        %v2747 = vld [vmem:[%s1353 + $0x1e88] sm:$0xff]
        %v2748 = vld [vmem:[%s1353 + $0x1e90] sm:$0xff]
        %v2749 = vld [vmem:[%s1353 + $0x1e98] sm:$0xff]
        %v2750 = vld [vmem:[%s1353 + $0x1ea0] sm:$0xff]
        %v2751 = vld [vmem:[%s1353 + $0x1ea8] sm:$0xff]
        %v2752 = vld [vmem:[%s1353 + $0x1eb0] sm:$0xff]
        %v2753 = vld [vmem:[%s1353 + $0x1eb8] sm:$0xff]
        %v2754 = vld [vmem:[%s1353 + $0x1ec0] sm:$0xff]
        %v2755 = vld [vmem:[%s1353 + $0x1ec8] sm:$0xff]
        %v2756 = vld [vmem:[%s1353 + $0x1ed0] sm:$0xff]
        %v2757 = vld [vmem:[%s1353 + $0x1ed8] sm:$0xff]
        %v2758 = vld [vmem:[%s1353 + $0x1ee0] sm:$0xff]
        %v2759 = vld [vmem:[%s1353 + $0x1ee8] sm:$0xff]
        %v2760 = vld [vmem:[%s1353 + $0x1ef0] sm:$0xff]
        %v2761 = vld [vmem:[%s1353 + $0x1ef8] sm:$0xff]
        %v2762 = vld [vmem:[%s1353 + $0x1f00] sm:$0xff]
        %v2763 = vld [vmem:[%s1353 + $0x1f08] sm:$0xff]
        %v2764 = vld [vmem:[%s1353 + $0x1f10] sm:$0xff]
        %v2765 = vld [vmem:[%s1353 + $0x1f18] sm:$0xff]
        %v2766 = vld [vmem:[%s1353 + $0x1f20] sm:$0xff]
        %v2767 = vld [vmem:[%s1353 + $0x1f28] sm:$0xff]
        %v2768 = vld [vmem:[%s1353 + $0x1f30] sm:$0xff]
        %v2769 = vld [vmem:[%s1353 + $0x1f38] sm:$0xff]
        %v2770 = vld [vmem:[%s1353 + $0x1f40] sm:$0xff]
        %v2771 = vld [vmem:[%s1353 + $0x1f48] sm:$0xff]
        %v2772 = vld [vmem:[%s1353 + $0x1f50] sm:$0xff]
        %v2773 = vld [vmem:[%s1353 + $0x1f58] sm:$0xff]
        %v2774 = vld [vmem:[%s1353 + $0x1f60] sm:$0xff]
        %v2775 = vld [vmem:[%s1353 + $0x1f68] sm:$0xff]
        %v2776 = vld [vmem:[%s1353 + $0x1f70] sm:$0xff]
        %v2777 = vld [vmem:[%s1353 + $0x1f78] sm:$0xff]
        %v2778 = vld [vmem:[%s1353 + $0x1f80] sm:$0xff]
        %v2779 = vld [vmem:[%s1353 + $0x1f88] sm:$0xff]
        %v2780 = vld [vmem:[%s1353 + $0x1f90] sm:$0xff]
        %v2781 = vld [vmem:[%s1353 + $0x1f98] sm:$0xff]
        %v2782 = vld [vmem:[%s1353 + $0x1fa0] sm:$0xff]
        %v2783 = vld [vmem:[%s1353 + $0x1fa8] sm:$0xff]
        %v2784 = vld [vmem:[%s1353 + $0x1fb0] sm:$0xff]
        %v2785 = vld [vmem:[%s1353 + $0x1fb8] sm:$0xff]
        %v2786 = vld [vmem:[%s1353 + $0x1fc0] sm:$0xff]
        %v2787 = vld [vmem:[%s1353 + $0x1fc8] sm:$0xff]
        %v2788 = vld [vmem:[%s1353 + $0x1fd0] sm:$0xff]
        %v2789 = vld [vmem:[%s1353 + $0x1fd8] sm:$0xff]
        %v2790 = vld [vmem:[%s1353 + $0x1fe0] sm:$0xff]
        %v2791 = vld [vmem:[%s1353 + $0x1fe8] sm:$0xff]
        %v2792 = vld [vmem:[%s1353 + $0x1ff0] sm:$0xff]
        %v2793 = vld [vmem:[%s1353 + $0x1ff8] sm:$0xff]
        %v2794 = vld [vmem:[%s1353 + $0x2000] sm:$0xff]
        %v2795 = vld [vmem:[%s1353 + $0x2008] sm:$0xff]
        %v2796 = vld [vmem:[%s1353 + $0x2010] sm:$0xff]
        %v2797 = vld [vmem:[%s1353 + $0x2018] sm:$0xff]
        %v2798 = vld [vmem:[%s1353 + $0x2020] sm:$0xff]
        %v2799 = vld [vmem:[%s1353 + $0x2028] sm:$0xff]
        %v2800 = vld [vmem:[%s1353 + $0x2030] sm:$0xff]
        %v2801 = vld [vmem:[%s1353 + $0x2038] sm:$0xff]
        %v2802 = vld [vmem:[%s1353 + $0x2040] sm:$0xff]
        %v2803 = vld [vmem:[%s1353 + $0x2048] sm:$0xff]
        %v2804 = vld [vmem:[%s1353 + $0x2050] sm:$0xff]
        %v2805 = vld [vmem:[%s1353 + $0x2058] sm:$0xff]
        %v2806 = vld [vmem:[%s1353 + $0x2060] sm:$0xff]
        %v2807 = vld [vmem:[%s1353 + $0x2068] sm:$0xff]
        %v2808 = vld [vmem:[%s1353 + $0x2070] sm:$0xff]
        %v2809 = vld [vmem:[%s1353 + $0x2078] sm:$0xff]
        %v2810 = vld [vmem:[%s1353 + $0x2080] sm:$0xff]
        %v2811 = vld [vmem:[%s1353 + $0x2088] sm:$0xff]
        %v2812 = vld [vmem:[%s1353 + $0x2090] sm:$0xff]
        %v2813 = vld [vmem:[%s1353 + $0x2098] sm:$0xff]
        %v2814 = vld [vmem:[%s1353 + $0x20a0] sm:$0xff]
        %v2815 = vld [vmem:[%s1353 + $0x20a8] sm:$0xff]
        %v2816 = vld [vmem:[%s1353 + $0x20b0] sm:$0xff]
        %v2817 = vld [vmem:[%s1353 + $0x20b8] sm:$0xff]
        %v2818 = vld [vmem:[%s1353 + $0x20c0] sm:$0xff]
        %v2819 = vld [vmem:[%s1353 + $0x20c8] sm:$0xff]
        %v2820 = vld [vmem:[%s1353 + $0x20d0] sm:$0xff]
        %v2821 = vld [vmem:[%s1353 + $0x20d8] sm:$0xff]
        %v2822 = vld [vmem:[%s1353 + $0x20e0] sm:$0xff]
        %v2823 = vld [vmem:[%s1353 + $0x20e8] sm:$0xff]
        %v2824 = vld [vmem:[%s1353 + $0x20f0] sm:$0xff]
        %v2825 = vld [vmem:[%s1353 + $0x20f8] sm:$0xff]
        %v2826 = vld [vmem:[%s1353 + $0x2100] sm:$0xff]
        %v2827 = vld [vmem:[%s1353 + $0x2108] sm:$0xff]
        %v2828 = vld [vmem:[%s1353 + $0x2110] sm:$0xff]
        %v2829 = vld [vmem:[%s1353 + $0x2118] sm:$0xff]
        %v2830 = vld [vmem:[%s1353 + $0x2120] sm:$0xff]
        %v2831 = vld [vmem:[%s1353 + $0x2128] sm:$0xff]
        %v2832 = vld [vmem:[%s1353 + $0x2130] sm:$0xff]
        %v2833 = vld [vmem:[%s1353 + $0x2138] sm:$0xff]
        %v2834 = vld [vmem:[%s1353 + $0x2140] sm:$0xff]
        %v2835 = vld [vmem:[%s1353 + $0x2148] sm:$0xff]
        %v2836 = vld [vmem:[%s1353 + $0x2150] sm:$0xff]
        %v2837 = vld [vmem:[%s1353 + $0x2158] sm:$0xff]
        %v2838 = vld [vmem:[%s1353 + $0x2160] sm:$0xff]
        %v2839 = vld [vmem:[%s1353 + $0x2168] sm:$0xff]
        %v2840 = vld [vmem:[%s1353 + $0x2170] sm:$0xff]
        %v2841 = vld [vmem:[%s1353 + $0x2178] sm:$0xff]
        %v2842 = vld [vmem:[%s1353 + $0x2180] sm:$0xff]
        %v2843 = vld [vmem:[%s1353 + $0x2188] sm:$0xff]
        %v2844 = vld [vmem:[%s1353 + $0x2190] sm:$0xff]
        %v2845 = vld [vmem:[%s1353 + $0x2198] sm:$0xff]
        %v2846 = vld [vmem:[%s1353 + $0x21a0] sm:$0xff]
        %v2847 = vld [vmem:[%s1353 + $0x21a8] sm:$0xff]
        %v2848 = vld [vmem:[%s1353 + $0x21b0] sm:$0xff]
        %v2849 = vld [vmem:[%s1353 + $0x21b8] sm:$0xff]
        %v2850 = vld [vmem:[%s1353 + $0x21c0] sm:$0xff]
        %v2851 = vld [vmem:[%s1353 + $0x21c8] sm:$0xff]
        %v2852 = vld [vmem:[%s1353 + $0x21d0] sm:$0xff]
        %v2853 = vld [vmem:[%s1353 + $0x21d8] sm:$0xff]
        %v2854 = vld [vmem:[%s1353 + $0x21e0] sm:$0xff]
        %v2855 = vld [vmem:[%s1353 + $0x21e8] sm:$0xff]
        %v2856 = vld [vmem:[%s1353 + $0x21f0] sm:$0xff]
        %v2857 = vld [vmem:[%s1353 + $0x21f8] sm:$0xff]
        %v2858 = vld [vmem:[%s1353 + $0x2200] sm:$0xff]
        %v2859 = vld [vmem:[%s1353 + $0x2208] sm:$0xff]
        %v2860 = vld [vmem:[%s1353 + $0x2210] sm:$0xff]
        %v2861 = vld [vmem:[%s1353 + $0x2218] sm:$0xff]
        %v2862 = vld [vmem:[%s1353 + $0x2220] sm:$0xff]
        %v2863 = vld [vmem:[%s1353 + $0x2228] sm:$0xff]
        %v2864 = vld [vmem:[%s1353 + $0x2230] sm:$0xff]
        %v2865 = vld [vmem:[%s1353 + $0x2238] sm:$0xff]
        %v2866 = vld [vmem:[%s1353 + $0x2240] sm:$0xff]
        %v2867 = vld [vmem:[%s1353 + $0x2248] sm:$0xff]
        %v2868 = vld [vmem:[%s1353 + $0x2250] sm:$0xff]
        %v2869 = vld [vmem:[%s1353 + $0x2258] sm:$0xff]
        %v2870 = vld [vmem:[%s1353 + $0x2260] sm:$0xff]
        %v2871 = vld [vmem:[%s1353 + $0x2268] sm:$0xff]
        %v2872 = vld [vmem:[%s1353 + $0x2270] sm:$0xff]
        %v2873 = vld [vmem:[%s1353 + $0x2278] sm:$0xff]
        %v2874 = vld [vmem:[%s1353 + $0x2280] sm:$0xff]
        %v2875 = vld [vmem:[%s1353 + $0x2288] sm:$0xff]
        %v2876 = vld [vmem:[%s1353 + $0x2290] sm:$0xff]
        %v2877 = vld [vmem:[%s1353 + $0x2298] sm:$0xff]
        %v2878 = vld [vmem:[%s1353 + $0x22a0] sm:$0xff]
        %v2879 = vld [vmem:[%s1353 + $0x22a8] sm:$0xff]
        %v2880 = vld [vmem:[%s1353 + $0x22b0] sm:$0xff]
        %v2881 = vld [vmem:[%s1353 + $0x22b8] sm:$0xff]
        %v2882 = vld [vmem:[%s1353 + $0x22c0] sm:$0xff]
        %v2883 = vld [vmem:[%s1353 + $0x22c8] sm:$0xff]
        %v2884 = vld [vmem:[%s1353 + $0x22d0] sm:$0xff]
        %v2885 = vld [vmem:[%s1353 + $0x22d8] sm:$0xff]
        %v2886 = vld [vmem:[%s1353 + $0x22e0] sm:$0xff]
        %v2887 = vld [vmem:[%s1353 + $0x22e8] sm:$0xff]
        %v2888 = vld [vmem:[%s1353 + $0x22f0] sm:$0xff]
        %v2889 = vld [vmem:[%s1353 + $0x22f8] sm:$0xff]
        %v2890 = vld [vmem:[%s1353 + $0x2300] sm:$0xff]
        %v2891 = vld [vmem:[%s1353 + $0x2308] sm:$0xff]
        %v2892 = vld [vmem:[%s1353 + $0x2310] sm:$0xff]
        %v2893 = vld [vmem:[%s1353 + $0x2318] sm:$0xff]
        %v2894 = vld [vmem:[%s1353 + $0x2320] sm:$0xff]
        %v2895 = vld [vmem:[%s1353 + $0x2328] sm:$0xff]
        %v2896 = vld [vmem:[%s1353 + $0x2330] sm:$0xff]
        %v2897 = vld [vmem:[%s1353 + $0x2338] sm:$0xff]
        %v2898 = vld [vmem:[%s1353 + $0x2340] sm:$0xff]
        %v2899 = vld [vmem:[%s1353 + $0x2348] sm:$0xff]
        %v2900 = vld [vmem:[%s1353 + $0x2350] sm:$0xff]
        %v2901 = vld [vmem:[%s1353 + $0x2358] sm:$0xff]
        %v2902 = vld [vmem:[%s1353 + $0x2360] sm:$0xff]
        %v2903 = vld [vmem:[%s1353 + $0x2368] sm:$0xff]
        %v2904 = vld [vmem:[%s1353 + $0x2370] sm:$0xff]
        %v2905 = vld [vmem:[%s1353 + $0x2378] sm:$0xff]
        %v2906 = vld [vmem:[%s1353 + $0x2380] sm:$0xff]
        %v2907 = vld [vmem:[%s1353 + $0x2388] sm:$0xff]
        %v2908 = vld [vmem:[%s1353 + $0x2390] sm:$0xff]
        %v2909 = vld [vmem:[%s1353 + $0x2398] sm:$0xff]
        %v2910 = vld [vmem:[%s1353 + $0x23a0] sm:$0xff]
        %v2911 = vld [vmem:[%s1353 + $0x23a8] sm:$0xff]
        %v2912 = vld [vmem:[%s1353 + $0x23b0] sm:$0xff]
        %v2913 = vld [vmem:[%s1353 + $0x23b8] sm:$0xff]
        %v2914 = vld [vmem:[%s1353 + $0x23c0] sm:$0xff]
        %v2915 = vld [vmem:[%s1353 + $0x23c8] sm:$0xff]
        %v2916 = vld [vmem:[%s1353 + $0x23d0] sm:$0xff]
        %v2917 = vld [vmem:[%s1353 + $0x23d8] sm:$0xff]
        %v2918 = vld [vmem:[%s1353 + $0x23e0] sm:$0xff]
        %v2919 = vld [vmem:[%s1353 + $0x23e8] sm:$0xff]
        %v2920 = vld [vmem:[%s1353 + $0x23f0] sm:$0xff]
        %v2921 = vld [vmem:[%s1353 + $0x23f8] sm:$0xff]
        %v2922 = vld [vmem:[%s1353 + $0x2400] sm:$0xff]
        %v2923 = vld [vmem:[%s1353 + $0x2408] sm:$0xff]
        %v2924 = vld [vmem:[%s1353 + $0x2410] sm:$0xff]
        %v2925 = vld [vmem:[%s1353 + $0x2418] sm:$0xff]
        %v2926 = vld [vmem:[%s1353 + $0x2420] sm:$0xff]
        %v2927 = vld [vmem:[%s1353 + $0x2428] sm:$0xff]
        %v2928 = vld [vmem:[%s1353 + $0x2430] sm:$0xff]
        %v2929 = vld [vmem:[%s1353 + $0x2438] sm:$0xff]
        %v2930 = vld [vmem:[%s1353 + $0x2440] sm:$0xff]
        %v2931 = vld [vmem:[%s1353 + $0x2448] sm:$0xff]
        %v2932 = vld [vmem:[%s1353 + $0x2450] sm:$0xff]
        %v2933 = vld [vmem:[%s1353 + $0x2458] sm:$0xff]
        %v2934 = vld [vmem:[%s1353 + $0x2460] sm:$0xff]
        %v2935 = vld [vmem:[%s1353 + $0x2468] sm:$0xff]
        %v2936 = vld [vmem:[%s1353 + $0x2470] sm:$0xff]
        %v2937 = vld [vmem:[%s1353 + $0x2478] sm:$0xff]
        %v2938 = vld [vmem:[%s1353 + $0x2480] sm:$0xff]
        %v2939 = vld [vmem:[%s1353 + $0x2488] sm:$0xff]
        %v2940 = vld [vmem:[%s1353 + $0x2490] sm:$0xff]
        %v2941 = vld [vmem:[%s1353 + $0x2498] sm:$0xff]
        %v2942 = vld [vmem:[%s1353 + $0x24a0] sm:$0xff]
        %v2943 = vld [vmem:[%s1353 + $0x24a8] sm:$0xff]
        %v2944 = vld [vmem:[%s1353 + $0x24b0] sm:$0xff]
        %v2945 = vld [vmem:[%s1353 + $0x24b8] sm:$0xff]
        %v2946 = vld [vmem:[%s1353 + $0x24c0] sm:$0xff]
        %v2947 = vld [vmem:[%s1353 + $0x24c8] sm:$0xff]
        %v2948 = vld [vmem:[%s1353 + $0x24d0] sm:$0xff]
        %v2949 = vld [vmem:[%s1353 + $0x24d8] sm:$0xff]
        %v2950 = vld [vmem:[%s1353 + $0x24e0] sm:$0xff]
        %v2951 = vld [vmem:[%s1353 + $0x24e8] sm:$0xff]
        %v2952 = vld [vmem:[%s1353 + $0x24f0] sm:$0xff]
        %v2953 = vld [vmem:[%s1353 + $0x24f8] sm:$0xff]
        %v2954 = vld [vmem:[%s1353 + $0x2500] sm:$0xff]
        %v2955 = vld [vmem:[%s1353 + $0x2508] sm:$0xff]
        %v2956 = vld [vmem:[%s1353 + $0x2510] sm:$0xff]
        %v2957 = vld [vmem:[%s1353 + $0x2518] sm:$0xff]
        %v2958 = vld [vmem:[%s1353 + $0x2520] sm:$0xff]
        %v2959 = vld [vmem:[%s1353 + $0x2528] sm:$0xff]
        %v2960 = vld [vmem:[%s1353 + $0x2530] sm:$0xff]
        %v2961 = vld [vmem:[%s1353 + $0x2538] sm:$0xff]
        %v2962 = vld [vmem:[%s1353 + $0x2540] sm:$0xff]
        %v2963 = vld [vmem:[%s1353 + $0x2548] sm:$0xff]
        %v2964 = vld [vmem:[%s1353 + $0x2550] sm:$0xff]
        %v2965 = vld [vmem:[%s1353 + $0x2558] sm:$0xff]
        %v2966 = vld [vmem:[%s1353 + $0x2560] sm:$0xff]
        %v2967 = vld [vmem:[%s1353 + $0x2568] sm:$0xff]
        %v2968 = vld [vmem:[%s1353 + $0x2570] sm:$0xff]
        %v2969 = vld [vmem:[%s1353 + $0x2578] sm:$0xff]
        %v2970 = vld [vmem:[%s1353 + $0x2580] sm:$0xff]
        %v2971 = vld [vmem:[%s1353 + $0x2588] sm:$0xff]
        %v2972 = vld [vmem:[%s1353 + $0x2590] sm:$0xff]
        %v2973 = vld [vmem:[%s1353 + $0x2598] sm:$0xff]
        %v2974 = vld [vmem:[%s1353 + $0x25a0] sm:$0xff]
        %v2975 = vld [vmem:[%s1353 + $0x25a8] sm:$0xff]
        %v2976 = vld [vmem:[%s1353 + $0x25b0] sm:$0xff]
        %v2977 = vld [vmem:[%s1353 + $0x25b8] sm:$0xff]
        %v2978 = vld [vmem:[%s1353 + $0x25c0] sm:$0xff]
        %v2979 = vld [vmem:[%s1353 + $0x25c8] sm:$0xff]
        %v2980 = vld [vmem:[%s1353 + $0x25d0] sm:$0xff]
        %v2981 = vld [vmem:[%s1353 + $0x25d8] sm:$0xff]
        %v2982 = vld [vmem:[%s1353 + $0x25e0] sm:$0xff]
        %v2983 = vld [vmem:[%s1353 + $0x25e8] sm:$0xff]
        %v2984 = vld [vmem:[%s1353 + $0x25f0] sm:$0xff]
        %v2985 = vld [vmem:[%s1353 + $0x25f8] sm:$0xff]
        %v2986 = vld [vmem:[%s1353 + $0x2600] sm:$0xff]
        %v2987 = vld [vmem:[%s1353 + $0x2608] sm:$0xff]
        %v2988 = vld [vmem:[%s1353 + $0x2610] sm:$0xff]
        %v2989 = vld [vmem:[%s1353 + $0x2618] sm:$0xff]
        %v2990 = vld [vmem:[%s1353 + $0x2620] sm:$0xff]
        %v2991 = vld [vmem:[%s1353 + $0x2628] sm:$0xff]
        %v2992 = vld [vmem:[%s1353 + $0x2630] sm:$0xff]
        %v2993 = vld [vmem:[%s1353 + $0x2638] sm:$0xff]
        %v2994 = vld [vmem:[%s1353 + $0x2640] sm:$0xff]
        %v2995 = vld [vmem:[%s1353 + $0x2648] sm:$0xff]
        %v2996 = vld [vmem:[%s1353 + $0x2650] sm:$0xff]
        %v2997 = vld [vmem:[%s1353 + $0x2658] sm:$0xff]
        %v2998 = vld [vmem:[%s1353 + $0x2660] sm:$0xff]
        %v2999 = vld [vmem:[%s1353 + $0x2668] sm:$0xff]
        %v3000 = vld [vmem:[%s1353 + $0x2670] sm:$0xff]
        %v3001 = vld [vmem:[%s1353 + $0x2678] sm:$0xff]
        %v3002 = vld [vmem:[%s1353 + $0x2680] sm:$0xff]
        %v3003 = vld [vmem:[%s1353 + $0x2688] sm:$0xff]
        %v3004 = vld [vmem:[%s1353 + $0x2690] sm:$0xff]
        %v3005 = vld [vmem:[%s1353 + $0x2698] sm:$0xff]
        %v3006 = vld [vmem:[%s1353 + $0x26a0] sm:$0xff]
        %v3007 = vld [vmem:[%s1353 + $0x26a8] sm:$0xff]
        %v3008 = vld [vmem:[%s1353 + $0x26b0] sm:$0xff]
        %v3009 = vld [vmem:[%s1353 + $0x26b8] sm:$0xff]
        %v3010 = vld [vmem:[%s1353 + $0x26c0] sm:$0xff]
        %v3011 = vld [vmem:[%s1353 + $0x26c8] sm:$0xff]
        %v3012 = vld [vmem:[%s1353 + $0x26d0] sm:$0xff]
        %v3013 = vld [vmem:[%s1353 + $0x26d8] sm:$0xff]
        %v3014 = vld [vmem:[%s1353 + $0x26e0] sm:$0xff]
        %v3015 = vld [vmem:[%s1353 + $0x26e8] sm:$0xff]
        %v3016 = vld [vmem:[%s1353 + $0x26f0] sm:$0xff]
        %v3017 = vld [vmem:[%s1353 + $0x26f8] sm:$0xff]
        %v3018 = vld [vmem:[%s1353 + $0x2700] sm:$0xff]
        %v3019 = vld [vmem:[%s1353 + $0x2708] sm:$0xff]
        %v3020 = vld [vmem:[%s1353 + $0x2710] sm:$0xff]
        %v3021 = vld [vmem:[%s1353 + $0x2718] sm:$0xff]
        %v3022 = vld [vmem:[%s1353 + $0x2720] sm:$0xff]
        %v3023 = vld [vmem:[%s1353 + $0x2728] sm:$0xff]
        %v3024 = vld [vmem:[%s1353 + $0x2730] sm:$0xff]
        %v3025 = vld [vmem:[%s1353 + $0x2738] sm:$0xff]
        %v3026 = vld [vmem:[%s1353 + $0x2740] sm:$0xff]
        %v3027 = vld [vmem:[%s1353 + $0x2748] sm:$0xff]
        %v3028 = vld [vmem:[%s1353 + $0x2750] sm:$0xff]
        %v3029 = vld [vmem:[%s1353 + $0x2758] sm:$0xff]
        %v3030 = vld [vmem:[%s1353 + $0x2760] sm:$0xff]
        %v3031 = vld [vmem:[%s1353 + $0x2768] sm:$0xff]
        %v3032 = vld [vmem:[%s1353 + $0x2770] sm:$0xff]
        %v3033 = vld [vmem:[%s1353 + $0x2778] sm:$0xff]
        %v3034 = vld [vmem:[%s1353 + $0x2780] sm:$0xff]
        %v3035 = vld [vmem:[%s1353 + $0x2788] sm:$0xff]
        %v3036 = vld [vmem:[%s1353 + $0x2790] sm:$0xff]
        %v3037 = vld [vmem:[%s1353 + $0x2798] sm:$0xff]
        %v3038 = vld [vmem:[%s1353 + $0x27a0] sm:$0xff]
        %v3039 = vld [vmem:[%s1353 + $0x27a8] sm:$0xff]
        %v3040 = vld [vmem:[%s1353 + $0x27b0] sm:$0xff]
        %v3041 = vld [vmem:[%s1353 + $0x27b8] sm:$0xff]
        %v3042 = vld [vmem:[%s1353 + $0x27c0] sm:$0xff]
        %v3043 = vld [vmem:[%s1353 + $0x27c8] sm:$0xff]
        %v3044 = vld [vmem:[%s1353 + $0x27d0] sm:$0xff]
        %v3045 = vld [vmem:[%s1353 + $0x27d8] sm:$0xff]
        %v3046 = vld [vmem:[%s1353 + $0x27e0] sm:$0xff]
        %v3047 = vld [vmem:[%s1353 + $0x27e8] sm:$0xff]
        %v3048 = vld [vmem:[%s1353 + $0x27f0] sm:$0xff]
        %v3049 = vld [vmem:[%s1353 + $0x27f8] sm:$0xff]
        %v3050 = vld [vmem:[%s1353 + $0x2800] sm:$0xff]
        %v3051 = vld [vmem:[%s1353 + $0x2808] sm:$0xff]
        %v3052 = vld [vmem:[%s1353 + $0x2810] sm:$0xff]
        %v3053 = vld [vmem:[%s1353 + $0x2818] sm:$0xff]
        %v3054 = vld [vmem:[%s1353 + $0x2820] sm:$0xff]
        %v3055 = vld [vmem:[%s1353 + $0x2828] sm:$0xff]
        %v3056 = vld [vmem:[%s1353 + $0x2830] sm:$0xff]
        %v3057 = vld [vmem:[%s1353 + $0x2838] sm:$0xff]
        %v3058 = vld [vmem:[%s1353 + $0x2840] sm:$0xff]
        %v3059 = vld [vmem:[%s1353 + $0x2848] sm:$0xff]
        %v3060 = vld [vmem:[%s1353 + $0x2850] sm:$0xff]
        %v3061 = vld [vmem:[%s1353 + $0x2858] sm:$0xff]
        %v3062 = vld [vmem:[%s1353 + $0x2860] sm:$0xff]
        %v3063 = vld [vmem:[%s1353 + $0x2868] sm:$0xff]
        %v3064 = vld [vmem:[%s1353 + $0x2870] sm:$0xff]
        %v3065 = vld [vmem:[%s1353 + $0x2878] sm:$0xff]
        %v3066 = vld [vmem:[%s1353 + $0x2880] sm:$0xff]
        %v3067 = vld [vmem:[%s1353 + $0x2888] sm:$0xff]
        %v3068 = vld [vmem:[%s1353 + $0x2890] sm:$0xff]
        %v3069 = vld [vmem:[%s1353 + $0x2898] sm:$0xff]
        %v3070 = vld [vmem:[%s1353 + $0x28a0] sm:$0xff]
        %v3071 = vld [vmem:[%s1353 + $0x28a8] sm:$0xff]
        %v3072 = vld [vmem:[%s1353 + $0x28b0] sm:$0xff]
        %v3073 = vld [vmem:[%s1353 + $0x28b8] sm:$0xff]
        %v3074 = vld [vmem:[%s1353 + $0x28c0] sm:$0xff]
        %v3075 = vld [vmem:[%s1353 + $0x28c8] sm:$0xff]
        %v3076 = vld [vmem:[%s1353 + $0x28d0] sm:$0xff]
        %v3077 = vld [vmem:[%s1353 + $0x28d8] sm:$0xff]
        %v3078 = vld [vmem:[%s1353 + $0x28e0] sm:$0xff]
        %v3079 = vld [vmem:[%s1353 + $0x28e8] sm:$0xff]
        %v3080 = vld [vmem:[%s1353 + $0x28f0] sm:$0xff]
        %v3081 = vld [vmem:[%s1353 + $0x28f8] sm:$0xff]
        %v3082 = vld [vmem:[%s1353 + $0x2900] sm:$0xff]
        %v3083 = vld [vmem:[%s1353 + $0x2908] sm:$0xff]
        %v3084 = vld [vmem:[%s1353 + $0x2910] sm:$0xff]
        %v3085 = vld [vmem:[%s1353 + $0x2918] sm:$0xff]
        %v3086 = vld [vmem:[%s1353 + $0x2920] sm:$0xff]
        %v3087 = vld [vmem:[%s1353 + $0x2928] sm:$0xff]
        %v3088 = vld [vmem:[%s1353 + $0x2930] sm:$0xff]
        %v3089 = vld [vmem:[%s1353 + $0x2938] sm:$0xff]
        %v3090 = vld [vmem:[%s1353 + $0x2940] sm:$0xff]
        %v3091 = vld [vmem:[%s1353 + $0x2948] sm:$0xff]
        %v3092 = vld [vmem:[%s1353 + $0x2950] sm:$0xff]
        %v3093 = vld [vmem:[%s1353 + $0x2958] sm:$0xff]
        %v3094 = vld [vmem:[%s1353 + $0x2960] sm:$0xff]
        %v3095 = vld [vmem:[%s1353 + $0x2968] sm:$0xff]
        %v3096 = vld [vmem:[%s1353 + $0x2970] sm:$0xff]
        %v3097 = vld [vmem:[%s1353 + $0x2978] sm:$0xff]
        %v3098 = vld [vmem:[%s1353 + $0x2980] sm:$0xff]
        %v3099 = vld [vmem:[%s1353 + $0x2988] sm:$0xff]
        %v3100 = vld [vmem:[%s1353 + $0x2990] sm:$0xff]
        %v3101 = vld [vmem:[%s1353 + $0x2998] sm:$0xff]
        %v3102 = vld [vmem:[%s1353 + $0x29a0] sm:$0xff]
        %v3103 = vld [vmem:[%s1353 + $0x29a8] sm:$0xff]
        %v3104 = vld [vmem:[%s1353 + $0x29b0] sm:$0xff]
        %v3105 = vld [vmem:[%s1353 + $0x29b8] sm:$0xff]
        %v3106 = vld [vmem:[%s1353 + $0x29c0] sm:$0xff]
        %v3107 = vld [vmem:[%s1353 + $0x29c8] sm:$0xff]
        %v3108 = vld [vmem:[%s1353 + $0x29d0] sm:$0xff]
        %v3109 = vld [vmem:[%s1353 + $0x29d8] sm:$0xff]
        %v3110 = vld [vmem:[%s1353 + $0x29e0] sm:$0xff]
        %v3111 = vld [vmem:[%s1353 + $0x29e8] sm:$0xff]
        %v3112 = vld [vmem:[%s1353 + $0x29f0] sm:$0xff]
        %v3113 = vld [vmem:[%s1353 + $0x29f8] sm:$0xff]
        %v3114 = vld [vmem:[%s1353 + $0x2a00] sm:$0xff]
        %v3115 = vld [vmem:[%s1353 + $0x2a08] sm:$0xff]
        %v3116 = vld [vmem:[%s1353 + $0x2a10] sm:$0xff]
        %v3117 = vld [vmem:[%s1353 + $0x2a18] sm:$0xff]
        %v3118 = vld [vmem:[%s1353 + $0x2a20] sm:$0xff]
        %v3119 = vld [vmem:[%s1353 + $0x2a28] sm:$0xff]
        %v3120 = vld [vmem:[%s1353 + $0x2a30] sm:$0xff]
        %v3121 = vld [vmem:[%s1353 + $0x2a38] sm:$0xff]
        %v3122 = vld [vmem:[%s1353 + $0x2a40] sm:$0xff]
        %v3123 = vld [vmem:[%s1353 + $0x2a48] sm:$0xff]
        %v3124 = vld [vmem:[%s1353 + $0x2a50] sm:$0xff]
        %v3125 = vld [vmem:[%s1353 + $0x2a58] sm:$0xff]
        %v3126 = vld [vmem:[%s1353 + $0x2a60] sm:$0xff]
        %v3127 = vld [vmem:[%s1353 + $0x2a68] sm:$0xff]
        %v3128 = vld [vmem:[%s1353 + $0x2a70] sm:$0xff]
        %v3129 = vld [vmem:[%s1353 + $0x2a78] sm:$0xff]
        %v3130 = vld [vmem:[%s1353 + $0x2a80] sm:$0xff]
        %v3131 = vld [vmem:[%s1353 + $0x2a88] sm:$0xff]
        %v3132 = vld [vmem:[%s1353 + $0x2a90] sm:$0xff]
        %v3133 = vld [vmem:[%s1353 + $0x2a98] sm:$0xff]
        %v3134 = vld [vmem:[%s1353 + $0x2aa0] sm:$0xff]
        %v3135 = vld [vmem:[%s1353 + $0x2aa8] sm:$0xff]
        %v3136 = vld [vmem:[%s1353 + $0x2ab0] sm:$0xff]
        %v3137 = vld [vmem:[%s1353 + $0x2ab8] sm:$0xff]
        %v3138 = vld [vmem:[%s1353 + $0x2ac0] sm:$0xff]
        %v3139 = vld [vmem:[%s1353 + $0x2ac8] sm:$0xff]
        %v3140 = vld [vmem:[%s1353 + $0x2ad0] sm:$0xff]
        %v3141 = vld [vmem:[%s1353 + $0x2ad8] sm:$0xff]
        %v3142 = vld [vmem:[%s1353 + $0x2ae0] sm:$0xff]
        %v3143 = vld [vmem:[%s1353 + $0x2ae8] sm:$0xff]
        %v3144 = vld [vmem:[%s1353 + $0x2af0] sm:$0xff]
        %v3145 = vld [vmem:[%s1353 + $0x2af8] sm:$0xff]
        %v3146 = vld [vmem:[%s1353 + $0x2b00] sm:$0xff]
        %v3147 = vld [vmem:[%s1353 + $0x2b08] sm:$0xff]
        %v3148 = vld [vmem:[%s1353 + $0x2b10] sm:$0xff]
        %v3149 = vld [vmem:[%s1353 + $0x2b18] sm:$0xff]
        %v3150 = vld [vmem:[%s1353 + $0x2b20] sm:$0xff]
        %v3151 = vld [vmem:[%s1353 + $0x2b28] sm:$0xff]
        %v3152 = vld [vmem:[%s1353 + $0x2b30] sm:$0xff]
        %v3153 = vld [vmem:[%s1353 + $0x2b38] sm:$0xff]
        %v3154 = vld [vmem:[%s1353 + $0x2b40] sm:$0xff]
        %v3155 = vld [vmem:[%s1353 + $0x2b48] sm:$0xff]
        %v3156 = vld [vmem:[%s1353 + $0x2b50] sm:$0xff]
        %v3157 = vld [vmem:[%s1353 + $0x2b58] sm:$0xff]
        %v3158 = vld [vmem:[%s1353 + $0x2b60] sm:$0xff]
        %v3159 = vld [vmem:[%s1353 + $0x2b68] sm:$0xff]
        %v3160 = vld [vmem:[%s1353 + $0x2b70] sm:$0xff]
        %v3161 = vld [vmem:[%s1353 + $0x2b78] sm:$0xff]
        %v3162 = vld [vmem:[%s1353 + $0x2b80] sm:$0xff]
        %v3163 = vld [vmem:[%s1353 + $0x2b88] sm:$0xff]
        %v3164 = vld [vmem:[%s1353 + $0x2b90] sm:$0xff]
        %v3165 = vld [vmem:[%s1353 + $0x2b98] sm:$0xff]
        %v3166 = vld [vmem:[%s1353 + $0x2ba0] sm:$0xff]
        %v3167 = vld [vmem:[%s1353 + $0x2ba8] sm:$0xff]
        %v3168 = vld [vmem:[%s1353 + $0x2bb0] sm:$0xff]
        %v3169 = vld [vmem:[%s1353 + $0x2bb8] sm:$0xff]
        %v3170 = vld [vmem:[%s1353 + $0x2bc0] sm:$0xff]
        %v3171 = vld [vmem:[%s1353 + $0x2bc8] sm:$0xff]
        %v3172 = vld [vmem:[%s1353 + $0x2bd0] sm:$0xff]
        %v3173 = vld [vmem:[%s1353 + $0x2bd8] sm:$0xff]
        %v3174 = vld [vmem:[%s1353 + $0x2be0] sm:$0xff]
        %v3175 = vld [vmem:[%s1353 + $0x2be8] sm:$0xff]
        %v3176 = vld [vmem:[%s1353 + $0x2bf0] sm:$0xff]
        %v3177 = vld [vmem:[%s1353 + $0x2bf8] sm:$0xff]
        %v3178 = vld [vmem:[%s1353 + $0x2c00] sm:$0xff]
        %v3179 = vld [vmem:[%s1353 + $0x2c08] sm:$0xff]
        %v3180 = vld [vmem:[%s1353 + $0x2c10] sm:$0xff]
        %v3181 = vld [vmem:[%s1353 + $0x2c18] sm:$0xff]
        %v3182 = vld [vmem:[%s1353 + $0x2c20] sm:$0xff]
        %v3183 = vld [vmem:[%s1353 + $0x2c28] sm:$0xff]
        %v3184 = vld [vmem:[%s1353 + $0x2c30] sm:$0xff]
        %v3185 = vld [vmem:[%s1353 + $0x2c38] sm:$0xff]
        %v3186 = vld [vmem:[%s1353 + $0x2c40] sm:$0xff]
        %v3187 = vld [vmem:[%s1353 + $0x2c48] sm:$0xff]
        %v3188 = vld [vmem:[%s1353 + $0x2c50] sm:$0xff]
        %v3189 = vld [vmem:[%s1353 + $0x2c58] sm:$0xff]
        %v3190 = vld [vmem:[%s1353 + $0x2c60] sm:$0xff]
        %v3191 = vld [vmem:[%s1353 + $0x2c68] sm:$0xff]
        %v3192 = vld [vmem:[%s1353 + $0x2c70] sm:$0xff]
        %v3193 = vld [vmem:[%s1353 + $0x2c78] sm:$0xff]
        %v3194 = vld [vmem:[%s1353 + $0x2c80] sm:$0xff]
        %v3195 = vld [vmem:[%s1353 + $0x2c88] sm:$0xff]
        %v3196 = vld [vmem:[%s1353 + $0x2c90] sm:$0xff]
        %v3197 = vld [vmem:[%s1353 + $0x2c98] sm:$0xff]
        %v3198 = vld [vmem:[%s1353 + $0x2ca0] sm:$0xff]
        %v3199 = vld [vmem:[%s1353 + $0x2ca8] sm:$0xff]
        %v3200 = vld [vmem:[%s1353 + $0x2cb0] sm:$0xff]
        %v3201 = vld [vmem:[%s1353 + $0x2cb8] sm:$0xff]
        %v3202 = vld [vmem:[%s1353 + $0x2cc0] sm:$0xff]
        %v3203 = vld [vmem:[%s1353 + $0x2cc8] sm:$0xff]
        %v3204 = vld [vmem:[%s1353 + $0x2cd0] sm:$0xff]
        %v3205 = vld [vmem:[%s1353 + $0x2cd8] sm:$0xff]
        %v3206 = vld [vmem:[%s1353 + $0x2ce0] sm:$0xff]
        %v3207 = vld [vmem:[%s1353 + $0x2ce8] sm:$0xff]
        %v3208 = vld [vmem:[%s1353 + $0x2cf0] sm:$0xff]
        %v3209 = vld [vmem:[%s1353 + $0x2cf8] sm:$0xff]
        %v3210 = vld [vmem:[%s1353 + $0x2d00] sm:$0xff]
        %v3211 = vld [vmem:[%s1353 + $0x2d08] sm:$0xff]
        %v3212 = vld [vmem:[%s1353 + $0x2d10] sm:$0xff]
        %v3213 = vld [vmem:[%s1353 + $0x2d18] sm:$0xff]
        %v3214 = vld [vmem:[%s1353 + $0x2d20] sm:$0xff]
        %v3215 = vld [vmem:[%s1353 + $0x2d28] sm:$0xff]
        %v3216 = vld [vmem:[%s1353 + $0x2d30] sm:$0xff]
        %v3217 = vld [vmem:[%s1353 + $0x2d38] sm:$0xff]
        %v3218 = vld [vmem:[%s1353 + $0x2d40] sm:$0xff]
        %v3219 = vld [vmem:[%s1353 + $0x2d48] sm:$0xff]
        %v3220 = vld [vmem:[%s1353 + $0x2d50] sm:$0xff]
        %v3221 = vld [vmem:[%s1353 + $0x2d58] sm:$0xff]
        %v3222 = vld [vmem:[%s1353 + $0x2d60] sm:$0xff]
        %v3223 = vld [vmem:[%s1353 + $0x2d68] sm:$0xff]
        %v3224 = vld [vmem:[%s1353 + $0x2d70] sm:$0xff]
        %v3225 = vld [vmem:[%s1353 + $0x2d78] sm:$0xff]
        %v3226 = vld [vmem:[%s1353 + $0x2d80] sm:$0xff]
        %v3227 = vld [vmem:[%s1353 + $0x2d88] sm:$0xff]
        %v3228 = vld [vmem:[%s1353 + $0x2d90] sm:$0xff]
        %v3229 = vld [vmem:[%s1353 + $0x2d98] sm:$0xff]
        %v3230 = vld [vmem:[%s1353 + $0x2da0] sm:$0xff]
        %v3231 = vld [vmem:[%s1353 + $0x2da8] sm:$0xff]
        %v3232 = vld [vmem:[%s1353 + $0x2db0] sm:$0xff]
        %v3233 = vld [vmem:[%s1353 + $0x2db8] sm:$0xff]
        %v3234 = vld [vmem:[%s1353 + $0x2dc0] sm:$0xff]
        %v3235 = vld [vmem:[%s1353 + $0x2dc8] sm:$0xff]
        %v3236 = vld [vmem:[%s1353 + $0x2dd0] sm:$0xff]
        %v3237 = vld [vmem:[%s1353 + $0x2dd8] sm:$0xff]
        %v3238 = vld [vmem:[%s1353 + $0x2de0] sm:$0xff]
        %v3239 = vld [vmem:[%s1353 + $0x2de8] sm:$0xff]
        %v3240 = vld [vmem:[%s1353 + $0x2df0] sm:$0xff]
        %v3241 = vld [vmem:[%s1353 + $0x2df8] sm:$0xff]
        %v3242 = vld [vmem:[%s1353 + $0x2e00] sm:$0xff]
        %v3243 = vld [vmem:[%s1353 + $0x2e08] sm:$0xff]
        %v3244 = vld [vmem:[%s1353 + $0x2e10] sm:$0xff]
        %v3245 = vld [vmem:[%s1353 + $0x2e18] sm:$0xff]
        %v3246 = vld [vmem:[%s1353 + $0x2e20] sm:$0xff]
        %v3247 = vld [vmem:[%s1353 + $0x2e28] sm:$0xff]
        %v3248 = vld [vmem:[%s1353 + $0x2e30] sm:$0xff]
        %v3249 = vld [vmem:[%s1353 + $0x2e38] sm:$0xff]
        %v3250 = vld [vmem:[%s1353 + $0x2e40] sm:$0xff]
        %v3251 = vld [vmem:[%s1353 + $0x2e48] sm:$0xff]
        %v3252 = vld [vmem:[%s1353 + $0x2e50] sm:$0xff]
        %v3253 = vld [vmem:[%s1353 + $0x2e58] sm:$0xff]
        %v3254 = vld [vmem:[%s1353 + $0x2e60] sm:$0xff]
        %v3255 = vld [vmem:[%s1353 + $0x2e68] sm:$0xff]
        %v3256 = vld [vmem:[%s1353 + $0x2e70] sm:$0xff]
        %v3257 = vld [vmem:[%s1353 + $0x2e78] sm:$0xff]
        %v3258 = vld [vmem:[%s1353 + $0x2e80] sm:$0xff]
        %v3259 = vld [vmem:[%s1353 + $0x2e88] sm:$0xff]
        %v3260 = vld [vmem:[%s1353 + $0x2e90] sm:$0xff]
        %v3261 = vld [vmem:[%s1353 + $0x2e98] sm:$0xff]
        %v3262 = vld [vmem:[%s1353 + $0x2ea0] sm:$0xff]
        %v3263 = vld [vmem:[%s1353 + $0x2ea8] sm:$0xff]
        %v3264 = vld [vmem:[%s1353 + $0x2eb0] sm:$0xff]
        %v3265 = vld [vmem:[%s1353 + $0x2eb8] sm:$0xff]
        %v3266 = vld [vmem:[%s1353 + $0x2ec0] sm:$0xff]
        %v3267 = vld [vmem:[%s1353 + $0x2ec8] sm:$0xff]
        %v3268 = vld [vmem:[%s1353 + $0x2ed0] sm:$0xff]
        %v3269 = vld [vmem:[%s1353 + $0x2ed8] sm:$0xff]
        %v3270 = vld [vmem:[%s1353 + $0x2ee0] sm:$0xff]
        %v3271 = vld [vmem:[%s1353 + $0x2ee8] sm:$0xff]
        %v3272 = vld [vmem:[%s1353 + $0x2ef0] sm:$0xff]
        %v3273 = vld [vmem:[%s1353 + $0x2ef8] sm:$0xff]
        %v3274 = vld [vmem:[%s1353 + $0x2f00] sm:$0xff]
        %v3275 = vld [vmem:[%s1353 + $0x2f08] sm:$0xff]
        %v3276 = vld [vmem:[%s1353 + $0x2f10] sm:$0xff]
        %v3277 = vld [vmem:[%s1353 + $0x2f18] sm:$0xff]
        %v3278 = vld [vmem:[%s1353 + $0x2f20] sm:$0xff]
        %v3279 = vld [vmem:[%s1353 + $0x2f28] sm:$0xff]
        %v3280 = vld [vmem:[%s1353 + $0x2f30] sm:$0xff]
        %v3281 = vld [vmem:[%s1353 + $0x2f38] sm:$0xff]
        %v3282 = vld [vmem:[%s1353 + $0x2f40] sm:$0xff]
        %v3283 = vld [vmem:[%s1353 + $0x2f48] sm:$0xff]
        %v3284 = vld [vmem:[%s1353 + $0x2f50] sm:$0xff]
        %v3285 = vld [vmem:[%s1353 + $0x2f58] sm:$0xff]
        %v3286 = vld [vmem:[%s1353 + $0x2f60] sm:$0xff]
        %v3287 = vld [vmem:[%s1353 + $0x2f68] sm:$0xff]
        %v3288 = vld [vmem:[%s1353 + $0x2f70] sm:$0xff]
        %v3289 = vld [vmem:[%s1353 + $0x2f78] sm:$0xff]
        %v3290 = vld [vmem:[%s1353 + $0x2f80] sm:$0xff]
        %v3291 = vld [vmem:[%s1353 + $0x2f88] sm:$0xff]
        %v3292 = vld [vmem:[%s1353 + $0x2f90] sm:$0xff]
        %v3293 = vld [vmem:[%s1353 + $0x2f98] sm:$0xff]
        %v3294 = vld [vmem:[%s1353 + $0x2fa0] sm:$0xff]
        %v3295 = vld [vmem:[%s1353 + $0x2fa8] sm:$0xff]
        %v3296 = vld [vmem:[%s1353 + $0x2fb0] sm:$0xff]
        %v3297 = vld [vmem:[%s1353 + $0x2fb8] sm:$0xff]
        %v3298 = vld [vmem:[%s1353 + $0x2fc0] sm:$0xff]
        %v3299 = vld [vmem:[%s1353 + $0x2fc8] sm:$0xff]
        %v3300 = vld [vmem:[%s1353 + $0x2fd0] sm:$0xff]
        %v3301 = vld [vmem:[%s1353 + $0x2fd8] sm:$0xff]
        %v3302 = vld [vmem:[%s1353 + $0x2fe0] sm:$0xff]
        %v3303 = vld [vmem:[%s1353 + $0x2fe8] sm:$0xff]
        %v3304 = vld [vmem:[%s1353 + $0x2ff0] sm:$0xff]
        %v3305 = vld [vmem:[%s1353 + $0x2ff8] sm:$0xff]
        %v3306 = vld [vmem:[%s1353 + $0x3000] sm:$0xff]
        %v3307 = vld [vmem:[%s1353 + $0x3008] sm:$0xff]
        %v3308 = vld [vmem:[%s1353 + $0x3010] sm:$0xff]
        %v3309 = vld [vmem:[%s1353 + $0x3018] sm:$0xff]
        %v3310 = vld [vmem:[%s1353 + $0x3020] sm:$0xff]
        %v3311 = vld [vmem:[%s1353 + $0x3028] sm:$0xff]
        %v3312 = vld [vmem:[%s1353 + $0x3030] sm:$0xff]
        %v3313 = vld [vmem:[%s1353 + $0x3038] sm:$0xff]
        %v3314 = vld [vmem:[%s1353 + $0x3040] sm:$0xff]
        %v3315 = vld [vmem:[%s1353 + $0x3048] sm:$0xff]
        %v3316 = vld [vmem:[%s1353 + $0x3050] sm:$0xff]
        %v3317 = vld [vmem:[%s1353 + $0x3058] sm:$0xff]
        %v3318 = vld [vmem:[%s1353 + $0x3060] sm:$0xff]
        %v3319 = vld [vmem:[%s1353 + $0x3068] sm:$0xff]
        %v3320 = vld [vmem:[%s1353 + $0x3070] sm:$0xff]
        %v3321 = vld [vmem:[%s1353 + $0x3078] sm:$0xff]
        %v3322 = vld [vmem:[%s1353 + $0x3080] sm:$0xff]
        %v3323 = vld [vmem:[%s1353 + $0x3088] sm:$0xff]
        %v3324 = vld [vmem:[%s1353 + $0x3090] sm:$0xff]
        %v3325 = vld [vmem:[%s1353 + $0x3098] sm:$0xff]
        %v3326 = vld [vmem:[%s1353 + $0x30a0] sm:$0xff]
        %v3327 = vld [vmem:[%s1353 + $0x30a8] sm:$0xff]
        %v3328 = vld [vmem:[%s1353 + $0x30b0] sm:$0xff]
        %v3329 = vld [vmem:[%s1353 + $0x30b8] sm:$0xff]
        %v3330 = vld [vmem:[%s1353 + $0x30c0] sm:$0xff]
        %v3331 = vld [vmem:[%s1353 + $0x30c8] sm:$0xff]
        %v3332 = vld [vmem:[%s1353 + $0x30d0] sm:$0xff]
        %v3333 = vld [vmem:[%s1353 + $0x30d8] sm:$0xff]
        %v3334 = vld [vmem:[%s1353 + $0x30e0] sm:$0xff]
        %v3335 = vld [vmem:[%s1353 + $0x30e8] sm:$0xff]
        %v3336 = vld [vmem:[%s1353 + $0x30f0] sm:$0xff]
        %v3337 = vld [vmem:[%s1353 + $0x30f8] sm:$0xff]
        %v3338 = vld [vmem:[%s1353 + $0x3100] sm:$0xff]
        %v3339 = vld [vmem:[%s1353 + $0x3108] sm:$0xff]
        %v3340 = vld [vmem:[%s1353 + $0x3110] sm:$0xff]
        %v3341 = vld [vmem:[%s1353 + $0x3118] sm:$0xff]
        %v3342 = vld [vmem:[%s1353 + $0x3120] sm:$0xff]
        %v3343 = vld [vmem:[%s1353 + $0x3128] sm:$0xff]
        %v3344 = vld [vmem:[%s1353 + $0x3130] sm:$0xff]
        %v3345 = vld [vmem:[%s1353 + $0x3138] sm:$0xff]
        %v3346 = vld [vmem:[%s1353 + $0x3140] sm:$0xff]
        %v3347 = vld [vmem:[%s1353 + $0x3148] sm:$0xff]
        %v3348 = vld [vmem:[%s1353 + $0x3150] sm:$0xff]
        %v3349 = vld [vmem:[%s1353 + $0x3158] sm:$0xff]
        %v3350 = vld [vmem:[%s1353 + $0x3160] sm:$0xff]
        %v3351 = vld [vmem:[%s1353 + $0x3168] sm:$0xff]
        %v3352 = vld [vmem:[%s1353 + $0x3170] sm:$0xff]
        %v3353 = vld [vmem:[%s1353 + $0x3178] sm:$0xff]
        %v3354 = vld [vmem:[%s1353 + $0x3180] sm:$0xff]
        %v3355 = vld [vmem:[%s1353 + $0x3188] sm:$0xff]
        %v3356 = vld [vmem:[%s1353 + $0x3190] sm:$0xff]
        %v3357 = vld [vmem:[%s1353 + $0x3198] sm:$0xff]
        %v3358 = vld [vmem:[%s1353 + $0x31a0] sm:$0xff]
        %v3359 = vld [vmem:[%s1353 + $0x31a8] sm:$0xff]
        %v3360 = vld [vmem:[%s1353 + $0x31b0] sm:$0xff]
        %v3361 = vld [vmem:[%s1353 + $0x31b8] sm:$0xff]
        %v3362 = vld [vmem:[%s1353 + $0x31c0] sm:$0xff]
        %v3363 = vld [vmem:[%s1353 + $0x31c8] sm:$0xff]
        %v3364 = vld [vmem:[%s1353 + $0x31d0] sm:$0xff]
        %v3365 = vld [vmem:[%s1353 + $0x31d8] sm:$0xff]
        %v3366 = vld [vmem:[%s1353 + $0x31e0] sm:$0xff]
        %v3367 = vld [vmem:[%s1353 + $0x31e8] sm:$0xff]
        %v3368 = vld [vmem:[%s1353 + $0x31f0] sm:$0xff]
        %v3369 = vld [vmem:[%s1353 + $0x31f8] sm:$0xff]
        %v3370 = vld [vmem:[%s1353 + $0x3200] sm:$0xff]
        %v3371 = vld [vmem:[%s1353 + $0x3208] sm:$0xff]
        %v3372 = vld [vmem:[%s1353 + $0x3210] sm:$0xff]
        %v3373 = vld [vmem:[%s1353 + $0x3218] sm:$0xff]
        %v3374 = vld [vmem:[%s1353 + $0x3220] sm:$0xff]
        %v3375 = vld [vmem:[%s1353 + $0x3228] sm:$0xff]
        %v3376 = vld [vmem:[%s1353 + $0x3230] sm:$0xff]
        %v3377 = vld [vmem:[%s1353 + $0x3238] sm:$0xff]
        %v3378 = vld [vmem:[%s1353 + $0x3240] sm:$0xff]
        %v3379 = vld [vmem:[%s1353 + $0x3248] sm:$0xff]
        %v3380 = vld [vmem:[%s1353 + $0x3250] sm:$0xff]
        %v3381 = vld [vmem:[%s1353 + $0x3258] sm:$0xff]
        %v3382 = vld [vmem:[%s1353 + $0x3260] sm:$0xff]
        %v3383 = vld [vmem:[%s1353 + $0x3268] sm:$0xff]
        %v3384 = vld [vmem:[%s1353 + $0x3270] sm:$0xff]
        %v3385 = vld [vmem:[%s1353 + $0x3278] sm:$0xff]
        %v3386 = vld [vmem:[%s1353 + $0x3280] sm:$0xff]
        %v3387 = vld [vmem:[%s1353 + $0x3288] sm:$0xff]
        %v3388 = vld [vmem:[%s1353 + $0x3290] sm:$0xff]
        %v3389 = vld [vmem:[%s1353 + $0x3298] sm:$0xff]
        %v3390 = vld [vmem:[%s1353 + $0x32a0] sm:$0xff]
        %v3391 = vld [vmem:[%s1353 + $0x32a8] sm:$0xff]
        %v3392 = vld [vmem:[%s1353 + $0x32b0] sm:$0xff]
        %v3393 = vld [vmem:[%s1353 + $0x32b8] sm:$0xff]
        %v3394 = vld [vmem:[%s1353 + $0x32c0] sm:$0xff]
        %v3395 = vld [vmem:[%s1353 + $0x32c8] sm:$0xff]
        %v3396 = vld [vmem:[%s1353 + $0x32d0] sm:$0xff]
        %v3397 = vld [vmem:[%s1353 + $0x32d8] sm:$0xff]
        %v3398 = vld [vmem:[%s1353 + $0x32e0] sm:$0xff]
        %v3399 = vld [vmem:[%s1353 + $0x32e8] sm:$0xff]
        %v3400 = vld [vmem:[%s1353 + $0x32f0] sm:$0xff]
        %v3401 = vld [vmem:[%s1353 + $0x32f8] sm:$0xff]
        %v3402 = vld [vmem:[%s1353 + $0x3300] sm:$0xff]
        %v3403 = vld [vmem:[%s1353 + $0x3308] sm:$0xff]
        %v3404 = vld [vmem:[%s1353 + $0x3310] sm:$0xff]
        %v3405 = vld [vmem:[%s1353 + $0x3318] sm:$0xff]
        %v3406 = vld [vmem:[%s1353 + $0x3320] sm:$0xff]
        %v3407 = vld [vmem:[%s1353 + $0x3328] sm:$0xff]
        %v3408 = vld [vmem:[%s1353 + $0x3330] sm:$0xff]
        %v3409 = vld [vmem:[%s1353 + $0x3338] sm:$0xff]
        %v3410 = vld [vmem:[%s1353 + $0x3340] sm:$0xff]
        %v3411 = vld [vmem:[%s1353 + $0x3348] sm:$0xff]
        %v3412 = vld [vmem:[%s1353 + $0x3350] sm:$0xff]
        %v3413 = vld [vmem:[%s1353 + $0x3358] sm:$0xff]
        %v3414 = vld [vmem:[%s1353 + $0x3360] sm:$0xff]
        %v3415 = vld [vmem:[%s1353 + $0x3368] sm:$0xff]
        %v3416 = vld [vmem:[%s1353 + $0x3370] sm:$0xff]
        %v3417 = vld [vmem:[%s1353 + $0x3378] sm:$0xff]
        %v3418 = vld [vmem:[%s1353 + $0x3380] sm:$0xff]
        %v3419 = vld [vmem:[%s1353 + $0x3388] sm:$0xff]
        %v3420 = vld [vmem:[%s1353 + $0x3390] sm:$0xff]
        %v3421 = vld [vmem:[%s1353 + $0x3398] sm:$0xff]
        %v3422 = vld [vmem:[%s1353 + $0x33a0] sm:$0xff]
        %v3423 = vld [vmem:[%s1353 + $0x33a8] sm:$0xff]
        %v3424 = vld [vmem:[%s1353 + $0x33b0] sm:$0xff]
        %v3425 = vld [vmem:[%s1353 + $0x33b8] sm:$0xff]
        %v3426 = vld [vmem:[%s1353 + $0x33c0] sm:$0xff]
        %v3427 = vld [vmem:[%s1353 + $0x33c8] sm:$0xff]
        %v3428 = vld [vmem:[%s1353 + $0x33d0] sm:$0xff]
        %v3429 = vld [vmem:[%s1353 + $0x33d8] sm:$0xff]
        %v3430 = vld [vmem:[%s1353 + $0x33e0] sm:$0xff]
        %v3431 = vld [vmem:[%s1353 + $0x33e8] sm:$0xff]
        %v3432 = vld [vmem:[%s1353 + $0x33f0] sm:$0xff]
        %v3433 = vld [vmem:[%s1353 + $0x33f8] sm:$0xff]
        %v3434 = vld [vmem:[%s1353 + $0x3400] sm:$0xff]
        %v3435 = vld [vmem:[%s1353 + $0x3408] sm:$0xff]
        %v3436 = vld [vmem:[%s1353 + $0x3410] sm:$0xff]
        %v3437 = vld [vmem:[%s1353 + $0x3418] sm:$0xff]
        %v3438 = vld [vmem:[%s1353 + $0x3420] sm:$0xff]
        %v3439 = vld [vmem:[%s1353 + $0x3428] sm:$0xff]
        %v3440 = vld [vmem:[%s1353 + $0x3430] sm:$0xff]
        %v3441 = vld [vmem:[%s1353 + $0x3438] sm:$0xff]
        %v3442 = vld [vmem:[%s1353 + $0x3440] sm:$0xff]
        %v3443 = vld [vmem:[%s1353 + $0x3448] sm:$0xff]
        %v3444 = vld [vmem:[%s1353 + $0x3450] sm:$0xff]
        %v3445 = vld [vmem:[%s1353 + $0x3458] sm:$0xff]
        %v3446 = vld [vmem:[%s1353 + $0x3460] sm:$0xff]
        %v3447 = vld [vmem:[%s1353 + $0x3468] sm:$0xff]
        %v3448 = vld [vmem:[%s1353 + $0x3470] sm:$0xff]
        %v3449 = vld [vmem:[%s1353 + $0x3478] sm:$0xff]
        %v3450 = vld [vmem:[%s1353 + $0x3480] sm:$0xff]
        %v3451 = vld [vmem:[%s1353 + $0x3488] sm:$0xff]
        %v3452 = vld [vmem:[%s1353 + $0x3490] sm:$0xff]
        %v3453 = vld [vmem:[%s1353 + $0x3498] sm:$0xff]
        %v3454 = vld [vmem:[%s1353 + $0x34a0] sm:$0xff]
        %v3455 = vld [vmem:[%s1353 + $0x34a8] sm:$0xff]
        %v3456 = vld [vmem:[%s1353 + $0x34b0] sm:$0xff]
        %v3457 = vld [vmem:[%s1353 + $0x34b8] sm:$0xff]
        %v3458 = vld [vmem:[%s1353 + $0x34c0] sm:$0xff]
        %v3459 = vld [vmem:[%s1353 + $0x34c8] sm:$0xff]
        %v3460 = vld [vmem:[%s1353 + $0x34d0] sm:$0xff]
        %v3461 = vld [vmem:[%s1353 + $0x34d8] sm:$0xff]
        %v3462 = vld [vmem:[%s1353 + $0x34e0] sm:$0xff]
        %v3463 = vld [vmem:[%s1353 + $0x34e8] sm:$0xff]
        %v3464 = vld [vmem:[%s1353 + $0x34f0] sm:$0xff]
        %v3465 = vld [vmem:[%s1353 + $0x34f8] sm:$0xff]
        %v3466 = vld [vmem:[%s1353 + $0x3500] sm:$0xff]
        %v3467 = vld [vmem:[%s1353 + $0x3508] sm:$0xff]
        %v3468 = vld [vmem:[%s1353 + $0x3510] sm:$0xff]
        %v3469 = vld [vmem:[%s1353 + $0x3518] sm:$0xff]
        %v3470 = vld [vmem:[%s1353 + $0x3520] sm:$0xff]
        %v3471 = vld [vmem:[%s1353 + $0x3528] sm:$0xff]
        %v3472 = vld [vmem:[%s1353 + $0x3530] sm:$0xff]
        %v3473 = vld [vmem:[%s1353 + $0x3538] sm:$0xff]
        %v3474 = vld [vmem:[%s1353 + $0x3540] sm:$0xff]
        %v3475 = vld [vmem:[%s1353 + $0x3548] sm:$0xff]
        %v3476 = vld [vmem:[%s1353 + $0x3550] sm:$0xff]
        %v3477 = vld [vmem:[%s1353 + $0x3558] sm:$0xff]
        %v3478 = vld [vmem:[%s1353 + $0x3560] sm:$0xff]
        %v3479 = vld [vmem:[%s1353 + $0x3568] sm:$0xff]
        %v3480 = vld [vmem:[%s1353 + $0x3570] sm:$0xff]
        %v3481 = vld [vmem:[%s1353 + $0x3578] sm:$0xff]
        %v3482 = vld [vmem:[%s1353 + $0x3580] sm:$0xff]
        %v3483 = vld [vmem:[%s1353 + $0x3588] sm:$0xff]
        %v3484 = vld [vmem:[%s1353 + $0x3590] sm:$0xff]
        %v3485 = vld [vmem:[%s1353 + $0x3598] sm:$0xff]
        %v3486 = vld [vmem:[%s1353 + $0x35a0] sm:$0xff]
        %v3487 = vld [vmem:[%s1353 + $0x35a8] sm:$0xff]
        %v3488 = vld [vmem:[%s1353 + $0x35b0] sm:$0xff]
        %v3489 = vld [vmem:[%s1353 + $0x35b8] sm:$0xff]
        %v3490 = vld [vmem:[%s1353 + $0x35c0] sm:$0xff]
        %v3491 = vld [vmem:[%s1353 + $0x35c8] sm:$0xff]
        %v3492 = vld [vmem:[%s1353 + $0x35d0] sm:$0xff]
        %v3493 = vld [vmem:[%s1353 + $0x35d8] sm:$0xff]
        %v3494 = vld [vmem:[%s1353 + $0x35e0] sm:$0xff]
        %v3495 = vld [vmem:[%s1353 + $0x35e8] sm:$0xff]
        %v3496 = vld [vmem:[%s1353 + $0x35f0] sm:$0xff]
        %v3497 = vld [vmem:[%s1353 + $0x35f8] sm:$0xff]
        %v3498 = vld [vmem:[%s1353 + $0x3600] sm:$0xff]
        %v3499 = vld [vmem:[%s1353 + $0x3608] sm:$0xff]
        %v3500 = vld [vmem:[%s1353 + $0x3610] sm:$0xff]
        %v3501 = vld [vmem:[%s1353 + $0x3618] sm:$0xff]
        %v3502 = vld [vmem:[%s1353 + $0x3620] sm:$0xff]
        %v3503 = vld [vmem:[%s1353 + $0x3628] sm:$0xff]
        %v3504 = vld [vmem:[%s1353 + $0x3630] sm:$0xff]
        %v3505 = vld [vmem:[%s1353 + $0x3638] sm:$0xff]
        %v3506 = vld [vmem:[%s1353 + $0x3640] sm:$0xff]
        %v3507 = vld [vmem:[%s1353 + $0x3648] sm:$0xff]
        %v3508 = vld [vmem:[%s1353 + $0x3650] sm:$0xff]
        %v3509 = vld [vmem:[%s1353 + $0x3658] sm:$0xff]
        %v3510 = vld [vmem:[%s1353 + $0x3660] sm:$0xff]
        %v3511 = vld [vmem:[%s1353 + $0x3668] sm:$0xff]
        %v3512 = vld [vmem:[%s1353 + $0x3670] sm:$0xff]
        %v3513 = vld [vmem:[%s1353 + $0x3678] sm:$0xff]
        %v3514 = vld [vmem:[%s1353 + $0x3680] sm:$0xff]
        %v3515 = vld [vmem:[%s1353 + $0x3688] sm:$0xff]
        %v3516 = vld [vmem:[%s1353 + $0x3690] sm:$0xff]
        %v3517 = vld [vmem:[%s1353 + $0x3698] sm:$0xff]
        %v3518 = vld [vmem:[%s1353 + $0x36a0] sm:$0xff]
        %v3519 = vld [vmem:[%s1353 + $0x36a8] sm:$0xff]
        %v3520 = vld [vmem:[%s1353 + $0x36b0] sm:$0xff]
        %v3521 = vld [vmem:[%s1353 + $0x36b8] sm:$0xff]
        %v3522 = vld [vmem:[%s1353 + $0x36c0] sm:$0xff]
        %v3523 = vld [vmem:[%s1353 + $0x36c8] sm:$0xff]
        %v3524 = vld [vmem:[%s1353 + $0x36d0] sm:$0xff]
        %v3525 = vld [vmem:[%s1353 + $0x36d8] sm:$0xff]
        %v3526 = vld [vmem:[%s1353 + $0x36e0] sm:$0xff]
        %v3527 = vld [vmem:[%s1353 + $0x36e8] sm:$0xff]
        %v3528 = vld [vmem:[%s1353 + $0x36f0] sm:$0xff]
        %v3529 = vld [vmem:[%s1353 + $0x36f8] sm:$0xff]
        %v3530 = vld [vmem:[%s1353 + $0x3700] sm:$0xff]
        %v3531 = vld [vmem:[%s1353 + $0x3708] sm:$0xff]
        %v3532 = vld [vmem:[%s1353 + $0x3710] sm:$0xff]
        %v3533 = vld [vmem:[%s1353 + $0x3718] sm:$0xff]
        %v3534 = vld [vmem:[%s1353 + $0x3720] sm:$0xff]
        %v3535 = vld [vmem:[%s1353 + $0x3728] sm:$0xff]
        %v3536 = vld [vmem:[%s1353 + $0x3730] sm:$0xff]
        %v3537 = vld [vmem:[%s1353 + $0x3738] sm:$0xff]
        %v3538 = vld [vmem:[%s1353 + $0x3740] sm:$0xff]
        %v3539 = vld [vmem:[%s1353 + $0x3748] sm:$0xff]
        %v3540 = vld [vmem:[%s1353 + $0x3750] sm:$0xff]
        %v3541 = vld [vmem:[%s1353 + $0x3758] sm:$0xff]
        %v3542 = vld [vmem:[%s1353 + $0x3760] sm:$0xff]
        %v3543 = vld [vmem:[%s1353 + $0x3768] sm:$0xff]
        %v3544 = vld [vmem:[%s1353 + $0x3770] sm:$0xff]
        %v3545 = vld [vmem:[%s1353 + $0x3778] sm:$0xff]
        %v3546 = vld [vmem:[%s1353 + $0x3780] sm:$0xff]
        %v3547 = vld [vmem:[%s1353 + $0x3788] sm:$0xff]
        %v3548 = vld [vmem:[%s1353 + $0x3790] sm:$0xff]
        %v3549 = vld [vmem:[%s1353 + $0x3798] sm:$0xff]
        %v3550 = vld [vmem:[%s1353 + $0x37a0] sm:$0xff]
        %v3551 = vld [vmem:[%s1353 + $0x37a8] sm:$0xff]
        %v3552 = vld [vmem:[%s1353 + $0x37b0] sm:$0xff]
        %v3553 = vld [vmem:[%s1353 + $0x37b8] sm:$0xff]
        %v3554 = vld [vmem:[%s1353 + $0x37c0] sm:$0xff]
        %v3555 = vld [vmem:[%s1353 + $0x37c8] sm:$0xff]
        %v3556 = vld [vmem:[%s1353 + $0x37d0] sm:$0xff]
        %v3557 = vld [vmem:[%s1353 + $0x37d8] sm:$0xff]
        %v3558 = vld [vmem:[%s1353 + $0x37e0] sm:$0xff]
        %v3559 = vld [vmem:[%s1353 + $0x37e8] sm:$0xff]
        %v3560 = vld [vmem:[%s1353 + $0x37f0] sm:$0xff]
        %v3561 = vld [vmem:[%s1353 + $0x37f8] sm:$0xff]
        %v3562 = vld [vmem:[%s1353 + $0x3800] sm:$0xff]
        %v3563 = vld [vmem:[%s1353 + $0x3808] sm:$0xff]
        %v3564 = vld [vmem:[%s1353 + $0x3810] sm:$0xff]
        %v3565 = vld [vmem:[%s1353 + $0x3818] sm:$0xff]
        %v3566 = vld [vmem:[%s1353 + $0x3820] sm:$0xff]
        %v3567 = vld [vmem:[%s1353 + $0x3828] sm:$0xff]
        %v3568 = vld [vmem:[%s1353 + $0x3830] sm:$0xff]
        %v3569 = vld [vmem:[%s1353 + $0x3838] sm:$0xff]
        %v3570 = vld [vmem:[%s1353 + $0x3840] sm:$0xff]
        %v3571 = vld [vmem:[%s1353 + $0x3848] sm:$0xff]
        %v3572 = vld [vmem:[%s1353 + $0x3850] sm:$0xff]
        %v3573 = vld [vmem:[%s1353 + $0x3858] sm:$0xff]
        %v3574 = vld [vmem:[%s1353 + $0x3860] sm:$0xff]
        %v3575 = vld [vmem:[%s1353 + $0x3868] sm:$0xff]
        %v3576 = vld [vmem:[%s1353 + $0x3870] sm:$0xff]
        %v3577 = vld [vmem:[%s1353 + $0x3878] sm:$0xff]
        %v3578 = vld [vmem:[%s1353 + $0x3880] sm:$0xff]
        %v3579 = vld [vmem:[%s1353 + $0x3888] sm:$0xff]
        %v3580 = vld [vmem:[%s1353 + $0x3890] sm:$0xff]
        %v3581 = vld [vmem:[%s1353 + $0x3898] sm:$0xff]
        %v3582 = vld [vmem:[%s1353 + $0x38a0] sm:$0xff]
        %v3583 = vld [vmem:[%s1353 + $0x38a8] sm:$0xff]
        %v3584 = vld [vmem:[%s1353 + $0x38b0] sm:$0xff]
        %v3585 = vld [vmem:[%s1353 + $0x38b8] sm:$0xff]
        %v3586 = vld [vmem:[%s1353 + $0x38c0] sm:$0xff]
        %v3587 = vld [vmem:[%s1353 + $0x38c8] sm:$0xff]
        %v3588 = vld [vmem:[%s1353 + $0x38d0] sm:$0xff]
        %v3589 = vld [vmem:[%s1353 + $0x38d8] sm:$0xff]
        %v3590 = vld [vmem:[%s1353 + $0x38e0] sm:$0xff]
        %v3591 = vld [vmem:[%s1353 + $0x38e8] sm:$0xff]
        %v3592 = vld [vmem:[%s1353 + $0x38f0] sm:$0xff]
        %v3593 = vld [vmem:[%s1353 + $0x38f8] sm:$0xff]
        %v3594 = vld [vmem:[%s1353 + $0x3900] sm:$0xff]
        %v3595 = vld [vmem:[%s1353 + $0x3908] sm:$0xff]
        %v3596 = vld [vmem:[%s1353 + $0x3910] sm:$0xff]
        %v3597 = vld [vmem:[%s1353 + $0x3918] sm:$0xff]
        %v3598 = vld [vmem:[%s1353 + $0x3920] sm:$0xff]
        %v3599 = vld [vmem:[%s1353 + $0x3928] sm:$0xff]
        %v3600 = vld [vmem:[%s1353 + $0x3930] sm:$0xff]
        %v3601 = vld [vmem:[%s1353 + $0x3938] sm:$0xff]
        %v3602 = vld [vmem:[%s1353 + $0x3940] sm:$0xff]
        %v3603 = vld [vmem:[%s1353 + $0x3948] sm:$0xff]
        %v3604 = vld [vmem:[%s1353 + $0x3950] sm:$0xff]
        %v3605 = vld [vmem:[%s1353 + $0x3958] sm:$0xff]
        %v3606 = vld [vmem:[%s1353 + $0x3960] sm:$0xff]
        %v3607 = vld [vmem:[%s1353 + $0x3968] sm:$0xff]
        %v3608 = vld [vmem:[%s1353 + $0x3970] sm:$0xff]
        %v3609 = vld [vmem:[%s1353 + $0x3978] sm:$0xff]
        %v3610 = vld [vmem:[%s1353 + $0x3980] sm:$0xff]
        %v3611 = vld [vmem:[%s1353 + $0x3988] sm:$0xff]
        %v3612 = vld [vmem:[%s1353 + $0x3990] sm:$0xff]
        %v3613 = vld [vmem:[%s1353 + $0x3998] sm:$0xff]
        %v3614 = vld [vmem:[%s1353 + $0x39a0] sm:$0xff]
        %v3615 = vld [vmem:[%s1353 + $0x39a8] sm:$0xff]
        %v3616 = vld [vmem:[%s1353 + $0x39b0] sm:$0xff]
        %v3617 = vld [vmem:[%s1353 + $0x39b8] sm:$0xff]
        %v3618 = vld [vmem:[%s1353 + $0x39c0] sm:$0xff]
        %v3619 = vld [vmem:[%s1353 + $0x39c8] sm:$0xff]
        %v3620 = vld [vmem:[%s1353 + $0x39d0] sm:$0xff]
        %v3621 = vld [vmem:[%s1353 + $0x39d8] sm:$0xff]
        %v3622 = vld [vmem:[%s1353 + $0x39e0] sm:$0xff]
        %v3623 = vld [vmem:[%s1353 + $0x39e8] sm:$0xff]
        %v3624 = vld [vmem:[%s1353 + $0x39f0] sm:$0xff]
        %v3625 = vld [vmem:[%s1353 + $0x39f8] sm:$0xff]
        %v3626 = vld [vmem:[%s1353 + $0x3a00] sm:$0xff]
        %v3627 = vld [vmem:[%s1353 + $0x3a08] sm:$0xff]
        %v3628 = vld [vmem:[%s1353 + $0x3a10] sm:$0xff]
        %v3629 = vld [vmem:[%s1353 + $0x3a18] sm:$0xff]
        %v3630 = vld [vmem:[%s1353 + $0x3a20] sm:$0xff]
        %v3631 = vld [vmem:[%s1353 + $0x3a28] sm:$0xff]
        %v3632 = vld [vmem:[%s1353 + $0x3a30] sm:$0xff]
        %v3633 = vld [vmem:[%s1353 + $0x3a38] sm:$0xff]
        %v3634 = vld [vmem:[%s1353 + $0x3a40] sm:$0xff]
        %v3635 = vld [vmem:[%s1353 + $0x3a48] sm:$0xff]
        %v3636 = vld [vmem:[%s1353 + $0x3a50] sm:$0xff]
        %v3637 = vld [vmem:[%s1353 + $0x3a58] sm:$0xff]
        %v3638 = vld [vmem:[%s1353 + $0x3a60] sm:$0xff]
        %v3639 = vld [vmem:[%s1353 + $0x3a68] sm:$0xff]
        %v3640 = vld [vmem:[%s1353 + $0x3a70] sm:$0xff]
        %v3641 = vld [vmem:[%s1353 + $0x3a78] sm:$0xff]
        %v3642 = vld [vmem:[%s1353 + $0x3a80] sm:$0xff]
        %v3643 = vld [vmem:[%s1353 + $0x3a88] sm:$0xff]
        %v3644 = vld [vmem:[%s1353 + $0x3a90] sm:$0xff]
        %v3645 = vld [vmem:[%s1353 + $0x3a98] sm:$0xff]
        %v3646 = vld [vmem:[%s1353 + $0x3aa0] sm:$0xff]
        %v3647 = vld [vmem:[%s1353 + $0x3aa8] sm:$0xff]
        %v3648 = vld [vmem:[%s1353 + $0x3ab0] sm:$0xff]
        %v3649 = vld [vmem:[%s1353 + $0x3ab8] sm:$0xff]
        %v3650 = vld [vmem:[%s1353 + $0x3ac0] sm:$0xff]
        %v3651 = vld [vmem:[%s1353 + $0x3ac8] sm:$0xff]
        %v3652 = vld [vmem:[%s1353 + $0x3ad0] sm:$0xff]
        %v3653 = vld [vmem:[%s1353 + $0x3ad8] sm:$0xff]
        %v3654 = vld [vmem:[%s1353 + $0x3ae0] sm:$0xff]
        %v3655 = vld [vmem:[%s1353 + $0x3ae8] sm:$0xff]
        %v3656 = vld [vmem:[%s1353 + $0x3af0] sm:$0xff]
        %v3657 = vld [vmem:[%s1353 + $0x3af8] sm:$0xff]
        %v3658 = vld [vmem:[%s1353 + $0x3b00] sm:$0xff]
        %v3659 = vld [vmem:[%s1353 + $0x3b08] sm:$0xff]
        %v3660 = vld [vmem:[%s1353 + $0x3b10] sm:$0xff]
        %v3661 = vld [vmem:[%s1353 + $0x3b18] sm:$0xff]
        %v3662 = vld [vmem:[%s1353 + $0x3b20] sm:$0xff]
        %v3663 = vld [vmem:[%s1353 + $0x3b28] sm:$0xff]
        %v3664 = vld [vmem:[%s1353 + $0x3b30] sm:$0xff]
        %v3665 = vld [vmem:[%s1353 + $0x3b38] sm:$0xff]
        %v3666 = vld [vmem:[%s1353 + $0x3b40] sm:$0xff]
        %v3667 = vld [vmem:[%s1353 + $0x3b48] sm:$0xff]
        %v3668 = vld [vmem:[%s1353 + $0x3b50] sm:$0xff]
        %v3669 = vld [vmem:[%s1353 + $0x3b58] sm:$0xff]
        %v3670 = vld [vmem:[%s1353 + $0x3b60] sm:$0xff]
        %v3671 = vld [vmem:[%s1353 + $0x3b68] sm:$0xff]
        %v3672 = vld [vmem:[%s1353 + $0x3b70] sm:$0xff]
        %v3673 = vld [vmem:[%s1353 + $0x3b78] sm:$0xff]
        %v3674 = vld [vmem:[%s1353 + $0x3b80] sm:$0xff]
        %v3675 = vld [vmem:[%s1353 + $0x3b88] sm:$0xff]
        %v3676 = vld [vmem:[%s1353 + $0x3b90] sm:$0xff]
        %v3677 = vld [vmem:[%s1353 + $0x3b98] sm:$0xff]
        %v3678 = vld [vmem:[%s1353 + $0x3ba0] sm:$0xff]
        %v3679 = vld [vmem:[%s1353 + $0x3ba8] sm:$0xff]
        %v3680 = vld [vmem:[%s1353 + $0x3bb0] sm:$0xff]
        %v3681 = vld [vmem:[%s1353 + $0x3bb8] sm:$0xff]
        %v3682 = vld [vmem:[%s1353 + $0x3bc0] sm:$0xff]
        %v3683 = vld [vmem:[%s1353 + $0x3bc8] sm:$0xff]
        %v3684 = vld [vmem:[%s1353 + $0x3bd0] sm:$0xff]
        %v3685 = vld [vmem:[%s1353 + $0x3bd8] sm:$0xff]
        %v3686 = vld [vmem:[%s1353 + $0x3be0] sm:$0xff]
        %v3687 = vld [vmem:[%s1353 + $0x3be8] sm:$0xff]
        %v3688 = vld [vmem:[%s1353 + $0x3bf0] sm:$0xff]
        %v3689 = vld [vmem:[%s1353 + $0x3bf8] sm:$0xff]
        %v3690 = vld [vmem:[%s1353 + $0x3c00] sm:$0xff]
        %v3691 = vld [vmem:[%s1353 + $0x3c08] sm:$0xff]
        %v3692 = vld [vmem:[%s1353 + $0x3c10] sm:$0xff]
        %v3693 = vld [vmem:[%s1353 + $0x3c18] sm:$0xff]
        %v3694 = vld [vmem:[%s1353 + $0x3c20] sm:$0xff]
        %v3695 = vld [vmem:[%s1353 + $0x3c28] sm:$0xff]
        %v3696 = vld [vmem:[%s1353 + $0x3c30] sm:$0xff]
        %v3697 = vld [vmem:[%s1353 + $0x3c38] sm:$0xff]
        %v3698 = vld [vmem:[%s1353 + $0x3c40] sm:$0xff]
        %v3699 = vld [vmem:[%s1353 + $0x3c48] sm:$0xff]
        %v3700 = vld [vmem:[%s1353 + $0x3c50] sm:$0xff]
        %v3701 = vld [vmem:[%s1353 + $0x3c58] sm:$0xff]
        %v3702 = vld [vmem:[%s1353 + $0x3c60] sm:$0xff]
        %v3703 = vld [vmem:[%s1353 + $0x3c68] sm:$0xff]
        %v3704 = vld [vmem:[%s1353 + $0x3c70] sm:$0xff]
        %v3705 = vld [vmem:[%s1353 + $0x3c78] sm:$0xff]
        %v3706 = vld [vmem:[%s1353 + $0x3c80] sm:$0xff]
        %v3707 = vld [vmem:[%s1353 + $0x3c88] sm:$0xff]
        %v3708 = vld [vmem:[%s1353 + $0x3c90] sm:$0xff]
        %v3709 = vld [vmem:[%s1353 + $0x3c98] sm:$0xff]
        %v3710 = vld [vmem:[%s1353 + $0x3ca0] sm:$0xff]
        %v3711 = vld [vmem:[%s1353 + $0x3ca8] sm:$0xff]
        %v3712 = vld [vmem:[%s1353 + $0x3cb0] sm:$0xff]
        %v3713 = vld [vmem:[%s1353 + $0x3cb8] sm:$0xff]
        %v3714 = vld [vmem:[%s1353 + $0x3cc0] sm:$0xff]
        %v3715 = vld [vmem:[%s1353 + $0x3cc8] sm:$0xff]
        %v3716 = vld [vmem:[%s1353 + $0x3cd0] sm:$0xff]
        %v3717 = vld [vmem:[%s1353 + $0x3cd8] sm:$0xff]
        %v3718 = vld [vmem:[%s1353 + $0x3ce0] sm:$0xff]
        %v3719 = vld [vmem:[%s1353 + $0x3ce8] sm:$0xff]
        %v3720 = vld [vmem:[%s1353 + $0x3cf0] sm:$0xff]
        %v3721 = vld [vmem:[%s1353 + $0x3cf8] sm:$0xff]
        %v3722 = vld [vmem:[%s1353 + $0x3d00] sm:$0xff]
        %v3723 = vld [vmem:[%s1353 + $0x3d08] sm:$0xff]
        %v3724 = vld [vmem:[%s1353 + $0x3d10] sm:$0xff]
        %v3725 = vld [vmem:[%s1353 + $0x3d18] sm:$0xff]
        %v3726 = vld [vmem:[%s1353 + $0x3d20] sm:$0xff]
        %v3727 = vld [vmem:[%s1353 + $0x3d28] sm:$0xff]
        %v3728 = vld [vmem:[%s1353 + $0x3d30] sm:$0xff]
        %v3729 = vld [vmem:[%s1353 + $0x3d38] sm:$0xff]
        %v3730 = vld [vmem:[%s1353 + $0x3d40] sm:$0xff]
        %v3731 = vld [vmem:[%s1353 + $0x3d48] sm:$0xff]
        %v3732 = vld [vmem:[%s1353 + $0x3d50] sm:$0xff]
        %v3733 = vld [vmem:[%s1353 + $0x3d58] sm:$0xff]
        %v3734 = vld [vmem:[%s1353 + $0x3d60] sm:$0xff]
        %v3735 = vld [vmem:[%s1353 + $0x3d68] sm:$0xff]
        %v3736 = vld [vmem:[%s1353 + $0x3d70] sm:$0xff]
        %v3737 = vld [vmem:[%s1353 + $0x3d78] sm:$0xff]
        %v3738 = vld [vmem:[%s1353 + $0x3d80] sm:$0xff]
        %v3739 = vld [vmem:[%s1353 + $0x3d88] sm:$0xff]
        %v3740 = vld [vmem:[%s1353 + $0x3d90] sm:$0xff]
        %v3741 = vld [vmem:[%s1353 + $0x3d98] sm:$0xff]
        %v3742 = vld [vmem:[%s1353 + $0x3da0] sm:$0xff]
        %v3743 = vld [vmem:[%s1353 + $0x3da8] sm:$0xff]
        %v3744 = vld [vmem:[%s1353 + $0x3db0] sm:$0xff]
        %v3745 = vld [vmem:[%s1353 + $0x3db8] sm:$0xff]
        %v3746 = vld [vmem:[%s1353 + $0x3dc0] sm:$0xff]
        %v3747 = vld [vmem:[%s1353 + $0x3dc8] sm:$0xff]
        %v3748 = vld [vmem:[%s1353 + $0x3dd0] sm:$0xff]
        %v3749 = vld [vmem:[%s1353 + $0x3dd8] sm:$0xff]
        %v3750 = vld [vmem:[%s1353 + $0x3de0] sm:$0xff]
        %v3751 = vld [vmem:[%s1353 + $0x3de8] sm:$0xff]
        %v3752 = vld [vmem:[%s1353 + $0x3df0] sm:$0xff]
        %v3753 = vld [vmem:[%s1353 + $0x3df8] sm:$0xff]
        %v3754 = vld [vmem:[%s1353 + $0x3e00] sm:$0xff]
        %v3755 = vld [vmem:[%s1353 + $0x3e08] sm:$0xff]
        %v3756 = vld [vmem:[%s1353 + $0x3e10] sm:$0xff]
        %v3757 = vld [vmem:[%s1353 + $0x3e18] sm:$0xff]
        %v3758 = vld [vmem:[%s1353 + $0x3e20] sm:$0xff]
        %v3759 = vld [vmem:[%s1353 + $0x3e28] sm:$0xff]
        %v3760 = vld [vmem:[%s1353 + $0x3e30] sm:$0xff]
        %v3761 = vld [vmem:[%s1353 + $0x3e38] sm:$0xff]
        %v3762 = vld [vmem:[%s1353 + $0x3e40] sm:$0xff]
        %v3763 = vld [vmem:[%s1353 + $0x3e48] sm:$0xff]
        %v3764 = vld [vmem:[%s1353 + $0x3e50] sm:$0xff]
        %v3765 = vld [vmem:[%s1353 + $0x3e58] sm:$0xff]
        %v3766 = vld [vmem:[%s1353 + $0x3e60] sm:$0xff]
        %v3767 = vld [vmem:[%s1353 + $0x3e68] sm:$0xff]
        %v3768 = vld [vmem:[%s1353 + $0x3e70] sm:$0xff]
        %v3769 = vld [vmem:[%s1353 + $0x3e78] sm:$0xff]
        %v3770 = vld [vmem:[%s1353 + $0x3e80] sm:$0xff]
        %v3771 = vld [vmem:[%s1353 + $0x3e88] sm:$0xff]
        %v3772 = vld [vmem:[%s1353 + $0x3e90] sm:$0xff]
        %v3773 = vld [vmem:[%s1353 + $0x3e98] sm:$0xff]
        %v3774 = vld [vmem:[%s1353 + $0x3ea0] sm:$0xff]
        %v3775 = vld [vmem:[%s1353 + $0x3ea8] sm:$0xff]
        %v3776 = vld [vmem:[%s1353 + $0x3eb0] sm:$0xff]
        %v3777 = vld [vmem:[%s1353 + $0x3eb8] sm:$0xff]
        %v3778 = vld [vmem:[%s1353 + $0x3ec0] sm:$0xff]
        %v3779 = vld [vmem:[%s1353 + $0x3ec8] sm:$0xff]
        %v3780 = vld [vmem:[%s1353 + $0x3ed0] sm:$0xff]
        %v3781 = vld [vmem:[%s1353 + $0x3ed8] sm:$0xff]
        %v3782 = vld [vmem:[%s1353 + $0x3ee0] sm:$0xff]
        %v3783 = vld [vmem:[%s1353 + $0x3ee8] sm:$0xff]
        %v3784 = vld [vmem:[%s1353 + $0x3ef0] sm:$0xff]
        %v3785 = vld [vmem:[%s1353 + $0x3ef8] sm:$0xff]
        %v3786 = vld [vmem:[%s1353 + $0x3f00] sm:$0xff]
        %v3787 = vld [vmem:[%s1353 + $0x3f08] sm:$0xff]
        %v3788 = vld [vmem:[%s1353 + $0x3f10] sm:$0xff]
        %v3789 = vld [vmem:[%s1353 + $0x3f18] sm:$0xff]
        %v3790 = vld [vmem:[%s1353 + $0x3f20] sm:$0xff]
        %v3791 = vld [vmem:[%s1353 + $0x3f28] sm:$0xff]
        %v3792 = vld [vmem:[%s1353 + $0x3f30] sm:$0xff]
        %v3793 = vld [vmem:[%s1353 + $0x3f38] sm:$0xff]
        %v3794 = vld [vmem:[%s1353 + $0x3f40] sm:$0xff]
        %v3795 = vld [vmem:[%s1353 + $0x3f48] sm:$0xff]
        %v3796 = vld [vmem:[%s1353 + $0x3f50] sm:$0xff]
        %v3797 = vld [vmem:[%s1353 + $0x3f58] sm:$0xff]
        %v3798 = vld [vmem:[%s1353 + $0x3f60] sm:$0xff]
        %v3799 = vld [vmem:[%s1353 + $0x3f68] sm:$0xff]
        %v3800 = vld [vmem:[%s1353 + $0x3f70] sm:$0xff]
        %v3801 = vld [vmem:[%s1353 + $0x3f78] sm:$0xff]
        %v3802 = vld [vmem:[%s1353 + $0x3f80] sm:$0xff]
        %v3803 = vld [vmem:[%s1353 + $0x3f88] sm:$0xff]
        %v3804 = vld [vmem:[%s1353 + $0x3f90] sm:$0xff]
        %v3805 = vld [vmem:[%s1353 + $0x3f98] sm:$0xff]
        %v3806 = vld [vmem:[%s1353 + $0x3fa0] sm:$0xff]
        %v3807 = vld [vmem:[%s1353 + $0x3fa8] sm:$0xff]
        %v3808 = vld [vmem:[%s1353 + $0x3fb0] sm:$0xff]
        %v3809 = vld [vmem:[%s1353 + $0x3fb8] sm:$0xff]
        %v3810 = vld [vmem:[%s1353 + $0x3fc0] sm:$0xff]
        %v3811 = vld [vmem:[%s1353 + $0x3fc8] sm:$0xff]
        %v3812 = vld [vmem:[%s1353 + $0x3fd0] sm:$0xff]
        %v3813 = vld [vmem:[%s1353 + $0x3fd8] sm:$0xff]
        %v3814 = vld [vmem:[%s1353 + $0x3fe0] sm:$0xff]
        %v3815 = vld [vmem:[%s1353 + $0x3fe8] sm:$0xff]
        %v3816 = vld [vmem:[%s1353 + $0x3ff0] sm:$0xff]
        %v3817 = vld [vmem:[%s1353 + $0x3ff8] sm:$0xff]
        %v3818 = vld [vmem:[%s1353 + $0x4000] sm:$0xff]
        %v3819 = vld [vmem:[%s1353 + $0x4008] sm:$0xff]
        %v3820 = vld [vmem:[%s1353 + $0x4010] sm:$0xff]
        %v3821 = vld [vmem:[%s1353 + $0x4018] sm:$0xff]
        %v3822 = vld [vmem:[%s1353 + $0x4020] sm:$0xff]
        %v3823 = vld [vmem:[%s1353 + $0x4028] sm:$0xff]
        %v3824 = vld [vmem:[%s1353 + $0x4030] sm:$0xff]
        %v3825 = vld [vmem:[%s1353 + $0x4038] sm:$0xff]
        %v3826 = vld [vmem:[%s1353 + $0x4040] sm:$0xff]
        %v3827 = vld [vmem:[%s1353 + $0x4048] sm:$0xff]
        %v3828 = vld [vmem:[%s1353 + $0x4050] sm:$0xff]
        %v3829 = vld [vmem:[%s1353 + $0x4058] sm:$0xff]
        %v3830 = vld [vmem:[%s1353 + $0x4060] sm:$0xff]
        %v3831 = vld [vmem:[%s1353 + $0x4068] sm:$0xff]
        %v3832 = vld [vmem:[%s1353 + $0x4070] sm:$0xff]
        %v3833 = vld [vmem:[%s1353 + $0x4078] sm:$0xff]
        %v3834 = vld [vmem:[%s1353 + $0x4080] sm:$0xff]
        %v3835 = vld [vmem:[%s1353 + $0x4088] sm:$0xff]
        %v3836 = vld [vmem:[%s1353 + $0x4090] sm:$0xff]
        %v3837 = vld [vmem:[%s1353 + $0x4098] sm:$0xff]
        %v3838 = vld [vmem:[%s1353 + $0x40a0] sm:$0xff]
        %v3839 = vld [vmem:[%s1353 + $0x40a8] sm:$0xff]
        %v3840 = vld [vmem:[%s1353 + $0x40b0] sm:$0xff]
        %v3841 = vld [vmem:[%s1353 + $0x40b8] sm:$0xff]
        %v3842 = vld [vmem:[%s1353 + $0x40c0] sm:$0xff]
        %v3843 = vld [vmem:[%s1353 + $0x40c8] sm:$0xff]
        %v3844 = vld [vmem:[%s1353 + $0x40d0] sm:$0xff]
        %v3845 = vld [vmem:[%s1353 + $0x40d8] sm:$0xff]
        %v3846 = vld [vmem:[%s1353 + $0x40e0] sm:$0xff]
        %v3847 = vld [vmem:[%s1353 + $0x40e8] sm:$0xff]
        %v3848 = vld [vmem:[%s1353 + $0x40f0] sm:$0xff]
        %v3849 = vld [vmem:[%s1353 + $0x40f8] sm:$0xff]
        %v3850 = vld [vmem:[%s1353 + $0x4100] sm:$0xff]
        %v3851 = vld [vmem:[%s1353 + $0x4108] sm:$0xff]
        %v3852 = vld [vmem:[%s1353 + $0x4110] sm:$0xff]
        %v3853 = vld [vmem:[%s1353 + $0x4118] sm:$0xff]
        %v3854 = vld [vmem:[%s1353 + $0x4120] sm:$0xff]
        %v3855 = vld [vmem:[%s1353 + $0x4128] sm:$0xff]
        %v3856 = vld [vmem:[%s1353 + $0x4130] sm:$0xff]
        %v3857 = vld [vmem:[%s1353 + $0x4138] sm:$0xff]
        %v3858 = vld [vmem:[%s1353 + $0x4140] sm:$0xff]
        %v3859 = vld [vmem:[%s1353 + $0x4148] sm:$0xff]
        %v3860 = vld [vmem:[%s1353 + $0x4150] sm:$0xff]
        %v3861 = vld [vmem:[%s1353 + $0x4158] sm:$0xff]
        %v3862 = vld [vmem:[%s1353 + $0x4160] sm:$0xff]
        %v3863 = vld [vmem:[%s1353 + $0x4168] sm:$0xff]
        %v3864 = vld [vmem:[%s1353 + $0x4170] sm:$0xff]
        %v3865 = vld [vmem:[%s1353 + $0x4178] sm:$0xff]
        %v3866 = vld [vmem:[%s1353 + $0x4180] sm:$0xff]
        %v3867 = vld [vmem:[%s1353 + $0x4188] sm:$0xff]
        %v3868 = vld [vmem:[%s1353 + $0x4190] sm:$0xff]
        %v3869 = vld [vmem:[%s1353 + $0x4198] sm:$0xff]
        %v3870 = vld [vmem:[%s1353 + $0x41a0] sm:$0xff]
        %v3871 = vld [vmem:[%s1353 + $0x41a8] sm:$0xff]
        %v3872 = vld [vmem:[%s1353 + $0x41b0] sm:$0xff]
        %v3873 = vld [vmem:[%s1353 + $0x41b8] sm:$0xff]
        %v3874 = vld [vmem:[%s1353 + $0x41c0] sm:$0xff]
        %v3875 = vld [vmem:[%s1353 + $0x41c8] sm:$0xff]
        %v3876 = vld [vmem:[%s1353 + $0x41d0] sm:$0xff]
        %v3877 = vld [vmem:[%s1353 + $0x41d8] sm:$0xff]
        %v3878 = vld [vmem:[%s1353 + $0x41e0] sm:$0xff]
        %v3879 = vld [vmem:[%s1353 + $0x41e8] sm:$0xff]
        %v3880 = vld [vmem:[%s1353 + $0x41f0] sm:$0xff]
        %v3881 = vld [vmem:[%s1353 + $0x41f8] sm:$0xff]
        %v3882 = vld [vmem:[%s1353 + $0x4200] sm:$0xff]
        %v3883 = vld [vmem:[%s1353 + $0x4208] sm:$0xff]
        %v3884 = vld [vmem:[%s1353 + $0x4210] sm:$0xff]
        %v3885 = vld [vmem:[%s1353 + $0x4218] sm:$0xff]
        %v3886 = vld [vmem:[%s1353 + $0x4220] sm:$0xff]
        %v3887 = vld [vmem:[%s1353 + $0x4228] sm:$0xff]
        %v3888 = vld [vmem:[%s1353 + $0x4230] sm:$0xff]
        %v3889 = vld [vmem:[%s1353 + $0x4238] sm:$0xff]
        %v3890 = vld [vmem:[%s1353 + $0x4240] sm:$0xff]
        %v3891 = vld [vmem:[%s1353 + $0x4248] sm:$0xff]
        %v3892 = vld [vmem:[%s1353 + $0x4250] sm:$0xff]
        %v3893 = vld [vmem:[%s1353 + $0x4258] sm:$0xff]
        %v3894 = vld [vmem:[%s1353 + $0x4260] sm:$0xff]
        %v3895 = vld [vmem:[%s1353 + $0x4268] sm:$0xff]
        %v3896 = vld [vmem:[%s1353 + $0x4270] sm:$0xff]
        %v3897 = vld [vmem:[%s1353 + $0x4278] sm:$0xff]
        %v3898 = vld [vmem:[%s1353 + $0x4280] sm:$0xff]
        %v3899 = vld [vmem:[%s1353 + $0x4288] sm:$0xff]
        %v3900 = vld [vmem:[%s1353 + $0x4290] sm:$0xff]
        %v3901 = vld [vmem:[%s1353 + $0x4298] sm:$0xff]
        %v3902 = vld [vmem:[%s1353 + $0x42a0] sm:$0xff]
        %v3903 = vld [vmem:[%s1353 + $0x42a8] sm:$0xff]
        %v3904 = vld [vmem:[%s1353 + $0x42b0] sm:$0xff]
        %v3905 = vld [vmem:[%s1353 + $0x42b8] sm:$0xff]
        %v3906 = vld [vmem:[%s1353 + $0x42c0] sm:$0xff]
        %v3907 = vld [vmem:[%s1353 + $0x42c8] sm:$0xff]
        %v3908 = vld [vmem:[%s1353 + $0x42d0] sm:$0xff]
        %v3909 = vld [vmem:[%s1353 + $0x42d8] sm:$0xff]
        %v3910 = vld [vmem:[%s1353 + $0x42e0] sm:$0xff]
        %v3911 = vld [vmem:[%s1353 + $0x42e8] sm:$0xff]
        %v3912 = vld [vmem:[%s1353 + $0x42f0] sm:$0xff]
        %v3913 = vld [vmem:[%s1353 + $0x42f8] sm:$0xff]
        %v3914 = vld [vmem:[%s1353 + $0x4300] sm:$0xff]
        %v3915 = vld [vmem:[%s1353 + $0x4308] sm:$0xff]
        %v3916 = vld [vmem:[%s1353 + $0x4310] sm:$0xff]
        %v3917 = vld [vmem:[%s1353 + $0x4318] sm:$0xff]
        %v3918 = vld [vmem:[%s1353 + $0x4320] sm:$0xff]
        %v3919 = vld [vmem:[%s1353 + $0x4328] sm:$0xff]
        %v3920 = vld [vmem:[%s1353 + $0x4330] sm:$0xff]
        %v3921 = vld [vmem:[%s1353 + $0x4338] sm:$0xff]
        %v3922 = vld [vmem:[%s1353 + $0x4340] sm:$0xff]
        %v3923 = vld [vmem:[%s1353 + $0x4348] sm:$0xff]
        %v3924 = vld [vmem:[%s1353 + $0x4350] sm:$0xff]
        %v3925 = vld [vmem:[%s1353 + $0x4358] sm:$0xff]
        %v3926 = vld [vmem:[%s1353 + $0x4360] sm:$0xff]
        %v3927 = vld [vmem:[%s1353 + $0x4368] sm:$0xff]
        %v3928 = vld [vmem:[%s1353 + $0x4370] sm:$0xff]
        %v3929 = vld [vmem:[%s1353 + $0x4378] sm:$0xff]
        %v3930 = vld [vmem:[%s1353 + $0x4380] sm:$0xff]
        %v3931 = vld [vmem:[%s1353 + $0x4388] sm:$0xff]
        %v3932 = vld [vmem:[%s1353 + $0x4390] sm:$0xff]
        %v3933 = vld [vmem:[%s1353 + $0x4398] sm:$0xff]
        %v3934 = vld [vmem:[%s1353 + $0x43a0] sm:$0xff]
        %v3935 = vld [vmem:[%s1353 + $0x43a8] sm:$0xff]
        %v3936 = vld [vmem:[%s1353 + $0x43b0] sm:$0xff]
        %v3937 = vld [vmem:[%s1353 + $0x43b8] sm:$0xff]
        %v3938 = vld [vmem:[%s1353 + $0x43c0] sm:$0xff]
        %v3939 = vld [vmem:[%s1353 + $0x43c8] sm:$0xff]
        %v3940 = vld [vmem:[%s1353 + $0x43d0] sm:$0xff]
        %v3941 = vld [vmem:[%s1353 + $0x43d8] sm:$0xff]
        %v3942 = vld [vmem:[%s1353 + $0x43e0] sm:$0xff]
        %v3943 = vld [vmem:[%s1353 + $0x43e8] sm:$0xff]
        %v3944 = vld [vmem:[%s1353 + $0x43f0] sm:$0xff]
        %v3945 = vld [vmem:[%s1353 + $0x43f8] sm:$0xff]
        %v3946 = vld [vmem:[%s1353 + $0x4400] sm:$0xff]
        %v3947 = vld [vmem:[%s1353 + $0x4408] sm:$0xff]
        %v3948 = vld [vmem:[%s1353 + $0x4410] sm:$0xff]
        %v3949 = vld [vmem:[%s1353 + $0x4418] sm:$0xff]
        %v3950 = vld [vmem:[%s1353 + $0x4420] sm:$0xff]
        %v3951 = vld [vmem:[%s1353 + $0x4428] sm:$0xff]
        %v3952 = vld [vmem:[%s1353 + $0x4430] sm:$0xff]
        %v3953 = vld [vmem:[%s1353 + $0x4438] sm:$0xff]
        %v3954 = vld [vmem:[%s1353 + $0x4440] sm:$0xff]
        %v3955 = vld [vmem:[%s1353 + $0x4448] sm:$0xff]
        %v3956 = vld [vmem:[%s1353 + $0x4450] sm:$0xff]
        %v3957 = vld [vmem:[%s1353 + $0x4458] sm:$0xff]
        %v3958 = vld [vmem:[%s1353 + $0x4460] sm:$0xff]
        %v3959 = vld [vmem:[%s1353 + $0x4468] sm:$0xff]
        %v3960 = vld [vmem:[%s1353 + $0x4470] sm:$0xff]
        %v3961 = vld [vmem:[%s1353 + $0x4478] sm:$0xff]
        %v3962 = vld [vmem:[%s1353 + $0x4480] sm:$0xff]
        %v3963 = vld [vmem:[%s1353 + $0x4488] sm:$0xff]
        %v3964 = vld [vmem:[%s1353 + $0x4490] sm:$0xff]
        %v3965 = vld [vmem:[%s1353 + $0x4498] sm:$0xff]
        %v3966 = vld [vmem:[%s1353 + $0x44a0] sm:$0xff]
        %v3967 = vld [vmem:[%s1353 + $0x44a8] sm:$0xff]
        %v3968 = vld [vmem:[%s1353 + $0x44b0] sm:$0xff]
        %v3969 = vld [vmem:[%s1353 + $0x44b8] sm:$0xff]
        %v3970 = vld [vmem:[%s1353 + $0x44c0] sm:$0xff]
        %v3971 = vld [vmem:[%s1353 + $0x44c8] sm:$0xff]
        %v3972 = vld [vmem:[%s1353 + $0x44d0] sm:$0xff]
        %v3973 = vld [vmem:[%s1353 + $0x44d8] sm:$0xff]
        %v3974 = vld [vmem:[%s1353 + $0x44e0] sm:$0xff]
        %v3975 = vld [vmem:[%s1353 + $0x44e8] sm:$0xff]
        %v3976 = vld [vmem:[%s1353 + $0x44f0] sm:$0xff]
        %v3977 = vld [vmem:[%s1353 + $0x44f8] sm:$0xff]
        %v3978 = vld [vmem:[%s1353 + $0x4500] sm:$0xff]
        %v3979 = vld [vmem:[%s1353 + $0x4508] sm:$0xff]
        %v3980 = vld [vmem:[%s1353 + $0x4510] sm:$0xff]
        %v3981 = vld [vmem:[%s1353 + $0x4518] sm:$0xff]
        %v3982 = vld [vmem:[%s1353 + $0x4520] sm:$0xff]
        %v3983 = vld [vmem:[%s1353 + $0x4528] sm:$0xff]
        %v3984 = vld [vmem:[%s1353 + $0x4530] sm:$0xff]
        %v3985 = vld [vmem:[%s1353 + $0x4538] sm:$0xff]
        %v3986 = vld [vmem:[%s1353 + $0x4540] sm:$0xff]
        %v3987 = vld [vmem:[%s1353 + $0x4548] sm:$0xff]
        %v3988 = vld [vmem:[%s1353 + $0x4550] sm:$0xff]
        %v3989 = vld [vmem:[%s1353 + $0x4558] sm:$0xff]
        %v3990 = vld [vmem:[%s1353 + $0x4560] sm:$0xff]
        %v3991 = vld [vmem:[%s1353 + $0x4568] sm:$0xff]
        %v3992 = vld [vmem:[%s1353 + $0x4570] sm:$0xff]
        %v3993 = vld [vmem:[%s1353 + $0x4578] sm:$0xff]
        %v3994 = vld [vmem:[%s1353 + $0x4580] sm:$0xff]
        %v3995 = vld [vmem:[%s1353 + $0x4588] sm:$0xff]
        %v3996 = vld [vmem:[%s1353 + $0x4590] sm:$0xff]
        %v3997 = vld [vmem:[%s1353 + $0x4598] sm:$0xff]
        %v3998 = vld [vmem:[%s1353 + $0x45a0] sm:$0xff]
        %v3999 = vld [vmem:[%s1353 + $0x45a8] sm:$0xff]
        %v4000 = vld [vmem:[%s1353 + $0x45b0] sm:$0xff]
        %v4001 = vld [vmem:[%s1353 + $0x45b8] sm:$0xff]
        %v4002 = vld [vmem:[%s1353 + $0x45c0] sm:$0xff]
        %v4003 = vld [vmem:[%s1353 + $0x45c8] sm:$0xff]
        %v4004 = vld [vmem:[%s1353 + $0x45d0] sm:$0xff]
        %v4005 = vld [vmem:[%s1353 + $0x45d8] sm:$0xff]
        %v4006 = vld [vmem:[%s1353 + $0x45e0] sm:$0xff]
        %v4007 = vld [vmem:[%s1353 + $0x45e8] sm:$0xff]
        %v4008 = vld [vmem:[%s1353 + $0x45f0] sm:$0xff]
        %v4009 = vld [vmem:[%s1353 + $0x45f8] sm:$0xff]
        %v4010 = vld [vmem:[%s1353 + $0x4600] sm:$0xff]
        %v4011 = vld [vmem:[%s1353 + $0x4608] sm:$0xff]
        %v4012 = vld [vmem:[%s1353 + $0x4610] sm:$0xff]
        %v4013 = vld [vmem:[%s1353 + $0x4618] sm:$0xff]
        %v4014 = vld [vmem:[%s1353 + $0x4620] sm:$0xff]
        %v4015 = vld [vmem:[%s1353 + $0x4628] sm:$0xff]
        %v4016 = vld [vmem:[%s1353 + $0x4630] sm:$0xff]
        %v4017 = vld [vmem:[%s1353 + $0x4638] sm:$0xff]
        %v4018 = vld [vmem:[%s1353 + $0x4640] sm:$0xff]
        %v4019 = vld [vmem:[%s1353 + $0x4648] sm:$0xff]
        %v4020 = vld [vmem:[%s1353 + $0x4650] sm:$0xff]
        %v4021 = vld [vmem:[%s1353 + $0x4658] sm:$0xff]
        %v4022 = vld [vmem:[%s1353 + $0x4660] sm:$0xff]
        %v4023 = vld [vmem:[%s1353 + $0x4668] sm:$0xff]
        %v4024 = vld [vmem:[%s1353 + $0x4670] sm:$0xff]
        %v4025 = vld [vmem:[%s1353 + $0x4678] sm:$0xff]
        %v4026 = vld [vmem:[%s1353 + $0x4680] sm:$0xff]
        %v4027 = vld [vmem:[%s1353 + $0x4688] sm:$0xff]
        %v4028 = vld [vmem:[%s1353 + $0x4690] sm:$0xff]
        %v4029 = vld [vmem:[%s1353 + $0x4698] sm:$0xff]
        %v4030 = vld [vmem:[%s1353 + $0x46a0] sm:$0xff]
        %v4031 = vld [vmem:[%s1353 + $0x46a8] sm:$0xff]
        %v4032 = vld [vmem:[%s1353 + $0x46b0] sm:$0xff]
        %v4033 = vld [vmem:[%s1353 + $0x46b8] sm:$0xff]
        %v4034 = vld [vmem:[%s1353 + $0x46c0] sm:$0xff]
        %v4035 = vld [vmem:[%s1353 + $0x46c8] sm:$0xff]
        %v4036 = vld [vmem:[%s1353 + $0x46d0] sm:$0xff]
        %v4037 = vld [vmem:[%s1353 + $0x46d8] sm:$0xff]
        %v4038 = vld [vmem:[%s1353 + $0x46e0] sm:$0xff]
        %v4039 = vld [vmem:[%s1353 + $0x46e8] sm:$0xff]
        %v4040 = vld [vmem:[%s1353 + $0x46f0] sm:$0xff]
        %v4041 = vld [vmem:[%s1353 + $0x46f8] sm:$0xff]
        %v4042 = vld [vmem:[%s1353 + $0x4700] sm:$0xff]
        %v4043 = vld [vmem:[%s1353 + $0x4708] sm:$0xff]
        %v4044 = vld [vmem:[%s1353 + $0x4710] sm:$0xff]
        %v4045 = vld [vmem:[%s1353 + $0x4718] sm:$0xff]
        %v4046 = vld [vmem:[%s1353 + $0x4720] sm:$0xff]
        %v4047 = vld [vmem:[%s1353 + $0x4728] sm:$0xff]
        %v4048 = vld [vmem:[%s1353 + $0x4730] sm:$0xff]
        %v4049 = vld [vmem:[%s1353 + $0x4738] sm:$0xff]
        %v4050 = vld [vmem:[%s1353 + $0x4740] sm:$0xff]
        %v4051 = vld [vmem:[%s1353 + $0x4748] sm:$0xff]
        %v4052 = vld [vmem:[%s1353 + $0x4750] sm:$0xff]
        %v4053 = vld [vmem:[%s1353 + $0x4758] sm:$0xff]
        %v4054 = vld [vmem:[%s1353 + $0x4760] sm:$0xff]
        %v4055 = vld [vmem:[%s1353 + $0x4768] sm:$0xff]
        %v4056 = vld [vmem:[%s1353 + $0x4770] sm:$0xff]
        %v4057 = vld [vmem:[%s1353 + $0x4778] sm:$0xff]
        %v4058 = vld [vmem:[%s1353 + $0x4780] sm:$0xff]
        %v4059 = vld [vmem:[%s1353 + $0x4788] sm:$0xff]
        %v4060 = vld [vmem:[%s1353 + $0x4790] sm:$0xff]
        %v4061 = vld [vmem:[%s1353 + $0x4798] sm:$0xff]
        %v4062 = vld [vmem:[%s1353 + $0x47a0] sm:$0xff]
        %v4063 = vld [vmem:[%s1353 + $0x47a8] sm:$0xff]
        %v4064 = vld [vmem:[%s1353 + $0x47b0] sm:$0xff]
        %v4065 = vld [vmem:[%s1353 + $0x47b8] sm:$0xff]
        %v4066 = vld [vmem:[%s1353 + $0x47c0] sm:$0xff]
        %v4067 = vld [vmem:[%s1353 + $0x47c8] sm:$0xff]
        %v4068 = vld [vmem:[%s1353 + $0x47d0] sm:$0xff]
        %v4069 = vld [vmem:[%s1353 + $0x47d8] sm:$0xff]
        %v4070 = vld [vmem:[%s1353 + $0x47e0] sm:$0xff]
        %v4071 = vld [vmem:[%s1353 + $0x47e8] sm:$0xff]
        %v4072 = vld [vmem:[%s1353 + $0x47f0] sm:$0xff]
        %v4073 = vld [vmem:[%s1353 + $0x47f8] sm:$0xff]
        %v4074 = vld [vmem:[%s1353 + $0x4800] sm:$0xff]
        %v4075 = vld [vmem:[%s1353 + $0x4808] sm:$0xff]
        %v4076 = vld [vmem:[%s1353 + $0x4810] sm:$0xff]
        %v4077 = vld [vmem:[%s1353 + $0x4818] sm:$0xff]
        %v4078 = vld [vmem:[%s1353 + $0x4820] sm:$0xff]
        %v4079 = vld [vmem:[%s1353 + $0x4828] sm:$0xff]
        %v4080 = vld [vmem:[%s1353 + $0x4830] sm:$0xff]
        %v4081 = vld [vmem:[%s1353 + $0x4838] sm:$0xff]
        %v4082 = vld [vmem:[%s1353 + $0x4840] sm:$0xff]
        %v4083 = vld [vmem:[%s1353 + $0x4848] sm:$0xff]
        %v4084 = vld [vmem:[%s1353 + $0x4850] sm:$0xff]
        %v4085 = vld [vmem:[%s1353 + $0x4858] sm:$0xff]
        %v4086 = vld [vmem:[%s1353 + $0x4860] sm:$0xff]
        %v4087 = vld [vmem:[%s1353 + $0x4868] sm:$0xff]
        %v4088 = vld [vmem:[%s1353 + $0x4870] sm:$0xff]
        %v4089 = vld [vmem:[%s1353 + $0x4878] sm:$0xff]
        %v4090 = vld [vmem:[%s1353 + $0x4880] sm:$0xff]
        %v4091 = vld [vmem:[%s1353 + $0x4888] sm:$0xff]
        %v4092 = vld [vmem:[%s1353 + $0x4890] sm:$0xff]
        %v4093 = vld [vmem:[%s1353 + $0x4898] sm:$0xff]
        %v4094 = vld [vmem:[%s1353 + $0x48a0] sm:$0xff]
        %v4095 = vld [vmem:[%s1353 + $0x48a8] sm:$0xff]
        %v4096 = vld [vmem:[%s1353 + $0x48b0] sm:$0xff]
        %v4097 = vld [vmem:[%s1353 + $0x48b8] sm:$0xff]
        %v4098 = vld [vmem:[%s1353 + $0x48c0] sm:$0xff]
        %v4099 = vld [vmem:[%s1353 + $0x48c8] sm:$0xff]
        %v4100 = vld [vmem:[%s1353 + $0x48d0] sm:$0xff]
        %v4101 = vld [vmem:[%s1353 + $0x48d8] sm:$0xff]
        %v4102 = vld [vmem:[%s1353 + $0x48e0] sm:$0xff]
        %v4103 = vld [vmem:[%s1353 + $0x48e8] sm:$0xff]
        %v4104 = vld [vmem:[%s1353 + $0x48f0] sm:$0xff]
        %v4105 = vld [vmem:[%s1353 + $0x48f8] sm:$0xff]
        %v4106 = vld [vmem:[%s1353 + $0x4900] sm:$0xff]
        %v4107 = vld [vmem:[%s1353 + $0x4908] sm:$0xff]
        %v4108 = vld [vmem:[%s1353 + $0x4910] sm:$0xff]
        %v4109 = vld [vmem:[%s1353 + $0x4918] sm:$0xff]
        %v4110 = vld [vmem:[%s1353 + $0x4920] sm:$0xff]
        %v4111 = vld [vmem:[%s1353 + $0x4928] sm:$0xff]
        %v4112 = vld [vmem:[%s1353 + $0x4930] sm:$0xff]
        %v4113 = vld [vmem:[%s1353 + $0x4938] sm:$0xff]
        %v4114 = vld [vmem:[%s1353 + $0x4940] sm:$0xff]
        %v4115 = vld [vmem:[%s1353 + $0x4948] sm:$0xff]
        %v4116 = vld [vmem:[%s1353 + $0x4950] sm:$0xff]
        %v4117 = vld [vmem:[%s1353 + $0x4958] sm:$0xff]
        %v4118 = vld [vmem:[%s1353 + $0x4960] sm:$0xff]
        %v4119 = vld [vmem:[%s1353 + $0x4968] sm:$0xff]
        %v4120 = vld [vmem:[%s1353 + $0x4970] sm:$0xff]
        %v4121 = vld [vmem:[%s1353 + $0x4978] sm:$0xff]
        %v4122 = vld [vmem:[%s1353 + $0x4980] sm:$0xff]
        %v4123 = vld [vmem:[%s1353 + $0x4988] sm:$0xff]
        %v4124 = vld [vmem:[%s1353 + $0x4990] sm:$0xff]
        %v4125 = vld [vmem:[%s1353 + $0x4998] sm:$0xff]
        %v4126 = vld [vmem:[%s1353 + $0x49a0] sm:$0xff]
        %v4127 = vld [vmem:[%s1353 + $0x49a8] sm:$0xff]
        %v4128 = vld [vmem:[%s1353 + $0x49b0] sm:$0xff]
        %v4129 = vld [vmem:[%s1353 + $0x49b8] sm:$0xff]
        %v4130 = vld [vmem:[%s1353 + $0x49c0] sm:$0xff]
        %v4131 = vld [vmem:[%s1353 + $0x49c8] sm:$0xff]
        %v4132 = vld [vmem:[%s1353 + $0x49d0] sm:$0xff]
        %v4133 = vld [vmem:[%s1353 + $0x49d8] sm:$0xff]
        %v4134 = vld [vmem:[%s1353 + $0x49e0] sm:$0xff]
        %v4135 = vld [vmem:[%s1353 + $0x49e8] sm:$0xff]
        %v4136 = vld [vmem:[%s1353 + $0x49f0] sm:$0xff]
        %v4137 = vld [vmem:[%s1353 + $0x49f8] sm:$0xff]
        %v4138 = vld [vmem:[%s1353 + $0x4a00] sm:$0xff]
        %v4139 = vld [vmem:[%s1353 + $0x4a08] sm:$0xff]
        %v4140 = vld [vmem:[%s1353 + $0x4a10] sm:$0xff]
        %v4141 = vld [vmem:[%s1353 + $0x4a18] sm:$0xff]
        %v4142 = vld [vmem:[%s1353 + $0x4a20] sm:$0xff]
        %v4143 = vld [vmem:[%s1353 + $0x4a28] sm:$0xff]
        %v4144 = vld [vmem:[%s1353 + $0x4a30] sm:$0xff]
        %v4145 = vld [vmem:[%s1353 + $0x4a38] sm:$0xff]
        %v4146 = vld [vmem:[%s1353 + $0x4a40] sm:$0xff]
        %v4147 = vld [vmem:[%s1353 + $0x4a48] sm:$0xff]
        %v4148 = vld [vmem:[%s1353 + $0x4a50] sm:$0xff]
        %v4149 = vld [vmem:[%s1353 + $0x4a58] sm:$0xff]
        %v4150 = vld [vmem:[%s1353 + $0x4a60] sm:$0xff]
        %v4151 = vld [vmem:[%s1353 + $0x4a68] sm:$0xff]
        %v4152 = vld [vmem:[%s1353 + $0x4a70] sm:$0xff]
        %v4153 = vld [vmem:[%s1353 + $0x4a78] sm:$0xff]
        %v4154 = vld [vmem:[%s1353 + $0x4a80] sm:$0xff]
        %v4155 = vld [vmem:[%s1353 + $0x4a88] sm:$0xff]
        %v4156 = vld [vmem:[%s1353 + $0x4a90] sm:$0xff]
        %v4157 = vld [vmem:[%s1353 + $0x4a98] sm:$0xff]
        %v4158 = vld [vmem:[%s1353 + $0x4aa0] sm:$0xff]
        %v4159 = vld [vmem:[%s1353 + $0x4aa8] sm:$0xff]
        %v4160 = vld [vmem:[%s1353 + $0x4ab0] sm:$0xff]
        %v4161 = vld [vmem:[%s1353 + $0x4ab8] sm:$0xff]
        %v4162 = vld [vmem:[%s1353 + $0x4ac0] sm:$0xff]
        %v4163 = vld [vmem:[%s1353 + $0x4ac8] sm:$0xff]
        %v4164 = vld [vmem:[%s1353 + $0x4ad0] sm:$0xff]
        %v4165 = vld [vmem:[%s1353 + $0x4ad8] sm:$0xff]
        %v4166 = vld [vmem:[%s1353 + $0x4ae0] sm:$0xff]
        %v4167 = vld [vmem:[%s1353 + $0x4ae8] sm:$0xff]
        %v4168 = vld [vmem:[%s1353 + $0x4af0] sm:$0xff]
        %v4169 = vld [vmem:[%s1353 + $0x4af8] sm:$0xff]
        %v4170 = vld [vmem:[%s1353 + $0x4b00] sm:$0xff]
        %v4171 = vld [vmem:[%s1353 + $0x4b08] sm:$0xff]
        %v4172 = vld [vmem:[%s1353 + $0x4b10] sm:$0xff]
        %v4173 = vld [vmem:[%s1353 + $0x4b18] sm:$0xff]
        %v4174 = vld [vmem:[%s1353 + $0x4b20] sm:$0xff]
        %v4175 = vld [vmem:[%s1353 + $0x4b28] sm:$0xff]
        %v4176 = vld [vmem:[%s1353 + $0x4b30] sm:$0xff]
        %v4177 = vld [vmem:[%s1353 + $0x4b38] sm:$0xff]
        %v4178 = vld [vmem:[%s1353 + $0x4b40] sm:$0xff]
        %v4179 = vld [vmem:[%s1353 + $0x4b48] sm:$0xff]
        %v4180 = vld [vmem:[%s1353 + $0x4b50] sm:$0xff]
        %v4181 = vld [vmem:[%s1353 + $0x4b58] sm:$0xff]
        %v4182 = vld [vmem:[%s1353 + $0x4b60] sm:$0xff]
        %v4183 = vld [vmem:[%s1353 + $0x4b68] sm:$0xff]
        %v4184 = vld [vmem:[%s1353 + $0x4b70] sm:$0xff]
        %v4185 = vld [vmem:[%s1353 + $0x4b78] sm:$0xff]
        %v4186 = vld [vmem:[%s1353 + $0x4b80] sm:$0xff]
        %v4187 = vld [vmem:[%s1353 + $0x4b88] sm:$0xff]
        %v4188 = vld [vmem:[%s1353 + $0x4b90] sm:$0xff]
        %v4189 = vld [vmem:[%s1353 + $0x4b98] sm:$0xff]
        %v4190 = vld [vmem:[%s1353 + $0x4ba0] sm:$0xff]
        %v4191 = vld [vmem:[%s1353 + $0x4ba8] sm:$0xff]
        %v4192 = vld [vmem:[%s1353 + $0x4bb0] sm:$0xff]
        %v4193 = vld [vmem:[%s1353 + $0x4bb8] sm:$0xff]
        %v4194 = vld [vmem:[%s1353 + $0x4bc0] sm:$0xff]
        %v4195 = vld [vmem:[%s1353 + $0x4bc8] sm:$0xff]
        %v4196 = vld [vmem:[%s1353 + $0x4bd0] sm:$0xff]
        %v4197 = vld [vmem:[%s1353 + $0x4bd8] sm:$0xff]
        %v4198 = vld [vmem:[%s1353 + $0x4be0] sm:$0xff]
        %v4199 = vld [vmem:[%s1353 + $0x4be8] sm:$0xff]
        %v4200 = vld [vmem:[%s1353 + $0x4bf0] sm:$0xff]
        %v4201 = vld [vmem:[%s1353 + $0x4bf8] sm:$0xff]
        %v4202 = vld [vmem:[%s1353 + $0x4c00] sm:$0xff]
        %v4203 = vld [vmem:[%s1353 + $0x4c08] sm:$0xff]
        %v4204 = vld [vmem:[%s1353 + $0x4c10] sm:$0xff]
        %v4205 = vld [vmem:[%s1353 + $0x4c18] sm:$0xff]
        %v4206 = vld [vmem:[%s1353 + $0x4c20] sm:$0xff]
        %v4207 = vld [vmem:[%s1353 + $0x4c28] sm:$0xff]
        %v4208 = vld [vmem:[%s1353 + $0x4c30] sm:$0xff]
        %v4209 = vld [vmem:[%s1353 + $0x4c38] sm:$0xff]
        %v4210 = vld [vmem:[%s1353 + $0x4c40] sm:$0xff]
        %v4211 = vld [vmem:[%s1353 + $0x4c48] sm:$0xff]
        %v4212 = vld [vmem:[%s1353 + $0x4c50] sm:$0xff]
        %v4213 = vld [vmem:[%s1353 + $0x4c58] sm:$0xff]
        %v4214 = vld [vmem:[%s1353 + $0x4c60] sm:$0xff]
        %v4215 = vld [vmem:[%s1353 + $0x4c68] sm:$0xff]
        %v4216 = vld [vmem:[%s1353 + $0x4c70] sm:$0xff]
        %v4217 = vld [vmem:[%s1353 + $0x4c78] sm:$0xff]
        %v4218 = vld [vmem:[%s1353 + $0x4c80] sm:$0xff]
        %v4219 = vld [vmem:[%s1353 + $0x4c88] sm:$0xff]
        %v4220 = vld [vmem:[%s1353 + $0x4c90] sm:$0xff]
        %v4221 = vld [vmem:[%s1353 + $0x4c98] sm:$0xff]
        %v4222 = vld [vmem:[%s1353 + $0x4ca0] sm:$0xff]
        %v4223 = vld [vmem:[%s1353 + $0x4ca8] sm:$0xff]
        %v4224 = vld [vmem:[%s1353 + $0x4cb0] sm:$0xff]
        %v4225 = vld [vmem:[%s1353 + $0x4cb8] sm:$0xff]
        %v4226 = vld [vmem:[%s1353 + $0x4cc0] sm:$0xff]
        %v4227 = vld [vmem:[%s1353 + $0x4cc8] sm:$0xff]
        %v4228 = vld [vmem:[%s1353 + $0x4cd0] sm:$0xff]
        %v4229 = vld [vmem:[%s1353 + $0x4cd8] sm:$0xff]
        %v4230 = vld [vmem:[%s1353 + $0x4ce0] sm:$0xff]
        %v4231 = vld [vmem:[%s1353 + $0x4ce8] sm:$0xff]
        %v4232 = vld [vmem:[%s1353 + $0x4cf0] sm:$0xff]
        %v4233 = vld [vmem:[%s1353 + $0x4cf8] sm:$0xff]
        %v4234 = vld [vmem:[%s1353 + $0x4d00] sm:$0xff]
        %v4235 = vld [vmem:[%s1353 + $0x4d08] sm:$0xff]
        %v4236 = vld [vmem:[%s1353 + $0x4d10] sm:$0xff]
        %v4237 = vld [vmem:[%s1353 + $0x4d18] sm:$0xff]
        %v4238 = vld [vmem:[%s1353 + $0x4d20] sm:$0xff]
        %v4239 = vld [vmem:[%s1353 + $0x4d28] sm:$0xff]
        %v4240 = vld [vmem:[%s1353 + $0x4d30] sm:$0xff]
        %v4241 = vld [vmem:[%s1353 + $0x4d38] sm:$0xff]
        %v4242 = vld [vmem:[%s1353 + $0x4d40] sm:$0xff]
        %v4243 = vld [vmem:[%s1353 + $0x4d48] sm:$0xff]
        %v4244 = vld [vmem:[%s1353 + $0x4d50] sm:$0xff]
        %v4245 = vld [vmem:[%s1353 + $0x4d58] sm:$0xff]
        %v4246 = vld [vmem:[%s1353 + $0x4d60] sm:$0xff]
        %v4247 = vld [vmem:[%s1353 + $0x4d68] sm:$0xff]
        %v4248 = vld [vmem:[%s1353 + $0x4d70] sm:$0xff]
        %v4249 = vld [vmem:[%s1353 + $0x4d78] sm:$0xff]
        %v4250 = vld [vmem:[%s1353 + $0x4d80] sm:$0xff]
        %v4251 = vld [vmem:[%s1353 + $0x4d88] sm:$0xff]
        %v4252 = vld [vmem:[%s1353 + $0x4d90] sm:$0xff]
        %v4253 = vld [vmem:[%s1353 + $0x4d98] sm:$0xff]
        %v4254 = vld [vmem:[%s1353 + $0x4da0] sm:$0xff]
        %v4255 = vld [vmem:[%s1353 + $0x4da8] sm:$0xff]
        %v4256 = vld [vmem:[%s1353 + $0x4db0] sm:$0xff]
        %v4257 = vld [vmem:[%s1353 + $0x4db8] sm:$0xff]
        %v4258 = vld [vmem:[%s1353 + $0x4dc0] sm:$0xff]
        %v4259 = vld [vmem:[%s1353 + $0x4dc8] sm:$0xff]
        %v4260 = vld [vmem:[%s1353 + $0x4dd0] sm:$0xff]
        %v4261 = vld [vmem:[%s1353 + $0x4dd8] sm:$0xff]
        %v4262 = vld [vmem:[%s1353 + $0x4de0] sm:$0xff]
        %v4263 = vld [vmem:[%s1353 + $0x4de8] sm:$0xff]
        %v4264 = vld [vmem:[%s1353 + $0x4df0] sm:$0xff]
        %v4265 = vld [vmem:[%s1353 + $0x4df8] sm:$0xff]
        %v4266 = vld [vmem:[%s1353 + $0x4e00] sm:$0xff]
        %v4267 = vld [vmem:[%s1353 + $0x4e08] sm:$0xff]
        %v4268 = vld [vmem:[%s1353 + $0x4e10] sm:$0xff]
        %v4269 = vld [vmem:[%s1353 + $0x4e18] sm:$0xff]
        %v4270 = vld [vmem:[%s1353 + $0x4e20] sm:$0xff]
        %v4271 = vld [vmem:[%s1353 + $0x4e28] sm:$0xff]
        %v4272 = vld [vmem:[%s1353 + $0x4e30] sm:$0xff]
        %v4273 = vld [vmem:[%s1353 + $0x4e38] sm:$0xff]
        %v4274 = vld [vmem:[%s1353 + $0x4e40] sm:$0xff]
        %v4275 = vld [vmem:[%s1353 + $0x4e48] sm:$0xff]
        %v4276 = vld [vmem:[%s1353 + $0x4e50] sm:$0xff]
        %v4277 = vld [vmem:[%s1353 + $0x4e58] sm:$0xff]
        %v4278 = vld [vmem:[%s1353 + $0x4e60] sm:$0xff]
        %v4279 = vld [vmem:[%s1353 + $0x4e68] sm:$0xff]
        %v4280 = vld [vmem:[%s1353 + $0x4e70] sm:$0xff]
        %v4281 = vld [vmem:[%s1353 + $0x4e78] sm:$0xff]
        %v4282 = vld [vmem:[%s1353 + $0x4e80] sm:$0xff]
        %v4283 = vld [vmem:[%s1353 + $0x4e88] sm:$0xff]
        %v4284 = vld [vmem:[%s1353 + $0x4e90] sm:$0xff]
        %v4285 = vld [vmem:[%s1353 + $0x4e98] sm:$0xff]
        %v4286 = vld [vmem:[%s1353 + $0x4ea0] sm:$0xff]
        %v4287 = vld [vmem:[%s1353 + $0x4ea8] sm:$0xff]
        %v4288 = vld [vmem:[%s1353 + $0x4eb0] sm:$0xff]
        %v4289 = vld [vmem:[%s1353 + $0x4eb8] sm:$0xff]
        %v4290 = vld [vmem:[%s1353 + $0x4ec0] sm:$0xff]
        %v4291 = vld [vmem:[%s1353 + $0x4ec8] sm:$0xff]
        %v4292 = vld [vmem:[%s1353 + $0x4ed0] sm:$0xff]
        %v4293 = vld [vmem:[%s1353 + $0x4ed8] sm:$0xff]
        %v4294 = vld [vmem:[%s1353 + $0x4ee0] sm:$0xff]
        %v4295 = vld [vmem:[%s1353 + $0x4ee8] sm:$0xff]
        %v4296 = vld [vmem:[%s1353 + $0x4ef0] sm:$0xff]
        %v4297 = vld [vmem:[%s1353 + $0x4ef8] sm:$0xff]
        %v4298 = vld [vmem:[%s1353 + $0x4f00] sm:$0xff]
        %v4299 = vld [vmem:[%s1353 + $0x4f08] sm:$0xff]
        %v4300 = vld [vmem:[%s1353 + $0x4f10] sm:$0xff]
        %v4301 = vld [vmem:[%s1353 + $0x4f18] sm:$0xff]
        %v4302 = vld [vmem:[%s1353 + $0x4f20] sm:$0xff]
        %v4303 = vld [vmem:[%s1353 + $0x4f28] sm:$0xff]
        %v4304 = vld [vmem:[%s1353 + $0x4f30] sm:$0xff]
        %v4305 = vld [vmem:[%s1353 + $0x4f38] sm:$0xff]
        %v4306 = vld [vmem:[%s1353 + $0x4f40] sm:$0xff]
        %v4307 = vld [vmem:[%s1353 + $0x4f48] sm:$0xff]
        %v4308 = vld [vmem:[%s1353 + $0x4f50] sm:$0xff]
        %v4309 = vld [vmem:[%s1353 + $0x4f58] sm:$0xff]
        %v4310 = vld [vmem:[%s1353 + $0x4f60] sm:$0xff]
        %v4311 = vld [vmem:[%s1353 + $0x4f68] sm:$0xff]
        %v4312 = vld [vmem:[%s1353 + $0x4f70] sm:$0xff]
        %v4313 = vld [vmem:[%s1353 + $0x4f78] sm:$0xff]
        %v4314 = vld [vmem:[%s1353 + $0x4f80] sm:$0xff]
        %v4315 = vld [vmem:[%s1353 + $0x4f88] sm:$0xff]
        %v4316 = vld [vmem:[%s1353 + $0x4f90] sm:$0xff]
        %v4317 = vld [vmem:[%s1353 + $0x4f98] sm:$0xff]
        %v4318 = vld [vmem:[%s1353 + $0x4fa0] sm:$0xff]
        %v4319 = vld [vmem:[%s1353 + $0x4fa8] sm:$0xff]
        %v4320 = vld [vmem:[%s1353 + $0x4fb0] sm:$0xff]
        %v4321 = vld [vmem:[%s1353 + $0x4fb8] sm:$0xff]
        %v4322 = vld [vmem:[%s1353 + $0x4fc0] sm:$0xff]
        %v4323 = vld [vmem:[%s1353 + $0x4fc8] sm:$0xff]
        %v4324 = vld [vmem:[%s1353 + $0x4fd0] sm:$0xff]
        %v4325 = vld [vmem:[%s1353 + $0x4fd8] sm:$0xff]
        %v4326 = vld [vmem:[%s1353 + $0x4fe0] sm:$0xff]
        %v4327 = vld [vmem:[%s1353 + $0x4fe8] sm:$0xff]
        %v4328 = vld [vmem:[%s1353 + $0x4ff0] sm:$0xff]
        %v4329 = vld [vmem:[%s1353 + $0x4ff8] sm:$0xff]
        %4330 = vmatprep.subr.mxu0 %v2071
        %4331 = vmatpush1.msra.mxu0 %v2070
        %4332 = vmatprep.subr.mxu0 %v2051
        %4333 = vmatpush1.msra.mxu0 %v2050
        %4334 = vmatprep.subr.mxu0 %v2031
        %4335 = vmatpush1.msra.mxu0 %v2030
        %4336 = vmatprep.subr.mxu0 %v2011
        %4337 = vmatpush1.msra.mxu0 %v2010
        %4338 = vmatprep.subr.mxu0 %v1991
        %4339 = vmatpush1.msra.mxu0 %v1990
        %4340 = vmatprep.subr.mxu0 %v1971
        %4341 = vmatpush1.msra.mxu0 %v1970
        %4342 = vmatprep.subr.mxu0 %v1951
        %4343 = vmatpush1.msra.mxu0 %v1950
        %4344 = vmatprep.subr.mxu0 %v1931
        %4345 = vmatpush1.msra.mxu0 %v1930
        %4346 = vmatprep.subr.mxu0 %v1911
        %4347 = vmatpush1.msra.mxu0 %v1910
        %4348 = vmatprep.subr.mxu0 %v1891
        %4349 = vmatpush1.msra.mxu0 %v1890
        %4350 = vmatprep.subr.mxu0 %v1871
        %4351 = vmatpush1.msra.mxu0 %v1870
        %4352 = vmatprep.subr.mxu0 %v1851
        %4353 = vmatpush1.msra.mxu0 %v1850
        %4354 = vmatprep.subr.mxu0 %v1831
        %4355 = vmatpush1.msra.mxu0 %v1830
        %4356 = vmatprep.subr.mxu0 %v1811
        %4357 = vmatpush1.msra.mxu0 %v1810
        %4358 = vmatprep.subr.mxu0 %v1791
        %4359 = vmatpush1.msra.mxu0 %v1790
        %4360 = vmatprep.subr.mxu0 %v1771
        %4361 = vmatpush1.msra.mxu0 %v1770
        %4362 = vmatprep.subr.mxu0 %v2391
        %4363 = vmatpush2.msra.mxu0 %v2390
        %4364 = vmatprep.subr.mxu0 %v2371
        %4365 = vmatpush2.msra.mxu0 %v2370
        %4366 = vmatprep.subr.mxu0 %v2351
        %4367 = vmatpush2.msra.mxu0 %v2350
        %4368 = vmatprep.subr.mxu0 %v2331
        %4369 = vmatpush2.msra.mxu0 %v2330
        %4370 = vmatprep.subr.mxu0 %v2311
        %4371 = vmatpush2.msra.mxu0 %v2310
        %4372 = vmatprep.subr.mxu0 %v2291
        %4373 = vmatpush2.msra.mxu0 %v2290
        %4374 = vmatprep.subr.mxu0 %v2271
        %4375 = vmatpush2.msra.mxu0 %v2270
        %4376 = vmatprep.subr.mxu0 %v2251
        %4377 = vmatpush2.msra.mxu0 %v2250
        %4378 = vmatprep.subr.mxu0 %v2231
        %4379 = vmatpush2.msra.mxu0 %v2230
        %4380 = vmatprep.subr.mxu0 %v2211
        %4381 = vmatpush2.msra.mxu0 %v2210
        %4382 = vmatprep.subr.mxu0 %v2191
        %4383 = vmatpush2.msra.mxu0 %v2190
        %4384 = vmatprep.subr.mxu0 %v2171
        %4385 = vmatpush2.msra.mxu0 %v2170
        %4386 = vmatprep.subr.mxu0 %v2151
        %4387 = vmatpush2.msra.mxu0 %v2150
        %4388 = vmatprep.subr.mxu0 %v2131
        %4389 = vmatpush2.msra.mxu0 %v2130
        %4390 = vmatprep.subr.mxu0 %v2111
        %4391 = vmatpush2.msra.mxu0 %v2110
        %4392 = vmatprep.subr.mxu0 %v2091
        %4393 = vmatpush2.msra.mxu0 %v2090
        %4394 = vmatprep.mubr.f32.mxu0 %v1763
        %4395 = vmatmul.mubr.f32.gmra.mxu0 %v1762
        %v4396 = vpop.f32.mrf.mxu0
        %v4397 = vadd.f32 0.0, %v4396
        %v4398 = vpop.f32.mrf.mxu0
        %v4399 = vadd.f32 0.0, %v4398
        %4400 = vdwg.mxu0
        %4401 = vmatprep.subr.mxu0 %v2711
        %4402 = vmatpush1.msra.mxu0 %v2710
        %4403 = vmatprep.subr.mxu0 %v2691
        %4404 = vmatpush1.msra.mxu0 %v2690
        %4405 = vmatprep.subr.mxu0 %v2671
        %4406 = vmatpush1.msra.mxu0 %v2670
        %4407 = vmatprep.subr.mxu0 %v2651
        %4408 = vmatpush1.msra.mxu0 %v2650
        %4409 = vmatprep.subr.mxu0 %v2631
        %4410 = vmatpush1.msra.mxu0 %v2630
        %4411 = vmatprep.subr.mxu0 %v2611
        %4412 = vmatpush1.msra.mxu0 %v2610
        %4413 = vmatprep.subr.mxu0 %v2591
        %4414 = vmatpush1.msra.mxu0 %v2590
        %4415 = vmatprep.subr.mxu0 %v2571
        %4416 = vmatpush1.msra.mxu0 %v2570
        %4417 = vmatprep.subr.mxu0 %v2551
        %4418 = vmatpush1.msra.mxu0 %v2550
        %4419 = vmatprep.subr.mxu0 %v2531
        %4420 = vmatpush1.msra.mxu0 %v2530
        %4421 = vmatprep.subr.mxu0 %v2511
        %4422 = vmatpush1.msra.mxu0 %v2510
        %4423 = vmatprep.subr.mxu0 %v2491
        %4424 = vmatpush1.msra.mxu0 %v2490
        %4425 = vmatprep.subr.mxu0 %v2471
        %4426 = vmatpush1.msra.mxu0 %v2470
        %4427 = vmatprep.subr.mxu0 %v2451
        %4428 = vmatpush1.msra.mxu0 %v2450
        %4429 = vmatprep.subr.mxu0 %v2431
        %4430 = vmatpush1.msra.mxu0 %v2430
        %4431 = vmatprep.subr.mxu0 %v2411
        %4432 = vmatpush1.msra.mxu0 %v2410
        %4433 = vmatprep.subr.mxu0 %v3031
        %4434 = vmatpush2.msra.mxu0 %v3030
        %4435 = vmatprep.subr.mxu0 %v3011
        %4436 = vmatpush2.msra.mxu0 %v3010
        %4437 = vmatprep.subr.mxu0 %v2991
        %4438 = vmatpush2.msra.mxu0 %v2990
        %4439 = vmatprep.subr.mxu0 %v2971
        %4440 = vmatpush2.msra.mxu0 %v2970
        %4441 = vmatprep.subr.mxu0 %v2951
        %4442 = vmatpush2.msra.mxu0 %v2950
        %4443 = vmatprep.subr.mxu0 %v2931
        %4444 = vmatpush2.msra.mxu0 %v2930
        %4445 = vmatprep.subr.mxu0 %v2911
        %4446 = vmatpush2.msra.mxu0 %v2910
        %4447 = vmatprep.subr.mxu0 %v2891
        %4448 = vmatpush2.msra.mxu0 %v2890
        %4449 = vmatprep.subr.mxu0 %v2871
        %4450 = vmatpush2.msra.mxu0 %v2870
        %4451 = vmatprep.subr.mxu0 %v2851
        %4452 = vmatpush2.msra.mxu0 %v2850
        %4453 = vmatprep.subr.mxu0 %v2831
        %4454 = vmatpush2.msra.mxu0 %v2830
        %4455 = vmatprep.subr.mxu0 %v2811
        %4456 = vmatpush2.msra.mxu0 %v2810
        %4457 = vmatprep.subr.mxu0 %v2791
        %4458 = vmatpush2.msra.mxu0 %v2790
        %4459 = vmatprep.subr.mxu0 %v2771
        %4460 = vmatpush2.msra.mxu0 %v2770
        %4461 = vmatprep.subr.mxu0 %v2751
        %4462 = vmatpush2.msra.mxu0 %v2750
        %4463 = vmatprep.subr.mxu0 %v2731
        %4464 = vmatpush2.msra.mxu0 %v2730
        %4465 = vmatprep.mubr.f32.mxu0 %v1765
        %4466 = vmatmul.mubr.f32.gmra.mxu0 %v1764
        %v4467 = vpop.f32.mrf.mxu0
        %v4468 = vadd.f32 %v4397, %v4467
        %v4469 = vpop.f32.mrf.mxu0
        %v4470 = vadd.f32 %v4399, %v4469
        %4471 = vdwg.mxu0
        %4472 = vmatprep.subr.mxu0 %v3351
        %4473 = vmatpush1.msra.mxu0 %v3350
        %4474 = vmatprep.subr.mxu0 %v3331
        %4475 = vmatpush1.msra.mxu0 %v3330
        %4476 = vmatprep.subr.mxu0 %v3311
        %4477 = vmatpush1.msra.mxu0 %v3310
        %4478 = vmatprep.subr.mxu0 %v3291
        %4479 = vmatpush1.msra.mxu0 %v3290
        %4480 = vmatprep.subr.mxu0 %v3271
        %4481 = vmatpush1.msra.mxu0 %v3270
        %4482 = vmatprep.subr.mxu0 %v3251
        %4483 = vmatpush1.msra.mxu0 %v3250
        %4484 = vmatprep.subr.mxu0 %v3231
        %4485 = vmatpush1.msra.mxu0 %v3230
        %4486 = vmatprep.subr.mxu0 %v3211
        %4487 = vmatpush1.msra.mxu0 %v3210
        %4488 = vmatprep.subr.mxu0 %v3191
        %4489 = vmatpush1.msra.mxu0 %v3190
        %4490 = vmatprep.subr.mxu0 %v3171
        %4491 = vmatpush1.msra.mxu0 %v3170
        %4492 = vmatprep.subr.mxu0 %v3151
        %4493 = vmatpush1.msra.mxu0 %v3150
        %4494 = vmatprep.subr.mxu0 %v3131
        %4495 = vmatpush1.msra.mxu0 %v3130
        %4496 = vmatprep.subr.mxu0 %v3111
        %4497 = vmatpush1.msra.mxu0 %v3110
        %4498 = vmatprep.subr.mxu0 %v3091
        %4499 = vmatpush1.msra.mxu0 %v3090
        %4500 = vmatprep.subr.mxu0 %v3071
        %4501 = vmatpush1.msra.mxu0 %v3070
        %4502 = vmatprep.subr.mxu0 %v3051
        %4503 = vmatpush1.msra.mxu0 %v3050
        %4504 = vmatprep.subr.mxu0 %v3671
        %4505 = vmatpush2.msra.mxu0 %v3670
        %4506 = vmatprep.subr.mxu0 %v3651
        %4507 = vmatpush2.msra.mxu0 %v3650
        %4508 = vmatprep.subr.mxu0 %v3631
        %4509 = vmatpush2.msra.mxu0 %v3630
        %4510 = vmatprep.subr.mxu0 %v3611
        %4511 = vmatpush2.msra.mxu0 %v3610
        %4512 = vmatprep.subr.mxu0 %v3591
        %4513 = vmatpush2.msra.mxu0 %v3590
        %4514 = vmatprep.subr.mxu0 %v3571
        %4515 = vmatpush2.msra.mxu0 %v3570
        %4516 = vmatprep.subr.mxu0 %v3551
        %4517 = vmatpush2.msra.mxu0 %v3550
        %4518 = vmatprep.subr.mxu0 %v3531
        %4519 = vmatpush2.msra.mxu0 %v3530
        %4520 = vmatprep.subr.mxu0 %v3511
        %4521 = vmatpush2.msra.mxu0 %v3510
        %4522 = vmatprep.subr.mxu0 %v3491
        %4523 = vmatpush2.msra.mxu0 %v3490
        %4524 = vmatprep.subr.mxu0 %v3471
        %4525 = vmatpush2.msra.mxu0 %v3470
        %4526 = vmatprep.subr.mxu0 %v3451
        %4527 = vmatpush2.msra.mxu0 %v3450
        %4528 = vmatprep.subr.mxu0 %v3431
        %4529 = vmatpush2.msra.mxu0 %v3430
        %4530 = vmatprep.subr.mxu0 %v3411
        %4531 = vmatpush2.msra.mxu0 %v3410
        %4532 = vmatprep.subr.mxu0 %v3391
        %4533 = vmatpush2.msra.mxu0 %v3390
        %4534 = vmatprep.subr.mxu0 %v3371
        %4535 = vmatpush2.msra.mxu0 %v3370
        %4536 = vmatprep.mubr.f32.mxu0 %v1767
        %4537 = vmatmul.mubr.f32.gmra.mxu0 %v1766
        %v4538 = vpop.f32.mrf.mxu0
        %v4539 = vadd.f32 %v4468, %v4538
        %v4540 = vpop.f32.mrf.mxu0
        %v4541 = vadd.f32 %v4470, %v4540
        %4542 = vdwg.mxu0
        %4543 = vmatprep.subr.mxu0 %v3991
        %4544 = vmatpush1.msra.mxu0 %v3990
        %4545 = vmatprep.subr.mxu0 %v3971
        %4546 = vmatpush1.msra.mxu0 %v3970
        %4547 = vmatprep.subr.mxu0 %v3951
        %4548 = vmatpush1.msra.mxu0 %v3950
        %4549 = vmatprep.subr.mxu0 %v3931
        %4550 = vmatpush1.msra.mxu0 %v3930
        %4551 = vmatprep.subr.mxu0 %v3911
        %4552 = vmatpush1.msra.mxu0 %v3910
        %4553 = vmatprep.subr.mxu0 %v3891
        %4554 = vmatpush1.msra.mxu0 %v3890
        %4555 = vmatprep.subr.mxu0 %v3871
        %4556 = vmatpush1.msra.mxu0 %v3870
        %4557 = vmatprep.subr.mxu0 %v3851
        %4558 = vmatpush1.msra.mxu0 %v3850
        %4559 = vmatprep.subr.mxu0 %v3831
        %4560 = vmatpush1.msra.mxu0 %v3830
        %4561 = vmatprep.subr.mxu0 %v3811
        %4562 = vmatpush1.msra.mxu0 %v3810
        %4563 = vmatprep.subr.mxu0 %v3791
        %4564 = vmatpush1.msra.mxu0 %v3790
        %4565 = vmatprep.subr.mxu0 %v3771
        %4566 = vmatpush1.msra.mxu0 %v3770
        %4567 = vmatprep.subr.mxu0 %v3751
        %4568 = vmatpush1.msra.mxu0 %v3750
        %4569 = vmatprep.subr.mxu0 %v3731
        %4570 = vmatpush1.msra.mxu0 %v3730
        %4571 = vmatprep.subr.mxu0 %v3711
        %4572 = vmatpush1.msra.mxu0 %v3710
        %4573 = vmatprep.subr.mxu0 %v3691
        %4574 = vmatpush1.msra.mxu0 %v3690
        %4575 = vmatprep.subr.mxu0 %v4311
        %4576 = vmatpush2.msra.mxu0 %v4310
        %4577 = vmatprep.subr.mxu0 %v4291
        %4578 = vmatpush2.msra.mxu0 %v4290
        %4579 = vmatprep.subr.mxu0 %v4271
        %4580 = vmatpush2.msra.mxu0 %v4270
        %4581 = vmatprep.subr.mxu0 %v4251
        %4582 = vmatpush2.msra.mxu0 %v4250
        %4583 = vmatprep.subr.mxu0 %v4231
        %4584 = vmatpush2.msra.mxu0 %v4230
        %4585 = vmatprep.subr.mxu0 %v4211
        %4586 = vmatpush2.msra.mxu0 %v4210
        %4587 = vmatprep.subr.mxu0 %v4191
        %4588 = vmatpush2.msra.mxu0 %v4190
        %4589 = vmatprep.subr.mxu0 %v4171
        %4590 = vmatpush2.msra.mxu0 %v4170
        %4591 = vmatprep.subr.mxu0 %v4151
        %4592 = vmatpush2.msra.mxu0 %v4150
        %4593 = vmatprep.subr.mxu0 %v4131
        %4594 = vmatpush2.msra.mxu0 %v4130
        %4595 = vmatprep.subr.mxu0 %v4111
        %4596 = vmatpush2.msra.mxu0 %v4110
        %4597 = vmatprep.subr.mxu0 %v4091
        %4598 = vmatpush2.msra.mxu0 %v4090
        %4599 = vmatprep.subr.mxu0 %v4071
        %4600 = vmatpush2.msra.mxu0 %v4070
        %4601 = vmatprep.subr.mxu0 %v4051
        %4602 = vmatpush2.msra.mxu0 %v4050
        %4603 = vmatprep.subr.mxu0 %v4031
        %4604 = vmatpush2.msra.mxu0 %v4030
        %4605 = vmatprep.subr.mxu0 %v4011
        %4606 = vmatpush2.msra.mxu0 %v4010
        %4607 = vmatprep.mubr.f32.mxu0 %v1769
        %4608 = vmatmul.mubr.f32.gmra.mxu0 %v1768
        %v4609 = vpop.f32.mrf.mxu0
        %v4610 = vadd.f32 %v4539, %v4609
        %v4611 = vpop.f32.mrf.mxu0
        %v4612 = vadd.f32 %v4541, %v4611
        %4613 = vdwg.mxu0
        %4614 = vmatprep.subr.mxu0 %v2073
        %4615 = vmatpush1.msra.mxu0 %v2072
        %4616 = vmatprep.subr.mxu0 %v2053
        %4617 = vmatpush1.msra.mxu0 %v2052
        %4618 = vmatprep.subr.mxu0 %v2033
        %4619 = vmatpush1.msra.mxu0 %v2032
        %4620 = vmatprep.subr.mxu0 %v2013
        %4621 = vmatpush1.msra.mxu0 %v2012
        %4622 = vmatprep.subr.mxu0 %v1993
        %4623 = vmatpush1.msra.mxu0 %v1992
        %4624 = vmatprep.subr.mxu0 %v1973
        %4625 = vmatpush1.msra.mxu0 %v1972
        %4626 = vmatprep.subr.mxu0 %v1953
        %4627 = vmatpush1.msra.mxu0 %v1952
        %4628 = vmatprep.subr.mxu0 %v1933
        %4629 = vmatpush1.msra.mxu0 %v1932
        %4630 = vmatprep.subr.mxu0 %v1913
        %4631 = vmatpush1.msra.mxu0 %v1912
        %4632 = vmatprep.subr.mxu0 %v1893
        %4633 = vmatpush1.msra.mxu0 %v1892
        %4634 = vmatprep.subr.mxu0 %v1873
        %4635 = vmatpush1.msra.mxu0 %v1872
        %4636 = vmatprep.subr.mxu0 %v1853
        %4637 = vmatpush1.msra.mxu0 %v1852
        %4638 = vmatprep.subr.mxu0 %v1833
        %4639 = vmatpush1.msra.mxu0 %v1832
        %4640 = vmatprep.subr.mxu0 %v1813
        %4641 = vmatpush1.msra.mxu0 %v1812
        %4642 = vmatprep.subr.mxu0 %v1793
        %4643 = vmatpush1.msra.mxu0 %v1792
        %4644 = vmatprep.subr.mxu0 %v1773
        %4645 = vmatpush1.msra.mxu0 %v1772
        %4646 = vmatprep.subr.mxu0 %v2393
        %4647 = vmatpush2.msra.mxu0 %v2392
        %4648 = vmatprep.subr.mxu0 %v2373
        %4649 = vmatpush2.msra.mxu0 %v2372
        %4650 = vmatprep.subr.mxu0 %v2353
        %4651 = vmatpush2.msra.mxu0 %v2352
        %4652 = vmatprep.subr.mxu0 %v2333
        %4653 = vmatpush2.msra.mxu0 %v2332
        %4654 = vmatprep.subr.mxu0 %v2313
        %4655 = vmatpush2.msra.mxu0 %v2312
        %4656 = vmatprep.subr.mxu0 %v2293
        %4657 = vmatpush2.msra.mxu0 %v2292
        %4658 = vmatprep.subr.mxu0 %v2273
        %4659 = vmatpush2.msra.mxu0 %v2272
        %4660 = vmatprep.subr.mxu0 %v2253
        %4661 = vmatpush2.msra.mxu0 %v2252
        %4662 = vmatprep.subr.mxu0 %v2233
        %4663 = vmatpush2.msra.mxu0 %v2232
        %4664 = vmatprep.subr.mxu0 %v2213
        %4665 = vmatpush2.msra.mxu0 %v2212
        %4666 = vmatprep.subr.mxu0 %v2193
        %4667 = vmatpush2.msra.mxu0 %v2192
        %4668 = vmatprep.subr.mxu0 %v2173
        %4669 = vmatpush2.msra.mxu0 %v2172
        %4670 = vmatprep.subr.mxu0 %v2153
        %4671 = vmatpush2.msra.mxu0 %v2152
        %4672 = vmatprep.subr.mxu0 %v2133
        %4673 = vmatpush2.msra.mxu0 %v2132
        %4674 = vmatprep.subr.mxu0 %v2113
        %4675 = vmatpush2.msra.mxu0 %v2112
        %4676 = vmatprep.subr.mxu0 %v2093
        %4677 = vmatpush2.msra.mxu0 %v2092
        %4678 = vmatprep.mubr.f32.mxu0 %v1763
        %4679 = vmatmul.mubr.f32.gmra.mxu0 %v1762
        %v4680 = vpop.f32.mrf.mxu0
        %v4681 = vadd.f32 0.0, %v4680
        %v4682 = vpop.f32.mrf.mxu0
        %v4683 = vadd.f32 0.0, %v4682
        %4684 = vdwg.mxu0
        %4685 = vmatprep.subr.mxu0 %v2713
        %4686 = vmatpush1.msra.mxu0 %v2712
        %4687 = vmatprep.subr.mxu0 %v2693
        %4688 = vmatpush1.msra.mxu0 %v2692
        %4689 = vmatprep.subr.mxu0 %v2673
        %4690 = vmatpush1.msra.mxu0 %v2672
        %4691 = vmatprep.subr.mxu0 %v2653
        %4692 = vmatpush1.msra.mxu0 %v2652
        %4693 = vmatprep.subr.mxu0 %v2633
        %4694 = vmatpush1.msra.mxu0 %v2632
        %4695 = vmatprep.subr.mxu0 %v2613
        %4696 = vmatpush1.msra.mxu0 %v2612
        %4697 = vmatprep.subr.mxu0 %v2593
        %4698 = vmatpush1.msra.mxu0 %v2592
        %4699 = vmatprep.subr.mxu0 %v2573
        %4700 = vmatpush1.msra.mxu0 %v2572
        %4701 = vmatprep.subr.mxu0 %v2553
        %4702 = vmatpush1.msra.mxu0 %v2552
        %4703 = vmatprep.subr.mxu0 %v2533
        %4704 = vmatpush1.msra.mxu0 %v2532
        %4705 = vmatprep.subr.mxu0 %v2513
        %4706 = vmatpush1.msra.mxu0 %v2512
        %4707 = vmatprep.subr.mxu0 %v2493
        %4708 = vmatpush1.msra.mxu0 %v2492
        %4709 = vmatprep.subr.mxu0 %v2473
        %4710 = vmatpush1.msra.mxu0 %v2472
        %4711 = vmatprep.subr.mxu0 %v2453
        %4712 = vmatpush1.msra.mxu0 %v2452
        %4713 = vmatprep.subr.mxu0 %v2433
        %4714 = vmatpush1.msra.mxu0 %v2432
        %4715 = vmatprep.subr.mxu0 %v2413
        %4716 = vmatpush1.msra.mxu0 %v2412
        %4717 = vmatprep.subr.mxu0 %v3033
        %4718 = vmatpush2.msra.mxu0 %v3032
        %4719 = vmatprep.subr.mxu0 %v3013
        %4720 = vmatpush2.msra.mxu0 %v3012
        %4721 = vmatprep.subr.mxu0 %v2993
        %4722 = vmatpush2.msra.mxu0 %v2992
        %4723 = vmatprep.subr.mxu0 %v2973
        %4724 = vmatpush2.msra.mxu0 %v2972
        %4725 = vmatprep.subr.mxu0 %v2953
        %4726 = vmatpush2.msra.mxu0 %v2952
        %4727 = vmatprep.subr.mxu0 %v2933
        %4728 = vmatpush2.msra.mxu0 %v2932
        %4729 = vmatprep.subr.mxu0 %v2913
        %4730 = vmatpush2.msra.mxu0 %v2912
        %4731 = vmatprep.subr.mxu0 %v2893
        %4732 = vmatpush2.msra.mxu0 %v2892
        %4733 = vmatprep.subr.mxu0 %v2873
        %4734 = vmatpush2.msra.mxu0 %v2872
        %4735 = vmatprep.subr.mxu0 %v2853
        %4736 = vmatpush2.msra.mxu0 %v2852
        %4737 = vmatprep.subr.mxu0 %v2833
        %4738 = vmatpush2.msra.mxu0 %v2832
        %4739 = vmatprep.subr.mxu0 %v2813
        %4740 = vmatpush2.msra.mxu0 %v2812
        %4741 = vmatprep.subr.mxu0 %v2793
        %4742 = vmatpush2.msra.mxu0 %v2792
        %4743 = vmatprep.subr.mxu0 %v2773
        %4744 = vmatpush2.msra.mxu0 %v2772
        %4745 = vmatprep.subr.mxu0 %v2753
        %4746 = vmatpush2.msra.mxu0 %v2752
        %4747 = vmatprep.subr.mxu0 %v2733
        %4748 = vmatpush2.msra.mxu0 %v2732
        %4749 = vmatprep.mubr.f32.mxu0 %v1765
        %4750 = vmatmul.mubr.f32.gmra.mxu0 %v1764
        %v4751 = vpop.f32.mrf.mxu0
        %v4752 = vadd.f32 %v4681, %v4751
        %v4753 = vpop.f32.mrf.mxu0
        %v4754 = vadd.f32 %v4683, %v4753
        %4755 = vdwg.mxu0
        %4756 = vmatprep.subr.mxu0 %v3353
        %4757 = vmatpush1.msra.mxu0 %v3352
        %4758 = vmatprep.subr.mxu0 %v3333
        %4759 = vmatpush1.msra.mxu0 %v3332
        %4760 = vmatprep.subr.mxu0 %v3313
        %4761 = vmatpush1.msra.mxu0 %v3312
        %4762 = vmatprep.subr.mxu0 %v3293
        %4763 = vmatpush1.msra.mxu0 %v3292
        %4764 = vmatprep.subr.mxu0 %v3273
        %4765 = vmatpush1.msra.mxu0 %v3272
        %4766 = vmatprep.subr.mxu0 %v3253
        %4767 = vmatpush1.msra.mxu0 %v3252
        %4768 = vmatprep.subr.mxu0 %v3233
        %4769 = vmatpush1.msra.mxu0 %v3232
        %4770 = vmatprep.subr.mxu0 %v3213
        %4771 = vmatpush1.msra.mxu0 %v3212
        %4772 = vmatprep.subr.mxu0 %v3193
        %4773 = vmatpush1.msra.mxu0 %v3192
        %4774 = vmatprep.subr.mxu0 %v3173
        %4775 = vmatpush1.msra.mxu0 %v3172
        %4776 = vmatprep.subr.mxu0 %v3153
        %4777 = vmatpush1.msra.mxu0 %v3152
        %4778 = vmatprep.subr.mxu0 %v3133
        %4779 = vmatpush1.msra.mxu0 %v3132
        %4780 = vmatprep.subr.mxu0 %v3113
        %4781 = vmatpush1.msra.mxu0 %v3112
        %4782 = vmatprep.subr.mxu0 %v3093
        %4783 = vmatpush1.msra.mxu0 %v3092
        %4784 = vmatprep.subr.mxu0 %v3073
        %4785 = vmatpush1.msra.mxu0 %v3072
        %4786 = vmatprep.subr.mxu0 %v3053
        %4787 = vmatpush1.msra.mxu0 %v3052
        %4788 = vmatprep.subr.mxu0 %v3673
        %4789 = vmatpush2.msra.mxu0 %v3672
        %4790 = vmatprep.subr.mxu0 %v3653
        %4791 = vmatpush2.msra.mxu0 %v3652
        %4792 = vmatprep.subr.mxu0 %v3633
        %4793 = vmatpush2.msra.mxu0 %v3632
        %4794 = vmatprep.subr.mxu0 %v3613
        %4795 = vmatpush2.msra.mxu0 %v3612
        %4796 = vmatprep.subr.mxu0 %v3593
        %4797 = vmatpush2.msra.mxu0 %v3592
        %4798 = vmatprep.subr.mxu0 %v3573
        %4799 = vmatpush2.msra.mxu0 %v3572
        %4800 = vmatprep.subr.mxu0 %v3553
        %4801 = vmatpush2.msra.mxu0 %v3552
        %4802 = vmatprep.subr.mxu0 %v3533
        %4803 = vmatpush2.msra.mxu0 %v3532
        %4804 = vmatprep.subr.mxu0 %v3513
        %4805 = vmatpush2.msra.mxu0 %v3512
        %4806 = vmatprep.subr.mxu0 %v3493
        %4807 = vmatpush2.msra.mxu0 %v3492
        %4808 = vmatprep.subr.mxu0 %v3473
        %4809 = vmatpush2.msra.mxu0 %v3472
        %4810 = vmatprep.subr.mxu0 %v3453
        %4811 = vmatpush2.msra.mxu0 %v3452
        %4812 = vmatprep.subr.mxu0 %v3433
        %4813 = vmatpush2.msra.mxu0 %v3432
        %4814 = vmatprep.subr.mxu0 %v3413
        %4815 = vmatpush2.msra.mxu0 %v3412
        %4816 = vmatprep.subr.mxu0 %v3393
        %4817 = vmatpush2.msra.mxu0 %v3392
        %4818 = vmatprep.subr.mxu0 %v3373
        %4819 = vmatpush2.msra.mxu0 %v3372
        %4820 = vmatprep.mubr.f32.mxu0 %v1767
        %4821 = vmatmul.mubr.f32.gmra.mxu0 %v1766
        %v4822 = vpop.f32.mrf.mxu0
        %v4823 = vadd.f32 %v4752, %v4822
        %v4824 = vpop.f32.mrf.mxu0
        %v4825 = vadd.f32 %v4754, %v4824
        %4826 = vdwg.mxu0
        %4827 = vmatprep.subr.mxu0 %v3993
        %4828 = vmatpush1.msra.mxu0 %v3992
        %4829 = vmatprep.subr.mxu0 %v3973
        %4830 = vmatpush1.msra.mxu0 %v3972
        %4831 = vmatprep.subr.mxu0 %v3953
        %4832 = vmatpush1.msra.mxu0 %v3952
        %4833 = vmatprep.subr.mxu0 %v3933
        %4834 = vmatpush1.msra.mxu0 %v3932
        %4835 = vmatprep.subr.mxu0 %v3913
        %4836 = vmatpush1.msra.mxu0 %v3912
        %4837 = vmatprep.subr.mxu0 %v3893
        %4838 = vmatpush1.msra.mxu0 %v3892
        %4839 = vmatprep.subr.mxu0 %v3873
        %4840 = vmatpush1.msra.mxu0 %v3872
        %4841 = vmatprep.subr.mxu0 %v3853
        %4842 = vmatpush1.msra.mxu0 %v3852
        %4843 = vmatprep.subr.mxu0 %v3833
        %4844 = vmatpush1.msra.mxu0 %v3832
        %4845 = vmatprep.subr.mxu0 %v3813
        %4846 = vmatpush1.msra.mxu0 %v3812
        %4847 = vmatprep.subr.mxu0 %v3793
        %4848 = vmatpush1.msra.mxu0 %v3792
        %4849 = vmatprep.subr.mxu0 %v3773
        %4850 = vmatpush1.msra.mxu0 %v3772
        %4851 = vmatprep.subr.mxu0 %v3753
        %4852 = vmatpush1.msra.mxu0 %v3752
        %4853 = vmatprep.subr.mxu0 %v3733
        %4854 = vmatpush1.msra.mxu0 %v3732
        %4855 = vmatprep.subr.mxu0 %v3713
        %4856 = vmatpush1.msra.mxu0 %v3712
        %4857 = vmatprep.subr.mxu0 %v3693
        %4858 = vmatpush1.msra.mxu0 %v3692
        %4859 = vmatprep.subr.mxu0 %v4313
        %4860 = vmatpush2.msra.mxu0 %v4312
        %4861 = vmatprep.subr.mxu0 %v4293
        %4862 = vmatpush2.msra.mxu0 %v4292
        %4863 = vmatprep.subr.mxu0 %v4273
        %4864 = vmatpush2.msra.mxu0 %v4272
        %4865 = vmatprep.subr.mxu0 %v4253
        %4866 = vmatpush2.msra.mxu0 %v4252
        %4867 = vmatprep.subr.mxu0 %v4233
        %4868 = vmatpush2.msra.mxu0 %v4232
        %4869 = vmatprep.subr.mxu0 %v4213
        %4870 = vmatpush2.msra.mxu0 %v4212
        %4871 = vmatprep.subr.mxu0 %v4193
        %4872 = vmatpush2.msra.mxu0 %v4192
        %4873 = vmatprep.subr.mxu0 %v4173
        %4874 = vmatpush2.msra.mxu0 %v4172
        %4875 = vmatprep.subr.mxu0 %v4153
        %4876 = vmatpush2.msra.mxu0 %v4152
        %4877 = vmatprep.subr.mxu0 %v4133
        %4878 = vmatpush2.msra.mxu0 %v4132
        %4879 = vmatprep.subr.mxu0 %v4113
        %4880 = vmatpush2.msra.mxu0 %v4112
        %4881 = vmatprep.subr.mxu0 %v4093
        %4882 = vmatpush2.msra.mxu0 %v4092
        %4883 = vmatprep.subr.mxu0 %v4073
        %4884 = vmatpush2.msra.mxu0 %v4072
        %4885 = vmatprep.subr.mxu0 %v4053
        %4886 = vmatpush2.msra.mxu0 %v4052
        %4887 = vmatprep.subr.mxu0 %v4033
        %4888 = vmatpush2.msra.mxu0 %v4032
        %4889 = vmatprep.subr.mxu0 %v4013
        %4890 = vmatpush2.msra.mxu0 %v4012
        %4891 = vmatprep.mubr.f32.mxu0 %v1769
        %4892 = vmatmul.mubr.f32.gmra.mxu0 %v1768
        %v4893 = vpop.f32.mrf.mxu0
        %v4894 = vadd.f32 %v4823, %v4893
        %v4895 = vpop.f32.mrf.mxu0
        %v4896 = vadd.f32 %v4825, %v4895
        %4897 = vdwg.mxu0
        %4898 = vmatprep.subr.mxu0 %v2075
        %4899 = vmatpush1.msra.mxu0 %v2074
        %4900 = vmatprep.subr.mxu0 %v2055
        %4901 = vmatpush1.msra.mxu0 %v2054
        %4902 = vmatprep.subr.mxu0 %v2035
        %4903 = vmatpush1.msra.mxu0 %v2034
        %4904 = vmatprep.subr.mxu0 %v2015
        %4905 = vmatpush1.msra.mxu0 %v2014
        %4906 = vmatprep.subr.mxu0 %v1995
        %4907 = vmatpush1.msra.mxu0 %v1994
        %4908 = vmatprep.subr.mxu0 %v1975
        %4909 = vmatpush1.msra.mxu0 %v1974
        %4910 = vmatprep.subr.mxu0 %v1955
        %4911 = vmatpush1.msra.mxu0 %v1954
        %4912 = vmatprep.subr.mxu0 %v1935
        %4913 = vmatpush1.msra.mxu0 %v1934
        %4914 = vmatprep.subr.mxu0 %v1915
        %4915 = vmatpush1.msra.mxu0 %v1914
        %4916 = vmatprep.subr.mxu0 %v1895
        %4917 = vmatpush1.msra.mxu0 %v1894
        %4918 = vmatprep.subr.mxu0 %v1875
        %4919 = vmatpush1.msra.mxu0 %v1874
        %4920 = vmatprep.subr.mxu0 %v1855
        %4921 = vmatpush1.msra.mxu0 %v1854
        %4922 = vmatprep.subr.mxu0 %v1835
        %4923 = vmatpush1.msra.mxu0 %v1834
        %4924 = vmatprep.subr.mxu0 %v1815
        %4925 = vmatpush1.msra.mxu0 %v1814
        %4926 = vmatprep.subr.mxu0 %v1795
        %4927 = vmatpush1.msra.mxu0 %v1794
        %4928 = vmatprep.subr.mxu0 %v1775
        %4929 = vmatpush1.msra.mxu0 %v1774
        %4930 = vmatprep.subr.mxu0 %v2395
        %4931 = vmatpush2.msra.mxu0 %v2394
        %4932 = vmatprep.subr.mxu0 %v2375
        %4933 = vmatpush2.msra.mxu0 %v2374
        %4934 = vmatprep.subr.mxu0 %v2355
        %4935 = vmatpush2.msra.mxu0 %v2354
        %4936 = vmatprep.subr.mxu0 %v2335
        %4937 = vmatpush2.msra.mxu0 %v2334
        %4938 = vmatprep.subr.mxu0 %v2315
        %4939 = vmatpush2.msra.mxu0 %v2314
        %4940 = vmatprep.subr.mxu0 %v2295
        %4941 = vmatpush2.msra.mxu0 %v2294
        %4942 = vmatprep.subr.mxu0 %v2275
        %4943 = vmatpush2.msra.mxu0 %v2274
        %4944 = vmatprep.subr.mxu0 %v2255
        %4945 = vmatpush2.msra.mxu0 %v2254
        %4946 = vmatprep.subr.mxu0 %v2235
        %4947 = vmatpush2.msra.mxu0 %v2234
        %4948 = vmatprep.subr.mxu0 %v2215
        %4949 = vmatpush2.msra.mxu0 %v2214
        %4950 = vmatprep.subr.mxu0 %v2195
        %4951 = vmatpush2.msra.mxu0 %v2194
        %4952 = vmatprep.subr.mxu0 %v2175
        %4953 = vmatpush2.msra.mxu0 %v2174
        %4954 = vmatprep.subr.mxu0 %v2155
        %4955 = vmatpush2.msra.mxu0 %v2154
        %4956 = vmatprep.subr.mxu0 %v2135
        %4957 = vmatpush2.msra.mxu0 %v2134
        %4958 = vmatprep.subr.mxu0 %v2115
        %4959 = vmatpush2.msra.mxu0 %v2114
        %4960 = vmatprep.subr.mxu0 %v2095
        %4961 = vmatpush2.msra.mxu0 %v2094
        %4962 = vmatprep.mubr.f32.mxu0 %v1763
        %4963 = vmatmul.mubr.f32.gmra.mxu0 %v1762
        %v4964 = vpop.f32.mrf.mxu0
        %v4965 = vadd.f32 0.0, %v4964
        %v4966 = vpop.f32.mrf.mxu0
        %v4967 = vadd.f32 0.0, %v4966
        %4968 = vdwg.mxu0
        %4969 = vmatprep.subr.mxu0 %v2715
        %4970 = vmatpush1.msra.mxu0 %v2714
        %4971 = vmatprep.subr.mxu0 %v2695
        %4972 = vmatpush1.msra.mxu0 %v2694
        %4973 = vmatprep.subr.mxu0 %v2675
        %4974 = vmatpush1.msra.mxu0 %v2674
        %4975 = vmatprep.subr.mxu0 %v2655
        %4976 = vmatpush1.msra.mxu0 %v2654
        %4977 = vmatprep.subr.mxu0 %v2635
        %4978 = vmatpush1.msra.mxu0 %v2634
        %4979 = vmatprep.subr.mxu0 %v2615
        %4980 = vmatpush1.msra.mxu0 %v2614
        %4981 = vmatprep.subr.mxu0 %v2595
        %4982 = vmatpush1.msra.mxu0 %v2594
        %4983 = vmatprep.subr.mxu0 %v2575
        %4984 = vmatpush1.msra.mxu0 %v2574
        %4985 = vmatprep.subr.mxu0 %v2555
        %4986 = vmatpush1.msra.mxu0 %v2554
        %4987 = vmatprep.subr.mxu0 %v2535
        %4988 = vmatpush1.msra.mxu0 %v2534
        %4989 = vmatprep.subr.mxu0 %v2515
        %4990 = vmatpush1.msra.mxu0 %v2514
        %4991 = vmatprep.subr.mxu0 %v2495
        %4992 = vmatpush1.msra.mxu0 %v2494
        %4993 = vmatprep.subr.mxu0 %v2475
        %4994 = vmatpush1.msra.mxu0 %v2474
        %4995 = vmatprep.subr.mxu0 %v2455
        %4996 = vmatpush1.msra.mxu0 %v2454
        %4997 = vmatprep.subr.mxu0 %v2435
        %4998 = vmatpush1.msra.mxu0 %v2434
        %4999 = vmatprep.subr.mxu0 %v2415
        %5000 = vmatpush1.msra.mxu0 %v2414
        %5001 = vmatprep.subr.mxu0 %v3035
        %5002 = vmatpush2.msra.mxu0 %v3034
        %5003 = vmatprep.subr.mxu0 %v3015
        %5004 = vmatpush2.msra.mxu0 %v3014
        %5005 = vmatprep.subr.mxu0 %v2995
        %5006 = vmatpush2.msra.mxu0 %v2994
        %5007 = vmatprep.subr.mxu0 %v2975
        %5008 = vmatpush2.msra.mxu0 %v2974
        %5009 = vmatprep.subr.mxu0 %v2955
        %5010 = vmatpush2.msra.mxu0 %v2954
        %5011 = vmatprep.subr.mxu0 %v2935
        %5012 = vmatpush2.msra.mxu0 %v2934
        %5013 = vmatprep.subr.mxu0 %v2915
        %5014 = vmatpush2.msra.mxu0 %v2914
        %5015 = vmatprep.subr.mxu0 %v2895
        %5016 = vmatpush2.msra.mxu0 %v2894
        %5017 = vmatprep.subr.mxu0 %v2875
        %5018 = vmatpush2.msra.mxu0 %v2874
        %5019 = vmatprep.subr.mxu0 %v2855
        %5020 = vmatpush2.msra.mxu0 %v2854
        %5021 = vmatprep.subr.mxu0 %v2835
        %5022 = vmatpush2.msra.mxu0 %v2834
        %5023 = vmatprep.subr.mxu0 %v2815
        %5024 = vmatpush2.msra.mxu0 %v2814
        %5025 = vmatprep.subr.mxu0 %v2795
        %5026 = vmatpush2.msra.mxu0 %v2794
        %5027 = vmatprep.subr.mxu0 %v2775
        %5028 = vmatpush2.msra.mxu0 %v2774
        %5029 = vmatprep.subr.mxu0 %v2755
        %5030 = vmatpush2.msra.mxu0 %v2754
        %5031 = vmatprep.subr.mxu0 %v2735
        %5032 = vmatpush2.msra.mxu0 %v2734
        %5033 = vmatprep.mubr.f32.mxu0 %v1765
        %5034 = vmatmul.mubr.f32.gmra.mxu0 %v1764
        %v5035 = vpop.f32.mrf.mxu0
        %v5036 = vadd.f32 %v4965, %v5035
        %v5037 = vpop.f32.mrf.mxu0
        %v5038 = vadd.f32 %v4967, %v5037
        %5039 = vdwg.mxu0
        %5040 = vmatprep.subr.mxu0 %v3355
        %5041 = vmatpush1.msra.mxu0 %v3354
        %5042 = vmatprep.subr.mxu0 %v3335
        %5043 = vmatpush1.msra.mxu0 %v3334
        %5044 = vmatprep.subr.mxu0 %v3315
        %5045 = vmatpush1.msra.mxu0 %v3314
        %5046 = vmatprep.subr.mxu0 %v3295
        %5047 = vmatpush1.msra.mxu0 %v3294
        %5048 = vmatprep.subr.mxu0 %v3275
        %5049 = vmatpush1.msra.mxu0 %v3274
        %5050 = vmatprep.subr.mxu0 %v3255
        %5051 = vmatpush1.msra.mxu0 %v3254
        %5052 = vmatprep.subr.mxu0 %v3235
        %5053 = vmatpush1.msra.mxu0 %v3234
        %5054 = vmatprep.subr.mxu0 %v3215
        %5055 = vmatpush1.msra.mxu0 %v3214
        %5056 = vmatprep.subr.mxu0 %v3195
        %5057 = vmatpush1.msra.mxu0 %v3194
        %5058 = vmatprep.subr.mxu0 %v3175
        %5059 = vmatpush1.msra.mxu0 %v3174
        %5060 = vmatprep.subr.mxu0 %v3155
        %5061 = vmatpush1.msra.mxu0 %v3154
        %5062 = vmatprep.subr.mxu0 %v3135
        %5063 = vmatpush1.msra.mxu0 %v3134
        %5064 = vmatprep.subr.mxu0 %v3115
        %5065 = vmatpush1.msra.mxu0 %v3114
        %5066 = vmatprep.subr.mxu0 %v3095
        %5067 = vmatpush1.msra.mxu0 %v3094
        %5068 = vmatprep.subr.mxu0 %v3075
        %5069 = vmatpush1.msra.mxu0 %v3074
        %5070 = vmatprep.subr.mxu0 %v3055
        %5071 = vmatpush1.msra.mxu0 %v3054
        %5072 = vmatprep.subr.mxu0 %v3675
        %5073 = vmatpush2.msra.mxu0 %v3674
        %5074 = vmatprep.subr.mxu0 %v3655
        %5075 = vmatpush2.msra.mxu0 %v3654
        %5076 = vmatprep.subr.mxu0 %v3635
        %5077 = vmatpush2.msra.mxu0 %v3634
        %5078 = vmatprep.subr.mxu0 %v3615
        %5079 = vmatpush2.msra.mxu0 %v3614
        %5080 = vmatprep.subr.mxu0 %v3595
        %5081 = vmatpush2.msra.mxu0 %v3594
        %5082 = vmatprep.subr.mxu0 %v3575
        %5083 = vmatpush2.msra.mxu0 %v3574
        %5084 = vmatprep.subr.mxu0 %v3555
        %5085 = vmatpush2.msra.mxu0 %v3554
        %5086 = vmatprep.subr.mxu0 %v3535
        %5087 = vmatpush2.msra.mxu0 %v3534
        %5088 = vmatprep.subr.mxu0 %v3515
        %5089 = vmatpush2.msra.mxu0 %v3514
        %5090 = vmatprep.subr.mxu0 %v3495
        %5091 = vmatpush2.msra.mxu0 %v3494
        %5092 = vmatprep.subr.mxu0 %v3475
        %5093 = vmatpush2.msra.mxu0 %v3474
        %5094 = vmatprep.subr.mxu0 %v3455
        %5095 = vmatpush2.msra.mxu0 %v3454
        %5096 = vmatprep.subr.mxu0 %v3435
        %5097 = vmatpush2.msra.mxu0 %v3434
        %5098 = vmatprep.subr.mxu0 %v3415
        %5099 = vmatpush2.msra.mxu0 %v3414
        %5100 = vmatprep.subr.mxu0 %v3395
        %5101 = vmatpush2.msra.mxu0 %v3394
        %5102 = vmatprep.subr.mxu0 %v3375
        %5103 = vmatpush2.msra.mxu0 %v3374
        %5104 = vmatprep.mubr.f32.mxu0 %v1767
        %5105 = vmatmul.mubr.f32.gmra.mxu0 %v1766
        %v5106 = vpop.f32.mrf.mxu0
        %v5107 = vadd.f32 %v5036, %v5106
        %v5108 = vpop.f32.mrf.mxu0
        %v5109 = vadd.f32 %v5038, %v5108
        %5110 = vdwg.mxu0
        %5111 = vmatprep.subr.mxu0 %v3995
        %5112 = vmatpush1.msra.mxu0 %v3994
        %5113 = vmatprep.subr.mxu0 %v3975
        %5114 = vmatpush1.msra.mxu0 %v3974
        %5115 = vmatprep.subr.mxu0 %v3955
        %5116 = vmatpush1.msra.mxu0 %v3954
        %5117 = vmatprep.subr.mxu0 %v3935
        %5118 = vmatpush1.msra.mxu0 %v3934
        %5119 = vmatprep.subr.mxu0 %v3915
        %5120 = vmatpush1.msra.mxu0 %v3914
        %5121 = vmatprep.subr.mxu0 %v3895
        %5122 = vmatpush1.msra.mxu0 %v3894
        %5123 = vmatprep.subr.mxu0 %v3875
        %5124 = vmatpush1.msra.mxu0 %v3874
        %5125 = vmatprep.subr.mxu0 %v3855
        %5126 = vmatpush1.msra.mxu0 %v3854
        %5127 = vmatprep.subr.mxu0 %v3835
        %5128 = vmatpush1.msra.mxu0 %v3834
        %5129 = vmatprep.subr.mxu0 %v3815
        %5130 = vmatpush1.msra.mxu0 %v3814
        %5131 = vmatprep.subr.mxu0 %v3795
        %5132 = vmatpush1.msra.mxu0 %v3794
        %5133 = vmatprep.subr.mxu0 %v3775
        %5134 = vmatpush1.msra.mxu0 %v3774
        %5135 = vmatprep.subr.mxu0 %v3755
        %5136 = vmatpush1.msra.mxu0 %v3754
        %5137 = vmatprep.subr.mxu0 %v3735
        %5138 = vmatpush1.msra.mxu0 %v3734
        %5139 = vmatprep.subr.mxu0 %v3715
        %5140 = vmatpush1.msra.mxu0 %v3714
        %5141 = vmatprep.subr.mxu0 %v3695
        %5142 = vmatpush1.msra.mxu0 %v3694
        %5143 = vmatprep.subr.mxu0 %v4315
        %5144 = vmatpush2.msra.mxu0 %v4314
        %5145 = vmatprep.subr.mxu0 %v4295
        %5146 = vmatpush2.msra.mxu0 %v4294
        %5147 = vmatprep.subr.mxu0 %v4275
        %5148 = vmatpush2.msra.mxu0 %v4274
        %5149 = vmatprep.subr.mxu0 %v4255
        %5150 = vmatpush2.msra.mxu0 %v4254
        %5151 = vmatprep.subr.mxu0 %v4235
        %5152 = vmatpush2.msra.mxu0 %v4234
        %5153 = vmatprep.subr.mxu0 %v4215
        %5154 = vmatpush2.msra.mxu0 %v4214
        %5155 = vmatprep.subr.mxu0 %v4195
        %5156 = vmatpush2.msra.mxu0 %v4194
        %5157 = vmatprep.subr.mxu0 %v4175
        %5158 = vmatpush2.msra.mxu0 %v4174
        %5159 = vmatprep.subr.mxu0 %v4155
        %5160 = vmatpush2.msra.mxu0 %v4154
        %5161 = vmatprep.subr.mxu0 %v4135
        %5162 = vmatpush2.msra.mxu0 %v4134
        %5163 = vmatprep.subr.mxu0 %v4115
        %5164 = vmatpush2.msra.mxu0 %v4114
        %5165 = vmatprep.subr.mxu0 %v4095
        %5166 = vmatpush2.msra.mxu0 %v4094
        %5167 = vmatprep.subr.mxu0 %v4075
        %5168 = vmatpush2.msra.mxu0 %v4074
        %5169 = vmatprep.subr.mxu0 %v4055
        %5170 = vmatpush2.msra.mxu0 %v4054
        %5171 = vmatprep.subr.mxu0 %v4035
        %5172 = vmatpush2.msra.mxu0 %v4034
        %5173 = vmatprep.subr.mxu0 %v4015
        %5174 = vmatpush2.msra.mxu0 %v4014
        %5175 = vmatprep.mubr.f32.mxu0 %v1769
        %5176 = vmatmul.mubr.f32.gmra.mxu0 %v1768
        %v5177 = vpop.f32.mrf.mxu0
        %v5178 = vadd.f32 %v5107, %v5177
        %v5179 = vpop.f32.mrf.mxu0
        %v5180 = vadd.f32 %v5109, %v5179
        %5181 = vdwg.mxu0
        %5182 = vmatprep.subr.mxu0 %v2077
        %5183 = vmatpush1.msra.mxu0 %v2076
        %5184 = vmatprep.subr.mxu0 %v2057
        %5185 = vmatpush1.msra.mxu0 %v2056
        %5186 = vmatprep.subr.mxu0 %v2037
        %5187 = vmatpush1.msra.mxu0 %v2036
        %5188 = vmatprep.subr.mxu0 %v2017
        %5189 = vmatpush1.msra.mxu0 %v2016
        %5190 = vmatprep.subr.mxu0 %v1997
        %5191 = vmatpush1.msra.mxu0 %v1996
        %5192 = vmatprep.subr.mxu0 %v1977
        %5193 = vmatpush1.msra.mxu0 %v1976
        %5194 = vmatprep.subr.mxu0 %v1957
        %5195 = vmatpush1.msra.mxu0 %v1956
        %5196 = vmatprep.subr.mxu0 %v1937
        %5197 = vmatpush1.msra.mxu0 %v1936
        %5198 = vmatprep.subr.mxu0 %v1917
        %5199 = vmatpush1.msra.mxu0 %v1916
        %5200 = vmatprep.subr.mxu0 %v1897
        %5201 = vmatpush1.msra.mxu0 %v1896
        %5202 = vmatprep.subr.mxu0 %v1877
        %5203 = vmatpush1.msra.mxu0 %v1876
        %5204 = vmatprep.subr.mxu0 %v1857
        %5205 = vmatpush1.msra.mxu0 %v1856
        %5206 = vmatprep.subr.mxu0 %v1837
        %5207 = vmatpush1.msra.mxu0 %v1836
        %5208 = vmatprep.subr.mxu0 %v1817
        %5209 = vmatpush1.msra.mxu0 %v1816
        %5210 = vmatprep.subr.mxu0 %v1797
        %5211 = vmatpush1.msra.mxu0 %v1796
        %5212 = vmatprep.subr.mxu0 %v1777
        %5213 = vmatpush1.msra.mxu0 %v1776
        %5214 = vmatprep.subr.mxu0 %v2397
        %5215 = vmatpush2.msra.mxu0 %v2396
        %5216 = vmatprep.subr.mxu0 %v2377
        %5217 = vmatpush2.msra.mxu0 %v2376
        %5218 = vmatprep.subr.mxu0 %v2357
        %5219 = vmatpush2.msra.mxu0 %v2356
        %5220 = vmatprep.subr.mxu0 %v2337
        %5221 = vmatpush2.msra.mxu0 %v2336
        %5222 = vmatprep.subr.mxu0 %v2317
        %5223 = vmatpush2.msra.mxu0 %v2316
        %5224 = vmatprep.subr.mxu0 %v2297
        %5225 = vmatpush2.msra.mxu0 %v2296
        %5226 = vmatprep.subr.mxu0 %v2277
        %5227 = vmatpush2.msra.mxu0 %v2276
        %5228 = vmatprep.subr.mxu0 %v2257
        %5229 = vmatpush2.msra.mxu0 %v2256
        %5230 = vmatprep.subr.mxu0 %v2237
        %5231 = vmatpush2.msra.mxu0 %v2236
        %5232 = vmatprep.subr.mxu0 %v2217
        %5233 = vmatpush2.msra.mxu0 %v2216
        %5234 = vmatprep.subr.mxu0 %v2197
        %5235 = vmatpush2.msra.mxu0 %v2196
        %5236 = vmatprep.subr.mxu0 %v2177
        %5237 = vmatpush2.msra.mxu0 %v2176
        %5238 = vmatprep.subr.mxu0 %v2157
        %5239 = vmatpush2.msra.mxu0 %v2156
        %5240 = vmatprep.subr.mxu0 %v2137
        %5241 = vmatpush2.msra.mxu0 %v2136
        %5242 = vmatprep.subr.mxu0 %v2117
        %5243 = vmatpush2.msra.mxu0 %v2116
        %5244 = vmatprep.subr.mxu0 %v2097
        %5245 = vmatpush2.msra.mxu0 %v2096
        %5246 = vmatprep.mubr.f32.mxu0 %v1763
        %5247 = vmatmul.mubr.f32.gmra.mxu0 %v1762
        %v5248 = vpop.f32.mrf.mxu0
        %v5249 = vadd.f32 0.0, %v5248
        %v5250 = vpop.f32.mrf.mxu0
        %v5251 = vadd.f32 0.0, %v5250
        %5252 = vdwg.mxu0
        %5253 = vmatprep.subr.mxu0 %v2717
        %5254 = vmatpush1.msra.mxu0 %v2716
        %5255 = vmatprep.subr.mxu0 %v2697
        %5256 = vmatpush1.msra.mxu0 %v2696
        %5257 = vmatprep.subr.mxu0 %v2677
        %5258 = vmatpush1.msra.mxu0 %v2676
        %5259 = vmatprep.subr.mxu0 %v2657
        %5260 = vmatpush1.msra.mxu0 %v2656
        %5261 = vmatprep.subr.mxu0 %v2637
        %5262 = vmatpush1.msra.mxu0 %v2636
        %5263 = vmatprep.subr.mxu0 %v2617
        %5264 = vmatpush1.msra.mxu0 %v2616
        %5265 = vmatprep.subr.mxu0 %v2597
        %5266 = vmatpush1.msra.mxu0 %v2596
        %5267 = vmatprep.subr.mxu0 %v2577
        %5268 = vmatpush1.msra.mxu0 %v2576
        %5269 = vmatprep.subr.mxu0 %v2557
        %5270 = vmatpush1.msra.mxu0 %v2556
        %5271 = vmatprep.subr.mxu0 %v2537
        %5272 = vmatpush1.msra.mxu0 %v2536
        %5273 = vmatprep.subr.mxu0 %v2517
        %5274 = vmatpush1.msra.mxu0 %v2516
        %5275 = vmatprep.subr.mxu0 %v2497
        %5276 = vmatpush1.msra.mxu0 %v2496
        %5277 = vmatprep.subr.mxu0 %v2477
        %5278 = vmatpush1.msra.mxu0 %v2476
        %5279 = vmatprep.subr.mxu0 %v2457
        %5280 = vmatpush1.msra.mxu0 %v2456
        %5281 = vmatprep.subr.mxu0 %v2437
        %5282 = vmatpush1.msra.mxu0 %v2436
        %5283 = vmatprep.subr.mxu0 %v2417
        %5284 = vmatpush1.msra.mxu0 %v2416
        %5285 = vmatprep.subr.mxu0 %v3037
        %5286 = vmatpush2.msra.mxu0 %v3036
        %5287 = vmatprep.subr.mxu0 %v3017
        %5288 = vmatpush2.msra.mxu0 %v3016
        %5289 = vmatprep.subr.mxu0 %v2997
        %5290 = vmatpush2.msra.mxu0 %v2996
        %5291 = vmatprep.subr.mxu0 %v2977
        %5292 = vmatpush2.msra.mxu0 %v2976
        %5293 = vmatprep.subr.mxu0 %v2957
        %5294 = vmatpush2.msra.mxu0 %v2956
        %5295 = vmatprep.subr.mxu0 %v2937
        %5296 = vmatpush2.msra.mxu0 %v2936
        %5297 = vmatprep.subr.mxu0 %v2917
        %5298 = vmatpush2.msra.mxu0 %v2916
        %5299 = vmatprep.subr.mxu0 %v2897
        %5300 = vmatpush2.msra.mxu0 %v2896
        %5301 = vmatprep.subr.mxu0 %v2877
        %5302 = vmatpush2.msra.mxu0 %v2876
        %5303 = vmatprep.subr.mxu0 %v2857
        %5304 = vmatpush2.msra.mxu0 %v2856
        %5305 = vmatprep.subr.mxu0 %v2837
        %5306 = vmatpush2.msra.mxu0 %v2836
        %5307 = vmatprep.subr.mxu0 %v2817
        %5308 = vmatpush2.msra.mxu0 %v2816
        %5309 = vmatprep.subr.mxu0 %v2797
        %5310 = vmatpush2.msra.mxu0 %v2796
        %5311 = vmatprep.subr.mxu0 %v2777
        %5312 = vmatpush2.msra.mxu0 %v2776
        %5313 = vmatprep.subr.mxu0 %v2757
        %5314 = vmatpush2.msra.mxu0 %v2756
        %5315 = vmatprep.subr.mxu0 %v2737
        %5316 = vmatpush2.msra.mxu0 %v2736
        %5317 = vmatprep.mubr.f32.mxu0 %v1765
        %5318 = vmatmul.mubr.f32.gmra.mxu0 %v1764
        %v5319 = vpop.f32.mrf.mxu0
        %v5320 = vadd.f32 %v5249, %v5319
        %v5321 = vpop.f32.mrf.mxu0
        %v5322 = vadd.f32 %v5251, %v5321
        %5323 = vdwg.mxu0
        %5324 = vmatprep.subr.mxu0 %v3357
        %5325 = vmatpush1.msra.mxu0 %v3356
        %5326 = vmatprep.subr.mxu0 %v3337
        %5327 = vmatpush1.msra.mxu0 %v3336
        %5328 = vmatprep.subr.mxu0 %v3317
        %5329 = vmatpush1.msra.mxu0 %v3316
        %5330 = vmatprep.subr.mxu0 %v3297
        %5331 = vmatpush1.msra.mxu0 %v3296
        %5332 = vmatprep.subr.mxu0 %v3277
        %5333 = vmatpush1.msra.mxu0 %v3276
        %5334 = vmatprep.subr.mxu0 %v3257
        %5335 = vmatpush1.msra.mxu0 %v3256
        %5336 = vmatprep.subr.mxu0 %v3237
        %5337 = vmatpush1.msra.mxu0 %v3236
        %5338 = vmatprep.subr.mxu0 %v3217
        %5339 = vmatpush1.msra.mxu0 %v3216
        %5340 = vmatprep.subr.mxu0 %v3197
        %5341 = vmatpush1.msra.mxu0 %v3196
        %5342 = vmatprep.subr.mxu0 %v3177
        %5343 = vmatpush1.msra.mxu0 %v3176
        %5344 = vmatprep.subr.mxu0 %v3157
        %5345 = vmatpush1.msra.mxu0 %v3156
        %5346 = vmatprep.subr.mxu0 %v3137
        %5347 = vmatpush1.msra.mxu0 %v3136
        %5348 = vmatprep.subr.mxu0 %v3117
        %5349 = vmatpush1.msra.mxu0 %v3116
        %5350 = vmatprep.subr.mxu0 %v3097
        %5351 = vmatpush1.msra.mxu0 %v3096
        %5352 = vmatprep.subr.mxu0 %v3077
        %5353 = vmatpush1.msra.mxu0 %v3076
        %5354 = vmatprep.subr.mxu0 %v3057
        %5355 = vmatpush1.msra.mxu0 %v3056
        %5356 = vmatprep.subr.mxu0 %v3677
        %5357 = vmatpush2.msra.mxu0 %v3676
        %5358 = vmatprep.subr.mxu0 %v3657
        %5359 = vmatpush2.msra.mxu0 %v3656
        %5360 = vmatprep.subr.mxu0 %v3637
        %5361 = vmatpush2.msra.mxu0 %v3636
        %5362 = vmatprep.subr.mxu0 %v3617
        %5363 = vmatpush2.msra.mxu0 %v3616
        %5364 = vmatprep.subr.mxu0 %v3597
        %5365 = vmatpush2.msra.mxu0 %v3596
        %5366 = vmatprep.subr.mxu0 %v3577
        %5367 = vmatpush2.msra.mxu0 %v3576
        %5368 = vmatprep.subr.mxu0 %v3557
        %5369 = vmatpush2.msra.mxu0 %v3556
        %5370 = vmatprep.subr.mxu0 %v3537
        %5371 = vmatpush2.msra.mxu0 %v3536
        %5372 = vmatprep.subr.mxu0 %v3517
        %5373 = vmatpush2.msra.mxu0 %v3516
        %5374 = vmatprep.subr.mxu0 %v3497
        %5375 = vmatpush2.msra.mxu0 %v3496
        %5376 = vmatprep.subr.mxu0 %v3477
        %5377 = vmatpush2.msra.mxu0 %v3476
        %5378 = vmatprep.subr.mxu0 %v3457
        %5379 = vmatpush2.msra.mxu0 %v3456
        %5380 = vmatprep.subr.mxu0 %v3437
        %5381 = vmatpush2.msra.mxu0 %v3436
        %5382 = vmatprep.subr.mxu0 %v3417
        %5383 = vmatpush2.msra.mxu0 %v3416
        %5384 = vmatprep.subr.mxu0 %v3397
        %5385 = vmatpush2.msra.mxu0 %v3396
        %5386 = vmatprep.subr.mxu0 %v3377
        %5387 = vmatpush2.msra.mxu0 %v3376
        %5388 = vmatprep.mubr.f32.mxu0 %v1767
        %5389 = vmatmul.mubr.f32.gmra.mxu0 %v1766
        %v5390 = vpop.f32.mrf.mxu0
        %v5391 = vadd.f32 %v5320, %v5390
        %v5392 = vpop.f32.mrf.mxu0
        %v5393 = vadd.f32 %v5322, %v5392
        %5394 = vdwg.mxu0
        %5395 = vmatprep.subr.mxu0 %v3997
        %5396 = vmatpush1.msra.mxu0 %v3996
        %5397 = vmatprep.subr.mxu0 %v3977
        %5398 = vmatpush1.msra.mxu0 %v3976
        %5399 = vmatprep.subr.mxu0 %v3957
        %5400 = vmatpush1.msra.mxu0 %v3956
        %5401 = vmatprep.subr.mxu0 %v3937
        %5402 = vmatpush1.msra.mxu0 %v3936
        %5403 = vmatprep.subr.mxu0 %v3917
        %5404 = vmatpush1.msra.mxu0 %v3916
        %5405 = vmatprep.subr.mxu0 %v3897
        %5406 = vmatpush1.msra.mxu0 %v3896
        %5407 = vmatprep.subr.mxu0 %v3877
        %5408 = vmatpush1.msra.mxu0 %v3876
        %5409 = vmatprep.subr.mxu0 %v3857
        %5410 = vmatpush1.msra.mxu0 %v3856
        %5411 = vmatprep.subr.mxu0 %v3837
        %5412 = vmatpush1.msra.mxu0 %v3836
        %5413 = vmatprep.subr.mxu0 %v3817
        %5414 = vmatpush1.msra.mxu0 %v3816
        %5415 = vmatprep.subr.mxu0 %v3797
        %5416 = vmatpush1.msra.mxu0 %v3796
        %5417 = vmatprep.subr.mxu0 %v3777
        %5418 = vmatpush1.msra.mxu0 %v3776
        %5419 = vmatprep.subr.mxu0 %v3757
        %5420 = vmatpush1.msra.mxu0 %v3756
        %5421 = vmatprep.subr.mxu0 %v3737
        %5422 = vmatpush1.msra.mxu0 %v3736
        %5423 = vmatprep.subr.mxu0 %v3717
        %5424 = vmatpush1.msra.mxu0 %v3716
        %5425 = vmatprep.subr.mxu0 %v3697
        %5426 = vmatpush1.msra.mxu0 %v3696
        %5427 = vmatprep.subr.mxu0 %v4317
        %5428 = vmatpush2.msra.mxu0 %v4316
        %5429 = vmatprep.subr.mxu0 %v4297
        %5430 = vmatpush2.msra.mxu0 %v4296
        %5431 = vmatprep.subr.mxu0 %v4277
        %5432 = vmatpush2.msra.mxu0 %v4276
        %5433 = vmatprep.subr.mxu0 %v4257
        %5434 = vmatpush2.msra.mxu0 %v4256
        %5435 = vmatprep.subr.mxu0 %v4237
        %5436 = vmatpush2.msra.mxu0 %v4236
        %5437 = vmatprep.subr.mxu0 %v4217
        %5438 = vmatpush2.msra.mxu0 %v4216
        %5439 = vmatprep.subr.mxu0 %v4197
        %5440 = vmatpush2.msra.mxu0 %v4196
        %5441 = vmatprep.subr.mxu0 %v4177
        %5442 = vmatpush2.msra.mxu0 %v4176
        %5443 = vmatprep.subr.mxu0 %v4157
        %5444 = vmatpush2.msra.mxu0 %v4156
        %5445 = vmatprep.subr.mxu0 %v4137
        %5446 = vmatpush2.msra.mxu0 %v4136
        %5447 = vmatprep.subr.mxu0 %v4117
        %5448 = vmatpush2.msra.mxu0 %v4116
        %5449 = vmatprep.subr.mxu0 %v4097
        %5450 = vmatpush2.msra.mxu0 %v4096
        %5451 = vmatprep.subr.mxu0 %v4077
        %5452 = vmatpush2.msra.mxu0 %v4076
        %5453 = vmatprep.subr.mxu0 %v4057
        %5454 = vmatpush2.msra.mxu0 %v4056
        %5455 = vmatprep.subr.mxu0 %v4037
        %5456 = vmatpush2.msra.mxu0 %v4036
        %5457 = vmatprep.subr.mxu0 %v4017
        %5458 = vmatpush2.msra.mxu0 %v4016
        %5459 = vmatprep.mubr.f32.mxu0 %v1769
        %5460 = vmatmul.mubr.f32.gmra.mxu0 %v1768
        %v5461 = vpop.f32.mrf.mxu0
        %v5462 = vadd.f32 %v5391, %v5461
        %v5463 = vpop.f32.mrf.mxu0
        %v5464 = vadd.f32 %v5393, %v5463
        %5465 = vdwg.mxu0
        %5466 = vmatprep.subr.mxu0 %v2079
        %5467 = vmatpush1.msra.mxu0 %v2078
        %5468 = vmatprep.subr.mxu0 %v2059
        %5469 = vmatpush1.msra.mxu0 %v2058
        %5470 = vmatprep.subr.mxu0 %v2039
        %5471 = vmatpush1.msra.mxu0 %v2038
        %5472 = vmatprep.subr.mxu0 %v2019
        %5473 = vmatpush1.msra.mxu0 %v2018
        %5474 = vmatprep.subr.mxu0 %v1999
        %5475 = vmatpush1.msra.mxu0 %v1998
        %5476 = vmatprep.subr.mxu0 %v1979
        %5477 = vmatpush1.msra.mxu0 %v1978
        %5478 = vmatprep.subr.mxu0 %v1959
        %5479 = vmatpush1.msra.mxu0 %v1958
        %5480 = vmatprep.subr.mxu0 %v1939
        %5481 = vmatpush1.msra.mxu0 %v1938
        %5482 = vmatprep.subr.mxu0 %v1919
        %5483 = vmatpush1.msra.mxu0 %v1918
        %5484 = vmatprep.subr.mxu0 %v1899
        %5485 = vmatpush1.msra.mxu0 %v1898
        %5486 = vmatprep.subr.mxu0 %v1879
        %5487 = vmatpush1.msra.mxu0 %v1878
        %5488 = vmatprep.subr.mxu0 %v1859
        %5489 = vmatpush1.msra.mxu0 %v1858
        %5490 = vmatprep.subr.mxu0 %v1839
        %5491 = vmatpush1.msra.mxu0 %v1838
        %5492 = vmatprep.subr.mxu0 %v1819
        %5493 = vmatpush1.msra.mxu0 %v1818
        %5494 = vmatprep.subr.mxu0 %v1799
        %5495 = vmatpush1.msra.mxu0 %v1798
        %5496 = vmatprep.subr.mxu0 %v1779
        %5497 = vmatpush1.msra.mxu0 %v1778
        %5498 = vmatprep.subr.mxu0 %v2399
        %5499 = vmatpush2.msra.mxu0 %v2398
        %5500 = vmatprep.subr.mxu0 %v2379
        %5501 = vmatpush2.msra.mxu0 %v2378
        %5502 = vmatprep.subr.mxu0 %v2359
        %5503 = vmatpush2.msra.mxu0 %v2358
        %5504 = vmatprep.subr.mxu0 %v2339
        %5505 = vmatpush2.msra.mxu0 %v2338
        %5506 = vmatprep.subr.mxu0 %v2319
        %5507 = vmatpush2.msra.mxu0 %v2318
        %5508 = vmatprep.subr.mxu0 %v2299
        %5509 = vmatpush2.msra.mxu0 %v2298
        %5510 = vmatprep.subr.mxu0 %v2279
        %5511 = vmatpush2.msra.mxu0 %v2278
        %5512 = vmatprep.subr.mxu0 %v2259
        %5513 = vmatpush2.msra.mxu0 %v2258
        %5514 = vmatprep.subr.mxu0 %v2239
        %5515 = vmatpush2.msra.mxu0 %v2238
        %5516 = vmatprep.subr.mxu0 %v2219
        %5517 = vmatpush2.msra.mxu0 %v2218
        %5518 = vmatprep.subr.mxu0 %v2199
        %5519 = vmatpush2.msra.mxu0 %v2198
        %5520 = vmatprep.subr.mxu0 %v2179
        %5521 = vmatpush2.msra.mxu0 %v2178
        %5522 = vmatprep.subr.mxu0 %v2159
        %5523 = vmatpush2.msra.mxu0 %v2158
        %5524 = vmatprep.subr.mxu0 %v2139
        %5525 = vmatpush2.msra.mxu0 %v2138
        %5526 = vmatprep.subr.mxu0 %v2119
        %5527 = vmatpush2.msra.mxu0 %v2118
        %5528 = vmatprep.subr.mxu0 %v2099
        %5529 = vmatpush2.msra.mxu0 %v2098
        %5530 = vmatprep.mubr.f32.mxu0 %v1763
        %5531 = vmatmul.mubr.f32.gmra.mxu0 %v1762
        %v5532 = vpop.f32.mrf.mxu0
        %v5533 = vadd.f32 0.0, %v5532
        %v5534 = vpop.f32.mrf.mxu0
        %v5535 = vadd.f32 0.0, %v5534
        %5536 = vdwg.mxu0
        %5537 = vmatprep.subr.mxu0 %v2719
        %5538 = vmatpush1.msra.mxu0 %v2718
        %5539 = vmatprep.subr.mxu0 %v2699
        %5540 = vmatpush1.msra.mxu0 %v2698
        %5541 = vmatprep.subr.mxu0 %v2679
        %5542 = vmatpush1.msra.mxu0 %v2678
        %5543 = vmatprep.subr.mxu0 %v2659
        %5544 = vmatpush1.msra.mxu0 %v2658
        %5545 = vmatprep.subr.mxu0 %v2639
        %5546 = vmatpush1.msra.mxu0 %v2638
        %5547 = vmatprep.subr.mxu0 %v2619
        %5548 = vmatpush1.msra.mxu0 %v2618
        %5549 = vmatprep.subr.mxu0 %v2599
        %5550 = vmatpush1.msra.mxu0 %v2598
        %5551 = vmatprep.subr.mxu0 %v2579
        %5552 = vmatpush1.msra.mxu0 %v2578
        %5553 = vmatprep.subr.mxu0 %v2559
        %5554 = vmatpush1.msra.mxu0 %v2558
        %5555 = vmatprep.subr.mxu0 %v2539
        %5556 = vmatpush1.msra.mxu0 %v2538
        %5557 = vmatprep.subr.mxu0 %v2519
        %5558 = vmatpush1.msra.mxu0 %v2518
        %5559 = vmatprep.subr.mxu0 %v2499
        %5560 = vmatpush1.msra.mxu0 %v2498
        %5561 = vmatprep.subr.mxu0 %v2479
        %5562 = vmatpush1.msra.mxu0 %v2478
        %5563 = vmatprep.subr.mxu0 %v2459
        %5564 = vmatpush1.msra.mxu0 %v2458
        %5565 = vmatprep.subr.mxu0 %v2439
        %5566 = vmatpush1.msra.mxu0 %v2438
        %5567 = vmatprep.subr.mxu0 %v2419
        %5568 = vmatpush1.msra.mxu0 %v2418
        %5569 = vmatprep.subr.mxu0 %v3039
        %5570 = vmatpush2.msra.mxu0 %v3038
        %5571 = vmatprep.subr.mxu0 %v3019
        %5572 = vmatpush2.msra.mxu0 %v3018
        %5573 = vmatprep.subr.mxu0 %v2999
        %5574 = vmatpush2.msra.mxu0 %v2998
        %5575 = vmatprep.subr.mxu0 %v2979
        %5576 = vmatpush2.msra.mxu0 %v2978
        %5577 = vmatprep.subr.mxu0 %v2959
        %5578 = vmatpush2.msra.mxu0 %v2958
        %5579 = vmatprep.subr.mxu0 %v2939
        %5580 = vmatpush2.msra.mxu0 %v2938
        %5581 = vmatprep.subr.mxu0 %v2919
        %5582 = vmatpush2.msra.mxu0 %v2918
        %5583 = vmatprep.subr.mxu0 %v2899
        %5584 = vmatpush2.msra.mxu0 %v2898
        %5585 = vmatprep.subr.mxu0 %v2879
        %5586 = vmatpush2.msra.mxu0 %v2878
        %5587 = vmatprep.subr.mxu0 %v2859
        %5588 = vmatpush2.msra.mxu0 %v2858
        %5589 = vmatprep.subr.mxu0 %v2839
        %5590 = vmatpush2.msra.mxu0 %v2838
        %5591 = vmatprep.subr.mxu0 %v2819
        %5592 = vmatpush2.msra.mxu0 %v2818
        %5593 = vmatprep.subr.mxu0 %v2799
        %5594 = vmatpush2.msra.mxu0 %v2798
        %5595 = vmatprep.subr.mxu0 %v2779
        %5596 = vmatpush2.msra.mxu0 %v2778
        %5597 = vmatprep.subr.mxu0 %v2759
        %5598 = vmatpush2.msra.mxu0 %v2758
        %5599 = vmatprep.subr.mxu0 %v2739
        %5600 = vmatpush2.msra.mxu0 %v2738
        %5601 = vmatprep.mubr.f32.mxu0 %v1765
        %5602 = vmatmul.mubr.f32.gmra.mxu0 %v1764
        %v5603 = vpop.f32.mrf.mxu0
        %v5604 = vadd.f32 %v5533, %v5603
        %v5605 = vpop.f32.mrf.mxu0
        %v5606 = vadd.f32 %v5535, %v5605
        %5607 = vdwg.mxu0
        %5608 = vmatprep.subr.mxu0 %v3359
        %5609 = vmatpush1.msra.mxu0 %v3358
        %5610 = vmatprep.subr.mxu0 %v3339
        %5611 = vmatpush1.msra.mxu0 %v3338
        %5612 = vmatprep.subr.mxu0 %v3319
        %5613 = vmatpush1.msra.mxu0 %v3318
        %5614 = vmatprep.subr.mxu0 %v3299
        %5615 = vmatpush1.msra.mxu0 %v3298
        %5616 = vmatprep.subr.mxu0 %v3279
        %5617 = vmatpush1.msra.mxu0 %v3278
        %5618 = vmatprep.subr.mxu0 %v3259
        %5619 = vmatpush1.msra.mxu0 %v3258
        %5620 = vmatprep.subr.mxu0 %v3239
        %5621 = vmatpush1.msra.mxu0 %v3238
        %5622 = vmatprep.subr.mxu0 %v3219
        %5623 = vmatpush1.msra.mxu0 %v3218
        %5624 = vmatprep.subr.mxu0 %v3199
        %5625 = vmatpush1.msra.mxu0 %v3198
        %5626 = vmatprep.subr.mxu0 %v3179
        %5627 = vmatpush1.msra.mxu0 %v3178
        %5628 = vmatprep.subr.mxu0 %v3159
        %5629 = vmatpush1.msra.mxu0 %v3158
        %5630 = vmatprep.subr.mxu0 %v3139
        %5631 = vmatpush1.msra.mxu0 %v3138
        %5632 = vmatprep.subr.mxu0 %v3119
        %5633 = vmatpush1.msra.mxu0 %v3118
        %5634 = vmatprep.subr.mxu0 %v3099
        %5635 = vmatpush1.msra.mxu0 %v3098
        %5636 = vmatprep.subr.mxu0 %v3079
        %5637 = vmatpush1.msra.mxu0 %v3078
        %5638 = vmatprep.subr.mxu0 %v3059
        %5639 = vmatpush1.msra.mxu0 %v3058
        %5640 = vmatprep.subr.mxu0 %v3679
        %5641 = vmatpush2.msra.mxu0 %v3678
        %5642 = vmatprep.subr.mxu0 %v3659
        %5643 = vmatpush2.msra.mxu0 %v3658
        %5644 = vmatprep.subr.mxu0 %v3639
        %5645 = vmatpush2.msra.mxu0 %v3638
        %5646 = vmatprep.subr.mxu0 %v3619
        %5647 = vmatpush2.msra.mxu0 %v3618
        %5648 = vmatprep.subr.mxu0 %v3599
        %5649 = vmatpush2.msra.mxu0 %v3598
        %5650 = vmatprep.subr.mxu0 %v3579
        %5651 = vmatpush2.msra.mxu0 %v3578
        %5652 = vmatprep.subr.mxu0 %v3559
        %5653 = vmatpush2.msra.mxu0 %v3558
        %5654 = vmatprep.subr.mxu0 %v3539
        %5655 = vmatpush2.msra.mxu0 %v3538
        %5656 = vmatprep.subr.mxu0 %v3519
        %5657 = vmatpush2.msra.mxu0 %v3518
        %5658 = vmatprep.subr.mxu0 %v3499
        %5659 = vmatpush2.msra.mxu0 %v3498
        %5660 = vmatprep.subr.mxu0 %v3479
        %5661 = vmatpush2.msra.mxu0 %v3478
        %5662 = vmatprep.subr.mxu0 %v3459
        %5663 = vmatpush2.msra.mxu0 %v3458
        %5664 = vmatprep.subr.mxu0 %v3439
        %5665 = vmatpush2.msra.mxu0 %v3438
        %5666 = vmatprep.subr.mxu0 %v3419
        %5667 = vmatpush2.msra.mxu0 %v3418
        %5668 = vmatprep.subr.mxu0 %v3399
        %5669 = vmatpush2.msra.mxu0 %v3398
        %5670 = vmatprep.subr.mxu0 %v3379
        %5671 = vmatpush2.msra.mxu0 %v3378
        %5672 = vmatprep.mubr.f32.mxu0 %v1767
        %5673 = vmatmul.mubr.f32.gmra.mxu0 %v1766
        %v5674 = vpop.f32.mrf.mxu0
        %v5675 = vadd.f32 %v5604, %v5674
        %v5676 = vpop.f32.mrf.mxu0
        %v5677 = vadd.f32 %v5606, %v5676
        %5678 = vdwg.mxu0
        %5679 = vmatprep.subr.mxu0 %v3999
        %5680 = vmatpush1.msra.mxu0 %v3998
        %5681 = vmatprep.subr.mxu0 %v3979
        %5682 = vmatpush1.msra.mxu0 %v3978
        %5683 = vmatprep.subr.mxu0 %v3959
        %5684 = vmatpush1.msra.mxu0 %v3958
        %5685 = vmatprep.subr.mxu0 %v3939
        %5686 = vmatpush1.msra.mxu0 %v3938
        %5687 = vmatprep.subr.mxu0 %v3919
        %5688 = vmatpush1.msra.mxu0 %v3918
        %5689 = vmatprep.subr.mxu0 %v3899
        %5690 = vmatpush1.msra.mxu0 %v3898
        %5691 = vmatprep.subr.mxu0 %v3879
        %5692 = vmatpush1.msra.mxu0 %v3878
        %5693 = vmatprep.subr.mxu0 %v3859
        %5694 = vmatpush1.msra.mxu0 %v3858
        %5695 = vmatprep.subr.mxu0 %v3839
        %5696 = vmatpush1.msra.mxu0 %v3838
        %5697 = vmatprep.subr.mxu0 %v3819
        %5698 = vmatpush1.msra.mxu0 %v3818
        %5699 = vmatprep.subr.mxu0 %v3799
        %5700 = vmatpush1.msra.mxu0 %v3798
        %5701 = vmatprep.subr.mxu0 %v3779
        %5702 = vmatpush1.msra.mxu0 %v3778
        %5703 = vmatprep.subr.mxu0 %v3759
        %5704 = vmatpush1.msra.mxu0 %v3758
        %5705 = vmatprep.subr.mxu0 %v3739
        %5706 = vmatpush1.msra.mxu0 %v3738
        %5707 = vmatprep.subr.mxu0 %v3719
        %5708 = vmatpush1.msra.mxu0 %v3718
        %5709 = vmatprep.subr.mxu0 %v3699
        %5710 = vmatpush1.msra.mxu0 %v3698
        %5711 = vmatprep.subr.mxu0 %v4319
        %5712 = vmatpush2.msra.mxu0 %v4318
        %5713 = vmatprep.subr.mxu0 %v4299
        %5714 = vmatpush2.msra.mxu0 %v4298
        %5715 = vmatprep.subr.mxu0 %v4279
        %5716 = vmatpush2.msra.mxu0 %v4278
        %5717 = vmatprep.subr.mxu0 %v4259
        %5718 = vmatpush2.msra.mxu0 %v4258
        %5719 = vmatprep.subr.mxu0 %v4239
        %5720 = vmatpush2.msra.mxu0 %v4238
        %5721 = vmatprep.subr.mxu0 %v4219
        %5722 = vmatpush2.msra.mxu0 %v4218
        %5723 = vmatprep.subr.mxu0 %v4199
        %5724 = vmatpush2.msra.mxu0 %v4198
        %5725 = vmatprep.subr.mxu0 %v4179
        %5726 = vmatpush2.msra.mxu0 %v4178
        %5727 = vmatprep.subr.mxu0 %v4159
        %5728 = vmatpush2.msra.mxu0 %v4158
        %5729 = vmatprep.subr.mxu0 %v4139
        %5730 = vmatpush2.msra.mxu0 %v4138
        %5731 = vmatprep.subr.mxu0 %v4119
        %5732 = vmatpush2.msra.mxu0 %v4118
        %5733 = vmatprep.subr.mxu0 %v4099
        %5734 = vmatpush2.msra.mxu0 %v4098
        %5735 = vmatprep.subr.mxu0 %v4079
        %5736 = vmatpush2.msra.mxu0 %v4078
        %5737 = vmatprep.subr.mxu0 %v4059
        %5738 = vmatpush2.msra.mxu0 %v4058
        %5739 = vmatprep.subr.mxu0 %v4039
        %5740 = vmatpush2.msra.mxu0 %v4038
        %5741 = vmatprep.subr.mxu0 %v4019
        %5742 = vmatpush2.msra.mxu0 %v4018
        %5743 = vmatprep.mubr.f32.mxu0 %v1769
        %5744 = vmatmul.mubr.f32.gmra.mxu0 %v1768
        %v5745 = vpop.f32.mrf.mxu0
        %v5746 = vadd.f32 %v5675, %v5745
        %v5747 = vpop.f32.mrf.mxu0
        %v5748 = vadd.f32 %v5677, %v5747
        %5749 = vdwg.mxu0
        %5750 = vmatprep.subr.mxu0 %v2081
        %5751 = vmatpush1.msra.mxu0 %v2080
        %5752 = vmatprep.subr.mxu0 %v2061
        %5753 = vmatpush1.msra.mxu0 %v2060
        %5754 = vmatprep.subr.mxu0 %v2041
        %5755 = vmatpush1.msra.mxu0 %v2040
        %5756 = vmatprep.subr.mxu0 %v2021
        %5757 = vmatpush1.msra.mxu0 %v2020
        %5758 = vmatprep.subr.mxu0 %v2001
        %5759 = vmatpush1.msra.mxu0 %v2000
        %5760 = vmatprep.subr.mxu0 %v1981
        %5761 = vmatpush1.msra.mxu0 %v1980
        %5762 = vmatprep.subr.mxu0 %v1961
        %5763 = vmatpush1.msra.mxu0 %v1960
        %5764 = vmatprep.subr.mxu0 %v1941
        %5765 = vmatpush1.msra.mxu0 %v1940
        %5766 = vmatprep.subr.mxu0 %v1921
        %5767 = vmatpush1.msra.mxu0 %v1920
        %5768 = vmatprep.subr.mxu0 %v1901
        %5769 = vmatpush1.msra.mxu0 %v1900
        %5770 = vmatprep.subr.mxu0 %v1881
        %5771 = vmatpush1.msra.mxu0 %v1880
        %5772 = vmatprep.subr.mxu0 %v1861
        %5773 = vmatpush1.msra.mxu0 %v1860
        %5774 = vmatprep.subr.mxu0 %v1841
        %5775 = vmatpush1.msra.mxu0 %v1840
        %5776 = vmatprep.subr.mxu0 %v1821
        %5777 = vmatpush1.msra.mxu0 %v1820
        %5778 = vmatprep.subr.mxu0 %v1801
        %5779 = vmatpush1.msra.mxu0 %v1800
        %5780 = vmatprep.subr.mxu0 %v1781
        %5781 = vmatpush1.msra.mxu0 %v1780
        %5782 = vmatprep.subr.mxu0 %v2401
        %5783 = vmatpush2.msra.mxu0 %v2400
        %5784 = vmatprep.subr.mxu0 %v2381
        %5785 = vmatpush2.msra.mxu0 %v2380
        %5786 = vmatprep.subr.mxu0 %v2361
        %5787 = vmatpush2.msra.mxu0 %v2360
        %5788 = vmatprep.subr.mxu0 %v2341
        %5789 = vmatpush2.msra.mxu0 %v2340
        %5790 = vmatprep.subr.mxu0 %v2321
        %5791 = vmatpush2.msra.mxu0 %v2320
        %5792 = vmatprep.subr.mxu0 %v2301
        %5793 = vmatpush2.msra.mxu0 %v2300
        %5794 = vmatprep.subr.mxu0 %v2281
        %5795 = vmatpush2.msra.mxu0 %v2280
        %5796 = vmatprep.subr.mxu0 %v2261
        %5797 = vmatpush2.msra.mxu0 %v2260
        %5798 = vmatprep.subr.mxu0 %v2241
        %5799 = vmatpush2.msra.mxu0 %v2240
        %5800 = vmatprep.subr.mxu0 %v2221
        %5801 = vmatpush2.msra.mxu0 %v2220
        %5802 = vmatprep.subr.mxu0 %v2201
        %5803 = vmatpush2.msra.mxu0 %v2200
        %5804 = vmatprep.subr.mxu0 %v2181
        %5805 = vmatpush2.msra.mxu0 %v2180
        %5806 = vmatprep.subr.mxu0 %v2161
        %5807 = vmatpush2.msra.mxu0 %v2160
        %5808 = vmatprep.subr.mxu0 %v2141
        %5809 = vmatpush2.msra.mxu0 %v2140
        %5810 = vmatprep.subr.mxu0 %v2121
        %5811 = vmatpush2.msra.mxu0 %v2120
        %5812 = vmatprep.subr.mxu0 %v2101
        %5813 = vmatpush2.msra.mxu0 %v2100
        %5814 = vmatprep.mubr.f32.mxu0 %v1763
        %5815 = vmatmul.mubr.f32.gmra.mxu0 %v1762
        %v5816 = vpop.f32.mrf.mxu0
        %v5817 = vadd.f32 0.0, %v5816
        %v5818 = vpop.f32.mrf.mxu0
        %v5819 = vadd.f32 0.0, %v5818
        %5820 = vdwg.mxu0
        %5821 = vmatprep.subr.mxu0 %v2721
        %5822 = vmatpush1.msra.mxu0 %v2720
        %5823 = vmatprep.subr.mxu0 %v2701
        %5824 = vmatpush1.msra.mxu0 %v2700
        %5825 = vmatprep.subr.mxu0 %v2681
        %5826 = vmatpush1.msra.mxu0 %v2680
        %5827 = vmatprep.subr.mxu0 %v2661
        %5828 = vmatpush1.msra.mxu0 %v2660
        %5829 = vmatprep.subr.mxu0 %v2641
        %5830 = vmatpush1.msra.mxu0 %v2640
        %5831 = vmatprep.subr.mxu0 %v2621
        %5832 = vmatpush1.msra.mxu0 %v2620
        %5833 = vmatprep.subr.mxu0 %v2601
        %5834 = vmatpush1.msra.mxu0 %v2600
        %5835 = vmatprep.subr.mxu0 %v2581
        %5836 = vmatpush1.msra.mxu0 %v2580
        %5837 = vmatprep.subr.mxu0 %v2561
        %5838 = vmatpush1.msra.mxu0 %v2560
        %5839 = vmatprep.subr.mxu0 %v2541
        %5840 = vmatpush1.msra.mxu0 %v2540
        %5841 = vmatprep.subr.mxu0 %v2521
        %5842 = vmatpush1.msra.mxu0 %v2520
        %5843 = vmatprep.subr.mxu0 %v2501
        %5844 = vmatpush1.msra.mxu0 %v2500
        %5845 = vmatprep.subr.mxu0 %v2481
        %5846 = vmatpush1.msra.mxu0 %v2480
        %5847 = vmatprep.subr.mxu0 %v2461
        %5848 = vmatpush1.msra.mxu0 %v2460
        %5849 = vmatprep.subr.mxu0 %v2441
        %5850 = vmatpush1.msra.mxu0 %v2440
        %5851 = vmatprep.subr.mxu0 %v2421
        %5852 = vmatpush1.msra.mxu0 %v2420
        %5853 = vmatprep.subr.mxu0 %v3041
        %5854 = vmatpush2.msra.mxu0 %v3040
        %5855 = vmatprep.subr.mxu0 %v3021
        %5856 = vmatpush2.msra.mxu0 %v3020
        %5857 = vmatprep.subr.mxu0 %v3001
        %5858 = vmatpush2.msra.mxu0 %v3000
        %5859 = vmatprep.subr.mxu0 %v2981
        %5860 = vmatpush2.msra.mxu0 %v2980
        %5861 = vmatprep.subr.mxu0 %v2961
        %5862 = vmatpush2.msra.mxu0 %v2960
        %5863 = vmatprep.subr.mxu0 %v2941
        %5864 = vmatpush2.msra.mxu0 %v2940
        %5865 = vmatprep.subr.mxu0 %v2921
        %5866 = vmatpush2.msra.mxu0 %v2920
        %5867 = vmatprep.subr.mxu0 %v2901
        %5868 = vmatpush2.msra.mxu0 %v2900
        %5869 = vmatprep.subr.mxu0 %v2881
        %5870 = vmatpush2.msra.mxu0 %v2880
        %5871 = vmatprep.subr.mxu0 %v2861
        %5872 = vmatpush2.msra.mxu0 %v2860
        %5873 = vmatprep.subr.mxu0 %v2841
        %5874 = vmatpush2.msra.mxu0 %v2840
        %5875 = vmatprep.subr.mxu0 %v2821
        %5876 = vmatpush2.msra.mxu0 %v2820
        %5877 = vmatprep.subr.mxu0 %v2801
        %5878 = vmatpush2.msra.mxu0 %v2800
        %5879 = vmatprep.subr.mxu0 %v2781
        %5880 = vmatpush2.msra.mxu0 %v2780
        %5881 = vmatprep.subr.mxu0 %v2761
        %5882 = vmatpush2.msra.mxu0 %v2760
        %5883 = vmatprep.subr.mxu0 %v2741
        %5884 = vmatpush2.msra.mxu0 %v2740
        %5885 = vmatprep.mubr.f32.mxu0 %v1765
        %5886 = vmatmul.mubr.f32.gmra.mxu0 %v1764
        %v5887 = vpop.f32.mrf.mxu0
        %v5888 = vadd.f32 %v5817, %v5887
        %v5889 = vpop.f32.mrf.mxu0
        %v5890 = vadd.f32 %v5819, %v5889
        %5891 = vdwg.mxu0
        %5892 = vmatprep.subr.mxu0 %v3361
        %5893 = vmatpush1.msra.mxu0 %v3360
        %5894 = vmatprep.subr.mxu0 %v3341
        %5895 = vmatpush1.msra.mxu0 %v3340
        %5896 = vmatprep.subr.mxu0 %v3321
        %5897 = vmatpush1.msra.mxu0 %v3320
        %5898 = vmatprep.subr.mxu0 %v3301
        %5899 = vmatpush1.msra.mxu0 %v3300
        %5900 = vmatprep.subr.mxu0 %v3281
        %5901 = vmatpush1.msra.mxu0 %v3280
        %5902 = vmatprep.subr.mxu0 %v3261
        %5903 = vmatpush1.msra.mxu0 %v3260
        %5904 = vmatprep.subr.mxu0 %v3241
        %5905 = vmatpush1.msra.mxu0 %v3240
        %5906 = vmatprep.subr.mxu0 %v3221
        %5907 = vmatpush1.msra.mxu0 %v3220
        %5908 = vmatprep.subr.mxu0 %v3201
        %5909 = vmatpush1.msra.mxu0 %v3200
        %5910 = vmatprep.subr.mxu0 %v3181
        %5911 = vmatpush1.msra.mxu0 %v3180
        %5912 = vmatprep.subr.mxu0 %v3161
        %5913 = vmatpush1.msra.mxu0 %v3160
        %5914 = vmatprep.subr.mxu0 %v3141
        %5915 = vmatpush1.msra.mxu0 %v3140
        %5916 = vmatprep.subr.mxu0 %v3121
        %5917 = vmatpush1.msra.mxu0 %v3120
        %5918 = vmatprep.subr.mxu0 %v3101
        %5919 = vmatpush1.msra.mxu0 %v3100
        %5920 = vmatprep.subr.mxu0 %v3081
        %5921 = vmatpush1.msra.mxu0 %v3080
        %5922 = vmatprep.subr.mxu0 %v3061
        %5923 = vmatpush1.msra.mxu0 %v3060
        %5924 = vmatprep.subr.mxu0 %v3681
        %5925 = vmatpush2.msra.mxu0 %v3680
        %5926 = vmatprep.subr.mxu0 %v3661
        %5927 = vmatpush2.msra.mxu0 %v3660
        %5928 = vmatprep.subr.mxu0 %v3641
        %5929 = vmatpush2.msra.mxu0 %v3640
        %5930 = vmatprep.subr.mxu0 %v3621
        %5931 = vmatpush2.msra.mxu0 %v3620
        %5932 = vmatprep.subr.mxu0 %v3601
        %5933 = vmatpush2.msra.mxu0 %v3600
        %5934 = vmatprep.subr.mxu0 %v3581
        %5935 = vmatpush2.msra.mxu0 %v3580
        %5936 = vmatprep.subr.mxu0 %v3561
        %5937 = vmatpush2.msra.mxu0 %v3560
        %5938 = vmatprep.subr.mxu0 %v3541
        %5939 = vmatpush2.msra.mxu0 %v3540
        %5940 = vmatprep.subr.mxu0 %v3521
        %5941 = vmatpush2.msra.mxu0 %v3520
        %5942 = vmatprep.subr.mxu0 %v3501
        %5943 = vmatpush2.msra.mxu0 %v3500
        %5944 = vmatprep.subr.mxu0 %v3481
        %5945 = vmatpush2.msra.mxu0 %v3480
        %5946 = vmatprep.subr.mxu0 %v3461
        %5947 = vmatpush2.msra.mxu0 %v3460
        %5948 = vmatprep.subr.mxu0 %v3441
        %5949 = vmatpush2.msra.mxu0 %v3440
        %5950 = vmatprep.subr.mxu0 %v3421
        %5951 = vmatpush2.msra.mxu0 %v3420
        %5952 = vmatprep.subr.mxu0 %v3401
        %5953 = vmatpush2.msra.mxu0 %v3400
        %5954 = vmatprep.subr.mxu0 %v3381
        %5955 = vmatpush2.msra.mxu0 %v3380
        %5956 = vmatprep.mubr.f32.mxu0 %v1767
        %5957 = vmatmul.mubr.f32.gmra.mxu0 %v1766
        %v5958 = vpop.f32.mrf.mxu0
        %v5959 = vadd.f32 %v5888, %v5958
        %v5960 = vpop.f32.mrf.mxu0
        %v5961 = vadd.f32 %v5890, %v5960
        %5962 = vdwg.mxu0
        %5963 = vmatprep.subr.mxu0 %v4001
        %5964 = vmatpush1.msra.mxu0 %v4000
        %5965 = vmatprep.subr.mxu0 %v3981
        %5966 = vmatpush1.msra.mxu0 %v3980
        %5967 = vmatprep.subr.mxu0 %v3961
        %5968 = vmatpush1.msra.mxu0 %v3960
        %5969 = vmatprep.subr.mxu0 %v3941
        %5970 = vmatpush1.msra.mxu0 %v3940
        %5971 = vmatprep.subr.mxu0 %v3921
        %5972 = vmatpush1.msra.mxu0 %v3920
        %5973 = vmatprep.subr.mxu0 %v3901
        %5974 = vmatpush1.msra.mxu0 %v3900
        %5975 = vmatprep.subr.mxu0 %v3881
        %5976 = vmatpush1.msra.mxu0 %v3880
        %5977 = vmatprep.subr.mxu0 %v3861
        %5978 = vmatpush1.msra.mxu0 %v3860
        %5979 = vmatprep.subr.mxu0 %v3841
        %5980 = vmatpush1.msra.mxu0 %v3840
        %5981 = vmatprep.subr.mxu0 %v3821
        %5982 = vmatpush1.msra.mxu0 %v3820
        %5983 = vmatprep.subr.mxu0 %v3801
        %5984 = vmatpush1.msra.mxu0 %v3800
        %5985 = vmatprep.subr.mxu0 %v3781
        %5986 = vmatpush1.msra.mxu0 %v3780
        %5987 = vmatprep.subr.mxu0 %v3761
        %5988 = vmatpush1.msra.mxu0 %v3760
        %5989 = vmatprep.subr.mxu0 %v3741
        %5990 = vmatpush1.msra.mxu0 %v3740
        %5991 = vmatprep.subr.mxu0 %v3721
        %5992 = vmatpush1.msra.mxu0 %v3720
        %5993 = vmatprep.subr.mxu0 %v3701
        %5994 = vmatpush1.msra.mxu0 %v3700
        %5995 = vmatprep.subr.mxu0 %v4321
        %5996 = vmatpush2.msra.mxu0 %v4320
        %5997 = vmatprep.subr.mxu0 %v4301
        %5998 = vmatpush2.msra.mxu0 %v4300
        %5999 = vmatprep.subr.mxu0 %v4281
        %6000 = vmatpush2.msra.mxu0 %v4280
        %6001 = vmatprep.subr.mxu0 %v4261
        %6002 = vmatpush2.msra.mxu0 %v4260
        %6003 = vmatprep.subr.mxu0 %v4241
        %6004 = vmatpush2.msra.mxu0 %v4240
        %6005 = vmatprep.subr.mxu0 %v4221
        %6006 = vmatpush2.msra.mxu0 %v4220
        %6007 = vmatprep.subr.mxu0 %v4201
        %6008 = vmatpush2.msra.mxu0 %v4200
        %6009 = vmatprep.subr.mxu0 %v4181
        %6010 = vmatpush2.msra.mxu0 %v4180
        %6011 = vmatprep.subr.mxu0 %v4161
        %6012 = vmatpush2.msra.mxu0 %v4160
        %6013 = vmatprep.subr.mxu0 %v4141
        %6014 = vmatpush2.msra.mxu0 %v4140
        %6015 = vmatprep.subr.mxu0 %v4121
        %6016 = vmatpush2.msra.mxu0 %v4120
        %6017 = vmatprep.subr.mxu0 %v4101
        %6018 = vmatpush2.msra.mxu0 %v4100
        %6019 = vmatprep.subr.mxu0 %v4081
        %6020 = vmatpush2.msra.mxu0 %v4080
        %6021 = vmatprep.subr.mxu0 %v4061
        %6022 = vmatpush2.msra.mxu0 %v4060
        %6023 = vmatprep.subr.mxu0 %v4041
        %6024 = vmatpush2.msra.mxu0 %v4040
        %6025 = vmatprep.subr.mxu0 %v4021
        %6026 = vmatpush2.msra.mxu0 %v4020
        %6027 = vmatprep.mubr.f32.mxu0 %v1769
        %6028 = vmatmul.mubr.f32.gmra.mxu0 %v1768
        %v6029 = vpop.f32.mrf.mxu0
        %v6030 = vadd.f32 %v5959, %v6029
        %v6031 = vpop.f32.mrf.mxu0
        %v6032 = vadd.f32 %v5961, %v6031
        %6033 = vdwg.mxu0
        %6034 = vmatprep.subr.mxu0 %v2083
        %6035 = vmatpush1.msra.mxu0 %v2082
        %6036 = vmatprep.subr.mxu0 %v2063
        %6037 = vmatpush1.msra.mxu0 %v2062
        %6038 = vmatprep.subr.mxu0 %v2043
        %6039 = vmatpush1.msra.mxu0 %v2042
        %6040 = vmatprep.subr.mxu0 %v2023
        %6041 = vmatpush1.msra.mxu0 %v2022
        %6042 = vmatprep.subr.mxu0 %v2003
        %6043 = vmatpush1.msra.mxu0 %v2002
        %6044 = vmatprep.subr.mxu0 %v1983
        %6045 = vmatpush1.msra.mxu0 %v1982
        %6046 = vmatprep.subr.mxu0 %v1963
        %6047 = vmatpush1.msra.mxu0 %v1962
        %6048 = vmatprep.subr.mxu0 %v1943
        %6049 = vmatpush1.msra.mxu0 %v1942
        %6050 = vmatprep.subr.mxu0 %v1923
        %6051 = vmatpush1.msra.mxu0 %v1922
        %6052 = vmatprep.subr.mxu0 %v1903
        %6053 = vmatpush1.msra.mxu0 %v1902
        %6054 = vmatprep.subr.mxu0 %v1883
        %6055 = vmatpush1.msra.mxu0 %v1882
        %6056 = vmatprep.subr.mxu0 %v1863
        %6057 = vmatpush1.msra.mxu0 %v1862
        %6058 = vmatprep.subr.mxu0 %v1843
        %6059 = vmatpush1.msra.mxu0 %v1842
        %6060 = vmatprep.subr.mxu0 %v1823
        %6061 = vmatpush1.msra.mxu0 %v1822
        %6062 = vmatprep.subr.mxu0 %v1803
        %6063 = vmatpush1.msra.mxu0 %v1802
        %6064 = vmatprep.subr.mxu0 %v1783
        %6065 = vmatpush1.msra.mxu0 %v1782
        %6066 = vmatprep.subr.mxu0 %v2403
        %6067 = vmatpush2.msra.mxu0 %v2402
        %6068 = vmatprep.subr.mxu0 %v2383
        %6069 = vmatpush2.msra.mxu0 %v2382
        %6070 = vmatprep.subr.mxu0 %v2363
        %6071 = vmatpush2.msra.mxu0 %v2362
        %6072 = vmatprep.subr.mxu0 %v2343
        %6073 = vmatpush2.msra.mxu0 %v2342
        %6074 = vmatprep.subr.mxu0 %v2323
        %6075 = vmatpush2.msra.mxu0 %v2322
        %6076 = vmatprep.subr.mxu0 %v2303
        %6077 = vmatpush2.msra.mxu0 %v2302
        %6078 = vmatprep.subr.mxu0 %v2283
        %6079 = vmatpush2.msra.mxu0 %v2282
        %6080 = vmatprep.subr.mxu0 %v2263
        %6081 = vmatpush2.msra.mxu0 %v2262
        %6082 = vmatprep.subr.mxu0 %v2243
        %6083 = vmatpush2.msra.mxu0 %v2242
        %6084 = vmatprep.subr.mxu0 %v2223
        %6085 = vmatpush2.msra.mxu0 %v2222
        %6086 = vmatprep.subr.mxu0 %v2203
        %6087 = vmatpush2.msra.mxu0 %v2202
        %6088 = vmatprep.subr.mxu0 %v2183
        %6089 = vmatpush2.msra.mxu0 %v2182
        %6090 = vmatprep.subr.mxu0 %v2163
        %6091 = vmatpush2.msra.mxu0 %v2162
        %6092 = vmatprep.subr.mxu0 %v2143
        %6093 = vmatpush2.msra.mxu0 %v2142
        %6094 = vmatprep.subr.mxu0 %v2123
        %6095 = vmatpush2.msra.mxu0 %v2122
        %6096 = vmatprep.subr.mxu0 %v2103
        %6097 = vmatpush2.msra.mxu0 %v2102
        %6098 = vmatprep.mubr.f32.mxu0 %v1763
        %6099 = vmatmul.mubr.f32.gmra.mxu0 %v1762
        %v6100 = vpop.f32.mrf.mxu0
        %v6101 = vadd.f32 0.0, %v6100
        %v6102 = vpop.f32.mrf.mxu0
        %v6103 = vadd.f32 0.0, %v6102
        %6104 = vdwg.mxu0
        %6105 = vmatprep.subr.mxu0 %v2723
        %6106 = vmatpush1.msra.mxu0 %v2722
        %6107 = vmatprep.subr.mxu0 %v2703
        %6108 = vmatpush1.msra.mxu0 %v2702
        %6109 = vmatprep.subr.mxu0 %v2683
        %6110 = vmatpush1.msra.mxu0 %v2682
        %6111 = vmatprep.subr.mxu0 %v2663
        %6112 = vmatpush1.msra.mxu0 %v2662
        %6113 = vmatprep.subr.mxu0 %v2643
        %6114 = vmatpush1.msra.mxu0 %v2642
        %6115 = vmatprep.subr.mxu0 %v2623
        %6116 = vmatpush1.msra.mxu0 %v2622
        %6117 = vmatprep.subr.mxu0 %v2603
        %6118 = vmatpush1.msra.mxu0 %v2602
        %6119 = vmatprep.subr.mxu0 %v2583
        %6120 = vmatpush1.msra.mxu0 %v2582
        %6121 = vmatprep.subr.mxu0 %v2563
        %6122 = vmatpush1.msra.mxu0 %v2562
        %6123 = vmatprep.subr.mxu0 %v2543
        %6124 = vmatpush1.msra.mxu0 %v2542
        %6125 = vmatprep.subr.mxu0 %v2523
        %6126 = vmatpush1.msra.mxu0 %v2522
        %6127 = vmatprep.subr.mxu0 %v2503
        %6128 = vmatpush1.msra.mxu0 %v2502
        %6129 = vmatprep.subr.mxu0 %v2483
        %6130 = vmatpush1.msra.mxu0 %v2482
        %6131 = vmatprep.subr.mxu0 %v2463
        %6132 = vmatpush1.msra.mxu0 %v2462
        %6133 = vmatprep.subr.mxu0 %v2443
        %6134 = vmatpush1.msra.mxu0 %v2442
        %6135 = vmatprep.subr.mxu0 %v2423
        %6136 = vmatpush1.msra.mxu0 %v2422
        %6137 = vmatprep.subr.mxu0 %v3043
        %6138 = vmatpush2.msra.mxu0 %v3042
        %6139 = vmatprep.subr.mxu0 %v3023
        %6140 = vmatpush2.msra.mxu0 %v3022
        %6141 = vmatprep.subr.mxu0 %v3003
        %6142 = vmatpush2.msra.mxu0 %v3002
        %6143 = vmatprep.subr.mxu0 %v2983
        %6144 = vmatpush2.msra.mxu0 %v2982
        %6145 = vmatprep.subr.mxu0 %v2963
        %6146 = vmatpush2.msra.mxu0 %v2962
        %6147 = vmatprep.subr.mxu0 %v2943
        %6148 = vmatpush2.msra.mxu0 %v2942
        %6149 = vmatprep.subr.mxu0 %v2923
        %6150 = vmatpush2.msra.mxu0 %v2922
        %6151 = vmatprep.subr.mxu0 %v2903
        %6152 = vmatpush2.msra.mxu0 %v2902
        %6153 = vmatprep.subr.mxu0 %v2883
        %6154 = vmatpush2.msra.mxu0 %v2882
        %6155 = vmatprep.subr.mxu0 %v2863
        %6156 = vmatpush2.msra.mxu0 %v2862
        %6157 = vmatprep.subr.mxu0 %v2843
        %6158 = vmatpush2.msra.mxu0 %v2842
        %6159 = vmatprep.subr.mxu0 %v2823
        %6160 = vmatpush2.msra.mxu0 %v2822
        %6161 = vmatprep.subr.mxu0 %v2803
        %6162 = vmatpush2.msra.mxu0 %v2802
        %6163 = vmatprep.subr.mxu0 %v2783
        %6164 = vmatpush2.msra.mxu0 %v2782
        %6165 = vmatprep.subr.mxu0 %v2763
        %6166 = vmatpush2.msra.mxu0 %v2762
        %6167 = vmatprep.subr.mxu0 %v2743
        %6168 = vmatpush2.msra.mxu0 %v2742
        %6169 = vmatprep.mubr.f32.mxu0 %v1765
        %6170 = vmatmul.mubr.f32.gmra.mxu0 %v1764
        %v6171 = vpop.f32.mrf.mxu0
        %v6172 = vadd.f32 %v6101, %v6171
        %v6173 = vpop.f32.mrf.mxu0
        %v6174 = vadd.f32 %v6103, %v6173
        %6175 = vdwg.mxu0
        %6176 = vmatprep.subr.mxu0 %v3363
        %6177 = vmatpush1.msra.mxu0 %v3362
        %6178 = vmatprep.subr.mxu0 %v3343
        %6179 = vmatpush1.msra.mxu0 %v3342
        %6180 = vmatprep.subr.mxu0 %v3323
        %6181 = vmatpush1.msra.mxu0 %v3322
        %6182 = vmatprep.subr.mxu0 %v3303
        %6183 = vmatpush1.msra.mxu0 %v3302
        %6184 = vmatprep.subr.mxu0 %v3283
        %6185 = vmatpush1.msra.mxu0 %v3282
        %6186 = vmatprep.subr.mxu0 %v3263
        %6187 = vmatpush1.msra.mxu0 %v3262
        %6188 = vmatprep.subr.mxu0 %v3243
        %6189 = vmatpush1.msra.mxu0 %v3242
        %6190 = vmatprep.subr.mxu0 %v3223
        %6191 = vmatpush1.msra.mxu0 %v3222
        %6192 = vmatprep.subr.mxu0 %v3203
        %6193 = vmatpush1.msra.mxu0 %v3202
        %6194 = vmatprep.subr.mxu0 %v3183
        %6195 = vmatpush1.msra.mxu0 %v3182
        %6196 = vmatprep.subr.mxu0 %v3163
        %6197 = vmatpush1.msra.mxu0 %v3162
        %6198 = vmatprep.subr.mxu0 %v3143
        %6199 = vmatpush1.msra.mxu0 %v3142
        %6200 = vmatprep.subr.mxu0 %v3123
        %6201 = vmatpush1.msra.mxu0 %v3122
        %6202 = vmatprep.subr.mxu0 %v3103
        %6203 = vmatpush1.msra.mxu0 %v3102
        %6204 = vmatprep.subr.mxu0 %v3083
        %6205 = vmatpush1.msra.mxu0 %v3082
        %6206 = vmatprep.subr.mxu0 %v3063
        %6207 = vmatpush1.msra.mxu0 %v3062
        %6208 = vmatprep.subr.mxu0 %v3683
        %6209 = vmatpush2.msra.mxu0 %v3682
        %6210 = vmatprep.subr.mxu0 %v3663
        %6211 = vmatpush2.msra.mxu0 %v3662
        %6212 = vmatprep.subr.mxu0 %v3643
        %6213 = vmatpush2.msra.mxu0 %v3642
        %6214 = vmatprep.subr.mxu0 %v3623
        %6215 = vmatpush2.msra.mxu0 %v3622
        %6216 = vmatprep.subr.mxu0 %v3603
        %6217 = vmatpush2.msra.mxu0 %v3602
        %6218 = vmatprep.subr.mxu0 %v3583
        %6219 = vmatpush2.msra.mxu0 %v3582
        %6220 = vmatprep.subr.mxu0 %v3563
        %6221 = vmatpush2.msra.mxu0 %v3562
        %6222 = vmatprep.subr.mxu0 %v3543
        %6223 = vmatpush2.msra.mxu0 %v3542
        %6224 = vmatprep.subr.mxu0 %v3523
        %6225 = vmatpush2.msra.mxu0 %v3522
        %6226 = vmatprep.subr.mxu0 %v3503
        %6227 = vmatpush2.msra.mxu0 %v3502
        %6228 = vmatprep.subr.mxu0 %v3483
        %6229 = vmatpush2.msra.mxu0 %v3482
        %6230 = vmatprep.subr.mxu0 %v3463
        %6231 = vmatpush2.msra.mxu0 %v3462
        %6232 = vmatprep.subr.mxu0 %v3443
        %6233 = vmatpush2.msra.mxu0 %v3442
        %6234 = vmatprep.subr.mxu0 %v3423
        %6235 = vmatpush2.msra.mxu0 %v3422
        %6236 = vmatprep.subr.mxu0 %v3403
        %6237 = vmatpush2.msra.mxu0 %v3402
        %6238 = vmatprep.subr.mxu0 %v3383
        %6239 = vmatpush2.msra.mxu0 %v3382
        %6240 = vmatprep.mubr.f32.mxu0 %v1767
        %6241 = vmatmul.mubr.f32.gmra.mxu0 %v1766
        %v6242 = vpop.f32.mrf.mxu0
        %v6243 = vadd.f32 %v6172, %v6242
        %v6244 = vpop.f32.mrf.mxu0
        %v6245 = vadd.f32 %v6174, %v6244
        %6246 = vdwg.mxu0
        %6247 = vmatprep.subr.mxu0 %v4003
        %6248 = vmatpush1.msra.mxu0 %v4002
        %6249 = vmatprep.subr.mxu0 %v3983
        %6250 = vmatpush1.msra.mxu0 %v3982
        %6251 = vmatprep.subr.mxu0 %v3963
        %6252 = vmatpush1.msra.mxu0 %v3962
        %6253 = vmatprep.subr.mxu0 %v3943
        %6254 = vmatpush1.msra.mxu0 %v3942
        %6255 = vmatprep.subr.mxu0 %v3923
        %6256 = vmatpush1.msra.mxu0 %v3922
        %6257 = vmatprep.subr.mxu0 %v3903
        %6258 = vmatpush1.msra.mxu0 %v3902
        %6259 = vmatprep.subr.mxu0 %v3883
        %6260 = vmatpush1.msra.mxu0 %v3882
        %6261 = vmatprep.subr.mxu0 %v3863
        %6262 = vmatpush1.msra.mxu0 %v3862
        %6263 = vmatprep.subr.mxu0 %v3843
        %6264 = vmatpush1.msra.mxu0 %v3842
        %6265 = vmatprep.subr.mxu0 %v3823
        %6266 = vmatpush1.msra.mxu0 %v3822
        %6267 = vmatprep.subr.mxu0 %v3803
        %6268 = vmatpush1.msra.mxu0 %v3802
        %6269 = vmatprep.subr.mxu0 %v3783
        %6270 = vmatpush1.msra.mxu0 %v3782
        %6271 = vmatprep.subr.mxu0 %v3763
        %6272 = vmatpush1.msra.mxu0 %v3762
        %6273 = vmatprep.subr.mxu0 %v3743
        %6274 = vmatpush1.msra.mxu0 %v3742
        %6275 = vmatprep.subr.mxu0 %v3723
        %6276 = vmatpush1.msra.mxu0 %v3722
        %6277 = vmatprep.subr.mxu0 %v3703
        %6278 = vmatpush1.msra.mxu0 %v3702
        %6279 = vmatprep.subr.mxu0 %v4323
        %6280 = vmatpush2.msra.mxu0 %v4322
        %6281 = vmatprep.subr.mxu0 %v4303
        %6282 = vmatpush2.msra.mxu0 %v4302
        %6283 = vmatprep.subr.mxu0 %v4283
        %6284 = vmatpush2.msra.mxu0 %v4282
        %6285 = vmatprep.subr.mxu0 %v4263
        %6286 = vmatpush2.msra.mxu0 %v4262
        %6287 = vmatprep.subr.mxu0 %v4243
        %6288 = vmatpush2.msra.mxu0 %v4242
        %6289 = vmatprep.subr.mxu0 %v4223
        %6290 = vmatpush2.msra.mxu0 %v4222
        %6291 = vmatprep.subr.mxu0 %v4203
        %6292 = vmatpush2.msra.mxu0 %v4202
        %6293 = vmatprep.subr.mxu0 %v4183
        %6294 = vmatpush2.msra.mxu0 %v4182
        %6295 = vmatprep.subr.mxu0 %v4163
        %6296 = vmatpush2.msra.mxu0 %v4162
        %6297 = vmatprep.subr.mxu0 %v4143
        %6298 = vmatpush2.msra.mxu0 %v4142
        %6299 = vmatprep.subr.mxu0 %v4123
        %6300 = vmatpush2.msra.mxu0 %v4122
        %6301 = vmatprep.subr.mxu0 %v4103
        %6302 = vmatpush2.msra.mxu0 %v4102
        %6303 = vmatprep.subr.mxu0 %v4083
        %6304 = vmatpush2.msra.mxu0 %v4082
        %6305 = vmatprep.subr.mxu0 %v4063
        %6306 = vmatpush2.msra.mxu0 %v4062
        %6307 = vmatprep.subr.mxu0 %v4043
        %6308 = vmatpush2.msra.mxu0 %v4042
        %6309 = vmatprep.subr.mxu0 %v4023
        %6310 = vmatpush2.msra.mxu0 %v4022
        %6311 = vmatprep.mubr.f32.mxu0 %v1769
        %6312 = vmatmul.mubr.f32.gmra.mxu0 %v1768
        %v6313 = vpop.f32.mrf.mxu0
        %v6314 = vadd.f32 %v6243, %v6313
        %v6315 = vpop.f32.mrf.mxu0
        %v6316 = vadd.f32 %v6245, %v6315
        %6317 = vdwg.mxu0
        %6318 = vmatprep.subr.mxu0 %v2085
        %6319 = vmatpush1.msra.mxu0 %v2084
        %6320 = vmatprep.subr.mxu0 %v2065
        %6321 = vmatpush1.msra.mxu0 %v2064
        %6322 = vmatprep.subr.mxu0 %v2045
        %6323 = vmatpush1.msra.mxu0 %v2044
        %6324 = vmatprep.subr.mxu0 %v2025
        %6325 = vmatpush1.msra.mxu0 %v2024
        %6326 = vmatprep.subr.mxu0 %v2005
        %6327 = vmatpush1.msra.mxu0 %v2004
        %6328 = vmatprep.subr.mxu0 %v1985
        %6329 = vmatpush1.msra.mxu0 %v1984
        %6330 = vmatprep.subr.mxu0 %v1965
        %6331 = vmatpush1.msra.mxu0 %v1964
        %6332 = vmatprep.subr.mxu0 %v1945
        %6333 = vmatpush1.msra.mxu0 %v1944
        %6334 = vmatprep.subr.mxu0 %v1925
        %6335 = vmatpush1.msra.mxu0 %v1924
        %6336 = vmatprep.subr.mxu0 %v1905
        %6337 = vmatpush1.msra.mxu0 %v1904
        %6338 = vmatprep.subr.mxu0 %v1885
        %6339 = vmatpush1.msra.mxu0 %v1884
        %6340 = vmatprep.subr.mxu0 %v1865
        %6341 = vmatpush1.msra.mxu0 %v1864
        %6342 = vmatprep.subr.mxu0 %v1845
        %6343 = vmatpush1.msra.mxu0 %v1844
        %6344 = vmatprep.subr.mxu0 %v1825
        %6345 = vmatpush1.msra.mxu0 %v1824
        %6346 = vmatprep.subr.mxu0 %v1805
        %6347 = vmatpush1.msra.mxu0 %v1804
        %6348 = vmatprep.subr.mxu0 %v1785
        %6349 = vmatpush1.msra.mxu0 %v1784
        %6350 = vmatprep.subr.mxu0 %v2405
        %6351 = vmatpush2.msra.mxu0 %v2404
        %6352 = vmatprep.subr.mxu0 %v2385
        %6353 = vmatpush2.msra.mxu0 %v2384
        %6354 = vmatprep.subr.mxu0 %v2365
        %6355 = vmatpush2.msra.mxu0 %v2364
        %6356 = vmatprep.subr.mxu0 %v2345
        %6357 = vmatpush2.msra.mxu0 %v2344
        %6358 = vmatprep.subr.mxu0 %v2325
        %6359 = vmatpush2.msra.mxu0 %v2324
        %6360 = vmatprep.subr.mxu0 %v2305
        %6361 = vmatpush2.msra.mxu0 %v2304
        %6362 = vmatprep.subr.mxu0 %v2285
        %6363 = vmatpush2.msra.mxu0 %v2284
        %6364 = vmatprep.subr.mxu0 %v2265
        %6365 = vmatpush2.msra.mxu0 %v2264
        %6366 = vmatprep.subr.mxu0 %v2245
        %6367 = vmatpush2.msra.mxu0 %v2244
        %6368 = vmatprep.subr.mxu0 %v2225
        %6369 = vmatpush2.msra.mxu0 %v2224
        %6370 = vmatprep.subr.mxu0 %v2205
        %6371 = vmatpush2.msra.mxu0 %v2204
        %6372 = vmatprep.subr.mxu0 %v2185
        %6373 = vmatpush2.msra.mxu0 %v2184
        %6374 = vmatprep.subr.mxu0 %v2165
        %6375 = vmatpush2.msra.mxu0 %v2164
        %6376 = vmatprep.subr.mxu0 %v2145
        %6377 = vmatpush2.msra.mxu0 %v2144
        %6378 = vmatprep.subr.mxu0 %v2125
        %6379 = vmatpush2.msra.mxu0 %v2124
        %6380 = vmatprep.subr.mxu0 %v2105
        %6381 = vmatpush2.msra.mxu0 %v2104
        %6382 = vmatprep.mubr.f32.mxu0 %v1763
        %6383 = vmatmul.mubr.f32.gmra.mxu0 %v1762
        %v6384 = vpop.f32.mrf.mxu0
        %v6385 = vadd.f32 0.0, %v6384
        %v6386 = vpop.f32.mrf.mxu0
        %v6387 = vadd.f32 0.0, %v6386
        %6388 = vdwg.mxu0
        %6389 = vmatprep.subr.mxu0 %v2725
        %6390 = vmatpush1.msra.mxu0 %v2724
        %6391 = vmatprep.subr.mxu0 %v2705
        %6392 = vmatpush1.msra.mxu0 %v2704
        %6393 = vmatprep.subr.mxu0 %v2685
        %6394 = vmatpush1.msra.mxu0 %v2684
        %6395 = vmatprep.subr.mxu0 %v2665
        %6396 = vmatpush1.msra.mxu0 %v2664
        %6397 = vmatprep.subr.mxu0 %v2645
        %6398 = vmatpush1.msra.mxu0 %v2644
        %6399 = vmatprep.subr.mxu0 %v2625
        %6400 = vmatpush1.msra.mxu0 %v2624
        %6401 = vmatprep.subr.mxu0 %v2605
        %6402 = vmatpush1.msra.mxu0 %v2604
        %6403 = vmatprep.subr.mxu0 %v2585
        %6404 = vmatpush1.msra.mxu0 %v2584
        %6405 = vmatprep.subr.mxu0 %v2565
        %6406 = vmatpush1.msra.mxu0 %v2564
        %6407 = vmatprep.subr.mxu0 %v2545
        %6408 = vmatpush1.msra.mxu0 %v2544
        %6409 = vmatprep.subr.mxu0 %v2525
        %6410 = vmatpush1.msra.mxu0 %v2524
        %6411 = vmatprep.subr.mxu0 %v2505
        %6412 = vmatpush1.msra.mxu0 %v2504
        %6413 = vmatprep.subr.mxu0 %v2485
        %6414 = vmatpush1.msra.mxu0 %v2484
        %6415 = vmatprep.subr.mxu0 %v2465
        %6416 = vmatpush1.msra.mxu0 %v2464
        %6417 = vmatprep.subr.mxu0 %v2445
        %6418 = vmatpush1.msra.mxu0 %v2444
        %6419 = vmatprep.subr.mxu0 %v2425
        %6420 = vmatpush1.msra.mxu0 %v2424
        %6421 = vmatprep.subr.mxu0 %v3045
        %6422 = vmatpush2.msra.mxu0 %v3044
        %6423 = vmatprep.subr.mxu0 %v3025
        %6424 = vmatpush2.msra.mxu0 %v3024
        %6425 = vmatprep.subr.mxu0 %v3005
        %6426 = vmatpush2.msra.mxu0 %v3004
        %6427 = vmatprep.subr.mxu0 %v2985
        %6428 = vmatpush2.msra.mxu0 %v2984
        %6429 = vmatprep.subr.mxu0 %v2965
        %6430 = vmatpush2.msra.mxu0 %v2964
        %6431 = vmatprep.subr.mxu0 %v2945
        %6432 = vmatpush2.msra.mxu0 %v2944
        %6433 = vmatprep.subr.mxu0 %v2925
        %6434 = vmatpush2.msra.mxu0 %v2924
        %6435 = vmatprep.subr.mxu0 %v2905
        %6436 = vmatpush2.msra.mxu0 %v2904
        %6437 = vmatprep.subr.mxu0 %v2885
        %6438 = vmatpush2.msra.mxu0 %v2884
        %6439 = vmatprep.subr.mxu0 %v2865
        %6440 = vmatpush2.msra.mxu0 %v2864
        %6441 = vmatprep.subr.mxu0 %v2845
        %6442 = vmatpush2.msra.mxu0 %v2844
        %6443 = vmatprep.subr.mxu0 %v2825
        %6444 = vmatpush2.msra.mxu0 %v2824
        %6445 = vmatprep.subr.mxu0 %v2805
        %6446 = vmatpush2.msra.mxu0 %v2804
        %6447 = vmatprep.subr.mxu0 %v2785
        %6448 = vmatpush2.msra.mxu0 %v2784
        %6449 = vmatprep.subr.mxu0 %v2765
        %6450 = vmatpush2.msra.mxu0 %v2764
        %6451 = vmatprep.subr.mxu0 %v2745
        %6452 = vmatpush2.msra.mxu0 %v2744
        %6453 = vmatprep.mubr.f32.mxu0 %v1765
        %6454 = vmatmul.mubr.f32.gmra.mxu0 %v1764
        %v6455 = vpop.f32.mrf.mxu0
        %v6456 = vadd.f32 %v6385, %v6455
        %v6457 = vpop.f32.mrf.mxu0
        %v6458 = vadd.f32 %v6387, %v6457
        %6459 = vdwg.mxu0
        %6460 = vmatprep.subr.mxu0 %v3365
        %6461 = vmatpush1.msra.mxu0 %v3364
        %6462 = vmatprep.subr.mxu0 %v3345
        %6463 = vmatpush1.msra.mxu0 %v3344
        %6464 = vmatprep.subr.mxu0 %v3325
        %6465 = vmatpush1.msra.mxu0 %v3324
        %6466 = vmatprep.subr.mxu0 %v3305
        %6467 = vmatpush1.msra.mxu0 %v3304
        %6468 = vmatprep.subr.mxu0 %v3285
        %6469 = vmatpush1.msra.mxu0 %v3284
        %6470 = vmatprep.subr.mxu0 %v3265
        %6471 = vmatpush1.msra.mxu0 %v3264
        %6472 = vmatprep.subr.mxu0 %v3245
        %6473 = vmatpush1.msra.mxu0 %v3244
        %6474 = vmatprep.subr.mxu0 %v3225
        %6475 = vmatpush1.msra.mxu0 %v3224
        %6476 = vmatprep.subr.mxu0 %v3205
        %6477 = vmatpush1.msra.mxu0 %v3204
        %6478 = vmatprep.subr.mxu0 %v3185
        %6479 = vmatpush1.msra.mxu0 %v3184
        %6480 = vmatprep.subr.mxu0 %v3165
        %6481 = vmatpush1.msra.mxu0 %v3164
        %6482 = vmatprep.subr.mxu0 %v3145
        %6483 = vmatpush1.msra.mxu0 %v3144
        %6484 = vmatprep.subr.mxu0 %v3125
        %6485 = vmatpush1.msra.mxu0 %v3124
        %6486 = vmatprep.subr.mxu0 %v3105
        %6487 = vmatpush1.msra.mxu0 %v3104
        %6488 = vmatprep.subr.mxu0 %v3085
        %6489 = vmatpush1.msra.mxu0 %v3084
        %6490 = vmatprep.subr.mxu0 %v3065
        %6491 = vmatpush1.msra.mxu0 %v3064
        %6492 = vmatprep.subr.mxu0 %v3685
        %6493 = vmatpush2.msra.mxu0 %v3684
        %6494 = vmatprep.subr.mxu0 %v3665
        %6495 = vmatpush2.msra.mxu0 %v3664
        %6496 = vmatprep.subr.mxu0 %v3645
        %6497 = vmatpush2.msra.mxu0 %v3644
        %6498 = vmatprep.subr.mxu0 %v3625
        %6499 = vmatpush2.msra.mxu0 %v3624
        %6500 = vmatprep.subr.mxu0 %v3605
        %6501 = vmatpush2.msra.mxu0 %v3604
        %6502 = vmatprep.subr.mxu0 %v3585
        %6503 = vmatpush2.msra.mxu0 %v3584
        %6504 = vmatprep.subr.mxu0 %v3565
        %6505 = vmatpush2.msra.mxu0 %v3564
        %6506 = vmatprep.subr.mxu0 %v3545
        %6507 = vmatpush2.msra.mxu0 %v3544
        %6508 = vmatprep.subr.mxu0 %v3525
        %6509 = vmatpush2.msra.mxu0 %v3524
        %6510 = vmatprep.subr.mxu0 %v3505
        %6511 = vmatpush2.msra.mxu0 %v3504
        %6512 = vmatprep.subr.mxu0 %v3485
        %6513 = vmatpush2.msra.mxu0 %v3484
        %6514 = vmatprep.subr.mxu0 %v3465
        %6515 = vmatpush2.msra.mxu0 %v3464
        %6516 = vmatprep.subr.mxu0 %v3445
        %6517 = vmatpush2.msra.mxu0 %v3444
        %6518 = vmatprep.subr.mxu0 %v3425
        %6519 = vmatpush2.msra.mxu0 %v3424
        %6520 = vmatprep.subr.mxu0 %v3405
        %6521 = vmatpush2.msra.mxu0 %v3404
        %6522 = vmatprep.subr.mxu0 %v3385
        %6523 = vmatpush2.msra.mxu0 %v3384
        %6524 = vmatprep.mubr.f32.mxu0 %v1767
        %6525 = vmatmul.mubr.f32.gmra.mxu0 %v1766
        %v6526 = vpop.f32.mrf.mxu0
        %v6527 = vadd.f32 %v6456, %v6526
        %v6528 = vpop.f32.mrf.mxu0
        %v6529 = vadd.f32 %v6458, %v6528
        %6530 = vdwg.mxu0
        %6531 = vmatprep.subr.mxu0 %v4005
        %6532 = vmatpush1.msra.mxu0 %v4004
        %6533 = vmatprep.subr.mxu0 %v3985
        %6534 = vmatpush1.msra.mxu0 %v3984
        %6535 = vmatprep.subr.mxu0 %v3965
        %6536 = vmatpush1.msra.mxu0 %v3964
        %6537 = vmatprep.subr.mxu0 %v3945
        %6538 = vmatpush1.msra.mxu0 %v3944
        %6539 = vmatprep.subr.mxu0 %v3925
        %6540 = vmatpush1.msra.mxu0 %v3924
        %6541 = vmatprep.subr.mxu0 %v3905
        %6542 = vmatpush1.msra.mxu0 %v3904
        %6543 = vmatprep.subr.mxu0 %v3885
        %6544 = vmatpush1.msra.mxu0 %v3884
        %6545 = vmatprep.subr.mxu0 %v3865
        %6546 = vmatpush1.msra.mxu0 %v3864
        %6547 = vmatprep.subr.mxu0 %v3845
        %6548 = vmatpush1.msra.mxu0 %v3844
        %6549 = vmatprep.subr.mxu0 %v3825
        %6550 = vmatpush1.msra.mxu0 %v3824
        %6551 = vmatprep.subr.mxu0 %v3805
        %6552 = vmatpush1.msra.mxu0 %v3804
        %6553 = vmatprep.subr.mxu0 %v3785
        %6554 = vmatpush1.msra.mxu0 %v3784
        %6555 = vmatprep.subr.mxu0 %v3765
        %6556 = vmatpush1.msra.mxu0 %v3764
        %6557 = vmatprep.subr.mxu0 %v3745
        %6558 = vmatpush1.msra.mxu0 %v3744
        %6559 = vmatprep.subr.mxu0 %v3725
        %6560 = vmatpush1.msra.mxu0 %v3724
        %6561 = vmatprep.subr.mxu0 %v3705
        %6562 = vmatpush1.msra.mxu0 %v3704
        %6563 = vmatprep.subr.mxu0 %v4325
        %6564 = vmatpush2.msra.mxu0 %v4324
        %6565 = vmatprep.subr.mxu0 %v4305
        %6566 = vmatpush2.msra.mxu0 %v4304
        %6567 = vmatprep.subr.mxu0 %v4285
        %6568 = vmatpush2.msra.mxu0 %v4284
        %6569 = vmatprep.subr.mxu0 %v4265
        %6570 = vmatpush2.msra.mxu0 %v4264
        %6571 = vmatprep.subr.mxu0 %v4245
        %6572 = vmatpush2.msra.mxu0 %v4244
        %6573 = vmatprep.subr.mxu0 %v4225
        %6574 = vmatpush2.msra.mxu0 %v4224
        %6575 = vmatprep.subr.mxu0 %v4205
        %6576 = vmatpush2.msra.mxu0 %v4204
        %6577 = vmatprep.subr.mxu0 %v4185
        %6578 = vmatpush2.msra.mxu0 %v4184
        %6579 = vmatprep.subr.mxu0 %v4165
        %6580 = vmatpush2.msra.mxu0 %v4164
        %6581 = vmatprep.subr.mxu0 %v4145
        %6582 = vmatpush2.msra.mxu0 %v4144
        %6583 = vmatprep.subr.mxu0 %v4125
        %6584 = vmatpush2.msra.mxu0 %v4124
        %6585 = vmatprep.subr.mxu0 %v4105
        %6586 = vmatpush2.msra.mxu0 %v4104
        %6587 = vmatprep.subr.mxu0 %v4085
        %6588 = vmatpush2.msra.mxu0 %v4084
        %6589 = vmatprep.subr.mxu0 %v4065
        %6590 = vmatpush2.msra.mxu0 %v4064
        %6591 = vmatprep.subr.mxu0 %v4045
        %6592 = vmatpush2.msra.mxu0 %v4044
        %6593 = vmatprep.subr.mxu0 %v4025
        %6594 = vmatpush2.msra.mxu0 %v4024
        %6595 = vmatprep.mubr.f32.mxu0 %v1769
        %6596 = vmatmul.mubr.f32.gmra.mxu0 %v1768
        %v6597 = vpop.f32.mrf.mxu0
        %v6598 = vadd.f32 %v6527, %v6597
        %v6599 = vpop.f32.mrf.mxu0
        %v6600 = vadd.f32 %v6529, %v6599
        %6601 = vdwg.mxu0
        %6602 = vmatprep.subr.mxu0 %v2087
        %6603 = vmatpush1.msra.mxu0 %v2086
        %6604 = vmatprep.subr.mxu0 %v2067
        %6605 = vmatpush1.msra.mxu0 %v2066
        %6606 = vmatprep.subr.mxu0 %v2047
        %6607 = vmatpush1.msra.mxu0 %v2046
        %6608 = vmatprep.subr.mxu0 %v2027
        %6609 = vmatpush1.msra.mxu0 %v2026
        %6610 = vmatprep.subr.mxu0 %v2007
        %6611 = vmatpush1.msra.mxu0 %v2006
        %6612 = vmatprep.subr.mxu0 %v1987
        %6613 = vmatpush1.msra.mxu0 %v1986
        %6614 = vmatprep.subr.mxu0 %v1967
        %6615 = vmatpush1.msra.mxu0 %v1966
        %6616 = vmatprep.subr.mxu0 %v1947
        %6617 = vmatpush1.msra.mxu0 %v1946
        %6618 = vmatprep.subr.mxu0 %v1927
        %6619 = vmatpush1.msra.mxu0 %v1926
        %6620 = vmatprep.subr.mxu0 %v1907
        %6621 = vmatpush1.msra.mxu0 %v1906
        %6622 = vmatprep.subr.mxu0 %v1887
        %6623 = vmatpush1.msra.mxu0 %v1886
        %6624 = vmatprep.subr.mxu0 %v1867
        %6625 = vmatpush1.msra.mxu0 %v1866
        %6626 = vmatprep.subr.mxu0 %v1847
        %6627 = vmatpush1.msra.mxu0 %v1846
        %6628 = vmatprep.subr.mxu0 %v1827
        %6629 = vmatpush1.msra.mxu0 %v1826
        %6630 = vmatprep.subr.mxu0 %v1807
        %6631 = vmatpush1.msra.mxu0 %v1806
        %6632 = vmatprep.subr.mxu0 %v1787
        %6633 = vmatpush1.msra.mxu0 %v1786
        %6634 = vmatprep.subr.mxu0 %v2407
        %6635 = vmatpush2.msra.mxu0 %v2406
        %6636 = vmatprep.subr.mxu0 %v2387
        %6637 = vmatpush2.msra.mxu0 %v2386
        %6638 = vmatprep.subr.mxu0 %v2367
        %6639 = vmatpush2.msra.mxu0 %v2366
        %6640 = vmatprep.subr.mxu0 %v2347
        %6641 = vmatpush2.msra.mxu0 %v2346
        %6642 = vmatprep.subr.mxu0 %v2327
        %6643 = vmatpush2.msra.mxu0 %v2326
        %6644 = vmatprep.subr.mxu0 %v2307
        %6645 = vmatpush2.msra.mxu0 %v2306
        %6646 = vmatprep.subr.mxu0 %v2287
        %6647 = vmatpush2.msra.mxu0 %v2286
        %6648 = vmatprep.subr.mxu0 %v2267
        %6649 = vmatpush2.msra.mxu0 %v2266
        %6650 = vmatprep.subr.mxu0 %v2247
        %6651 = vmatpush2.msra.mxu0 %v2246
        %6652 = vmatprep.subr.mxu0 %v2227
        %6653 = vmatpush2.msra.mxu0 %v2226
        %6654 = vmatprep.subr.mxu0 %v2207
        %6655 = vmatpush2.msra.mxu0 %v2206
        %6656 = vmatprep.subr.mxu0 %v2187
        %6657 = vmatpush2.msra.mxu0 %v2186
        %6658 = vmatprep.subr.mxu0 %v2167
        %6659 = vmatpush2.msra.mxu0 %v2166
        %6660 = vmatprep.subr.mxu0 %v2147
        %6661 = vmatpush2.msra.mxu0 %v2146
        %6662 = vmatprep.subr.mxu0 %v2127
        %6663 = vmatpush2.msra.mxu0 %v2126
        %6664 = vmatprep.subr.mxu0 %v2107
        %6665 = vmatpush2.msra.mxu0 %v2106
        %6666 = vmatprep.mubr.f32.mxu0 %v1763
        %6667 = vmatmul.mubr.f32.gmra.mxu0 %v1762
        %v6668 = vpop.f32.mrf.mxu0
        %v6669 = vadd.f32 0.0, %v6668
        %v6670 = vpop.f32.mrf.mxu0
        %v6671 = vadd.f32 0.0, %v6670
        %6672 = vdwg.mxu0
        %6673 = vmatprep.subr.mxu0 %v2727
        %6674 = vmatpush1.msra.mxu0 %v2726
        %6675 = vmatprep.subr.mxu0 %v2707
        %6676 = vmatpush1.msra.mxu0 %v2706
        %6677 = vmatprep.subr.mxu0 %v2687
        %6678 = vmatpush1.msra.mxu0 %v2686
        %6679 = vmatprep.subr.mxu0 %v2667
        %6680 = vmatpush1.msra.mxu0 %v2666
        %6681 = vmatprep.subr.mxu0 %v2647
        %6682 = vmatpush1.msra.mxu0 %v2646
        %6683 = vmatprep.subr.mxu0 %v2627
        %6684 = vmatpush1.msra.mxu0 %v2626
        %6685 = vmatprep.subr.mxu0 %v2607
        %6686 = vmatpush1.msra.mxu0 %v2606
        %6687 = vmatprep.subr.mxu0 %v2587
        %6688 = vmatpush1.msra.mxu0 %v2586
        %6689 = vmatprep.subr.mxu0 %v2567
        %6690 = vmatpush1.msra.mxu0 %v2566
        %6691 = vmatprep.subr.mxu0 %v2547
        %6692 = vmatpush1.msra.mxu0 %v2546
        %6693 = vmatprep.subr.mxu0 %v2527
        %6694 = vmatpush1.msra.mxu0 %v2526
        %6695 = vmatprep.subr.mxu0 %v2507
        %6696 = vmatpush1.msra.mxu0 %v2506
        %6697 = vmatprep.subr.mxu0 %v2487
        %6698 = vmatpush1.msra.mxu0 %v2486
        %6699 = vmatprep.subr.mxu0 %v2467
        %6700 = vmatpush1.msra.mxu0 %v2466
        %6701 = vmatprep.subr.mxu0 %v2447
        %6702 = vmatpush1.msra.mxu0 %v2446
        %6703 = vmatprep.subr.mxu0 %v2427
        %6704 = vmatpush1.msra.mxu0 %v2426
        %6705 = vmatprep.subr.mxu0 %v3047
        %6706 = vmatpush2.msra.mxu0 %v3046
        %6707 = vmatprep.subr.mxu0 %v3027
        %6708 = vmatpush2.msra.mxu0 %v3026
        %6709 = vmatprep.subr.mxu0 %v3007
        %6710 = vmatpush2.msra.mxu0 %v3006
        %6711 = vmatprep.subr.mxu0 %v2987
        %6712 = vmatpush2.msra.mxu0 %v2986
        %6713 = vmatprep.subr.mxu0 %v2967
        %6714 = vmatpush2.msra.mxu0 %v2966
        %6715 = vmatprep.subr.mxu0 %v2947
        %6716 = vmatpush2.msra.mxu0 %v2946
        %6717 = vmatprep.subr.mxu0 %v2927
        %6718 = vmatpush2.msra.mxu0 %v2926
        %6719 = vmatprep.subr.mxu0 %v2907
        %6720 = vmatpush2.msra.mxu0 %v2906
        %6721 = vmatprep.subr.mxu0 %v2887
        %6722 = vmatpush2.msra.mxu0 %v2886
        %6723 = vmatprep.subr.mxu0 %v2867
        %6724 = vmatpush2.msra.mxu0 %v2866
        %6725 = vmatprep.subr.mxu0 %v2847
        %6726 = vmatpush2.msra.mxu0 %v2846
        %6727 = vmatprep.subr.mxu0 %v2827
        %6728 = vmatpush2.msra.mxu0 %v2826
        %6729 = vmatprep.subr.mxu0 %v2807
        %6730 = vmatpush2.msra.mxu0 %v2806
        %6731 = vmatprep.subr.mxu0 %v2787
        %6732 = vmatpush2.msra.mxu0 %v2786
        %6733 = vmatprep.subr.mxu0 %v2767
        %6734 = vmatpush2.msra.mxu0 %v2766
        %6735 = vmatprep.subr.mxu0 %v2747
        %6736 = vmatpush2.msra.mxu0 %v2746
        %6737 = vmatprep.mubr.f32.mxu0 %v1765
        %6738 = vmatmul.mubr.f32.gmra.mxu0 %v1764
        %v6739 = vpop.f32.mrf.mxu0
        %v6740 = vadd.f32 %v6669, %v6739
        %v6741 = vpop.f32.mrf.mxu0
        %v6742 = vadd.f32 %v6671, %v6741
        %6743 = vdwg.mxu0
        %6744 = vmatprep.subr.mxu0 %v3367
        %6745 = vmatpush1.msra.mxu0 %v3366
        %6746 = vmatprep.subr.mxu0 %v3347
        %6747 = vmatpush1.msra.mxu0 %v3346
        %6748 = vmatprep.subr.mxu0 %v3327
        %6749 = vmatpush1.msra.mxu0 %v3326
        %6750 = vmatprep.subr.mxu0 %v3307
        %6751 = vmatpush1.msra.mxu0 %v3306
        %6752 = vmatprep.subr.mxu0 %v3287
        %6753 = vmatpush1.msra.mxu0 %v3286
        %6754 = vmatprep.subr.mxu0 %v3267
        %6755 = vmatpush1.msra.mxu0 %v3266
        %6756 = vmatprep.subr.mxu0 %v3247
        %6757 = vmatpush1.msra.mxu0 %v3246
        %6758 = vmatprep.subr.mxu0 %v3227
        %6759 = vmatpush1.msra.mxu0 %v3226
        %6760 = vmatprep.subr.mxu0 %v3207
        %6761 = vmatpush1.msra.mxu0 %v3206
        %6762 = vmatprep.subr.mxu0 %v3187
        %6763 = vmatpush1.msra.mxu0 %v3186
        %6764 = vmatprep.subr.mxu0 %v3167
        %6765 = vmatpush1.msra.mxu0 %v3166
        %6766 = vmatprep.subr.mxu0 %v3147
        %6767 = vmatpush1.msra.mxu0 %v3146
        %6768 = vmatprep.subr.mxu0 %v3127
        %6769 = vmatpush1.msra.mxu0 %v3126
        %6770 = vmatprep.subr.mxu0 %v3107
        %6771 = vmatpush1.msra.mxu0 %v3106
        %6772 = vmatprep.subr.mxu0 %v3087
        %6773 = vmatpush1.msra.mxu0 %v3086
        %6774 = vmatprep.subr.mxu0 %v3067
        %6775 = vmatpush1.msra.mxu0 %v3066
        %6776 = vmatprep.subr.mxu0 %v3687
        %6777 = vmatpush2.msra.mxu0 %v3686
        %6778 = vmatprep.subr.mxu0 %v3667
        %6779 = vmatpush2.msra.mxu0 %v3666
        %6780 = vmatprep.subr.mxu0 %v3647
        %6781 = vmatpush2.msra.mxu0 %v3646
        %6782 = vmatprep.subr.mxu0 %v3627
        %6783 = vmatpush2.msra.mxu0 %v3626
        %6784 = vmatprep.subr.mxu0 %v3607
        %6785 = vmatpush2.msra.mxu0 %v3606
        %6786 = vmatprep.subr.mxu0 %v3587
        %6787 = vmatpush2.msra.mxu0 %v3586
        %6788 = vmatprep.subr.mxu0 %v3567
        %6789 = vmatpush2.msra.mxu0 %v3566
        %6790 = vmatprep.subr.mxu0 %v3547
        %6791 = vmatpush2.msra.mxu0 %v3546
        %6792 = vmatprep.subr.mxu0 %v3527
        %6793 = vmatpush2.msra.mxu0 %v3526
        %6794 = vmatprep.subr.mxu0 %v3507
        %6795 = vmatpush2.msra.mxu0 %v3506
        %6796 = vmatprep.subr.mxu0 %v3487
        %6797 = vmatpush2.msra.mxu0 %v3486
        %6798 = vmatprep.subr.mxu0 %v3467
        %6799 = vmatpush2.msra.mxu0 %v3466
        %6800 = vmatprep.subr.mxu0 %v3447
        %6801 = vmatpush2.msra.mxu0 %v3446
        %6802 = vmatprep.subr.mxu0 %v3427
        %6803 = vmatpush2.msra.mxu0 %v3426
        %6804 = vmatprep.subr.mxu0 %v3407
        %6805 = vmatpush2.msra.mxu0 %v3406
        %6806 = vmatprep.subr.mxu0 %v3387
        %6807 = vmatpush2.msra.mxu0 %v3386
        %6808 = vmatprep.mubr.f32.mxu0 %v1767
        %6809 = vmatmul.mubr.f32.gmra.mxu0 %v1766
        %v6810 = vpop.f32.mrf.mxu0
        %v6811 = vadd.f32 %v6740, %v6810
        %v6812 = vpop.f32.mrf.mxu0
        %v6813 = vadd.f32 %v6742, %v6812
        %6814 = vdwg.mxu0
        %6815 = vmatprep.subr.mxu0 %v4007
        %6816 = vmatpush1.msra.mxu0 %v4006
        %6817 = vmatprep.subr.mxu0 %v3987
        %6818 = vmatpush1.msra.mxu0 %v3986
        %6819 = vmatprep.subr.mxu0 %v3967
        %6820 = vmatpush1.msra.mxu0 %v3966
        %6821 = vmatprep.subr.mxu0 %v3947
        %6822 = vmatpush1.msra.mxu0 %v3946
        %6823 = vmatprep.subr.mxu0 %v3927
        %6824 = vmatpush1.msra.mxu0 %v3926
        %6825 = vmatprep.subr.mxu0 %v3907
        %6826 = vmatpush1.msra.mxu0 %v3906
        %6827 = vmatprep.subr.mxu0 %v3887
        %6828 = vmatpush1.msra.mxu0 %v3886
        %6829 = vmatprep.subr.mxu0 %v3867
        %6830 = vmatpush1.msra.mxu0 %v3866
        %6831 = vmatprep.subr.mxu0 %v3847
        %6832 = vmatpush1.msra.mxu0 %v3846
        %6833 = vmatprep.subr.mxu0 %v3827
        %6834 = vmatpush1.msra.mxu0 %v3826
        %6835 = vmatprep.subr.mxu0 %v3807
        %6836 = vmatpush1.msra.mxu0 %v3806
        %6837 = vmatprep.subr.mxu0 %v3787
        %6838 = vmatpush1.msra.mxu0 %v3786
        %6839 = vmatprep.subr.mxu0 %v3767
        %6840 = vmatpush1.msra.mxu0 %v3766
        %6841 = vmatprep.subr.mxu0 %v3747
        %6842 = vmatpush1.msra.mxu0 %v3746
        %6843 = vmatprep.subr.mxu0 %v3727
        %6844 = vmatpush1.msra.mxu0 %v3726
        %6845 = vmatprep.subr.mxu0 %v3707
        %6846 = vmatpush1.msra.mxu0 %v3706
        %6847 = vmatprep.subr.mxu0 %v4327
        %6848 = vmatpush2.msra.mxu0 %v4326
        %6849 = vmatprep.subr.mxu0 %v4307
        %6850 = vmatpush2.msra.mxu0 %v4306
        %6851 = vmatprep.subr.mxu0 %v4287
        %6852 = vmatpush2.msra.mxu0 %v4286
        %6853 = vmatprep.subr.mxu0 %v4267
        %6854 = vmatpush2.msra.mxu0 %v4266
        %6855 = vmatprep.subr.mxu0 %v4247
        %6856 = vmatpush2.msra.mxu0 %v4246
        %6857 = vmatprep.subr.mxu0 %v4227
        %6858 = vmatpush2.msra.mxu0 %v4226
        %6859 = vmatprep.subr.mxu0 %v4207
        %6860 = vmatpush2.msra.mxu0 %v4206
        %6861 = vmatprep.subr.mxu0 %v4187
        %6862 = vmatpush2.msra.mxu0 %v4186
        %6863 = vmatprep.subr.mxu0 %v4167
        %6864 = vmatpush2.msra.mxu0 %v4166
        %6865 = vmatprep.subr.mxu0 %v4147
        %6866 = vmatpush2.msra.mxu0 %v4146
        %6867 = vmatprep.subr.mxu0 %v4127
        %6868 = vmatpush2.msra.mxu0 %v4126
        %6869 = vmatprep.subr.mxu0 %v4107
        %6870 = vmatpush2.msra.mxu0 %v4106
        %6871 = vmatprep.subr.mxu0 %v4087
        %6872 = vmatpush2.msra.mxu0 %v4086
        %6873 = vmatprep.subr.mxu0 %v4067
        %6874 = vmatpush2.msra.mxu0 %v4066
        %6875 = vmatprep.subr.mxu0 %v4047
        %6876 = vmatpush2.msra.mxu0 %v4046
        %6877 = vmatprep.subr.mxu0 %v4027
        %6878 = vmatpush2.msra.mxu0 %v4026
        %6879 = vmatprep.mubr.f32.mxu0 %v1769
        %6880 = vmatmul.mubr.f32.gmra.mxu0 %v1768
        %v6881 = vpop.f32.mrf.mxu0
        %v6882 = vadd.f32 %v6811, %v6881
        %v6883 = vpop.f32.mrf.mxu0
        %v6884 = vadd.f32 %v6813, %v6883
        %6885 = vdwg.mxu0
        %6886 = vmatprep.subr.mxu0 %v2089
        %6887 = vmatpush1.msra.mxu0 %v2088
        %6888 = vmatprep.subr.mxu0 %v2069
        %6889 = vmatpush1.msra.mxu0 %v2068
        %6890 = vmatprep.subr.mxu0 %v2049
        %6891 = vmatpush1.msra.mxu0 %v2048
        %6892 = vmatprep.subr.mxu0 %v2029
        %6893 = vmatpush1.msra.mxu0 %v2028
        %6894 = vmatprep.subr.mxu0 %v2009
        %6895 = vmatpush1.msra.mxu0 %v2008
        %6896 = vmatprep.subr.mxu0 %v1989
        %6897 = vmatpush1.msra.mxu0 %v1988
        %6898 = vmatprep.subr.mxu0 %v1969
        %6899 = vmatpush1.msra.mxu0 %v1968
        %6900 = vmatprep.subr.mxu0 %v1949
        %6901 = vmatpush1.msra.mxu0 %v1948
        %6902 = vmatprep.subr.mxu0 %v1929
        %6903 = vmatpush1.msra.mxu0 %v1928
        %6904 = vmatprep.subr.mxu0 %v1909
        %6905 = vmatpush1.msra.mxu0 %v1908
        %6906 = vmatprep.subr.mxu0 %v1889
        %6907 = vmatpush1.msra.mxu0 %v1888
        %6908 = vmatprep.subr.mxu0 %v1869
        %6909 = vmatpush1.msra.mxu0 %v1868
        %6910 = vmatprep.subr.mxu0 %v1849
        %6911 = vmatpush1.msra.mxu0 %v1848
        %6912 = vmatprep.subr.mxu0 %v1829
        %6913 = vmatpush1.msra.mxu0 %v1828
        %6914 = vmatprep.subr.mxu0 %v1809
        %6915 = vmatpush1.msra.mxu0 %v1808
        %6916 = vmatprep.subr.mxu0 %v1789
        %6917 = vmatpush1.msra.mxu0 %v1788
        %6918 = vmatprep.subr.mxu0 %v2409
        %6919 = vmatpush2.msra.mxu0 %v2408
        %6920 = vmatprep.subr.mxu0 %v2389
        %6921 = vmatpush2.msra.mxu0 %v2388
        %6922 = vmatprep.subr.mxu0 %v2369
        %6923 = vmatpush2.msra.mxu0 %v2368
        %6924 = vmatprep.subr.mxu0 %v2349
        %6925 = vmatpush2.msra.mxu0 %v2348
        %6926 = vmatprep.subr.mxu0 %v2329
        %6927 = vmatpush2.msra.mxu0 %v2328
        %6928 = vmatprep.subr.mxu0 %v2309
        %6929 = vmatpush2.msra.mxu0 %v2308
        %6930 = vmatprep.subr.mxu0 %v2289
        %6931 = vmatpush2.msra.mxu0 %v2288
        %6932 = vmatprep.subr.mxu0 %v2269
        %6933 = vmatpush2.msra.mxu0 %v2268
        %6934 = vmatprep.subr.mxu0 %v2249
        %6935 = vmatpush2.msra.mxu0 %v2248
        %6936 = vmatprep.subr.mxu0 %v2229
        %6937 = vmatpush2.msra.mxu0 %v2228
        %6938 = vmatprep.subr.mxu0 %v2209
        %6939 = vmatpush2.msra.mxu0 %v2208
        %6940 = vmatprep.subr.mxu0 %v2189
        %6941 = vmatpush2.msra.mxu0 %v2188
        %6942 = vmatprep.subr.mxu0 %v2169
        %6943 = vmatpush2.msra.mxu0 %v2168
        %6944 = vmatprep.subr.mxu0 %v2149
        %6945 = vmatpush2.msra.mxu0 %v2148
        %6946 = vmatprep.subr.mxu0 %v2129
        %6947 = vmatpush2.msra.mxu0 %v2128
        %6948 = vmatprep.subr.mxu0 %v2109
        %6949 = vmatpush2.msra.mxu0 %v2108
        %6950 = vmatprep.mubr.f32.mxu0 %v1763
        %6951 = vmatmul.mubr.f32.gmra.mxu0 %v1762
        %v6952 = vpop.f32.mrf.mxu0
        %v6953 = vadd.f32 0.0, %v6952
        %v6954 = vpop.f32.mrf.mxu0
        %v6955 = vadd.f32 0.0, %v6954
        %6956 = vdwg.mxu0
        %6957 = vmatprep.subr.mxu0 %v2729
        %6958 = vmatpush1.msra.mxu0 %v2728
        %6959 = vmatprep.subr.mxu0 %v2709
        %6960 = vmatpush1.msra.mxu0 %v2708
        %6961 = vmatprep.subr.mxu0 %v2689
        %6962 = vmatpush1.msra.mxu0 %v2688
        %6963 = vmatprep.subr.mxu0 %v2669
        %6964 = vmatpush1.msra.mxu0 %v2668
        %6965 = vmatprep.subr.mxu0 %v2649
        %6966 = vmatpush1.msra.mxu0 %v2648
        %6967 = vmatprep.subr.mxu0 %v2629
        %6968 = vmatpush1.msra.mxu0 %v2628
        %6969 = vmatprep.subr.mxu0 %v2609
        %6970 = vmatpush1.msra.mxu0 %v2608
        %6971 = vmatprep.subr.mxu0 %v2589
        %6972 = vmatpush1.msra.mxu0 %v2588
        %6973 = vmatprep.subr.mxu0 %v2569
        %6974 = vmatpush1.msra.mxu0 %v2568
        %6975 = vmatprep.subr.mxu0 %v2549
        %6976 = vmatpush1.msra.mxu0 %v2548
        %6977 = vmatprep.subr.mxu0 %v2529
        %6978 = vmatpush1.msra.mxu0 %v2528
        %6979 = vmatprep.subr.mxu0 %v2509
        %6980 = vmatpush1.msra.mxu0 %v2508
        %6981 = vmatprep.subr.mxu0 %v2489
        %6982 = vmatpush1.msra.mxu0 %v2488
        %6983 = vmatprep.subr.mxu0 %v2469
        %6984 = vmatpush1.msra.mxu0 %v2468
        %6985 = vmatprep.subr.mxu0 %v2449
        %6986 = vmatpush1.msra.mxu0 %v2448
        %6987 = vmatprep.subr.mxu0 %v2429
        %6988 = vmatpush1.msra.mxu0 %v2428
        %6989 = vmatprep.subr.mxu0 %v3049
        %6990 = vmatpush2.msra.mxu0 %v3048
        %6991 = vmatprep.subr.mxu0 %v3029
        %6992 = vmatpush2.msra.mxu0 %v3028
        %6993 = vmatprep.subr.mxu0 %v3009
        %6994 = vmatpush2.msra.mxu0 %v3008
        %6995 = vmatprep.subr.mxu0 %v2989
        %6996 = vmatpush2.msra.mxu0 %v2988
        %6997 = vmatprep.subr.mxu0 %v2969
        %6998 = vmatpush2.msra.mxu0 %v2968
        %6999 = vmatprep.subr.mxu0 %v2949
        %7000 = vmatpush2.msra.mxu0 %v2948
        %7001 = vmatprep.subr.mxu0 %v2929
        %7002 = vmatpush2.msra.mxu0 %v2928
        %7003 = vmatprep.subr.mxu0 %v2909
        %7004 = vmatpush2.msra.mxu0 %v2908
        %7005 = vmatprep.subr.mxu0 %v2889
        %7006 = vmatpush2.msra.mxu0 %v2888
        %7007 = vmatprep.subr.mxu0 %v2869
        %7008 = vmatpush2.msra.mxu0 %v2868
        %7009 = vmatprep.subr.mxu0 %v2849
        %7010 = vmatpush2.msra.mxu0 %v2848
        %7011 = vmatprep.subr.mxu0 %v2829
        %7012 = vmatpush2.msra.mxu0 %v2828
        %7013 = vmatprep.subr.mxu0 %v2809
        %7014 = vmatpush2.msra.mxu0 %v2808
        %7015 = vmatprep.subr.mxu0 %v2789
        %7016 = vmatpush2.msra.mxu0 %v2788
        %7017 = vmatprep.subr.mxu0 %v2769
        %7018 = vmatpush2.msra.mxu0 %v2768
        %7019 = vmatprep.subr.mxu0 %v2749
        %7020 = vmatpush2.msra.mxu0 %v2748
        %7021 = vmatprep.mubr.f32.mxu0 %v1765
        %7022 = vmatmul.mubr.f32.gmra.mxu0 %v1764
        %v7023 = vpop.f32.mrf.mxu0
        %v7024 = vadd.f32 %v6953, %v7023
        %v7025 = vpop.f32.mrf.mxu0
        %v7026 = vadd.f32 %v6955, %v7025
        %7027 = vdwg.mxu0
        %7028 = vmatprep.subr.mxu0 %v3369
        %7029 = vmatpush1.msra.mxu0 %v3368
        %7030 = vmatprep.subr.mxu0 %v3349
        %7031 = vmatpush1.msra.mxu0 %v3348
        %7032 = vmatprep.subr.mxu0 %v3329
        %7033 = vmatpush1.msra.mxu0 %v3328
        %7034 = vmatprep.subr.mxu0 %v3309
        %7035 = vmatpush1.msra.mxu0 %v3308
        %7036 = vmatprep.subr.mxu0 %v3289
        %7037 = vmatpush1.msra.mxu0 %v3288
        %7038 = vmatprep.subr.mxu0 %v3269
        %7039 = vmatpush1.msra.mxu0 %v3268
        %7040 = vmatprep.subr.mxu0 %v3249
        %7041 = vmatpush1.msra.mxu0 %v3248
        %7042 = vmatprep.subr.mxu0 %v3229
        %7043 = vmatpush1.msra.mxu0 %v3228
        %7044 = vmatprep.subr.mxu0 %v3209
        %7045 = vmatpush1.msra.mxu0 %v3208
        %7046 = vmatprep.subr.mxu0 %v3189
        %7047 = vmatpush1.msra.mxu0 %v3188
        %7048 = vmatprep.subr.mxu0 %v3169
        %7049 = vmatpush1.msra.mxu0 %v3168
        %7050 = vmatprep.subr.mxu0 %v3149
        %7051 = vmatpush1.msra.mxu0 %v3148
        %7052 = vmatprep.subr.mxu0 %v3129
        %7053 = vmatpush1.msra.mxu0 %v3128
        %7054 = vmatprep.subr.mxu0 %v3109
        %7055 = vmatpush1.msra.mxu0 %v3108
        %7056 = vmatprep.subr.mxu0 %v3089
        %7057 = vmatpush1.msra.mxu0 %v3088
        %7058 = vmatprep.subr.mxu0 %v3069
        %7059 = vmatpush1.msra.mxu0 %v3068
        %7060 = vmatprep.subr.mxu0 %v3689
        %7061 = vmatpush2.msra.mxu0 %v3688
        %7062 = vmatprep.subr.mxu0 %v3669
        %7063 = vmatpush2.msra.mxu0 %v3668
        %7064 = vmatprep.subr.mxu0 %v3649
        %7065 = vmatpush2.msra.mxu0 %v3648
        %7066 = vmatprep.subr.mxu0 %v3629
        %7067 = vmatpush2.msra.mxu0 %v3628
        %7068 = vmatprep.subr.mxu0 %v3609
        %7069 = vmatpush2.msra.mxu0 %v3608
        %7070 = vmatprep.subr.mxu0 %v3589
        %7071 = vmatpush2.msra.mxu0 %v3588
        %7072 = vmatprep.subr.mxu0 %v3569
        %7073 = vmatpush2.msra.mxu0 %v3568
        %7074 = vmatprep.subr.mxu0 %v3549
        %7075 = vmatpush2.msra.mxu0 %v3548
        %7076 = vmatprep.subr.mxu0 %v3529
        %7077 = vmatpush2.msra.mxu0 %v3528
        %7078 = vmatprep.subr.mxu0 %v3509
        %7079 = vmatpush2.msra.mxu0 %v3508
        %7080 = vmatprep.subr.mxu0 %v3489
        %7081 = vmatpush2.msra.mxu0 %v3488
        %7082 = vmatprep.subr.mxu0 %v3469
        %7083 = vmatpush2.msra.mxu0 %v3468
        %7084 = vmatprep.subr.mxu0 %v3449
        %7085 = vmatpush2.msra.mxu0 %v3448
        %7086 = vmatprep.subr.mxu0 %v3429
        %7087 = vmatpush2.msra.mxu0 %v3428
        %7088 = vmatprep.subr.mxu0 %v3409
        %7089 = vmatpush2.msra.mxu0 %v3408
        %7090 = vmatprep.subr.mxu0 %v3389
        %7091 = vmatpush2.msra.mxu0 %v3388
        %7092 = vmatprep.mubr.f32.mxu0 %v1767
        %7093 = vmatmul.mubr.f32.gmra.mxu0 %v1766
        %v7094 = vpop.f32.mrf.mxu0
        %v7095 = vadd.f32 %v7024, %v7094
        %v7096 = vpop.f32.mrf.mxu0
        %v7097 = vadd.f32 %v7026, %v7096
        %7098 = vdwg.mxu0
        %7099 = vmatprep.subr.mxu0 %v4009
        %7100 = vmatpush1.msra.mxu0 %v4008
        %7101 = vmatprep.subr.mxu0 %v3989
        %7102 = vmatpush1.msra.mxu0 %v3988
        %7103 = vmatprep.subr.mxu0 %v3969
        %7104 = vmatpush1.msra.mxu0 %v3968
        %7105 = vmatprep.subr.mxu0 %v3949
        %7106 = vmatpush1.msra.mxu0 %v3948
        %7107 = vmatprep.subr.mxu0 %v3929
        %7108 = vmatpush1.msra.mxu0 %v3928
        %7109 = vmatprep.subr.mxu0 %v3909
        %7110 = vmatpush1.msra.mxu0 %v3908
        %7111 = vmatprep.subr.mxu0 %v3889
        %7112 = vmatpush1.msra.mxu0 %v3888
        %7113 = vmatprep.subr.mxu0 %v3869
        %7114 = vmatpush1.msra.mxu0 %v3868
        %7115 = vmatprep.subr.mxu0 %v3849
        %7116 = vmatpush1.msra.mxu0 %v3848
        %7117 = vmatprep.subr.mxu0 %v3829
        %7118 = vmatpush1.msra.mxu0 %v3828
        %7119 = vmatprep.subr.mxu0 %v3809
        %7120 = vmatpush1.msra.mxu0 %v3808
        %7121 = vmatprep.subr.mxu0 %v3789
        %7122 = vmatpush1.msra.mxu0 %v3788
        %7123 = vmatprep.subr.mxu0 %v3769
        %7124 = vmatpush1.msra.mxu0 %v3768
        %7125 = vmatprep.subr.mxu0 %v3749
        %7126 = vmatpush1.msra.mxu0 %v3748
        %7127 = vmatprep.subr.mxu0 %v3729
        %7128 = vmatpush1.msra.mxu0 %v3728
        %7129 = vmatprep.subr.mxu0 %v3709
        %7130 = vmatpush1.msra.mxu0 %v3708
        %7131 = vmatprep.subr.mxu0 %v4329
        %7132 = vmatpush2.msra.mxu0 %v4328
        %7133 = vmatprep.subr.mxu0 %v4309
        %7134 = vmatpush2.msra.mxu0 %v4308
        %7135 = vmatprep.subr.mxu0 %v4289
        %7136 = vmatpush2.msra.mxu0 %v4288
        %7137 = vmatprep.subr.mxu0 %v4269
        %7138 = vmatpush2.msra.mxu0 %v4268
        %7139 = vmatprep.subr.mxu0 %v4249
        %7140 = vmatpush2.msra.mxu0 %v4248
        %7141 = vmatprep.subr.mxu0 %v4229
        %7142 = vmatpush2.msra.mxu0 %v4228
        %7143 = vmatprep.subr.mxu0 %v4209
        %7144 = vmatpush2.msra.mxu0 %v4208
        %7145 = vmatprep.subr.mxu0 %v4189
        %7146 = vmatpush2.msra.mxu0 %v4188
        %7147 = vmatprep.subr.mxu0 %v4169
        %7148 = vmatpush2.msra.mxu0 %v4168
        %7149 = vmatprep.subr.mxu0 %v4149
        %7150 = vmatpush2.msra.mxu0 %v4148
        %7151 = vmatprep.subr.mxu0 %v4129
        %7152 = vmatpush2.msra.mxu0 %v4128
        %7153 = vmatprep.subr.mxu0 %v4109
        %7154 = vmatpush2.msra.mxu0 %v4108
        %7155 = vmatprep.subr.mxu0 %v4089
        %7156 = vmatpush2.msra.mxu0 %v4088
        %7157 = vmatprep.subr.mxu0 %v4069
        %7158 = vmatpush2.msra.mxu0 %v4068
        %7159 = vmatprep.subr.mxu0 %v4049
        %7160 = vmatpush2.msra.mxu0 %v4048
        %7161 = vmatprep.subr.mxu0 %v4029
        %7162 = vmatpush2.msra.mxu0 %v4028
        %7163 = vmatprep.mubr.f32.mxu0 %v1769
        %7164 = vmatmul.mubr.f32.gmra.mxu0 %v1768
        %v7165 = vpop.f32.mrf.mxu0
        %v7166 = vadd.f32 %v7095, %v7165
        %v7167 = vpop.f32.mrf.mxu0
        %v7168 = vadd.f32 %v7097, %v7167
        %7169 = vdwg.mxu0
        %v7170 = vld [vmem:[%s1394] sm:$0xff]
        %v7171 = vld [vmem:[%s1394 + $0x8] sm:$0xff]
        %v7172 = vld [vmem:[%s1394 + $0x10] sm:$0xf]
        %v7176 = vlaneseq
        %v7177 = vshrl.u32 %v7176, 7
        %v7178 = vsub.s32 0, %v7177
        %v7179 = vrot.slane %v7170, %v7178
        %v7180 = vlaneseq
        %v7181 = vshrl.u32 %v7180, 7
        %v7182 = vsub.s32 1, %v7181
        %v7183 = vrot.slane %v7170, %v7182
        %v7184 = vlaneseq
        %v7185 = vshrl.u32 %v7184, 7
        %v7186 = vsub.s32 2, %v7185
        %v7187 = vrot.slane %v7170, %v7186
        %v7188 = vlaneseq
        %v7189 = vshrl.u32 %v7188, 7
        %v7190 = vsub.s32 3, %v7189
        %v7191 = vrot.slane %v7170, %v7190
        %v7192 = vlaneseq
        %v7193 = vshrl.u32 %v7192, 7
        %v7194 = vsub.s32 4, %v7193
        %v7195 = vrot.slane %v7170, %v7194
        %v7196 = vlaneseq
        %v7197 = vshrl.u32 %v7196, 7
        %v7198 = vsub.s32 5, %v7197
        %v7199 = vrot.slane %v7170, %v7198
        %v7200 = vlaneseq
        %v7201 = vshrl.u32 %v7200, 7
        %v7202 = vsub.s32 6, %v7201
        %v7203 = vrot.slane %v7170, %v7202
        %v7204 = vlaneseq
        %v7205 = vshrl.u32 %v7204, 7
        %v7206 = vsub.s32 7, %v7205
        %v7207 = vrot.slane %v7170, %v7206
        %v7208 = vlaneseq
        %v7209 = vshrl.u32 %v7208, 7
        %v7210 = vsub.s32 0, %v7209
        %v7211 = vrot.slane %v7171, %v7210
        %v7212 = vlaneseq
        %v7213 = vshrl.u32 %v7212, 7
        %v7214 = vsub.s32 1, %v7213
        %v7215 = vrot.slane %v7171, %v7214
        %v7216 = vlaneseq
        %v7217 = vshrl.u32 %v7216, 7
        %v7218 = vsub.s32 2, %v7217
        %v7219 = vrot.slane %v7171, %v7218
        %v7220 = vlaneseq
        %v7221 = vshrl.u32 %v7220, 7
        %v7222 = vsub.s32 3, %v7221
        %v7223 = vrot.slane %v7171, %v7222
        %v7224 = vlaneseq
        %v7225 = vshrl.u32 %v7224, 7
        %v7226 = vsub.s32 4, %v7225
        %v7227 = vrot.slane %v7171, %v7226
        %v7228 = vlaneseq
        %v7229 = vshrl.u32 %v7228, 7
        %v7230 = vsub.s32 5, %v7229
        %v7231 = vrot.slane %v7171, %v7230
        %v7232 = vlaneseq
        %v7233 = vshrl.u32 %v7232, 7
        %v7234 = vsub.s32 6, %v7233
        %v7235 = vrot.slane %v7171, %v7234
        %v7236 = vlaneseq
        %v7237 = vshrl.u32 %v7236, 7
        %v7238 = vsub.s32 7, %v7237
        %v7239 = vrot.slane %v7171, %v7238
        %v7240 = vlaneseq
        %v7241 = vshrl.u32 %v7240, 7
        %v7242 = vsub.s32 0, %v7241
        %v7243 = vrot.slane %v7172, %v7242
        %v7244 = vlaneseq
        %v7245 = vshrl.u32 %v7244, 7
        %v7246 = vsub.s32 1, %v7245
        %v7247 = vrot.slane %v7172, %v7246
        %v7248 = vlaneseq
        %v7249 = vshrl.u32 %v7248, 7
        %v7250 = vsub.s32 2, %v7249
        %v7251 = vrot.slane %v7172, %v7250
        %v7252 = vlaneseq
        %v7253 = vshrl.u32 %v7252, 7
        %v7254 = vsub.s32 3, %v7253
        %v7255 = vrot.slane %v7172, %v7254
        %v7276 = vmul.f32 %v4610, %v7179
        %v7277 = vmul.f32 %v4612, %v7183
        %v7278 = vmul.f32 %v4894, %v7187
        %v7279 = vmul.f32 %v4896, %v7191
        %v7280 = vmul.f32 %v5178, %v7195
        %v7281 = vmul.f32 %v5180, %v7199
        %v7282 = vmul.f32 %v5462, %v7203
        %v7283 = vmul.f32 %v5464, %v7207
        %v7284 = vmul.f32 %v5746, %v7211
        %v7285 = vmul.f32 %v5748, %v7215
        %v7286 = vmul.f32 %v6030, %v7219
        %v7287 = vmul.f32 %v6032, %v7223
        %v7288 = vmul.f32 %v6314, %v7227
        %v7289 = vmul.f32 %v6316, %v7231
        %v7290 = vmul.f32 %v6598, %v7235
        %v7291 = vmul.f32 %v6600, %v7239
        %v7292 = vmul.f32 %v6882, %v7243
        %v7293 = vmul.f32 %v6884, %v7247
        %v7294 = vmul.f32 %v7166, %v7251
        %v7295 = vmul.f32 %v7168, %v7255
        %v7296 = vxor.u32 %v7276, 2147483648
        %v7297 = vxor.u32 %v7277, 2147483648
        %v7298 = vxor.u32 %v7278, 2147483648
        %v7299 = vxor.u32 %v7279, 2147483648
        %v7300 = vxor.u32 %v7280, 2147483648
        %v7301 = vxor.u32 %v7281, 2147483648
        %v7302 = vxor.u32 %v7282, 2147483648
        %v7303 = vxor.u32 %v7283, 2147483648
        %v7304 = vxor.u32 %v7284, 2147483648
        %v7305 = vxor.u32 %v7285, 2147483648
        %v7306 = vxor.u32 %v7286, 2147483648
        %v7307 = vxor.u32 %v7287, 2147483648
        %v7308 = vxor.u32 %v7288, 2147483648
        %v7309 = vxor.u32 %v7289, 2147483648
        %v7310 = vxor.u32 %v7290, 2147483648
        %v7311 = vxor.u32 %v7291, 2147483648
        %v7312 = vxor.u32 %v7292, 2147483648
        %v7313 = vxor.u32 %v7293, 2147483648
        %v7314 = vxor.u32 %v7294, 2147483648
        %v7315 = vxor.u32 %v7295, 2147483648
        %v7316 = vmul.f32 %v7296, 1.442695
        %v7317 = vpow.pop %v7316
        %v7318 = vmul.f32 %v7297, 1.442695
        %v7319 = vpow.pop %v7318
        %v7320 = vmul.f32 %v7298, 1.442695
        %v7321 = vpow.pop %v7320
        %v7322 = vmul.f32 %v7299, 1.442695
        %v7323 = vpow.pop %v7322
        %v7324 = vmul.f32 %v7300, 1.442695
        %v7325 = vpow.pop %v7324
        %v7326 = vmul.f32 %v7301, 1.442695
        %v7327 = vpow.pop %v7326
        %v7328 = vmul.f32 %v7302, 1.442695
        %v7329 = vpow.pop %v7328
        %v7330 = vmul.f32 %v7303, 1.442695
        %v7331 = vpow.pop %v7330
        %v7332 = vmul.f32 %v7304, 1.442695
        %v7333 = vpow.pop %v7332
        %v7334 = vmul.f32 %v7305, 1.442695
        %v7335 = vpow.pop %v7334
        %v7336 = vmul.f32 %v7306, 1.442695
        %v7337 = vpow.pop %v7336
        %v7338 = vmul.f32 %v7307, 1.442695
        %v7339 = vpow.pop %v7338
        %v7340 = vmul.f32 %v7308, 1.442695
        %v7341 = vpow.pop %v7340
        %v7342 = vmul.f32 %v7309, 1.442695
        %v7343 = vpow.pop %v7342
        %v7344 = vmul.f32 %v7310, 1.442695
        %v7345 = vpow.pop %v7344
        %v7346 = vmul.f32 %v7311, 1.442695
        %v7347 = vpow.pop %v7346
        %v7348 = vmul.f32 %v7312, 1.442695
        %v7349 = vpow.pop %v7348
        %v7350 = vmul.f32 %v7313, 1.442695
        %v7351 = vpow.pop %v7350
        %v7352 = vmul.f32 %v7314, 1.442695
        %v7353 = vpow.pop %v7352
        %v7354 = vmul.f32 %v7315, 1.442695
        %v7355 = vpow.pop %v7354
        %v7356 = vadd.f32 %v7317, 1.0
        %v7357 = vadd.f32 %v7319, 1.0
        %v7358 = vadd.f32 %v7321, 1.0
        %v7359 = vadd.f32 %v7323, 1.0
        %v7360 = vadd.f32 %v7325, 1.0
        %v7361 = vadd.f32 %v7327, 1.0
        %v7362 = vadd.f32 %v7329, 1.0
        %v7363 = vadd.f32 %v7331, 1.0
        %v7364 = vadd.f32 %v7333, 1.0
        %v7365 = vadd.f32 %v7335, 1.0
        %v7366 = vadd.f32 %v7337, 1.0
        %v7367 = vadd.f32 %v7339, 1.0
        %v7368 = vadd.f32 %v7341, 1.0
        %v7369 = vadd.f32 %v7343, 1.0
        %v7370 = vadd.f32 %v7345, 1.0
        %v7371 = vadd.f32 %v7347, 1.0
        %v7372 = vadd.f32 %v7349, 1.0
        %v7373 = vadd.f32 %v7351, 1.0
        %v7374 = vadd.f32 %v7353, 1.0
        %v7375 = vadd.f32 %v7355, 1.0
        %v7376 = vrcp.pop %v7356
        %v7377 = vmul.f32 1.0, %v7376
        %v7378 = vrcp.pop %v7357
        %v7379 = vmul.f32 1.0, %v7378
        %v7380 = vrcp.pop %v7358
        %v7381 = vmul.f32 1.0, %v7380
        %v7382 = vrcp.pop %v7359
        %v7383 = vmul.f32 1.0, %v7382
        %v7384 = vrcp.pop %v7360
        %v7385 = vmul.f32 1.0, %v7384
        %v7386 = vrcp.pop %v7361
        %v7387 = vmul.f32 1.0, %v7386
        %v7388 = vrcp.pop %v7362
        %v7389 = vmul.f32 1.0, %v7388
        %v7390 = vrcp.pop %v7363
        %v7391 = vmul.f32 1.0, %v7390
        %v7392 = vrcp.pop %v7364
        %v7393 = vmul.f32 1.0, %v7392
        %v7394 = vrcp.pop %v7365
        %v7395 = vmul.f32 1.0, %v7394
        %v7396 = vrcp.pop %v7366
        %v7397 = vmul.f32 1.0, %v7396
        %v7398 = vrcp.pop %v7367
        %v7399 = vmul.f32 1.0, %v7398
        %v7400 = vrcp.pop %v7368
        %v7401 = vmul.f32 1.0, %v7400
        %v7402 = vrcp.pop %v7369
        %v7403 = vmul.f32 1.0, %v7402
        %v7404 = vrcp.pop %v7370
        %v7405 = vmul.f32 1.0, %v7404
        %v7406 = vrcp.pop %v7371
        %v7407 = vmul.f32 1.0, %v7406
        %v7408 = vrcp.pop %v7372
        %v7409 = vmul.f32 1.0, %v7408
        %v7410 = vrcp.pop %v7373
        %v7411 = vmul.f32 1.0, %v7410
        %v7412 = vrcp.pop %v7374
        %v7413 = vmul.f32 1.0, %v7412
        %v7414 = vrcp.pop %v7375
        %v7415 = vmul.f32 1.0, %v7414
        %v7436 = vcombine.low %v7377, %v7379
        %v7437 = vcombine.low %v7381, %v7383
        %v7439 = vunpack.c.l.s4 1983009808
        %v7440 = vunpack.c.0.s8 %v7439
        %v7441 = vlaneseq
        %v7442 = vshrl.u32 %v7441, 7
        %v7443 = vsub.s32 %v7440, %v7442
        %v7444 = vrot.slane %v7436, %v7443
        %v7446 = vunpack.c.l.s4 1983009808
        %v7447 = vunpack.c.0.s8 %v7446
        %v7448 = vlaneseq
        %v7449 = vshrl.u32 %v7448, 7
        %v7450 = vsub.s32 %v7447, %v7449
        %v7451 = vrot.slane %v7437, %v7450
        %v7452 = vcombine.low %v7444, %v7451
        %v7453 = vcombine.low %v7385, %v7387
        %v7454 = vcombine.low %v7389, %v7391
        %v7456 = vunpack.c.l.s4 1983009808
        %v7457 = vunpack.c.0.s8 %v7456
        %v7458 = vlaneseq
        %v7459 = vshrl.u32 %v7458, 7
        %v7460 = vsub.s32 %v7457, %v7459
        %v7461 = vrot.slane %v7453, %v7460
        %v7463 = vunpack.c.l.s4 1983009808
        %v7464 = vunpack.c.0.s8 %v7463
        %v7465 = vlaneseq
        %v7466 = vshrl.u32 %v7465, 7
        %v7467 = vsub.s32 %v7464, %v7466
        %v7468 = vrot.slane %v7454, %v7467
        %v7469 = vcombine.low %v7461, %v7468
        %v7470 = vcombine.low %v7393, %v7395
        %v7471 = vcombine.low %v7397, %v7399
        %v7473 = vunpack.c.l.s4 1983009808
        %v7474 = vunpack.c.0.s8 %v7473
        %v7475 = vlaneseq
        %v7476 = vshrl.u32 %v7475, 7
        %v7477 = vsub.s32 %v7474, %v7476
        %v7478 = vrot.slane %v7470, %v7477
        %v7480 = vunpack.c.l.s4 1983009808
        %v7481 = vunpack.c.0.s8 %v7480
        %v7482 = vlaneseq
        %v7483 = vshrl.u32 %v7482, 7
        %v7484 = vsub.s32 %v7481, %v7483
        %v7485 = vrot.slane %v7471, %v7484
        %v7486 = vcombine.low %v7478, %v7485
        %v7487 = vcombine.low %v7401, %v7403
        %v7488 = vcombine.low %v7405, %v7407
        %v7490 = vunpack.c.l.s4 1983009808
        %v7491 = vunpack.c.0.s8 %v7490
        %v7492 = vlaneseq
        %v7493 = vshrl.u32 %v7492, 7
        %v7494 = vsub.s32 %v7491, %v7493
        %v7495 = vrot.slane %v7487, %v7494
        %v7497 = vunpack.c.l.s4 1983009808
        %v7498 = vunpack.c.0.s8 %v7497
        %v7499 = vlaneseq
        %v7500 = vshrl.u32 %v7499, 7
        %v7501 = vsub.s32 %v7498, %v7500
        %v7502 = vrot.slane %v7488, %v7501
        %v7503 = vcombine.low %v7495, %v7502
        %v7504 = vcombine.low %v7409, %v7411
        %v7505 = vcombine.low %v7413, %v7415
        %v7507 = vunpack.c.l.s4 1983009808
        %v7508 = vunpack.c.0.s8 %v7507
        %v7509 = vlaneseq
        %v7510 = vshrl.u32 %v7509, 7
        %v7511 = vsub.s32 %v7508, %v7510
        %v7512 = vrot.slane %v7504, %v7511
        %v7514 = vunpack.c.l.s4 1983009808
        %v7515 = vunpack.c.0.s8 %v7514
        %v7516 = vlaneseq
        %v7517 = vshrl.u32 %v7516, 7
        %v7518 = vsub.s32 %v7515, %v7517
        %v7519 = vrot.slane %v7505, %v7518
        %v7520 = vcombine.low %v7512, %v7519
        %7526 = vst [vmem:[%s1386] sm:$0xff] %v7452
        %7527 = vst [vmem:[%s1386 + $0x8] sm:$0xff] %v7469
        %7528 = vst [vmem:[%s1386 + $0x10] sm:$0xff] %v7486
        %7529 = vst [vmem:[%s1386 + $0x18] sm:$0xff] %v7503
        %7530 = vst [vmem:[%s1386 + $0x20] sm:$0xff] %v7520
        %s7531 = sand.u32 %s161, 1
        %s7532 = sand.u32 %s161, 1
        %s7533 = smul.addr %s7532, 40
        %s7534 = scalar_lea.vmem [#allocation3], %s7533
        // Predicated region
        $region97: #{decoder_forward.1} parent=91 // pred_check
          %p7535 = pneg %p171
        $region98: #{decoder_forward.1} parent=91 // pred_check_branch
          %7537 = sbr.rel (%p7535) target = $region100
        $region99: #{decoder_forward.1} parent=91 // pred_region
          %s7538 = smul.u32 20, %s17
          %s7539 = ssub.s32 79, %s7538
          %p7540 = scmp.lt.s32.totalorder %s7539, 20
          %s7541 = scalar_select %p7540, %s7539, 20
          %s7542 = smul.u32 32, %s7541
          %p7543 = scmp.ne.s32.totalorder 0, %s7542
          %s7544 = smul.addr %s7538, 2
          %s7545 = scalar_lea.vmem %s6, %s7544
          %s7546 = smul.u32 %s7541, 2
          // Predicated region
          $region101: #{decoder_forward.1} parent=99 // pred_check
            %p7547 = pneg %p7543
          $region102: #{decoder_forward.1} parent=99 // pred_check_branch
            %7549 = sbr.rel (%p7547) target = $region104
          $region103: #{decoder_forward.1} parent=99 // pred_region
            %p7550 = scmp.lt.u32.totalorder %s7546, 8
            %p7551 = pneg %p7550
            // Predicated region
            $region105: #{decoder_forward.1} parent=103 // pred_check
              _
            $region106: #{decoder_forward.1} parent=103 // pred_check_branch
              %7553 = sbr.rel (%p7550) target = $region108
            $region107: #{decoder_forward.1} parent=103 // pred_region
              %s7569 = sand.u32 %s7546, 7
              %p7570 = scmp.eq.s32.totalorder %s7569, 0
              // Predicated region
              $region120: #{decoder_forward.1} parent=107 // pred_check
                %p7571 = pneg %p7570
              $region121: #{decoder_forward.1} parent=107 // pred_check_branch
                %7573 = sbr.rel (%p7571) target = $region123
              $region122: #{decoder_forward.1} parent=107 // pred_region
                %s7574 = sshrl.u32 %s7546, 3
                %s7575 = sshrl.u32 %s7574, 6
                // While loop
                $region124: #{decoder_forward.1} parent=122 // loop_pre_header
                  _
                $region125: #{decoder_forward.1} parent=122 // loop_header
                  %s7579 = sphi 0, %s7581
                  %p7580 = scmp.ge.s32.totalorder %s7579, %s7575
                  %s7584 = sphi 0, %s7717
                  %s7585 = sphi %s7534, %s7720
                  %s7586 = sphi %s7545, %s7721
                $region126: #{decoder_forward.1} parent=122 // loop_header_branch
                  %7583 = sbr.rel (%p7580) target = $region130
                $region127: #{decoder_forward.1} parent=122 // loop_body
                  %v7587 = vld [vmem:[%s7585] sm:$0xff]
                  %7588 = vst [vmem:[%s7586] sm:$0xff] %v7587
                  %v7589 = vld [vmem:[%s7585 + $0x8] sm:$0xff]
                  %7590 = vst [vmem:[%s7586 + $0x8] sm:$0xff] %v7589
                  %v7591 = vld [vmem:[%s7585 + $0x10] sm:$0xff]
                  %7592 = vst [vmem:[%s7586 + $0x10] sm:$0xff] %v7591
                  %v7593 = vld [vmem:[%s7585 + $0x18] sm:$0xff]
                  %7594 = vst [vmem:[%s7586 + $0x18] sm:$0xff] %v7593
                  %v7595 = vld [vmem:[%s7585 + $0x20] sm:$0xff]
                  %7596 = vst [vmem:[%s7586 + $0x20] sm:$0xff] %v7595
                  %v7597 = vld [vmem:[%s7585 + $0x28] sm:$0xff]
                  %7598 = vst [vmem:[%s7586 + $0x28] sm:$0xff] %v7597
                  %v7599 = vld [vmem:[%s7585 + $0x30] sm:$0xff]
                  %7600 = vst [vmem:[%s7586 + $0x30] sm:$0xff] %v7599
                  %v7601 = vld [vmem:[%s7585 + $0x38] sm:$0xff]
                  %7602 = vst [vmem:[%s7586 + $0x38] sm:$0xff] %v7601
                  %v7603 = vld [vmem:[%s7585 + $0x40] sm:$0xff]
                  %7604 = vst [vmem:[%s7586 + $0x40] sm:$0xff] %v7603
                  %v7605 = vld [vmem:[%s7585 + $0x48] sm:$0xff]
                  %7606 = vst [vmem:[%s7586 + $0x48] sm:$0xff] %v7605
                  %v7607 = vld [vmem:[%s7585 + $0x50] sm:$0xff]
                  %7608 = vst [vmem:[%s7586 + $0x50] sm:$0xff] %v7607
                  %v7609 = vld [vmem:[%s7585 + $0x58] sm:$0xff]
                  %7610 = vst [vmem:[%s7586 + $0x58] sm:$0xff] %v7609
                  %v7611 = vld [vmem:[%s7585 + $0x60] sm:$0xff]
                  %7612 = vst [vmem:[%s7586 + $0x60] sm:$0xff] %v7611
                  %v7613 = vld [vmem:[%s7585 + $0x68] sm:$0xff]
                  %7614 = vst [vmem:[%s7586 + $0x68] sm:$0xff] %v7613
                  %v7615 = vld [vmem:[%s7585 + $0x70] sm:$0xff]
                  %7616 = vst [vmem:[%s7586 + $0x70] sm:$0xff] %v7615
                  %v7617 = vld [vmem:[%s7585 + $0x78] sm:$0xff]
                  %7618 = vst [vmem:[%s7586 + $0x78] sm:$0xff] %v7617
                  %v7619 = vld [vmem:[%s7585 + $0x80] sm:$0xff]
                  %7620 = vst [vmem:[%s7586 + $0x80] sm:$0xff] %v7619
                  %v7621 = vld [vmem:[%s7585 + $0x88] sm:$0xff]
                  %7622 = vst [vmem:[%s7586 + $0x88] sm:$0xff] %v7621
                  %v7623 = vld [vmem:[%s7585 + $0x90] sm:$0xff]
                  %7624 = vst [vmem:[%s7586 + $0x90] sm:$0xff] %v7623
                  %v7625 = vld [vmem:[%s7585 + $0x98] sm:$0xff]
                  %7626 = vst [vmem:[%s7586 + $0x98] sm:$0xff] %v7625
                  %v7627 = vld [vmem:[%s7585 + $0xa0] sm:$0xff]
                  %7628 = vst [vmem:[%s7586 + $0xa0] sm:$0xff] %v7627
                  %v7629 = vld [vmem:[%s7585 + $0xa8] sm:$0xff]
                  %7630 = vst [vmem:[%s7586 + $0xa8] sm:$0xff] %v7629
                  %v7631 = vld [vmem:[%s7585 + $0xb0] sm:$0xff]
                  %7632 = vst [vmem:[%s7586 + $0xb0] sm:$0xff] %v7631
                  %v7633 = vld [vmem:[%s7585 + $0xb8] sm:$0xff]
                  %7634 = vst [vmem:[%s7586 + $0xb8] sm:$0xff] %v7633
                  %v7635 = vld [vmem:[%s7585 + $0xc0] sm:$0xff]
                  %7636 = vst [vmem:[%s7586 + $0xc0] sm:$0xff] %v7635
                  %v7637 = vld [vmem:[%s7585 + $0xc8] sm:$0xff]
                  %7638 = vst [vmem:[%s7586 + $0xc8] sm:$0xff] %v7637
                  %v7639 = vld [vmem:[%s7585 + $0xd0] sm:$0xff]
                  %7640 = vst [vmem:[%s7586 + $0xd0] sm:$0xff] %v7639
                  %v7641 = vld [vmem:[%s7585 + $0xd8] sm:$0xff]
                  %7642 = vst [vmem:[%s7586 + $0xd8] sm:$0xff] %v7641
                  %v7643 = vld [vmem:[%s7585 + $0xe0] sm:$0xff]
                  %7644 = vst [vmem:[%s7586 + $0xe0] sm:$0xff] %v7643
                  %v7645 = vld [vmem:[%s7585 + $0xe8] sm:$0xff]
                  %7646 = vst [vmem:[%s7586 + $0xe8] sm:$0xff] %v7645
                  %v7647 = vld [vmem:[%s7585 + $0xf0] sm:$0xff]
                  %7648 = vst [vmem:[%s7586 + $0xf0] sm:$0xff] %v7647
                  %v7649 = vld [vmem:[%s7585 + $0xf8] sm:$0xff]
                  %7650 = vst [vmem:[%s7586 + $0xf8] sm:$0xff] %v7649
                  %v7651 = vld [vmem:[%s7585 + $0x100] sm:$0xff]
                  %7652 = vst [vmem:[%s7586 + $0x100] sm:$0xff] %v7651
                  %v7653 = vld [vmem:[%s7585 + $0x108] sm:$0xff]
                  %7654 = vst [vmem:[%s7586 + $0x108] sm:$0xff] %v7653
                  %v7655 = vld [vmem:[%s7585 + $0x110] sm:$0xff]
                  %7656 = vst [vmem:[%s7586 + $0x110] sm:$0xff] %v7655
                  %v7657 = vld [vmem:[%s7585 + $0x118] sm:$0xff]
                  %7658 = vst [vmem:[%s7586 + $0x118] sm:$0xff] %v7657
                  %v7659 = vld [vmem:[%s7585 + $0x120] sm:$0xff]
                  %7660 = vst [vmem:[%s7586 + $0x120] sm:$0xff] %v7659
                  %v7661 = vld [vmem:[%s7585 + $0x128] sm:$0xff]
                  %7662 = vst [vmem:[%s7586 + $0x128] sm:$0xff] %v7661
                  %v7663 = vld [vmem:[%s7585 + $0x130] sm:$0xff]
                  %7664 = vst [vmem:[%s7586 + $0x130] sm:$0xff] %v7663
                  %v7665 = vld [vmem:[%s7585 + $0x138] sm:$0xff]
                  %7666 = vst [vmem:[%s7586 + $0x138] sm:$0xff] %v7665
                  %v7667 = vld [vmem:[%s7585 + $0x140] sm:$0xff]
                  %7668 = vst [vmem:[%s7586 + $0x140] sm:$0xff] %v7667
                  %v7669 = vld [vmem:[%s7585 + $0x148] sm:$0xff]
                  %7670 = vst [vmem:[%s7586 + $0x148] sm:$0xff] %v7669
                  %v7671 = vld [vmem:[%s7585 + $0x150] sm:$0xff]
                  %7672 = vst [vmem:[%s7586 + $0x150] sm:$0xff] %v7671
                  %v7673 = vld [vmem:[%s7585 + $0x158] sm:$0xff]
                  %7674 = vst [vmem:[%s7586 + $0x158] sm:$0xff] %v7673
                  %v7675 = vld [vmem:[%s7585 + $0x160] sm:$0xff]
                  %7676 = vst [vmem:[%s7586 + $0x160] sm:$0xff] %v7675
                  %v7677 = vld [vmem:[%s7585 + $0x168] sm:$0xff]
                  %7678 = vst [vmem:[%s7586 + $0x168] sm:$0xff] %v7677
                  %v7679 = vld [vmem:[%s7585 + $0x170] sm:$0xff]
                  %7680 = vst [vmem:[%s7586 + $0x170] sm:$0xff] %v7679
                  %v7681 = vld [vmem:[%s7585 + $0x178] sm:$0xff]
                  %7682 = vst [vmem:[%s7586 + $0x178] sm:$0xff] %v7681
                  %v7683 = vld [vmem:[%s7585 + $0x180] sm:$0xff]
                  %7684 = vst [vmem:[%s7586 + $0x180] sm:$0xff] %v7683
                  %v7685 = vld [vmem:[%s7585 + $0x188] sm:$0xff]
                  %7686 = vst [vmem:[%s7586 + $0x188] sm:$0xff] %v7685
                  %v7687 = vld [vmem:[%s7585 + $0x190] sm:$0xff]
                  %7688 = vst [vmem:[%s7586 + $0x190] sm:$0xff] %v7687
                  %v7689 = vld [vmem:[%s7585 + $0x198] sm:$0xff]
                  %7690 = vst [vmem:[%s7586 + $0x198] sm:$0xff] %v7689
                  %v7691 = vld [vmem:[%s7585 + $0x1a0] sm:$0xff]
                  %7692 = vst [vmem:[%s7586 + $0x1a0] sm:$0xff] %v7691
                  %v7693 = vld [vmem:[%s7585 + $0x1a8] sm:$0xff]
                  %7694 = vst [vmem:[%s7586 + $0x1a8] sm:$0xff] %v7693
                  %v7695 = vld [vmem:[%s7585 + $0x1b0] sm:$0xff]
                  %7696 = vst [vmem:[%s7586 + $0x1b0] sm:$0xff] %v7695
                  %v7697 = vld [vmem:[%s7585 + $0x1b8] sm:$0xff]
                  %7698 = vst [vmem:[%s7586 + $0x1b8] sm:$0xff] %v7697
                  %v7699 = vld [vmem:[%s7585 + $0x1c0] sm:$0xff]
                  %7700 = vst [vmem:[%s7586 + $0x1c0] sm:$0xff] %v7699
                  %v7701 = vld [vmem:[%s7585 + $0x1c8] sm:$0xff]
                  %7702 = vst [vmem:[%s7586 + $0x1c8] sm:$0xff] %v7701
                  %v7703 = vld [vmem:[%s7585 + $0x1d0] sm:$0xff]
                  %7704 = vst [vmem:[%s7586 + $0x1d0] sm:$0xff] %v7703
                  %v7705 = vld [vmem:[%s7585 + $0x1d8] sm:$0xff]
                  %7706 = vst [vmem:[%s7586 + $0x1d8] sm:$0xff] %v7705
                  %v7707 = vld [vmem:[%s7585 + $0x1e0] sm:$0xff]
                  %7708 = vst [vmem:[%s7586 + $0x1e0] sm:$0xff] %v7707
                  %v7709 = vld [vmem:[%s7585 + $0x1e8] sm:$0xff]
                  %7710 = vst [vmem:[%s7586 + $0x1e8] sm:$0xff] %v7709
                  %v7711 = vld [vmem:[%s7585 + $0x1f0] sm:$0xff]
                  %7712 = vst [vmem:[%s7586 + $0x1f0] sm:$0xff] %v7711
                  %v7713 = vld [vmem:[%s7585 + $0x1f8] sm:$0xff]
                  %7714 = vst [vmem:[%s7586 + $0x1f8] sm:$0xff] %v7713
                  %s7715 = sadd.s32 1, %s7584
                  %p7716 = scmp.ge.s32.totalorder %s7715, %s7575
                  %s7717 = scalar_select %p7716, 0, %s7715
                  %s7718 = smul.u32 %s7717, 512
                  %s7719 = smul.u32 %s7717, 512
                  %s7720 = scalar_lea.vmem %s7534, %s7718 [#allocation3]
                  %s7721 = scalar_lea.vmem %s7545, %s7719
                $region128: #{decoder_forward.1} parent=122 // loop_footer
                  %s7581 = sadd.s32 %s7579, 1
                $region129: #{decoder_forward.1} parent=122 // loop_footer_branch
                  %7578 = sbr.rel target = $region125
                $region130: #{decoder_forward.1} parent=122 // loop_exit
                  _
                %s7722 = sshrl.u32 %s7574, 6
                %s7723 = sand.u32 %s7574, 63
                %s7724 = smul.u32 %s7722, 64
                %s7725 = smul.u32 128, %s7724
                %s7726 = sshra.s32 %s7725, 4
                %s7727 = scalar_lea.vmem %s7534, %s7726 [#allocation3]
                %s7728 = smul.u32 128, %s7724
                %s7729 = sshra.s32 %s7728, 4
                %s7730 = scalar_lea.vmem %s7545, %s7729
                // While loop
                $region131: #{decoder_forward.1} parent=122 // loop_pre_header
                  _
                $region132: #{decoder_forward.1} parent=122 // loop_header
                  %s7734 = sphi 0, %s7736
                  %p7735 = scmp.ge.s32.totalorder %s7734, %s7723
                  %s7739 = sphi 0, %s7746
                  %s7740 = sphi %s7727, %s7749
                  %s7741 = sphi %s7730, %s7750
                $region133: #{decoder_forward.1} parent=122 // loop_header_branch
                  %7738 = sbr.rel (%p7735) target = $region137
                $region134: #{decoder_forward.1} parent=122 // loop_body
                  %v7742 = vld [vmem:[%s7740] sm:$0xff]
                  %7743 = vst [vmem:[%s7741] sm:$0xff] %v7742
                  %s7744 = sadd.s32 1, %s7739
                  %p7745 = scmp.ge.s32.totalorder %s7744, %s7723
                  %s7746 = scalar_select %p7745, 0, %s7744
                  %s7747 = smul.u32 %s7746, 8
                  %s7748 = smul.u32 %s7746, 8
                  %s7749 = scalar_lea.vmem %s7727, %s7747 [#allocation3]
                  %s7750 = scalar_lea.vmem %s7730, %s7748
                $region135: #{decoder_forward.1} parent=122 // loop_footer
                  %s7736 = sadd.s32 %s7734, 1
                $region136: #{decoder_forward.1} parent=122 // loop_footer_branch
                  %7733 = sbr.rel target = $region132
                $region137: #{decoder_forward.1} parent=122 // loop_exit
                  _
              $region123: #{decoder_forward.1} parent=107 // pred_fallthru
                _
              %p7751 = pneg %p7570
              // Predicated region
              $region138: #{decoder_forward.1} parent=107 // pred_check
                _
              $region139: #{decoder_forward.1} parent=107 // pred_check_branch
                %7753 = sbr.rel (%p7570) target = $region141
              $region140: #{decoder_forward.1} parent=107 // pred_region
                %s7754 = sand.u32 %s7546, 7
                %s7755 = ssub.s32 %s7546, %s7754
                %s7756 = scalar_lea.vmem %s7534, %s7755 [#allocation3]
                %s7757 = ssub.s32 %s7546, %s7754
                %s7758 = scalar_lea.vmem %s7545, %s7757
                %s7759 = sshrl.u32 %s7546, 3
                %s7760 = sshrl.u32 %s7759, 6
                // While loop
                $region142: #{decoder_forward.1} parent=140 // loop_pre_header
                  _
                $region143: #{decoder_forward.1} parent=140 // loop_header
                  %s7764 = sphi 0, %s7766
                  %p7765 = scmp.ge.s32.totalorder %s7764, %s7760
                  %s7769 = sphi 0, %s7902
                  %s7770 = sphi %s7534, %s7905
                  %s7771 = sphi %s7545, %s7906
                $region144: #{decoder_forward.1} parent=140 // loop_header_branch
                  %7768 = sbr.rel (%p7765) target = $region148
                $region145: #{decoder_forward.1} parent=140 // loop_body
                  %v7772 = vld [vmem:[%s7770] sm:$0xff]
                  %7773 = vst [vmem:[%s7771] sm:$0xff] %v7772
                  %v7774 = vld [vmem:[%s7770 + $0x8] sm:$0xff]
                  %7775 = vst [vmem:[%s7771 + $0x8] sm:$0xff] %v7774
                  %v7776 = vld [vmem:[%s7770 + $0x10] sm:$0xff]
                  %7777 = vst [vmem:[%s7771 + $0x10] sm:$0xff] %v7776
                  %v7778 = vld [vmem:[%s7770 + $0x18] sm:$0xff]
                  %7779 = vst [vmem:[%s7771 + $0x18] sm:$0xff] %v7778
                  %v7780 = vld [vmem:[%s7770 + $0x20] sm:$0xff]
                  %7781 = vst [vmem:[%s7771 + $0x20] sm:$0xff] %v7780
                  %v7782 = vld [vmem:[%s7770 + $0x28] sm:$0xff]
                  %7783 = vst [vmem:[%s7771 + $0x28] sm:$0xff] %v7782
                  %v7784 = vld [vmem:[%s7770 + $0x30] sm:$0xff]
                  %7785 = vst [vmem:[%s7771 + $0x30] sm:$0xff] %v7784
                  %v7786 = vld [vmem:[%s7770 + $0x38] sm:$0xff]
                  %7787 = vst [vmem:[%s7771 + $0x38] sm:$0xff] %v7786
                  %v7788 = vld [vmem:[%s7770 + $0x40] sm:$0xff]
                  %7789 = vst [vmem:[%s7771 + $0x40] sm:$0xff] %v7788
                  %v7790 = vld [vmem:[%s7770 + $0x48] sm:$0xff]
                  %7791 = vst [vmem:[%s7771 + $0x48] sm:$0xff] %v7790
                  %v7792 = vld [vmem:[%s7770 + $0x50] sm:$0xff]
                  %7793 = vst [vmem:[%s7771 + $0x50] sm:$0xff] %v7792
                  %v7794 = vld [vmem:[%s7770 + $0x58] sm:$0xff]
                  %7795 = vst [vmem:[%s7771 + $0x58] sm:$0xff] %v7794
                  %v7796 = vld [vmem:[%s7770 + $0x60] sm:$0xff]
                  %7797 = vst [vmem:[%s7771 + $0x60] sm:$0xff] %v7796
                  %v7798 = vld [vmem:[%s7770 + $0x68] sm:$0xff]
                  %7799 = vst [vmem:[%s7771 + $0x68] sm:$0xff] %v7798
                  %v7800 = vld [vmem:[%s7770 + $0x70] sm:$0xff]
                  %7801 = vst [vmem:[%s7771 + $0x70] sm:$0xff] %v7800
                  %v7802 = vld [vmem:[%s7770 + $0x78] sm:$0xff]
                  %7803 = vst [vmem:[%s7771 + $0x78] sm:$0xff] %v7802
                  %v7804 = vld [vmem:[%s7770 + $0x80] sm:$0xff]
                  %7805 = vst [vmem:[%s7771 + $0x80] sm:$0xff] %v7804
                  %v7806 = vld [vmem:[%s7770 + $0x88] sm:$0xff]
                  %7807 = vst [vmem:[%s7771 + $0x88] sm:$0xff] %v7806
                  %v7808 = vld [vmem:[%s7770 + $0x90] sm:$0xff]
                  %7809 = vst [vmem:[%s7771 + $0x90] sm:$0xff] %v7808
                  %v7810 = vld [vmem:[%s7770 + $0x98] sm:$0xff]
                  %7811 = vst [vmem:[%s7771 + $0x98] sm:$0xff] %v7810
                  %v7812 = vld [vmem:[%s7770 + $0xa0] sm:$0xff]
                  %7813 = vst [vmem:[%s7771 + $0xa0] sm:$0xff] %v7812
                  %v7814 = vld [vmem:[%s7770 + $0xa8] sm:$0xff]
                  %7815 = vst [vmem:[%s7771 + $0xa8] sm:$0xff] %v7814
                  %v7816 = vld [vmem:[%s7770 + $0xb0] sm:$0xff]
                  %7817 = vst [vmem:[%s7771 + $0xb0] sm:$0xff] %v7816
                  %v7818 = vld [vmem:[%s7770 + $0xb8] sm:$0xff]
                  %7819 = vst [vmem:[%s7771 + $0xb8] sm:$0xff] %v7818
                  %v7820 = vld [vmem:[%s7770 + $0xc0] sm:$0xff]
                  %7821 = vst [vmem:[%s7771 + $0xc0] sm:$0xff] %v7820
                  %v7822 = vld [vmem:[%s7770 + $0xc8] sm:$0xff]
                  %7823 = vst [vmem:[%s7771 + $0xc8] sm:$0xff] %v7822
                  %v7824 = vld [vmem:[%s7770 + $0xd0] sm:$0xff]
                  %7825 = vst [vmem:[%s7771 + $0xd0] sm:$0xff] %v7824
                  %v7826 = vld [vmem:[%s7770 + $0xd8] sm:$0xff]
                  %7827 = vst [vmem:[%s7771 + $0xd8] sm:$0xff] %v7826
                  %v7828 = vld [vmem:[%s7770 + $0xe0] sm:$0xff]
                  %7829 = vst [vmem:[%s7771 + $0xe0] sm:$0xff] %v7828
                  %v7830 = vld [vmem:[%s7770 + $0xe8] sm:$0xff]
                  %7831 = vst [vmem:[%s7771 + $0xe8] sm:$0xff] %v7830
                  %v7832 = vld [vmem:[%s7770 + $0xf0] sm:$0xff]
                  %7833 = vst [vmem:[%s7771 + $0xf0] sm:$0xff] %v7832
                  %v7834 = vld [vmem:[%s7770 + $0xf8] sm:$0xff]
                  %7835 = vst [vmem:[%s7771 + $0xf8] sm:$0xff] %v7834
                  %v7836 = vld [vmem:[%s7770 + $0x100] sm:$0xff]
                  %7837 = vst [vmem:[%s7771 + $0x100] sm:$0xff] %v7836
                  %v7838 = vld [vmem:[%s7770 + $0x108] sm:$0xff]
                  %7839 = vst [vmem:[%s7771 + $0x108] sm:$0xff] %v7838
                  %v7840 = vld [vmem:[%s7770 + $0x110] sm:$0xff]
                  %7841 = vst [vmem:[%s7771 + $0x110] sm:$0xff] %v7840
                  %v7842 = vld [vmem:[%s7770 + $0x118] sm:$0xff]
                  %7843 = vst [vmem:[%s7771 + $0x118] sm:$0xff] %v7842
                  %v7844 = vld [vmem:[%s7770 + $0x120] sm:$0xff]
                  %7845 = vst [vmem:[%s7771 + $0x120] sm:$0xff] %v7844
                  %v7846 = vld [vmem:[%s7770 + $0x128] sm:$0xff]
                  %7847 = vst [vmem:[%s7771 + $0x128] sm:$0xff] %v7846
                  %v7848 = vld [vmem:[%s7770 + $0x130] sm:$0xff]
                  %7849 = vst [vmem:[%s7771 + $0x130] sm:$0xff] %v7848
                  %v7850 = vld [vmem:[%s7770 + $0x138] sm:$0xff]
                  %7851 = vst [vmem:[%s7771 + $0x138] sm:$0xff] %v7850
                  %v7852 = vld [vmem:[%s7770 + $0x140] sm:$0xff]
                  %7853 = vst [vmem:[%s7771 + $0x140] sm:$0xff] %v7852
                  %v7854 = vld [vmem:[%s7770 + $0x148] sm:$0xff]
                  %7855 = vst [vmem:[%s7771 + $0x148] sm:$0xff] %v7854
                  %v7856 = vld [vmem:[%s7770 + $0x150] sm:$0xff]
                  %7857 = vst [vmem:[%s7771 + $0x150] sm:$0xff] %v7856
                  %v7858 = vld [vmem:[%s7770 + $0x158] sm:$0xff]
                  %7859 = vst [vmem:[%s7771 + $0x158] sm:$0xff] %v7858
                  %v7860 = vld [vmem:[%s7770 + $0x160] sm:$0xff]
                  %7861 = vst [vmem:[%s7771 + $0x160] sm:$0xff] %v7860
                  %v7862 = vld [vmem:[%s7770 + $0x168] sm:$0xff]
                  %7863 = vst [vmem:[%s7771 + $0x168] sm:$0xff] %v7862
                  %v7864 = vld [vmem:[%s7770 + $0x170] sm:$0xff]
                  %7865 = vst [vmem:[%s7771 + $0x170] sm:$0xff] %v7864
                  %v7866 = vld [vmem:[%s7770 + $0x178] sm:$0xff]
                  %7867 = vst [vmem:[%s7771 + $0x178] sm:$0xff] %v7866
                  %v7868 = vld [vmem:[%s7770 + $0x180] sm:$0xff]
                  %7869 = vst [vmem:[%s7771 + $0x180] sm:$0xff] %v7868
                  %v7870 = vld [vmem:[%s7770 + $0x188] sm:$0xff]
                  %7871 = vst [vmem:[%s7771 + $0x188] sm:$0xff] %v7870
                  %v7872 = vld [vmem:[%s7770 + $0x190] sm:$0xff]
                  %7873 = vst [vmem:[%s7771 + $0x190] sm:$0xff] %v7872
                  %v7874 = vld [vmem:[%s7770 + $0x198] sm:$0xff]
                  %7875 = vst [vmem:[%s7771 + $0x198] sm:$0xff] %v7874
                  %v7876 = vld [vmem:[%s7770 + $0x1a0] sm:$0xff]
                  %7877 = vst [vmem:[%s7771 + $0x1a0] sm:$0xff] %v7876
                  %v7878 = vld [vmem:[%s7770 + $0x1a8] sm:$0xff]
                  %7879 = vst [vmem:[%s7771 + $0x1a8] sm:$0xff] %v7878
                  %v7880 = vld [vmem:[%s7770 + $0x1b0] sm:$0xff]
                  %7881 = vst [vmem:[%s7771 + $0x1b0] sm:$0xff] %v7880
                  %v7882 = vld [vmem:[%s7770 + $0x1b8] sm:$0xff]
                  %7883 = vst [vmem:[%s7771 + $0x1b8] sm:$0xff] %v7882
                  %v7884 = vld [vmem:[%s7770 + $0x1c0] sm:$0xff]
                  %7885 = vst [vmem:[%s7771 + $0x1c0] sm:$0xff] %v7884
                  %v7886 = vld [vmem:[%s7770 + $0x1c8] sm:$0xff]
                  %7887 = vst [vmem:[%s7771 + $0x1c8] sm:$0xff] %v7886
                  %v7888 = vld [vmem:[%s7770 + $0x1d0] sm:$0xff]
                  %7889 = vst [vmem:[%s7771 + $0x1d0] sm:$0xff] %v7888
                  %v7890 = vld [vmem:[%s7770 + $0x1d8] sm:$0xff]
                  %7891 = vst [vmem:[%s7771 + $0x1d8] sm:$0xff] %v7890
                  %v7892 = vld [vmem:[%s7770 + $0x1e0] sm:$0xff]
                  %7893 = vst [vmem:[%s7771 + $0x1e0] sm:$0xff] %v7892
                  %v7894 = vld [vmem:[%s7770 + $0x1e8] sm:$0xff]
                  %7895 = vst [vmem:[%s7771 + $0x1e8] sm:$0xff] %v7894
                  %v7896 = vld [vmem:[%s7770 + $0x1f0] sm:$0xff]
                  %7897 = vst [vmem:[%s7771 + $0x1f0] sm:$0xff] %v7896
                  %v7898 = vld [vmem:[%s7770 + $0x1f8] sm:$0xff]
                  %7899 = vst [vmem:[%s7771 + $0x1f8] sm:$0xff] %v7898
                  %s7900 = sadd.s32 1, %s7769
                  %p7901 = scmp.ge.s32.totalorder %s7900, %s7760
                  %s7902 = scalar_select %p7901, 0, %s7900
                  %s7903 = smul.u32 %s7902, 512
                  %s7904 = smul.u32 %s7902, 512
                  %s7905 = scalar_lea.vmem %s7534, %s7903 [#allocation3]
                  %s7906 = scalar_lea.vmem %s7545, %s7904
                $region146: #{decoder_forward.1} parent=140 // loop_footer
                  %s7766 = sadd.s32 %s7764, 1
                $region147: #{decoder_forward.1} parent=140 // loop_footer_branch
                  %7763 = sbr.rel target = $region143
                $region148: #{decoder_forward.1} parent=140 // loop_exit
                  _
                %s7907 = sshrl.u32 %s7759, 6
                %s7908 = sand.u32 %s7759, 63
                %s7909 = smul.u32 %s7907, 64
                %s7910 = smul.u32 128, %s7909
                %s7911 = sshra.s32 %s7910, 4
                %s7912 = scalar_lea.vmem %s7534, %s7911 [#allocation3]
                %s7913 = smul.u32 128, %s7909
                %s7914 = sshra.s32 %s7913, 4
                %s7915 = scalar_lea.vmem %s7545, %s7914
                // While loop
                $region149: #{decoder_forward.1} parent=140 // loop_pre_header
                  _
                $region150: #{decoder_forward.1} parent=140 // loop_header
                  %s7919 = sphi 0, %s7921
                  %p7920 = scmp.ge.s32.totalorder %s7919, %s7908
                  %s7924 = sphi 0, %s7931
                  %s7925 = sphi %s7912, %s7934
                  %s7926 = sphi %s7915, %s7935
                $region151: #{decoder_forward.1} parent=140 // loop_header_branch
                  %7923 = sbr.rel (%p7920) target = $region155
                $region152: #{decoder_forward.1} parent=140 // loop_body
                  %v7927 = vld [vmem:[%s7925] sm:$0xff]
                  %7928 = vst [vmem:[%s7926] sm:$0xff] %v7927
                  %s7929 = sadd.s32 1, %s7924
                  %p7930 = scmp.ge.s32.totalorder %s7929, %s7908
                  %s7931 = scalar_select %p7930, 0, %s7929
                  %s7932 = smul.u32 %s7931, 8
                  %s7933 = smul.u32 %s7931, 8
                  %s7934 = scalar_lea.vmem %s7912, %s7932 [#allocation3]
                  %s7935 = scalar_lea.vmem %s7915, %s7933
                $region153: #{decoder_forward.1} parent=140 // loop_footer
                  %s7921 = sadd.s32 %s7919, 1
                $region154: #{decoder_forward.1} parent=140 // loop_footer_branch
                  %7918 = sbr.rel target = $region150
                $region155: #{decoder_forward.1} parent=140 // loop_exit
                  _
                %s7936 = sshll.u32 1, %s7754
                %s7937 = ssub.s32 %s7936, 1
                loop: start=0, step=1, limit=1
                $region156: #{decoder_forward.1} parent=140 // loop_pre_header
                  _
                $region157: #{decoder_forward.1} parent=140 // loop_header
                  %s7939 = sphi 0, %s7943
                  %p7940 = scmp.ge.s32.totalorder %s7939, 1
                  %s7944 = sphi %s7756, %s7756
                  %s7945 = sphi %s7758, %s7758
                $region158: #{decoder_forward.1} parent=140 // loop_header_branch
                  %7942 = sbr.rel (%p7940) target = $region162
                $region159: #{decoder_forward.1} parent=140 // loop_body
                  %v7946 = vld [vmem:[%s7944] sm:%s7937]
                  %7947 = vst [vmem:[%s7945] sm:%s7937] %v7946
                $region160: #{decoder_forward.1} parent=140 // loop_footer
                  %s7943 = sadd.s32 1, %s7939
                $region161: #{decoder_forward.1} parent=140 // loop_footer_branch
                  %7938 = sbr.rel target = $region157
                $region162: #{decoder_forward.1} parent=140 // loop_exit
                  _
              $region141: #{decoder_forward.1} parent=107 // pred_fallthru
                _
            $region108: #{decoder_forward.1} parent=103 // pred_fallthru
              _
            // Predicated region
            $region109: #{decoder_forward.1} parent=103 // pred_check
              %p7554 = pneg %p7550
            $region110: #{decoder_forward.1} parent=103 // pred_check_branch
              %7556 = sbr.rel (%p7554) target = $region112
            $region111: #{decoder_forward.1} parent=103 // pred_region
              %s7557 = sshll.u32 1, %s7546
              %s7558 = ssub.s32 %s7557, 1
              loop: start=0, step=1, limit=1
              $region113: #{decoder_forward.1} parent=111 // loop_pre_header
                _
              $region114: #{decoder_forward.1} parent=111 // loop_header
                %s7560 = sphi 0, %s7564
                %p7561 = scmp.ge.s32.totalorder %s7560, 1
                %s7565 = sphi %s7534, %s7534
                %s7566 = sphi %s7545, %s7545
              $region115: #{decoder_forward.1} parent=111 // loop_header_branch
                %7563 = sbr.rel (%p7561) target = $region119
              $region116: #{decoder_forward.1} parent=111 // loop_body
                %v7567 = vld [vmem:[%s7565] sm:%s7558]
                %7568 = vst [vmem:[%s7566] sm:%s7558] %v7567
              $region117: #{decoder_forward.1} parent=111 // loop_footer
                %s7564 = sadd.s32 1, %s7560
              $region118: #{decoder_forward.1} parent=111 // loop_footer_branch
                %7559 = sbr.rel target = $region114
              $region119: #{decoder_forward.1} parent=111 // loop_exit
                _
            $region112: #{decoder_forward.1} parent=103 // pred_fallthru
              _
          $region104: #{decoder_forward.1} parent=99 // pred_fallthru
            _
          %7948 = vnop
        $region100: #{decoder_forward.1} parent=91 // pred_fallthru
          _
      $region92: #{decoder_forward.1} parent=5 // pred_fallthru
        _
      %p7949 = scmp.le.s32.totalorder 2, %s12
      // Predicated region
      $region163: #{decoder_forward.1} parent=5 // pred_check
        %p7950 = pneg %p7949
      $region164: #{decoder_forward.1} parent=5 // pred_check_branch
        %7952 = sbr.rel (%p7950) target = $region166
      $region165: #{decoder_forward.1} parent=5 // pred_region
        %s7953 = ssub.s32 %s12, 2
        // Predicated region
        $region167: #{decoder_forward.1} parent=165 // pred_check
          %p7954 = pneg %p177
        $region168: #{decoder_forward.1} parent=165 // pred_check_branch
          %7956 = sbr.rel (%p7954) target = $region170
        $region169: #{decoder_forward.1} parent=165 // pred_region
          %s7957 = sand.u32 %s162, 1
          %s7958 = sand.u32 %s162, 1
          %s7959 = smul.addr %s7958, 40
          %s7960 = scalar_lea.vmem [#allocation3], %s7959
        $region170: #{decoder_forward.1} parent=165 // pred_fallthru
          _
      $region166: #{decoder_forward.1} parent=5 // pred_fallthru
        _
    $region6: #{decoder_forward.1} parent=1 // loop_footer
      %s16 = sadd.s32 1, %s12
    $region7: #{decoder_forward.1} parent=1 // loop_footer_branch
      %11 = sbr.rel target = $region3
    $region8: #{decoder_forward.1} parent=1 // loop_exit
      _

</llo_original>
